<compile_context>
chip_gen: v5e
topology: v5e:2x2
jax: 0.10.0
libtpu: 0.0.40
codegen_flags: <defaults>
</compile_context>

<pallas_src>
import jax
import jax.numpy as jnp
import numpy as np
from jax.experimental import pallas as pl
from jax.experimental.pallas import tpu as pltpu

C_A, Cr = 4, 5
H, W = 201, 16                    # Cr * H == 1005 == Conv1d in_channels
K, PAD = 9, 4
CIN_1D, COUT_1D = Cr * H, 201     # 1005, 201
ROW0 = 8                          # sublane-aligned start row of the data inside the padded scratch
NROWS = ROW0 + W + PAD            # 28 rows: [0:4) unused zeros, [4:8) top pad, [8:24) data, [24:28) bottom pad
EPS = 1e-5


# ---------------------------------------------------------------- kernel ----

def _fused_attention_kernel(x_ref, w2_ref, b2_ref, w1_ref, b1_ref, o_ref, ypad_ref):
    # x_ref : (bblk, C_A, W, H) f32 VMEM      w2_ref: (Cr, C_A) f32 SMEM   b2_ref: (Cr,) f32 SMEM
    # w1_ref: (K, Cr, H, COUT) bf16 VMEM      b1_ref: (1, COUT) f32 VMEM
    # o_ref : (bblk, W, COUT) f32 VMEM        ypad_ref: (Cr, bblk, NROWS, H) f32 VMEM scratch
    bblk = o_ref.shape[0]

    # In-kernel zero padding: the pad rows of the scratch read back as the conv1d's +/-4 zero pad.
    ypad_ref[...] = jnp.zeros(ypad_ref.shape, ypad_ref.dtype)

    # ---- stage 1: Conv2d(1x1) + BN(folded) + ReLU as scalar-broadcast MACs on the VPU ----
    xc = [x_ref[:, c] for c in range(C_A)]                     # 4 loads of (bblk, W, H) f32
    for cr in range(Cr):
        a = xc[0] * w2_ref[cr, 0]
        for c in range(1, C_A):
            a = a + xc[c] * w2_ref[cr, c]
        y_cr = jnp.maximum(a + b2_ref[cr], 0.0)                # (bblk, W, H) f32
        # tile-aligned store (sublane offset 8, 16 rows) into the padded VMEM scratch
        ypad_ref[cr, :, ROW0:ROW0 + W, :] = y_cr

    # ---- stage 2: Conv1d(k=9, pad=4) + BN(folded) + ReLU as 45 tap matmuls on the MXU ----
    # acc[b*W + w, o] += sum_h ypad[cr, b, (ROW0 - PAD) + k + w, h] * w1[k, cr, h, o]
    acc = None
    for cr in range(Cr):
        xp = ypad_ref[cr].astype(jnp.bfloat16)                 # (bblk, NROWS, H) bf16, one cast per cr
        for k in range(K):
            s = ROW0 - PAD + k
            win = xp[:, s:s + W, :].reshape(bblk * W, H)       # M = bblk*W, lane dim = H
            d = jnp.dot(win, w1_ref[k, cr],
                        preferred_element_type=jnp.float32)    # (bblk*W, COUT) f32 accumulate
            acc = d if acc is None else acc + d
    out = jnp.maximum(acc + b1_ref[...], 0.0)                  # lane-dense Cout=201 output
    o_ref[...] = out.reshape(bblk, W, COUT_1D)


def fused_attention(x_t, w2, b2, w1_kcrho, b1_row, *, bblk=1):
    """Fused forward.  x_t: (B, C_A, W, H) f32 -> (B, W, COUT) f32.

    bblk batches are stacked along the MXU M dim per grid step; raise it (e.g. 8) for
    large B so stage-2 dots see M >= 128 rows instead of 16.
    """
    B = x_t.shape[0]
    assert B % bblk == 0, (B, bblk)
    return pl.pallas_call(
        _fused_attention_kernel,
        out_shape=jax.ShapeDtypeStruct((B, W, COUT_1D), jnp.float32),
        grid_spec=pltpu.PrefetchScalarGridSpec(
            num_scalar_prefetch=0,
            grid=(B // bblk,),
            in_specs=[
                pl.BlockSpec((bblk, C_A, W, H), lambda i: (i, 0, 0, 0)),
                pl.BlockSpec(memory_space=pltpu.MemorySpace.SMEM),   # (Cr, C_A) stage-1 weight
                pl.BlockSpec(memory_space=pltpu.MemorySpace.SMEM),   # (Cr,)    stage-1 bias
                # bf16 conv1d weight: constant index_map -> fetched once, VMEM-resident;
                # Buffered(1) -> no pointless double buffer for a constant block.
                pl.BlockSpec((K, Cr, H, COUT_1D), lambda i: (0, 0, 0, 0),
                             pipeline_mode=pl.Buffered(1)),
                pl.BlockSpec((1, COUT_1D), lambda i: (0, 0)),
            ],
            out_specs=pl.BlockSpec((bblk, W, COUT_1D), lambda i: (i, 0, 0)),
            scratch_shapes=[pltpu.VMEM((Cr, bblk, NROWS, H), jnp.float32)],
        ),
        compiler_params=pltpu.CompilerParams(
            dimension_semantics=("parallel",),
            vmem_limit_bytes=12 * 1024 * 1024,
        ),
    )(x_t, w2, b2, w1_kcrho, b1_row)


# ------------------------------------------------------------ param setup ----

def fold_bn(w, b, gamma, beta, mean, var, eps=EPS):
    """Fold eval-mode BatchNorm into the preceding conv's weight & bias."""
    scale = gamma / jnp.sqrt(var + eps)
    w_f = w * scale.reshape((-1,) + (1,) * (w.ndim - 1))
    b_f = (b - mean) * scale + beta
    return w_f, b_f


def init_params(key):
    ks = jax.random.split(key, 12)
    p = {
        "conv2d_w_raw": jax.random.normal(ks[0], (Cr, C_A)) * 0.3,
        "conv2d_b_raw": jax.random.normal(ks[1], (Cr,)) * 0.1,
        "bn2d_gamma": jax.random.uniform(ks[2], (Cr,), minval=0.5, maxval=1.5),
        "bn2d_beta": jax.random.normal(ks[3], (Cr,)) * 0.1,
        "bn2d_mean": jax.random.normal(ks[4], (Cr,)) * 0.1,
        "bn2d_var": jax.random.uniform(ks[5], (Cr,), minval=0.5, maxval=1.5),
        "conv1d_w_raw": jax.random.normal(ks[6], (COUT_1D, CIN_1D, K)) * 0.01,
        "conv1d_b_raw": jax.random.normal(ks[7], (COUT_1D,)) * 0.1,
        "bn1d_gamma": jax.random.uniform(ks[8], (COUT_1D,), minval=0.5, maxval=1.5),
        "bn1d_beta": jax.random.normal(ks[9], (COUT_1D,)) * 0.1,
        "bn1d_mean": jax.random.normal(ks[10], (COUT_1D,)) * 0.1,
        "bn1d_var": jax.random.uniform(ks[11], (COUT_1D,), minval=0.5, maxval=1.5),
    }
    w2f, b2f = fold_bn(p["conv2d_w_raw"], p["conv2d_b_raw"],
                       p["bn2d_gamma"], p["bn2d_beta"], p["bn2d_mean"], p["bn2d_var"])
    w1f, b1f = fold_bn(p["conv1d_w_raw"], p["conv1d_b_raw"],
                       p["bn1d_gamma"], p["bn1d_beta"], p["bn1d_mean"], p["bn1d_var"])
    # All layout transforms / bf16 casts hoisted here (done exactly once):
    #   w1f (Cout, Cin=Cr*H, K) -> (K, Cr, H, Cout) bf16 so w1[k, cr] is a clean (H, Cout) MXU tile.
    w1_kcrho = jnp.transpose(w1f.reshape(COUT_1D, Cr, H, K), (3, 1, 2, 0)).astype(jnp.bfloat16)
    return {
        "conv2d_w": w2f,                       # (Cr, C_A)        f32 (SMEM operand)
        "conv2d_b": b2f,                       # (Cr,)            f32 (SMEM operand)
        "conv1d_w_kcrho": w1_kcrho,            # (K, Cr, H, Cout) bf16 (VMEM-resident weight)
        "conv1d_b_row": b1f.reshape(1, -1),    # (1, Cout)        f32
        "conv1d_w_ref": w1f,                   # (Cout, Cin, K)   f32 (XLA reference only)
    }


# ------------------------------------------------------------ forward pass ----

def attention_forward(x, params, *, bblk=1):
    """Pallas implementation of Attention.forward.  x: (B, C_A, H, W) NCHW."""
    B, _, Hh, Ww = x.shape
    # Tiny input layout swap so the kernel's stage-2 M dim is W and its lane dim is H / Cout.
    x_t = jnp.swapaxes(x, 2, 3)                                    # (B, C_A, W, H)
    z_t = fused_attention(x_t, params["conv2d_w"], params["conv2d_b"],
                          params["conv1d_w_kcrho"], params["conv1d_b_row"], bblk=bblk)
    z = jnp.swapaxes(z_t, 1, 2)                                    # (B, Cout, W) — tiny transpose
    # PyTorch: conv_1d_output.reshape(input.shape[0], input.shape[2], -1)
    return z.reshape(B, Hh, -1)


def attention_reference(x, params):
    """Pure-JAX (XLA, f32) reference of the same forward pass."""
    B, _, Hh, Ww = x.shape
    y = jnp.einsum("oc,bchw->bohw", params["conv2d_w"], x)
    y = jnp.maximum(y + params["conv2d_b"].reshape(1, -1, 1, 1), 0.0)
    y = y.reshape(B, -1, Ww)
    z = jax.lax.conv_general_dilated(
        y, params["conv1d_w_ref"], window_strides=(1,), padding=[(PAD, PAD)],
        dimension_numbers=("NCH", "OIH", "NCH"))
    z = jnp.maximum(z + params["conv1d_b_row"].reshape(1, -1, 1), 0.0)
    return z.reshape(B, Hh, -1)


# --------------------------------------------------------------------- main ---

if __name__ == "__main__":
    key = jax.random.PRNGKey(0)
    k_x, k_p = jax.random.split(key)
    x = jax.random.normal(k_x, (2, C_A, H, W), dtype=jnp.float32) * 0.5
    params = init_params(k_p)

    fwd = jax.jit(attention_forward)
    out = jax.block_until_ready(fwd(x, params))

    ref = jax.block_until_ready(attention_reference(x, params))
    assert out.shape == (2, H, (COUT_1D * W) // H), out.shape
    # NOTE: stage-2 runs with bf16 weights/activations (f32 accumulation) vs. the f32 reference,
    # hence the 2e-2 tolerance — an intentional inference-precision deviation from PyTorch/f32.
    assert np.allclose(np.asarray(out), np.asarray(ref), atol=2e-2, rtol=2e-2), (
        "mismatch vs reference: max abs diff = %g"
        % float(jnp.max(jnp.abs(out - ref))))

    print("KERNEL_OK")
</pallas_src>

<mosaic_0001>
module attributes {stable_mosaic.version = 11 : i64} {
  func.func @_fused_attention_kernel(%arg0: i32, %arg1: memref<1x4x16x201xf32, #tpu.memory_space<vmem>>, %arg2: memref<5x4xf32, #tpu.memory_space<smem>>, %arg3: memref<5xf32, #tpu.memory_space<smem>>, %arg4: memref<9x5x201x201xbf16, #tpu.memory_space<vmem>>, %arg5: memref<1x201xf32, #tpu.memory_space<vmem>>, %arg6: memref<1x16x201xf32, #tpu.memory_space<vmem>>, %arg7: memref<5x1x28x201xf32, #tpu.memory_space<vmem>>) attributes {dimension_semantics = [#tpu.dimension_semantics<parallel>], iteration_bounds = array<i64: 2>, scalar_prefetch = 0 : i64, scratch_operands = 1 : i64, tpu.core_type = #tpu.core_type<tc>, window_params = [{transform_indices = @transform_0, window_bounds = array<i64: 1, 4, 16, 201>}, {transform_indices = @transform_1, window_bounds = array<i64: 5, 4>}, {transform_indices = @transform_2, window_bounds = array<i64: 5>}, {pipeline_mode = #tpu.pipeline_mode<synchronous>, transform_indices = @transform_3, window_bounds = array<i64: 9, 5, 201, 201>}, {pipeline_mode = #tpu.pipeline_mode<synchronous>, transform_indices = @transform_4, window_bounds = array<i64: 1, 201>}, {transform_indices = @transform_5, window_bounds = array<i64: 1, 16, 201>}]} {
    %cst = arith.constant 0.000000e+00 : f32
    %0 = vector.broadcast %cst : f32 to vector<5x1x28x201xf32>
    %c0 = arith.constant 0 : index
    %c0_0 = arith.constant 0 : index
    %c0_1 = arith.constant 0 : index
    %c0_2 = arith.constant 0 : index
    %1 = vector.load %arg7[%c0, %c0_0, %c0_1, %c0_2] : memref<5x1x28x201xf32, #tpu.memory_space<vmem>>, vector<5x1x28x201xf32>
    tpu.vector_store %arg7[%c0, %c0_0, %c0_1, %c0_2], %0 {strides = array<i32>} : memref<5x1x28x201xf32, #tpu.memory_space<vmem>>, vector<5x1x28x201xf32>,
    %c0_3 = arith.constant 0 : index
    %c0_4 = arith.constant 0 : index
    %c0_5 = arith.constant 0 : index
    %c0_6 = arith.constant 0 : index
    %2 = vector.load %arg1[%c0_3, %c0_4, %c0_5, %c0_6] : memref<1x4x16x201xf32, #tpu.memory_space<vmem>>, vector<1x1x16x201xf32>
    %3 = vector.shape_cast %2 : vector<1x1x16x201xf32> to vector<1x16x201xf32>
    %c0_7 = arith.constant 0 : index
    %c1 = arith.constant 1 : index
    %c0_8 = arith.constant 0 : index
    %c0_9 = arith.constant 0 : index
    %4 = vector.load %arg1[%c0_7, %c1, %c0_8, %c0_9] : memref<1x4x16x201xf32, #tpu.memory_space<vmem>>, vector<1x1x16x201xf32>
    %5 = vector.shape_cast %4 : vector<1x1x16x201xf32> to vector<1x16x201xf32>
    %c0_10 = arith.constant 0 : index
    %c2 = arith.constant 2 : index
    %c0_11 = arith.constant 0 : index
    %c0_12 = arith.constant 0 : index
    %6 = vector.load %arg1[%c0_10, %c2, %c0_11, %c0_12] : memref<1x4x16x201xf32, #tpu.memory_space<vmem>>, vector<1x1x16x201xf32>
    %7 = vector.shape_cast %6 : vector<1x1x16x201xf32> to vector<1x16x201xf32>
    %c0_13 = arith.constant 0 : index
    %c3 = arith.constant 3 : index
    %c0_14 = arith.constant 0 : index
    %c0_15 = arith.constant 0 : index
    %8 = vector.load %arg1[%c0_13, %c3, %c0_14, %c0_15] : memref<1x4x16x201xf32, #tpu.memory_space<vmem>>, vector<1x1x16x201xf32>
    %9 = vector.shape_cast %8 : vector<1x1x16x201xf32> to vector<1x16x201xf32>
    %c0_16 = arith.constant 0 : index
    %c0_17 = arith.constant 0 : index
    %10 = memref.load %arg2[%c0_16, %c0_17] : memref<5x4xf32, #tpu.memory_space<smem>>
    %11 = vector.broadcast %10 : f32 to vector<1x16x201xf32>
    %12 = arith.mulf %3, %11 : vector<1x16x201xf32>
    %c0_18 = arith.constant 0 : index
    %c1_19 = arith.constant 1 : index
    %13 = memref.load %arg2[%c0_18, %c1_19] : memref<5x4xf32, #tpu.memory_space<smem>>
    %14 = vector.broadcast %13 : f32 to vector<1x16x201xf32>
    %15 = arith.mulf %5, %14 : vector<1x16x201xf32>
    %16 = arith.addf %12, %15 : vector<1x16x201xf32>
    %c0_20 = arith.constant 0 : index
    %c2_21 = arith.constant 2 : index
    %17 = memref.load %arg2[%c0_20, %c2_21] : memref<5x4xf32, #tpu.memory_space<smem>>
    %18 = vector.broadcast %17 : f32 to vector<1x16x201xf32>
    %19 = arith.mulf %7, %18 : vector<1x16x201xf32>
    %20 = arith.addf %16, %19 : vector<1x16x201xf32>
    %c0_22 = arith.constant 0 : index
    %c3_23 = arith.constant 3 : index
    %21 = memref.load %arg2[%c0_22, %c3_23] : memref<5x4xf32, #tpu.memory_space<smem>>
    %22 = vector.broadcast %21 : f32 to vector<1x16x201xf32>
    %23 = arith.mulf %9, %22 : vector<1x16x201xf32>
    %24 = arith.addf %20, %23 : vector<1x16x201xf32>
    %c0_24 = arith.constant 0 : index
    %25 = memref.load %arg3[%c0_24] : memref<5xf32, #tpu.memory_space<smem>>
    %26 = vector.broadcast %25 : f32 to vector<1x16x201xf32>
    %27 = arith.addf %24, %26 : vector<1x16x201xf32>
    %cst_25 = arith.constant 0.000000e+00 : f32
    %28 = vector.broadcast %cst_25 : f32 to vector<1x16x201xf32>
    %29 = arith.maximumf %27, %28 : vector<1x16x201xf32>
    %c0_26 = arith.constant 0 : index
    %c0_27 = arith.constant 0 : index
    %c8 = arith.constant 8 : index
    %c0_28 = arith.constant 0 : index
    %30 = vector.load %arg7[%c0_26, %c0_27, %c8, %c0_28] : memref<5x1x28x201xf32, #tpu.memory_space<vmem>>, vector<1x1x16x201xf32>
    %31 = vector.shape_cast %30 : vector<1x1x16x201xf32> to vector<1x16x201xf32>
    %32 = vector.shape_cast %29 : vector<1x16x201xf32> to vector<1x1x16x201xf32>
    tpu.vector_store %arg7[%c0_26, %c0_27, %c8, %c0_28], %32 {strides = array<i32>} : memref<5x1x28x201xf32, #tpu.memory_space<vmem>>, vector<1x1x16x201xf32>,
    %c1_29 = arith.constant 1 : index
    %c0_30 = arith.constant 0 : index
    %33 = memref.load %arg2[%c1_29, %c0_30] : memref<5x4xf32, #tpu.memory_space<smem>>
    %34 = vector.broadcast %33 : f32 to vector<1x16x201xf32>
    %35 = arith.mulf %3, %34 : vector<1x16x201xf32>
    %c1_31 = arith.constant 1 : index
    %c1_32 = arith.constant 1 : index
    %36 = memref.load %arg2[%c1_31, %c1_32] : memref<5x4xf32, #tpu.memory_space<smem>>
    %37 = vector.broadcast %36 : f32 to vector<1x16x201xf32>
    %38 = arith.mulf %5, %37 : vector<1x16x201xf32>
    %39 = arith.addf %35, %38 : vector<1x16x201xf32>
    %c1_33 = arith.constant 1 : index
    %c2_34 = arith.constant 2 : index
    %40 = memref.load %arg2[%c1_33, %c2_34] : memref<5x4xf32, #tpu.memory_space<smem>>
    %41 = vector.broadcast %40 : f32 to vector<1x16x201xf32>
    %42 = arith.mulf %7, %41 : vector<1x16x201xf32>
    %43 = arith.addf %39, %42 : vector<1x16x201xf32>
    %c1_35 = arith.constant 1 : index
    %c3_36 = arith.constant 3 : index
    %44 = memref.load %arg2[%c1_35, %c3_36] : memref<5x4xf32, #tpu.memory_space<smem>>
    %45 = vector.broadcast %44 : f32 to vector<1x16x201xf32>
    %46 = arith.mulf %9, %45 : vector<1x16x201xf32>
    %47 = arith.addf %43, %46 : vector<1x16x201xf32>
    %c1_37 = arith.constant 1 : index
    %48 = memref.load %arg3[%c1_37] : memref<5xf32, #tpu.memory_space<smem>>
    %49 = vector.broadcast %48 : f32 to vector<1x16x201xf32>
    %50 = arith.addf %47, %49 : vector<1x16x201xf32>
    %cst_38 = arith.constant 0.000000e+00 : f32
    %51 = vector.broadcast %cst_38 : f32 to vector<1x16x201xf32>
    %52 = arith.maximumf %50, %51 : vector<1x16x201xf32>
    %c1_39 = arith.constant 1 : index
    %c0_40 = arith.constant 0 : index
    %c8_41 = arith.constant 8 : index
    %c0_42 = arith.constant 0 : index
    %53 = vector.load %arg7[%c1_39, %c0_40, %c8_41, %c0_42] : memref<5x1x28x201xf32, #tpu.memory_space<vmem>>, vector<1x1x16x201xf32>
    %54 = vector.shape_cast %53 : vector<1x1x16x201xf32> to vector<1x16x201xf32>
    %55 = vector.shape_cast %52 : vector<1x16x201xf32> to vector<1x1x16x201xf32>
    tpu.vector_store %arg7[%c1_39, %c0_40, %c8_41, %c0_42], %55 {strides = array<i32>} : memref<5x1x28x201xf32, #tpu.memory_space<vmem>>, vector<1x1x16x201xf32>,
    %c2_43 = arith.constant 2 : index
    %c0_44 = arith.constant 0 : index
    %56 = memref.load %arg2[%c2_43, %c0_44] : memref<5x4xf32, #tpu.memory_space<smem>>
    %57 = vector.broadcast %56 : f32 to vector<1x16x201xf32>
    %58 = arith.mulf %3, %57 : vector<1x16x201xf32>
    %c2_45 = arith.constant 2 : index
    %c1_46 = arith.constant 1 : index
    %59 = memref.load %arg2[%c2_45, %c1_46] : memref<5x4xf32, #tpu.memory_space<smem>>
    %60 = vector.broadcast %59 : f32 to vector<1x16x201xf32>
    %61 = arith.mulf %5, %60 : vector<1x16x201xf32>
    %62 = arith.addf %58, %61 : vector<1x16x201xf32>
    %c2_47 = arith.constant 2 : index
    %c2_48 = arith.constant 2 : index
    %63 = memref.load %arg2[%c2_47, %c2_48] : memref<5x4xf32, #tpu.memory_space<smem>>
    %64 = vector.broadcast %63 : f32 to vector<1x16x201xf32>
    %65 = arith.mulf %7, %64 : vector<1x16x201xf32>
    %66 = arith.addf %62, %65 : vector<1x16x201xf32>
    %c2_49 = arith.constant 2 : index
    %c3_50 = arith.constant 3 : index
    %67 = memref.load %arg2[%c2_49, %c3_50] : memref<5x4xf32, #tpu.memory_space<smem>>
    %68 = vector.broadcast %67 : f32 to vector<1x16x201xf32>
    %69 = arith.mulf %9, %68 : vector<1x16x201xf32>
    %70 = arith.addf %66, %69 : vector<1x16x201xf32>
    %c2_51 = arith.constant 2 : index
    %71 = memref.load %arg3[%c2_51] : memref<5xf32, #tpu.memory_space<smem>>
    %72 = vector.broadcast %71 : f32 to vector<1x16x201xf32>
    %73 = arith.addf %70, %72 : vector<1x16x201xf32>
    %cst_52 = arith.constant 0.000000e+00 : f32
    %74 = vector.broadcast %cst_52 : f32 to vector<1x16x201xf32>
    %75 = arith.maximumf %73, %74 : vector<1x16x201xf32>
    %c2_53 = arith.constant 2 : index
    %c0_54 = arith.constant 0 : index
    %c8_55 = arith.constant 8 : index
    %c0_56 = arith.constant 0 : index
    %76 = vector.load %arg7[%c2_53, %c0_54, %c8_55, %c0_56] : memref<5x1x28x201xf32, #tpu.memory_space<vmem>>, vector<1x1x16x201xf32>
    %77 = vector.shape_cast %76 : vector<1x1x16x201xf32> to vector<1x16x201xf32>
    %78 = vector.shape_cast %75 : vector<1x16x201xf32> to vector<1x1x16x201xf32>
    tpu.vector_store %arg7[%c2_53, %c0_54, %c8_55, %c0_56], %78 {strides = array<i32>} : memref<5x1x28x201xf32, #tpu.memory_space<vmem>>, vector<1x1x16x201xf32>,
    %c3_57 = arith.constant 3 : index
    %c0_58 = arith.constant 0 : index
    %79 = memref.load %arg2[%c3_57, %c0_58] : memref<5x4xf32, #tpu.memory_space<smem>>
    %80 = vector.broadcast %79 : f32 to vector<1x16x201xf32>
    %81 = arith.mulf %3, %80 : vector<1x16x201xf32>
    %c3_59 = arith.constant 3 : index
    %c1_60 = arith.constant 1 : index
    %82 = memref.load %arg2[%c3_59, %c1_60] : memref<5x4xf32, #tpu.memory_space<smem>>
    %83 = vector.broadcast %82 : f32 to vector<1x16x201xf32>
    %84 = arith.mulf %5, %83 : vector<1x16x201xf32>
    %85 = arith.addf %81, %84 : vector<1x16x201xf32>
    %c3_61 = arith.constant 3 : index
    %c2_62 = arith.constant 2 : index
    %86 = memref.load %arg2[%c3_61, %c2_62] : memref<5x4xf32, #tpu.memory_space<smem>>
    %87 = vector.broadcast %86 : f32 to vector<1x16x201xf32>
    %88 = arith.mulf %7, %87 : vector<1x16x201xf32>
    %89 = arith.addf %85, %88 : vector<1x16x201xf32>
    %c3_63 = arith.constant 3 : index
    %c3_64 = arith.constant 3 : index
    %90 = memref.load %arg2[%c3_63, %c3_64] : memref<5x4xf32, #tpu.memory_space<smem>>
    %91 = vector.broadcast %90 : f32 to vector<1x16x201xf32>
    %92 = arith.mulf %9, %91 : vector<1x16x201xf32>
    %93 = arith.addf %89, %92 : vector<1x16x201xf32>
    %c3_65 = arith.constant 3 : index
    %94 = memref.load %arg3[%c3_65] : memref<5xf32, #tpu.memory_space<smem>>
    %95 = vector.broadcast %94 : f32 to vector<1x16x201xf32>
    %96 = arith.addf %93, %95 : vector<1x16x201xf32>
    %cst_66 = arith.constant 0.000000e+00 : f32
    %97 = vector.broadcast %cst_66 : f32 to vector<1x16x201xf32>
    %98 = arith.maximumf %96, %97 : vector<1x16x201xf32>
    %c3_67 = arith.constant 3 : index
    %c0_68 = arith.constant 0 : index
    %c8_69 = arith.constant 8 : index
    %c0_70 = arith.constant 0 : index
    %99 = vector.load %arg7[%c3_67, %c0_68, %c8_69, %c0_70] : memref<5x1x28x201xf32, #tpu.memory_space<vmem>>, vector<1x1x16x201xf32>
    %100 = vector.shape_cast %99 : vector<1x1x16x201xf32> to vector<1x16x201xf32>
    %101 = vector.shape_cast %98 : vector<1x16x201xf32> to vector<1x1x16x201xf32>
    tpu.vector_store %arg7[%c3_67, %c0_68, %c8_69, %c0_70], %101 {strides = array<i32>} : memref<5x1x28x201xf32, #tpu.memory_space<vmem>>, vector<1x1x16x201xf32>,
    %c4 = arith.constant 4 : index
    %c0_71 = arith.constant 0 : index
    %102 = memref.load %arg2[%c4, %c0_71] : memref<5x4xf32, #tpu.memory_space<smem>>
    %103 = vector.broadcast %102 : f32 to vector<1x16x201xf32>
    %104 = arith.mulf %3, %103 : vector<1x16x201xf32>
    %c4_72 = arith.constant 4 : index
    %c1_73 = arith.constant 1 : index
    %105 = memref.load %arg2[%c4_72, %c1_73] : memref<5x4xf32, #tpu.memory_space<smem>>
    %106 = vector.broadcast %105 : f32 to vector<1x16x201xf32>
    %107 = arith.mulf %5, %106 : vector<1x16x201xf32>
    %108 = arith.addf %104, %107 : vector<1x16x201xf32>
    %c4_74 = arith.constant 4 : index
    %c2_75 = arith.constant 2 : index
    %109 = memref.load %arg2[%c4_74, %c2_75] : memref<5x4xf32, #tpu.memory_space<smem>>
    %110 = vector.broadcast %109 : f32 to vector<1x16x201xf32>
    %111 = arith.mulf %7, %110 : vector<1x16x201xf32>
    %112 = arith.addf %108, %111 : vector<1x16x201xf32>
    %c4_76 = arith.constant 4 : index
    %c3_77 = arith.constant 3 : index
    %113 = memref.load %arg2[%c4_76, %c3_77] : memref<5x4xf32, #tpu.memory_space<smem>>
    %114 = vector.broadcast %113 : f32 to vector<1x16x201xf32>
    %115 = arith.mulf %9, %114 : vector<1x16x201xf32>
    %116 = arith.addf %112, %115 : vector<1x16x201xf32>
    %c4_78 = arith.constant 4 : index
    %117 = memref.load %arg3[%c4_78] : memref<5xf32, #tpu.memory_space<smem>>
    %118 = vector.broadcast %117 : f32 to vector<1x16x201xf32>
    %119 = arith.addf %116, %118 : vector<1x16x201xf32>
    %cst_79 = arith.constant 0.000000e+00 : f32
    %120 = vector.broadcast %cst_79 : f32 to vector<1x16x201xf32>
    %121 = arith.maximumf %119, %120 : vector<1x16x201xf32>
    %c4_80 = arith.constant 4 : index
    %c0_81 = arith.constant 0 : index
    %c8_82 = arith.constant 8 : index
    %c0_83 = arith.constant 0 : index
    %122 = vector.load %arg7[%c4_80, %c0_81, %c8_82, %c0_83] : memref<5x1x28x201xf32, #tpu.memory_space<vmem>>, vector<1x1x16x201xf32>
    %123 = vector.shape_cast %122 : vector<1x1x16x201xf32> to vector<1x16x201xf32>
    %124 = vector.shape_cast %121 : vector<1x16x201xf32> to vector<1x1x16x201xf32>
    tpu.vector_store %arg7[%c4_80, %c0_81, %c8_82, %c0_83], %124 {strides = array<i32>} : memref<5x1x28x201xf32, #tpu.memory_space<vmem>>, vector<1x1x16x201xf32>,
    %c0_84 = arith.constant 0 : index
    %c0_85 = arith.constant 0 : index
    %c0_86 = arith.constant 0 : index
    %c0_87 = arith.constant 0 : index
    %125 = vector.load %arg7[%c0_84, %c0_85, %c0_86, %c0_87] : memref<5x1x28x201xf32, #tpu.memory_space<vmem>>, vector<1x1x28x201xf32>
    %126 = vector.shape_cast %125 : vector<1x1x28x201xf32> to vector<1x28x201xf32>
    %127 = arith.truncf %126 : vector<1x28x201xf32> to vector<1x28x201xbf16>
    %128 = vector.extract_strided_slice %127 {offsets = [0, 4, 0], sizes = [1, 16, 201], strides = [1, 1, 1]} : vector<1x28x201xbf16> to vector<1x16x201xbf16>
    %129 = vector.shape_cast %128 : vector<1x16x201xbf16> to vector<16x201xbf16>
    %c0_88 = arith.constant 0 : index
    %c0_89 = arith.constant 0 : index
    %c0_90 = arith.constant 0 : index
    %c0_91 = arith.constant 0 : index
    %130 = vector.load %arg4[%c0_88, %c0_89, %c0_90, %c0_91] : memref<9x5x201x201xbf16, #tpu.memory_space<vmem>>, vector<1x1x201x201xbf16>
    %131 = vector.shape_cast %130 : vector<1x1x201x201xbf16> to vector<201x201xbf16>
    %cst_92 = arith.constant dense<0.000000e+00> : vector<16x201xf32>
    %132 = tpu.matmul %129, %131, %cst_92 {dimension_numbers = #tpu.dot_dimension_numbers<[1], [0], [0], [1], [0, 0, 1, 1], [], []>} : vector<16x201xbf16>, vector<201x201xbf16>, vector<16x201xf32> -> vector<16x201xf32>
    %133 = vector.extract_strided_slice %127 {offsets = [0, 5, 0], sizes = [1, 16, 201], strides = [1, 1, 1]} : vector<1x28x201xbf16> to vector<1x16x201xbf16>
    %134 = vector.shape_cast %133 : vector<1x16x201xbf16> to vector<16x201xbf16>
    %c1_93 = arith.constant 1 : index
    %c0_94 = arith.constant 0 : index
    %c0_95 = arith.constant 0 : index
    %c0_96 = arith.constant 0 : index
    %135 = vector.load %arg4[%c1_93, %c0_94, %c0_95, %c0_96] : memref<9x5x201x201xbf16, #tpu.memory_space<vmem>>, vector<1x1x201x201xbf16>
    %136 = vector.shape_cast %135 : vector<1x1x201x201xbf16> to vector<201x201xbf16>
    %cst_97 = arith.constant dense<0.000000e+00> : vector<16x201xf32>
    %137 = tpu.matmul %134, %136, %cst_97 {dimension_numbers = #tpu.dot_dimension_numbers<[1], [0], [0], [1], [0, 0, 1, 1], [], []>} : vector<16x201xbf16>, vector<201x201xbf16>, vector<16x201xf32> -> vector<16x201xf32>
    %138 = arith.addf %132, %137 : vector<16x201xf32>
    %139 = vector.extract_strided_slice %127 {offsets = [0, 6, 0], sizes = [1, 16, 201], strides = [1, 1, 1]} : vector<1x28x201xbf16> to vector<1x16x201xbf16>
    %140 = vector.shape_cast %139 : vector<1x16x201xbf16> to vector<16x201xbf16>
    %c2_98 = arith.constant 2 : index
    %c0_99 = arith.constant 0 : index
    %c0_100 = arith.constant 0 : index
    %c0_101 = arith.constant 0 : index
    %141 = vector.load %arg4[%c2_98, %c0_99, %c0_100, %c0_101] : memref<9x5x201x201xbf16, #tpu.memory_space<vmem>>, vector<1x1x201x201xbf16>
    %142 = vector.shape_cast %141 : vector<1x1x201x201xbf16> to vector<201x201xbf16>
    %cst_102 = arith.constant dense<0.000000e+00> : vector<16x201xf32>
    %143 = tpu.matmul %140, %142, %cst_102 {dimension_numbers = #tpu.dot_dimension_numbers<[1], [0], [0], [1], [0, 0, 1, 1], [], []>} : vector<16x201xbf16>, vector<201x201xbf16>, vector<16x201xf32> -> vector<16x201xf32>
    %144 = arith.addf %138, %143 : vector<16x201xf32>
    %145 = vector.extract_strided_slice %127 {offsets = [0, 7, 0], sizes = [1, 16, 201], strides = [1, 1, 1]} : vector<1x28x201xbf16> to vector<1x16x201xbf16>
    %146 = vector.shape_cast %145 : vector<1x16x201xbf16> to vector<16x201xbf16>
    %c3_103 = arith.constant 3 : index
    %c0_104 = arith.constant 0 : index
    %c0_105 = arith.constant 0 : index
    %c0_106 = arith.constant 0 : index
    %147 = vector.load %arg4[%c3_103, %c0_104, %c0_105, %c0_106] : memref<9x5x201x201xbf16, #tpu.memory_space<vmem>>, vector<1x1x201x201xbf16>
    %148 = vector.shape_cast %147 : vector<1x1x201x201xbf16> to vector<201x201xbf16>
    %cst_107 = arith.constant dense<0.000000e+00> : vector<16x201xf32>
    %149 = tpu.matmul %146, %148, %cst_107 {dimension_numbers = #tpu.dot_dimension_numbers<[1], [0], [0], [1], [0, 0, 1, 1], [], []>} : vector<16x201xbf16>, vector<201x201xbf16>, vector<16x201xf32> -> vector<16x201xf32>
    %150 = arith.addf %144, %149 : vector<16x201xf32>
    %151 = vector.extract_strided_slice %127 {offsets = [0, 8, 0], sizes = [1, 16, 201], strides = [1, 1, 1]} : vector<1x28x201xbf16> to vector<1x16x201xbf16>
    %152 = vector.shape_cast %151 : vector<1x16x201xbf16> to vector<16x201xbf16>
    %c4_108 = arith.constant 4 : index
    %c0_109 = arith.constant 0 : index
    %c0_110 = arith.constant 0 : index
    %c0_111 = arith.constant 0 : index
    %153 = vector.load %arg4[%c4_108, %c0_109, %c0_110, %c0_111] : memref<9x5x201x201xbf16, #tpu.memory_space<vmem>>, vector<1x1x201x201xbf16>
    %154 = vector.shape_cast %153 : vector<1x1x201x201xbf16> to vector<201x201xbf16>
    %cst_112 = arith.constant dense<0.000000e+00> : vector<16x201xf32>
    %155 = tpu.matmul %152, %154, %cst_112 {dimension_numbers = #tpu.dot_dimension_numbers<[1], [0], [0], [1], [0, 0, 1, 1], [], []>} : vector<16x201xbf16>, vector<201x201xbf16>, vector<16x201xf32> -> vector<16x201xf32>
    %156 = arith.addf %150, %155 : vector<16x201xf32>
    %157 = vector.extract_strided_slice %127 {offsets = [0, 9, 0], sizes = [1, 16, 201], strides = [1, 1, 1]} : vector<1x28x201xbf16> to vector<1x16x201xbf16>
    %158 = vector.shape_cast %157 : vector<1x16x201xbf16> to vector<16x201xbf16>
    %c5 = arith.constant 5 : index
    %c0_113 = arith.constant 0 : index
    %c0_114 = arith.constant 0 : index
    %c0_115 = arith.constant 0 : index
    %159 = vector.load %arg4[%c5, %c0_113, %c0_114, %c0_115] : memref<9x5x201x201xbf16, #tpu.memory_space<vmem>>, vector<1x1x201x201xbf16>
    %160 = vector.shape_cast %159 : vector<1x1x201x201xbf16> to vector<201x201xbf16>
    %cst_116 = arith.constant dense<0.000000e+00> : vector<16x201xf32>
    %161 = tpu.matmul %158, %160, %cst_116 {dimension_numbers = #tpu.dot_dimension_numbers<[1], [0], [0], [1], [0, 0, 1, 1], [], []>} : vector<16x201xbf16>, vector<201x201xbf16>, vector<16x201xf32> -> vector<16x201xf32>
    %162 = arith.addf %156, %161 : vector<16x201xf32>
    %163 = vector.extract_strided_slice %127 {offsets = [0, 10, 0], sizes = [1, 16, 201], strides = [1, 1, 1]} : vector<1x28x201xbf16> to vector<1x16x201xbf16>
    %164 = vector.shape_cast %163 : vector<1x16x201xbf16> to vector<16x201xbf16>
    %c6 = arith.constant 6 : index
    %c0_117 = arith.constant 0 : index
    %c0_118 = arith.constant 0 : index
    %c0_119 = arith.constant 0 : index
    %165 = vector.load %arg4[%c6, %c0_117, %c0_118, %c0_119] : memref<9x5x201x201xbf16, #tpu.memory_space<vmem>>, vector<1x1x201x201xbf16>
    %166 = vector.shape_cast %165 : vector<1x1x201x201xbf16> to vector<201x201xbf16>
    %cst_120 = arith.constant dense<0.000000e+00> : vector<16x201xf32>
    %167 = tpu.matmul %164, %166, %cst_120 {dimension_numbers = #tpu.dot_dimension_numbers<[1], [0], [0], [1], [0, 0, 1, 1], [], []>} : vector<16x201xbf16>, vector<201x201xbf16>, vector<16x201xf32> -> vector<16x201xf32>
    %168 = arith.addf %162, %167 : vector<16x201xf32>
    %169 = vector.extract_strided_slice %127 {offsets = [0, 11, 0], sizes = [1, 16, 201], strides = [1, 1, 1]} : vector<1x28x201xbf16> to vector<1x16x201xbf16>
    %170 = vector.shape_cast %169 : vector<1x16x201xbf16> to vector<16x201xbf16>
    %c7 = arith.constant 7 : index
    %c0_121 = arith.constant 0 : index
    %c0_122 = arith.constant 0 : index
    %c0_123 = arith.constant 0 : index
    %171 = vector.load %arg4[%c7, %c0_121, %c0_122, %c0_123] : memref<9x5x201x201xbf16, #tpu.memory_space<vmem>>, vector<1x1x201x201xbf16>
    %172 = vector.shape_cast %171 : vector<1x1x201x201xbf16> to vector<201x201xbf16>
    %cst_124 = arith.constant dense<0.000000e+00> : vector<16x201xf32>
    %173 = tpu.matmul %170, %172, %cst_124 {dimension_numbers = #tpu.dot_dimension_numbers<[1], [0], [0], [1], [0, 0, 1, 1], [], []>} : vector<16x201xbf16>, vector<201x201xbf16>, vector<16x201xf32> -> vector<16x201xf32>
    %174 = arith.addf %168, %173 : vector<16x201xf32>
    %175 = vector.extract_strided_slice %127 {offsets = [0, 12, 0], sizes = [1, 16, 201], strides = [1, 1, 1]} : vector<1x28x201xbf16> to vector<1x16x201xbf16>
    %176 = vector.shape_cast %175 : vector<1x16x201xbf16> to vector<16x201xbf16>
    %c8_125 = arith.constant 8 : index
    %c0_126 = arith.constant 0 : index
    %c0_127 = arith.constant 0 : index
    %c0_128 = arith.constant 0 : index
    %177 = vector.load %arg4[%c8_125, %c0_126, %c0_127, %c0_128] : memref<9x5x201x201xbf16, #tpu.memory_space<vmem>>, vector<1x1x201x201xbf16>
    %178 = vector.shape_cast %177 : vector<1x1x201x201xbf16> to vector<201x201xbf16>
    %cst_129 = arith.constant dense<0.000000e+00> : vector<16x201xf32>
    %179 = tpu.matmul %176, %178, %cst_129 {dimension_numbers = #tpu.dot_dimension_numbers<[1], [0], [0], [1], [0, 0, 1, 1], [], []>} : vector<16x201xbf16>, vector<201x201xbf16>, vector<16x201xf32> -> vector<16x201xf32>
    %180 = arith.addf %174, %179 : vector<16x201xf32>
    %c1_130 = arith.constant 1 : index
    %c0_131 = arith.constant 0 : index
    %c0_132 = arith.constant 0 : index
    %c0_133 = arith.constant 0 : index
    %181 = vector.load %arg7[%c1_130, %c0_131, %c0_132, %c0_133] : memref<5x1x28x201xf32, #tpu.memory_space<vmem>>, vector<1x1x28x201xf32>
    %182 = vector.shape_cast %181 : vector<1x1x28x201xf32> to vector<1x28x201xf32>
    %183 = arith.truncf %182 : vector<1x28x201xf32> to vector<1x28x201xbf16>
    %184 = vector.extract_strided_slice %183 {offsets = [0, 4, 0], sizes = [1, 16, 201], strides = [1, 1, 1]} : vector<1x28x201xbf16> to vector<1x16x201xbf16>
    %185 = vector.shape_cast %184 : vector<1x16x201xbf16> to vector<16x201xbf16>
    %c0_134 = arith.constant 0 : index
    %c1_135 = arith.constant 1 : index
    %c0_136 = arith.constant 0 : index
    %c0_137 = arith.constant 0 : index
    %186 = vector.load %arg4[%c0_134, %c1_135, %c0_136, %c0_137] : memref<9x5x201x201xbf16, #tpu.memory_space<vmem>>, vector<1x1x201x201xbf16>
    %187 = vector.shape_cast %186 : vector<1x1x201x201xbf16> to vector<201x201xbf16>
    %cst_138 = arith.constant dense<0.000000e+00> : vector<16x201xf32>
    %188 = tpu.matmul %185, %187, %cst_138 {dimension_numbers = #tpu.dot_dimension_numbers<[1], [0], [0], [1], [0, 0, 1, 1], [], []>} : vector<16x201xbf16>, vector<201x201xbf16>, vector<16x201xf32> -> vector<16x201xf32>
    %189 = arith.addf %180, %188 : vector<16x201xf32>
    %190 = vector.extract_strided_slice %183 {offsets = [0, 5, 0], sizes = [1, 16, 201], strides = [1, 1, 1]} : vector<1x28x201xbf16> to vector<1x16x201xbf16>
    %191 = vector.shape_cast %190 : vector<1x16x201xbf16> to vector<16x201xbf16>
    %c1_139 = arith.constant 1 : index
    %c1_140 = arith.constant 1 : index
    %c0_141 = arith.constant 0 : index
    %c0_142 = arith.constant 0 : index
    %192 = vector.load %arg4[%c1_139, %c1_140, %c0_141, %c0_142] : memref<9x5x201x201xbf16, #tpu.memory_space<vmem>>, vector<1x1x201x201xbf16>
    %193 = vector.shape_cast %192 : vector<1x1x201x201xbf16> to vector<201x201xbf16>
    %cst_143 = arith.constant dense<0.000000e+00> : vector<16x201xf32>
    %194 = tpu.matmul %191, %193, %cst_143 {dimension_numbers = #tpu.dot_dimension_numbers<[1], [0], [0], [1], [0, 0, 1, 1], [], []>} : vector<16x201xbf16>, vector<201x201xbf16>, vector<16x201xf32> -> vector<16x201xf32>
    %195 = arith.addf %189, %194 : vector<16x201xf32>
    %196 = vector.extract_strided_slice %183 {offsets = [0, 6, 0], sizes = [1, 16, 201], strides = [1, 1, 1]} : vector<1x28x201xbf16> to vector<1x16x201xbf16>
    %197 = vector.shape_cast %196 : vector<1x16x201xbf16> to vector<16x201xbf16>
    %c2_144 = arith.constant 2 : index
    %c1_145 = arith.constant 1 : index
    %c0_146 = arith.constant 0 : index
    %c0_147 = arith.constant 0 : index
    %198 = vector.load %arg4[%c2_144, %c1_145, %c0_146, %c0_147] : memref<9x5x201x201xbf16, #tpu.memory_space<vmem>>, vector<1x1x201x201xbf16>
    %199 = vector.shape_cast %198 : vector<1x1x201x201xbf16> to vector<201x201xbf16>
    %cst_148 = arith.constant dense<0.000000e+00> : vector<16x201xf32>
    %200 = tpu.matmul %197, %199, %cst_148 {dimension_numbers = #tpu.dot_dimension_numbers<[1], [0], [0], [1], [0, 0, 1, 1], [], []>} : vector<16x201xbf16>, vector<201x201xbf16>, vector<16x201xf32> -> vector<16x201xf32>
    %201 = arith.addf %195, %200 : vector<16x201xf32>
    %202 = vector.extract_strided_slice %183 {offsets = [0, 7, 0], sizes = [1, 16, 201], strides = [1, 1, 1]} : vector<1x28x201xbf16> to vector<1x16x201xbf16>
    %203 = vector.shape_cast %202 : vector<1x16x201xbf16> to vector<16x201xbf16>
    %c3_149 = arith.constant 3 : index
    %c1_150 = arith.constant 1 : index
    %c0_151 = arith.constant 0 : index
    %c0_152 = arith.constant 0 : index
    %204 = vector.load %arg4[%c3_149, %c1_150, %c0_151, %c0_152] : memref<9x5x201x201xbf16, #tpu.memory_space<vmem>>, vector<1x1x201x201xbf16>
    %205 = vector.shape_cast %204 : vector<1x1x201x201xbf16> to vector<201x201xbf16>
    %cst_153 = arith.constant dense<0.000000e+00> : vector<16x201xf32>
    %206 = tpu.matmul %203, %205, %cst_153 {dimension_numbers = #tpu.dot_dimension_numbers<[1], [0], [0], [1], [0, 0, 1, 1], [], []>} : vector<16x201xbf16>, vector<201x201xbf16>, vector<16x201xf32> -> vector<16x201xf32>
    %207 = arith.addf %201, %206 : vector<16x201xf32>
    %208 = vector.extract_strided_slice %183 {offsets = [0, 8, 0], sizes = [1, 16, 201], strides = [1, 1, 1]} : vector<1x28x201xbf16> to vector<1x16x201xbf16>
    %209 = vector.shape_cast %208 : vector<1x16x201xbf16> to vector<16x201xbf16>
    %c4_154 = arith.constant 4 : index
    %c1_155 = arith.constant 1 : index
    %c0_156 = arith.constant 0 : index
    %c0_157 = arith.constant 0 : index
    %210 = vector.load %arg4[%c4_154, %c1_155, %c0_156, %c0_157] : memref<9x5x201x201xbf16, #tpu.memory_space<vmem>>, vector<1x1x201x201xbf16>
    %211 = vector.shape_cast %210 : vector<1x1x201x201xbf16> to vector<201x201xbf16>
    %cst_158 = arith.constant dense<0.000000e+00> : vector<16x201xf32>
    %212 = tpu.matmul %209, %211, %cst_158 {dimension_numbers = #tpu.dot_dimension_numbers<[1], [0], [0], [1], [0, 0, 1, 1], [], []>} : vector<16x201xbf16>, vector<201x201xbf16>, vector<16x201xf32> -> vector<16x201xf32>
    %213 = arith.addf %207, %212 : vector<16x201xf32>
    %214 = vector.extract_strided_slice %183 {offsets = [0, 9, 0], sizes = [1, 16, 201], strides = [1, 1, 1]} : vector<1x28x201xbf16> to vector<1x16x201xbf16>
    %215 = vector.shape_cast %214 : vector<1x16x201xbf16> to vector<16x201xbf16>
    %c5_159 = arith.constant 5 : index
    %c1_160 = arith.constant 1 : index
    %c0_161 = arith.constant 0 : index
    %c0_162 = arith.constant 0 : index
    %216 = vector.load %arg4[%c5_159, %c1_160, %c0_161, %c0_162] : memref<9x5x201x201xbf16, #tpu.memory_space<vmem>>, vector<1x1x201x201xbf16>
    %217 = vector.shape_cast %216 : vector<1x1x201x201xbf16> to vector<201x201xbf16>
    %cst_163 = arith.constant dense<0.000000e+00> : vector<16x201xf32>
    %218 = tpu.matmul %215, %217, %cst_163 {dimension_numbers = #tpu.dot_dimension_numbers<[1], [0], [0], [1], [0, 0, 1, 1], [], []>} : vector<16x201xbf16>, vector<201x201xbf16>, vector<16x201xf32> -> vector<16x201xf32>
    %219 = arith.addf %213, %218 : vector<16x201xf32>
    %220 = vector.extract_strided_slice %183 {offsets = [0, 10, 0], sizes = [1, 16, 201], strides = [1, 1, 1]} : vector<1x28x201xbf16> to vector<1x16x201xbf16>
    %221 = vector.shape_cast %220 : vector<1x16x201xbf16> to vector<16x201xbf16>
    %c6_164 = arith.constant 6 : index
    %c1_165 = arith.constant 1 : index
    %c0_166 = arith.constant 0 : index
    %c0_167 = arith.constant 0 : index
    %222 = vector.load %arg4[%c6_164, %c1_165, %c0_166, %c0_167] : memref<9x5x201x201xbf16, #tpu.memory_space<vmem>>, vector<1x1x201x201xbf16>
    %223 = vector.shape_cast %222 : vector<1x1x201x201xbf16> to vector<201x201xbf16>
    %cst_168 = arith.constant dense<0.000000e+00> : vector<16x201xf32>
    %224 = tpu.matmul %221, %223, %cst_168 {dimension_numbers = #tpu.dot_dimension_numbers<[1], [0], [0], [1], [0, 0, 1, 1], [], []>} : vector<16x201xbf16>, vector<201x201xbf16>, vector<16x201xf32> -> vector<16x201xf32>
    %225 = arith.addf %219, %224 : vector<16x201xf32>
    %226 = vector.extract_strided_slice %183 {offsets = [0, 11, 0], sizes = [1, 16, 201], strides = [1, 1, 1]} : vector<1x28x201xbf16> to vector<1x16x201xbf16>
    %227 = vector.shape_cast %226 : vector<1x16x201xbf16> to vector<16x201xbf16>
    %c7_169 = arith.constant 7 : index
    %c1_170 = arith.constant 1 : index
    %c0_171 = arith.constant 0 : index
    %c0_172 = arith.constant 0 : index
    %228 = vector.load %arg4[%c7_169, %c1_170, %c0_171, %c0_172] : memref<9x5x201x201xbf16, #tpu.memory_space<vmem>>, vector<1x1x201x201xbf16>
    %229 = vector.shape_cast %228 : vector<1x1x201x201xbf16> to vector<201x201xbf16>
    %cst_173 = arith.constant dense<0.000000e+00> : vector<16x201xf32>
    %230 = tpu.matmul %227, %229, %cst_173 {dimension_numbers = #tpu.dot_dimension_numbers<[1], [0], [0], [1], [0, 0, 1, 1], [], []>} : vector<16x201xbf16>, vector<201x201xbf16>, vector<16x201xf32> -> vector<16x201xf32>
    %231 = arith.addf %225, %230 : vector<16x201xf32>
    %232 = vector.extract_strided_slice %183 {offsets = [0, 12, 0], sizes = [1, 16, 201], strides = [1, 1, 1]} : vector<1x28x201xbf16> to vector<1x16x201xbf16>
    %233 = vector.shape_cast %232 : vector<1x16x201xbf16> to vector<16x201xbf16>
    %c8_174 = arith.constant 8 : index
    %c1_175 = arith.constant 1 : index
    %c0_176 = arith.constant 0 : index
    %c0_177 = arith.constant 0 : index
    %234 = vector.load %arg4[%c8_174, %c1_175, %c0_176, %c0_177] : memref<9x5x201x201xbf16, #tpu.memory_space<vmem>>, vector<1x1x201x201xbf16>
    %235 = vector.shape_cast %234 : vector<1x1x201x201xbf16> to vector<201x201xbf16>
    %cst_178 = arith.constant dense<0.000000e+00> : vector<16x201xf32>
    %236 = tpu.matmul %233, %235, %cst_178 {dimension_numbers = #tpu.dot_dimension_numbers<[1], [0], [0], [1], [0, 0, 1, 1], [], []>} : vector<16x201xbf16>, vector<201x201xbf16>, vector<16x201xf32> -> vector<16x201xf32>
    %237 = arith.addf %231, %236 : vector<16x201xf32>
    %c2_179 = arith.constant 2 : index
    %c0_180 = arith.constant 0 : index
    %c0_181 = arith.constant 0 : index
    %c0_182 = arith.constant 0 : index
    %238 = vector.load %arg7[%c2_179, %c0_180, %c0_181, %c0_182] : memref<5x1x28x201xf32, #tpu.memory_space<vmem>>, vector<1x1x28x201xf32>
    %239 = vector.shape_cast %238 : vector<1x1x28x201xf32> to vector<1x28x201xf32>
    %240 = arith.truncf %239 : vector<1x28x201xf32> to vector<1x28x201xbf16>
    %241 = vector.extract_strided_slice %240 {offsets = [0, 4, 0], sizes = [1, 16, 201], strides = [1, 1, 1]} : vector<1x28x201xbf16> to vector<1x16x201xbf16>
    %242 = vector.shape_cast %241 : vector<1x16x201xbf16> to vector<16x201xbf16>
    %c0_183 = arith.constant 0 : index
    %c2_184 = arith.constant 2 : index
    %c0_185 = arith.constant 0 : index
    %c0_186 = arith.constant 0 : index
    %243 = vector.load %arg4[%c0_183, %c2_184, %c0_185, %c0_186] : memref<9x5x201x201xbf16, #tpu.memory_space<vmem>>, vector<1x1x201x201xbf16>
    %244 = vector.shape_cast %243 : vector<1x1x201x201xbf16> to vector<201x201xbf16>
    %cst_187 = arith.constant dense<0.000000e+00> : vector<16x201xf32>
    %245 = tpu.matmul %242, %244, %cst_187 {dimension_numbers = #tpu.dot_dimension_numbers<[1], [0], [0], [1], [0, 0, 1, 1], [], []>} : vector<16x201xbf16>, vector<201x201xbf16>, vector<16x201xf32> -> vector<16x201xf32>
    %246 = arith.addf %237, %245 : vector<16x201xf32>
    %247 = vector.extract_strided_slice %240 {offsets = [0, 5, 0], sizes = [1, 16, 201], strides = [1, 1, 1]} : vector<1x28x201xbf16> to vector<1x16x201xbf16>
    %248 = vector.shape_cast %247 : vector<1x16x201xbf16> to vector<16x201xbf16>
    %c1_188 = arith.constant 1 : index
    %c2_189 = arith.constant 2 : index
    %c0_190 = arith.constant 0 : index
    %c0_191 = arith.constant 0 : index
    %249 = vector.load %arg4[%c1_188, %c2_189, %c0_190, %c0_191] : memref<9x5x201x201xbf16, #tpu.memory_space<vmem>>, vector<1x1x201x201xbf16>
    %250 = vector.shape_cast %249 : vector<1x1x201x201xbf16> to vector<201x201xbf16>
    %cst_192 = arith.constant dense<0.000000e+00> : vector<16x201xf32>
    %251 = tpu.matmul %248, %250, %cst_192 {dimension_numbers = #tpu.dot_dimension_numbers<[1], [0], [0], [1], [0, 0, 1, 1], [], []>} : vector<16x201xbf16>, vector<201x201xbf16>, vector<16x201xf32> -> vector<16x201xf32>
    %252 = arith.addf %246, %251 : vector<16x201xf32>
    %253 = vector.extract_strided_slice %240 {offsets = [0, 6, 0], sizes = [1, 16, 201], strides = [1, 1, 1]} : vector<1x28x201xbf16> to vector<1x16x201xbf16>
    %254 = vector.shape_cast %253 : vector<1x16x201xbf16> to vector<16x201xbf16>
    %c2_193 = arith.constant 2 : index
    %c2_194 = arith.constant 2 : index
    %c0_195 = arith.constant 0 : index
    %c0_196 = arith.constant 0 : index
    %255 = vector.load %arg4[%c2_193, %c2_194, %c0_195, %c0_196] : memref<9x5x201x201xbf16, #tpu.memory_space<vmem>>, vector<1x1x201x201xbf16>
    %256 = vector.shape_cast %255 : vector<1x1x201x201xbf16> to vector<201x201xbf16>
    %cst_197 = arith.constant dense<0.000000e+00> : vector<16x201xf32>
    %257 = tpu.matmul %254, %256, %cst_197 {dimension_numbers = #tpu.dot_dimension_numbers<[1], [0], [0], [1], [0, 0, 1, 1], [], []>} : vector<16x201xbf16>, vector<201x201xbf16>, vector<16x201xf32> -> vector<16x201xf32>
    %258 = arith.addf %252, %257 : vector<16x201xf32>
    %259 = vector.extract_strided_slice %240 {offsets = [0, 7, 0], sizes = [1, 16, 201], strides = [1, 1, 1]} : vector<1x28x201xbf16> to vector<1x16x201xbf16>
    %260 = vector.shape_cast %259 : vector<1x16x201xbf16> to vector<16x201xbf16>
    %c3_198 = arith.constant 3 : index
    %c2_199 = arith.constant 2 : index
    %c0_200 = arith.constant 0 : index
    %c0_201 = arith.constant 0 : index
    %261 = vector.load %arg4[%c3_198, %c2_199, %c0_200, %c0_201] : memref<9x5x201x201xbf16, #tpu.memory_space<vmem>>, vector<1x1x201x201xbf16>
    %262 = vector.shape_cast %261 : vector<1x1x201x201xbf16> to vector<201x201xbf16>
    %cst_202 = arith.constant dense<0.000000e+00> : vector<16x201xf32>
    %263 = tpu.matmul %260, %262, %cst_202 {dimension_numbers = #tpu.dot_dimension_numbers<[1], [0], [0], [1], [0, 0, 1, 1], [], []>} : vector<16x201xbf16>, vector<201x201xbf16>, vector<16x201xf32> -> vector<16x201xf32>
    %264 = arith.addf %258, %263 : vector<16x201xf32>
    %265 = vector.extract_strided_slice %240 {offsets = [0, 8, 0], sizes = [1, 16, 201], strides = [1, 1, 1]} : vector<1x28x201xbf16> to vector<1x16x201xbf16>
    %266 = vector.shape_cast %265 : vector<1x16x201xbf16> to vector<16x201xbf16>
    %c4_203 = arith.constant 4 : index
    %c2_204 = arith.constant 2 : index
    %c0_205 = arith.constant 0 : index
    %c0_206 = arith.constant 0 : index
    %267 = vector.load %arg4[%c4_203, %c2_204, %c0_205, %c0_206] : memref<9x5x201x201xbf16, #tpu.memory_space<vmem>>, vector<1x1x201x201xbf16>
    %268 = vector.shape_cast %267 : vector<1x1x201x201xbf16> to vector<201x201xbf16>
    %cst_207 = arith.constant dense<0.000000e+00> : vector<16x201xf32>
    %269 = tpu.matmul %266, %268, %cst_207 {dimension_numbers = #tpu.dot_dimension_numbers<[1], [0], [0], [1], [0, 0, 1, 1], [], []>} : vector<16x201xbf16>, vector<201x201xbf16>, vector<16x201xf32> -> vector<16x201xf32>
    %270 = arith.addf %264, %269 : vector<16x201xf32>
    %271 = vector.extract_strided_slice %240 {offsets = [0, 9, 0], sizes = [1, 16, 201], strides = [1, 1, 1]} : vector<1x28x201xbf16> to vector<1x16x201xbf16>
    %272 = vector.shape_cast %271 : vector<1x16x201xbf16> to vector<16x201xbf16>
    %c5_208 = arith.constant 5 : index
    %c2_209 = arith.constant 2 : index
    %c0_210 = arith.constant 0 : index
    %c0_211 = arith.constant 0 : index
    %273 = vector.load %arg4[%c5_208, %c2_209, %c0_210, %c0_211] : memref<9x5x201x201xbf16, #tpu.memory_space<vmem>>, vector<1x1x201x201xbf16>
    %274 = vector.shape_cast %273 : vector<1x1x201x201xbf16> to vector<201x201xbf16>
    %cst_212 = arith.constant dense<0.000000e+00> : vector<16x201xf32>
    %275 = tpu.matmul %272, %274, %cst_212 {dimension_numbers = #tpu.dot_dimension_numbers<[1], [0], [0], [1], [0, 0, 1, 1], [], []>} : vector<16x201xbf16>, vector<201x201xbf16>, vector<16x201xf32> -> vector<16x201xf32>
    %276 = arith.addf %270, %275 : vector<16x201xf32>
    %277 = vector.extract_strided_slice %240 {offsets = [0, 10, 0], sizes = [1, 16, 201], strides = [1, 1, 1]} : vector<1x28x201xbf16> to vector<1x16x201xbf16>
    %278 = vector.shape_cast %277 : vector<1x16x201xbf16> to vector<16x201xbf16>
    %c6_213 = arith.constant 6 : index
    %c2_214 = arith.constant 2 : index
    %c0_215 = arith.constant 0 : index
    %c0_216 = arith.constant 0 : index
    %279 = vector.load %arg4[%c6_213, %c2_214, %c0_215, %c0_216] : memref<9x5x201x201xbf16, #tpu.memory_space<vmem>>, vector<1x1x201x201xbf16>
    %280 = vector.shape_cast %279 : vector<1x1x201x201xbf16> to vector<201x201xbf16>
    %cst_217 = arith.constant dense<0.000000e+00> : vector<16x201xf32>
    %281 = tpu.matmul %278, %280, %cst_217 {dimension_numbers = #tpu.dot_dimension_numbers<[1], [0], [0], [1], [0, 0, 1, 1], [], []>} : vector<16x201xbf16>, vector<201x201xbf16>, vector<16x201xf32> -> vector<16x201xf32>
    %282 = arith.addf %276, %281 : vector<16x201xf32>
    %283 = vector.extract_strided_slice %240 {offsets = [0, 11, 0], sizes = [1, 16, 201], strides = [1, 1, 1]} : vector<1x28x201xbf16> to vector<1x16x201xbf16>
    %284 = vector.shape_cast %283 : vector<1x16x201xbf16> to vector<16x201xbf16>
    %c7_218 = arith.constant 7 : index
    %c2_219 = arith.constant 2 : index
    %c0_220 = arith.constant 0 : index
    %c0_221 = arith.constant 0 : index
    %285 = vector.load %arg4[%c7_218, %c2_219, %c0_220, %c0_221] : memref<9x5x201x201xbf16, #tpu.memory_space<vmem>>, vector<1x1x201x201xbf16>
    %286 = vector.shape_cast %285 : vector<1x1x201x201xbf16> to vector<201x201xbf16>
    %cst_222 = arith.constant dense<0.000000e+00> : vector<16x201xf32>
    %287 = tpu.matmul %284, %286, %cst_222 {dimension_numbers = #tpu.dot_dimension_numbers<[1], [0], [0], [1], [0, 0, 1, 1], [], []>} : vector<16x201xbf16>, vector<201x201xbf16>, vector<16x201xf32> -> vector<16x201xf32>
    %288 = arith.addf %282, %287 : vector<16x201xf32>
    %289 = vector.extract_strided_slice %240 {offsets = [0, 12, 0], sizes = [1, 16, 201], strides = [1, 1, 1]} : vector<1x28x201xbf16> to vector<1x16x201xbf16>
    %290 = vector.shape_cast %289 : vector<1x16x201xbf16> to vector<16x201xbf16>
    %c8_223 = arith.constant 8 : index
    %c2_224 = arith.constant 2 : index
    %c0_225 = arith.constant 0 : index
    %c0_226 = arith.constant 0 : index
    %291 = vector.load %arg4[%c8_223, %c2_224, %c0_225, %c0_226] : memref<9x5x201x201xbf16, #tpu.memory_space<vmem>>, vector<1x1x201x201xbf16>
    %292 = vector.shape_cast %291 : vector<1x1x201x201xbf16> to vector<201x201xbf16>
    %cst_227 = arith.constant dense<0.000000e+00> : vector<16x201xf32>
    %293 = tpu.matmul %290, %292, %cst_227 {dimension_numbers = #tpu.dot_dimension_numbers<[1], [0], [0], [1], [0, 0, 1, 1], [], []>} : vector<16x201xbf16>, vector<201x201xbf16>, vector<16x201xf32> -> vector<16x201xf32>
    %294 = arith.addf %288, %293 : vector<16x201xf32>
    %c3_228 = arith.constant 3 : index
    %c0_229 = arith.constant 0 : index
    %c0_230 = arith.constant 0 : index
    %c0_231 = arith.constant 0 : index
    %295 = vector.load %arg7[%c3_228, %c0_229, %c0_230, %c0_231] : memref<5x1x28x201xf32, #tpu.memory_space<vmem>>, vector<1x1x28x201xf32>
    %296 = vector.shape_cast %295 : vector<1x1x28x201xf32> to vector<1x28x201xf32>
    %297 = arith.truncf %296 : vector<1x28x201xf32> to vector<1x28x201xbf16>
    %298 = vector.extract_strided_slice %297 {offsets = [0, 4, 0], sizes = [1, 16, 201], strides = [1, 1, 1]} : vector<1x28x201xbf16> to vector<1x16x201xbf16>
    %299 = vector.shape_cast %298 : vector<1x16x201xbf16> to vector<16x201xbf16>
    %c0_232 = arith.constant 0 : index
    %c3_233 = arith.constant 3 : index
    %c0_234 = arith.constant 0 : index
    %c0_235 = arith.constant 0 : index
    %300 = vector.load %arg4[%c0_232, %c3_233, %c0_234, %c0_235] : memref<9x5x201x201xbf16, #tpu.memory_space<vmem>>, vector<1x1x201x201xbf16>
    %301 = vector.shape_cast %300 : vector<1x1x201x201xbf16> to vector<201x201xbf16>
    %cst_236 = arith.constant dense<0.000000e+00> : vector<16x201xf32>
    %302 = tpu.matmul %299, %301, %cst_236 {dimension_numbers = #tpu.dot_dimension_numbers<[1], [0], [0], [1], [0, 0, 1, 1], [], []>} : vector<16x201xbf16>, vector<201x201xbf16>, vector<16x201xf32> -> vector<16x201xf32>
    %303 = arith.addf %294, %302 : vector<16x201xf32>
    %304 = vector.extract_strided_slice %297 {offsets = [0, 5, 0], sizes = [1, 16, 201], strides = [1, 1, 1]} : vector<1x28x201xbf16> to vector<1x16x201xbf16>
    %305 = vector.shape_cast %304 : vector<1x16x201xbf16> to vector<16x201xbf16>
    %c1_237 = arith.constant 1 : index
    %c3_238 = arith.constant 3 : index
    %c0_239 = arith.constant 0 : index
    %c0_240 = arith.constant 0 : index
    %306 = vector.load %arg4[%c1_237, %c3_238, %c0_239, %c0_240] : memref<9x5x201x201xbf16, #tpu.memory_space<vmem>>, vector<1x1x201x201xbf16>
    %307 = vector.shape_cast %306 : vector<1x1x201x201xbf16> to vector<201x201xbf16>
    %cst_241 = arith.constant dense<0.000000e+00> : vector<16x201xf32>
    %308 = tpu.matmul %305, %307, %cst_241 {dimension_numbers = #tpu.dot_dimension_numbers<[1], [0], [0], [1], [0, 0, 1, 1], [], []>} : vector<16x201xbf16>, vector<201x201xbf16>, vector<16x201xf32> -> vector<16x201xf32>
    %309 = arith.addf %303, %308 : vector<16x201xf32>
    %310 = vector.extract_strided_slice %297 {offsets = [0, 6, 0], sizes = [1, 16, 201], strides = [1, 1, 1]} : vector<1x28x201xbf16> to vector<1x16x201xbf16>
    %311 = vector.shape_cast %310 : vector<1x16x201xbf16> to vector<16x201xbf16>
    %c2_242 = arith.constant 2 : index
    %c3_243 = arith.constant 3 : index
    %c0_244 = arith.constant 0 : index
    %c0_245 = arith.constant 0 : index
    %312 = vector.load %arg4[%c2_242, %c3_243, %c0_244, %c0_245] : memref<9x5x201x201xbf16, #tpu.memory_space<vmem>>, vector<1x1x201x201xbf16>
    %313 = vector.shape_cast %312 : vector<1x1x201x201xbf16> to vector<201x201xbf16>
    %cst_246 = arith.constant dense<0.000000e+00> : vector<16x201xf32>
    %314 = tpu.matmul %311, %313, %cst_246 {dimension_numbers = #tpu.dot_dimension_numbers<[1], [0], [0], [1], [0, 0, 1, 1], [], []>} : vector<16x201xbf16>, vector<201x201xbf16>, vector<16x201xf32> -> vector<16x201xf32>
    %315 = arith.addf %309, %314 : vector<16x201xf32>
    %316 = vector.extract_strided_slice %297 {offsets = [0, 7, 0], sizes = [1, 16, 201], strides = [1, 1, 1]} : vector<1x28x201xbf16> to vector<1x16x201xbf16>
    %317 = vector.shape_cast %316 : vector<1x16x201xbf16> to vector<16x201xbf16>
    %c3_247 = arith.constant 3 : index
    %c3_248 = arith.constant 3 : index
    %c0_249 = arith.constant 0 : index
    %c0_250 = arith.constant 0 : index
    %318 = vector.load %arg4[%c3_247, %c3_248, %c0_249, %c0_250] : memref<9x5x201x201xbf16, #tpu.memory_space<vmem>>, vector<1x1x201x201xbf16>
    %319 = vector.shape_cast %318 : vector<1x1x201x201xbf16> to vector<201x201xbf16>
    %cst_251 = arith.constant dense<0.000000e+00> : vector<16x201xf32>
    %320 = tpu.matmul %317, %319, %cst_251 {dimension_numbers = #tpu.dot_dimension_numbers<[1], [0], [0], [1], [0, 0, 1, 1], [], []>} : vector<16x201xbf16>, vector<201x201xbf16>, vector<16x201xf32> -> vector<16x201xf32>
    %321 = arith.addf %315, %320 : vector<16x201xf32>
    %322 = vector.extract_strided_slice %297 {offsets = [0, 8, 0], sizes = [1, 16, 201], strides = [1, 1, 1]} : vector<1x28x201xbf16> to vector<1x16x201xbf16>
    %323 = vector.shape_cast %322 : vector<1x16x201xbf16> to vector<16x201xbf16>
    %c4_252 = arith.constant 4 : index
    %c3_253 = arith.constant 3 : index
    %c0_254 = arith.constant 0 : index
    %c0_255 = arith.constant 0 : index
    %324 = vector.load %arg4[%c4_252, %c3_253, %c0_254, %c0_255] : memref<9x5x201x201xbf16, #tpu.memory_space<vmem>>, vector<1x1x201x201xbf16>
    %325 = vector.shape_cast %324 : vector<1x1x201x201xbf16> to vector<201x201xbf16>
    %cst_256 = arith.constant dense<0.000000e+00> : vector<16x201xf32>
    %326 = tpu.matmul %323, %325, %cst_256 {dimension_numbers = #tpu.dot_dimension_numbers<[1], [0], [0], [1], [0, 0, 1, 1], [], []>} : vector<16x201xbf16>, vector<201x201xbf16>, vector<16x201xf32> -> vector<16x201xf32>
    %327 = arith.addf %321, %326 : vector<16x201xf32>
    %328 = vector.extract_strided_slice %297 {offsets = [0, 9, 0], sizes = [1, 16, 201], strides = [1, 1, 1]} : vector<1x28x201xbf16> to vector<1x16x201xbf16>
    %329 = vector.shape_cast %328 : vector<1x16x201xbf16> to vector<16x201xbf16>
    %c5_257 = arith.constant 5 : index
    %c3_258 = arith.constant 3 : index
    %c0_259 = arith.constant 0 : index
    %c0_260 = arith.constant 0 : index
    %330 = vector.load %arg4[%c5_257, %c3_258, %c0_259, %c0_260] : memref<9x5x201x201xbf16, #tpu.memory_space<vmem>>, vector<1x1x201x201xbf16>
    %331 = vector.shape_cast %330 : vector<1x1x201x201xbf16> to vector<201x201xbf16>
    %cst_261 = arith.constant dense<0.000000e+00> : vector<16x201xf32>
    %332 = tpu.matmul %329, %331, %cst_261 {dimension_numbers = #tpu.dot_dimension_numbers<[1], [0], [0], [1], [0, 0, 1, 1], [], []>} : vector<16x201xbf16>, vector<201x201xbf16>, vector<16x201xf32> -> vector<16x201xf32>
    %333 = arith.addf %327, %332 : vector<16x201xf32>
    %334 = vector.extract_strided_slice %297 {offsets = [0, 10, 0], sizes = [1, 16, 201], strides = [1, 1, 1]} : vector<1x28x201xbf16> to vector<1x16x201xbf16>
    %335 = vector.shape_cast %334 : vector<1x16x201xbf16> to vector<16x201xbf16>
    %c6_262 = arith.constant 6 : index
    %c3_263 = arith.constant 3 : index
    %c0_264 = arith.constant 0 : index
    %c0_265 = arith.constant 0 : index
    %336 = vector.load %arg4[%c6_262, %c3_263, %c0_264, %c0_265] : memref<9x5x201x201xbf16, #tpu.memory_space<vmem>>, vector<1x1x201x201xbf16>
    %337 = vector.shape_cast %336 : vector<1x1x201x201xbf16> to vector<201x201xbf16>
    %cst_266 = arith.constant dense<0.000000e+00> : vector<16x201xf32>
    %338 = tpu.matmul %335, %337, %cst_266 {dimension_numbers = #tpu.dot_dimension_numbers<[1], [0], [0], [1], [0, 0, 1, 1], [], []>} : vector<16x201xbf16>, vector<201x201xbf16>, vector<16x201xf32> -> vector<16x201xf32>
    %339 = arith.addf %333, %338 : vector<16x201xf32>
    %340 = vector.extract_strided_slice %297 {offsets = [0, 11, 0], sizes = [1, 16, 201], strides = [1, 1, 1]} : vector<1x28x201xbf16> to vector<1x16x201xbf16>
    %341 = vector.shape_cast %340 : vector<1x16x201xbf16> to vector<16x201xbf16>
    %c7_267 = arith.constant 7 : index
    %c3_268 = arith.constant 3 : index
    %c0_269 = arith.constant 0 : index
    %c0_270 = arith.constant 0 : index
    %342 = vector.load %arg4[%c7_267, %c3_268, %c0_269, %c0_270] : memref<9x5x201x201xbf16, #tpu.memory_space<vmem>>, vector<1x1x201x201xbf16>
    %343 = vector.shape_cast %342 : vector<1x1x201x201xbf16> to vector<201x201xbf16>
    %cst_271 = arith.constant dense<0.000000e+00> : vector<16x201xf32>
    %344 = tpu.matmul %341, %343, %cst_271 {dimension_numbers = #tpu.dot_dimension_numbers<[1], [0], [0], [1], [0, 0, 1, 1], [], []>} : vector<16x201xbf16>, vector<201x201xbf16>, vector<16x201xf32> -> vector<16x201xf32>
    %345 = arith.addf %339, %344 : vector<16x201xf32>
    %346 = vector.extract_strided_slice %297 {offsets = [0, 12, 0], sizes = [1, 16, 201], strides = [1, 1, 1]} : vector<1x28x201xbf16> to vector<1x16x201xbf16>
    %347 = vector.shape_cast %346 : vector<1x16x201xbf16> to vector<16x201xbf16>
    %c8_272 = arith.constant 8 : index
    %c3_273 = arith.constant 3 : index
    %c0_274 = arith.constant 0 : index
    %c0_275 = arith.constant 0 : index
    %348 = vector.load %arg4[%c8_272, %c3_273, %c0_274, %c0_275] : memref<9x5x201x201xbf16, #tpu.memory_space<vmem>>, vector<1x1x201x201xbf16>
    %349 = vector.shape_cast %348 : vector<1x1x201x201xbf16> to vector<201x201xbf16>
    %cst_276 = arith.constant dense<0.000000e+00> : vector<16x201xf32>
    %350 = tpu.matmul %347, %349, %cst_276 {dimension_numbers = #tpu.dot_dimension_numbers<[1], [0], [0], [1], [0, 0, 1, 1], [], []>} : vector<16x201xbf16>, vector<201x201xbf16>, vector<16x201xf32> -> vector<16x201xf32>
    %351 = arith.addf %345, %350 : vector<16x201xf32>
    %c4_277 = arith.constant 4 : index
    %c0_278 = arith.constant 0 : index
    %c0_279 = arith.constant 0 : index
    %c0_280 = arith.constant 0 : index
    %352 = vector.load %arg7[%c4_277, %c0_278, %c0_279, %c0_280] : memref<5x1x28x201xf32, #tpu.memory_space<vmem>>, vector<1x1x28x201xf32>
    %353 = vector.shape_cast %352 : vector<1x1x28x201xf32> to vector<1x28x201xf32>
    %354 = arith.truncf %353 : vector<1x28x201xf32> to vector<1x28x201xbf16>
    %355 = vector.extract_strided_slice %354 {offsets = [0, 4, 0], sizes = [1, 16, 201], strides = [1, 1, 1]} : vector<1x28x201xbf16> to vector<1x16x201xbf16>
    %356 = vector.shape_cast %355 : vector<1x16x201xbf16> to vector<16x201xbf16>
    %c0_281 = arith.constant 0 : index
    %c4_282 = arith.constant 4 : index
    %c0_283 = arith.constant 0 : index
    %c0_284 = arith.constant 0 : index
    %357 = vector.load %arg4[%c0_281, %c4_282, %c0_283, %c0_284] : memref<9x5x201x201xbf16, #tpu.memory_space<vmem>>, vector<1x1x201x201xbf16>
    %358 = vector.shape_cast %357 : vector<1x1x201x201xbf16> to vector<201x201xbf16>
    %cst_285 = arith.constant dense<0.000000e+00> : vector<16x201xf32>
    %359 = tpu.matmul %356, %358, %cst_285 {dimension_numbers = #tpu.dot_dimension_numbers<[1], [0], [0], [1], [0, 0, 1, 1], [], []>} : vector<16x201xbf16>, vector<201x201xbf16>, vector<16x201xf32> -> vector<16x201xf32>
    %360 = arith.addf %351, %359 : vector<16x201xf32>
    %361 = vector.extract_strided_slice %354 {offsets = [0, 5, 0], sizes = [1, 16, 201], strides = [1, 1, 1]} : vector<1x28x201xbf16> to vector<1x16x201xbf16>
    %362 = vector.shape_cast %361 : vector<1x16x201xbf16> to vector<16x201xbf16>
    %c1_286 = arith.constant 1 : index
    %c4_287 = arith.constant 4 : index
    %c0_288 = arith.constant 0 : index
    %c0_289 = arith.constant 0 : index
    %363 = vector.load %arg4[%c1_286, %c4_287, %c0_288, %c0_289] : memref<9x5x201x201xbf16, #tpu.memory_space<vmem>>, vector<1x1x201x201xbf16>
    %364 = vector.shape_cast %363 : vector<1x1x201x201xbf16> to vector<201x201xbf16>
    %cst_290 = arith.constant dense<0.000000e+00> : vector<16x201xf32>
    %365 = tpu.matmul %362, %364, %cst_290 {dimension_numbers = #tpu.dot_dimension_numbers<[1], [0], [0], [1], [0, 0, 1, 1], [], []>} : vector<16x201xbf16>, vector<201x201xbf16>, vector<16x201xf32> -> vector<16x201xf32>
    %366 = arith.addf %360, %365 : vector<16x201xf32>
    %367 = vector.extract_strided_slice %354 {offsets = [0, 6, 0], sizes = [1, 16, 201], strides = [1, 1, 1]} : vector<1x28x201xbf16> to vector<1x16x201xbf16>
    %368 = vector.shape_cast %367 : vector<1x16x201xbf16> to vector<16x201xbf16>
    %c2_291 = arith.constant 2 : index
    %c4_292 = arith.constant 4 : index
    %c0_293 = arith.constant 0 : index
    %c0_294 = arith.constant 0 : index
    %369 = vector.load %arg4[%c2_291, %c4_292, %c0_293, %c0_294] : memref<9x5x201x201xbf16, #tpu.memory_space<vmem>>, vector<1x1x201x201xbf16>
    %370 = vector.shape_cast %369 : vector<1x1x201x201xbf16> to vector<201x201xbf16>
    %cst_295 = arith.constant dense<0.000000e+00> : vector<16x201xf32>
    %371 = tpu.matmul %368, %370, %cst_295 {dimension_numbers = #tpu.dot_dimension_numbers<[1], [0], [0], [1], [0, 0, 1, 1], [], []>} : vector<16x201xbf16>, vector<201x201xbf16>, vector<16x201xf32> -> vector<16x201xf32>
    %372 = arith.addf %366, %371 : vector<16x201xf32>
    %373 = vector.extract_strided_slice %354 {offsets = [0, 7, 0], sizes = [1, 16, 201], strides = [1, 1, 1]} : vector<1x28x201xbf16> to vector<1x16x201xbf16>
    %374 = vector.shape_cast %373 : vector<1x16x201xbf16> to vector<16x201xbf16>
    %c3_296 = arith.constant 3 : index
    %c4_297 = arith.constant 4 : index
    %c0_298 = arith.constant 0 : index
    %c0_299 = arith.constant 0 : index
    %375 = vector.load %arg4[%c3_296, %c4_297, %c0_298, %c0_299] : memref<9x5x201x201xbf16, #tpu.memory_space<vmem>>, vector<1x1x201x201xbf16>
    %376 = vector.shape_cast %375 : vector<1x1x201x201xbf16> to vector<201x201xbf16>
    %cst_300 = arith.constant dense<0.000000e+00> : vector<16x201xf32>
    %377 = tpu.matmul %374, %376, %cst_300 {dimension_numbers = #tpu.dot_dimension_numbers<[1], [0], [0], [1], [0, 0, 1, 1], [], []>} : vector<16x201xbf16>, vector<201x201xbf16>, vector<16x201xf32> -> vector<16x201xf32>
    %378 = arith.addf %372, %377 : vector<16x201xf32>
    %379 = vector.extract_strided_slice %354 {offsets = [0, 8, 0], sizes = [1, 16, 201], strides = [1, 1, 1]} : vector<1x28x201xbf16> to vector<1x16x201xbf16>
    %380 = vector.shape_cast %379 : vector<1x16x201xbf16> to vector<16x201xbf16>
    %c4_301 = arith.constant 4 : index
    %c4_302 = arith.constant 4 : index
    %c0_303 = arith.constant 0 : index
    %c0_304 = arith.constant 0 : index
    %381 = vector.load %arg4[%c4_301, %c4_302, %c0_303, %c0_304] : memref<9x5x201x201xbf16, #tpu.memory_space<vmem>>, vector<1x1x201x201xbf16>
    %382 = vector.shape_cast %381 : vector<1x1x201x201xbf16> to vector<201x201xbf16>
    %cst_305 = arith.constant dense<0.000000e+00> : vector<16x201xf32>
    %383 = tpu.matmul %380, %382, %cst_305 {dimension_numbers = #tpu.dot_dimension_numbers<[1], [0], [0], [1], [0, 0, 1, 1], [], []>} : vector<16x201xbf16>, vector<201x201xbf16>, vector<16x201xf32> -> vector<16x201xf32>
    %384 = arith.addf %378, %383 : vector<16x201xf32>
    %385 = vector.extract_strided_slice %354 {offsets = [0, 9, 0], sizes = [1, 16, 201], strides = [1, 1, 1]} : vector<1x28x201xbf16> to vector<1x16x201xbf16>
    %386 = vector.shape_cast %385 : vector<1x16x201xbf16> to vector<16x201xbf16>
    %c5_306 = arith.constant 5 : index
    %c4_307 = arith.constant 4 : index
    %c0_308 = arith.constant 0 : index
    %c0_309 = arith.constant 0 : index
    %387 = vector.load %arg4[%c5_306, %c4_307, %c0_308, %c0_309] : memref<9x5x201x201xbf16, #tpu.memory_space<vmem>>, vector<1x1x201x201xbf16>
    %388 = vector.shape_cast %387 : vector<1x1x201x201xbf16> to vector<201x201xbf16>
    %cst_310 = arith.constant dense<0.000000e+00> : vector<16x201xf32>
    %389 = tpu.matmul %386, %388, %cst_310 {dimension_numbers = #tpu.dot_dimension_numbers<[1], [0], [0], [1], [0, 0, 1, 1], [], []>} : vector<16x201xbf16>, vector<201x201xbf16>, vector<16x201xf32> -> vector<16x201xf32>
    %390 = arith.addf %384, %389 : vector<16x201xf32>
    %391 = vector.extract_strided_slice %354 {offsets = [0, 10, 0], sizes = [1, 16, 201], strides = [1, 1, 1]} : vector<1x28x201xbf16> to vector<1x16x201xbf16>
    %392 = vector.shape_cast %391 : vector<1x16x201xbf16> to vector<16x201xbf16>
    %c6_311 = arith.constant 6 : index
    %c4_312 = arith.constant 4 : index
    %c0_313 = arith.constant 0 : index
    %c0_314 = arith.constant 0 : index
    %393 = vector.load %arg4[%c6_311, %c4_312, %c0_313, %c0_314] : memref<9x5x201x201xbf16, #tpu.memory_space<vmem>>, vector<1x1x201x201xbf16>
    %394 = vector.shape_cast %393 : vector<1x1x201x201xbf16> to vector<201x201xbf16>
    %cst_315 = arith.constant dense<0.000000e+00> : vector<16x201xf32>
    %395 = tpu.matmul %392, %394, %cst_315 {dimension_numbers = #tpu.dot_dimension_numbers<[1], [0], [0], [1], [0, 0, 1, 1], [], []>} : vector<16x201xbf16>, vector<201x201xbf16>, vector<16x201xf32> -> vector<16x201xf32>
    %396 = arith.addf %390, %395 : vector<16x201xf32>
    %397 = vector.extract_strided_slice %354 {offsets = [0, 11, 0], sizes = [1, 16, 201], strides = [1, 1, 1]} : vector<1x28x201xbf16> to vector<1x16x201xbf16>
    %398 = vector.shape_cast %397 : vector<1x16x201xbf16> to vector<16x201xbf16>
    %c7_316 = arith.constant 7 : index
    %c4_317 = arith.constant 4 : index
    %c0_318 = arith.constant 0 : index
    %c0_319 = arith.constant 0 : index
    %399 = vector.load %arg4[%c7_316, %c4_317, %c0_318, %c0_319] : memref<9x5x201x201xbf16, #tpu.memory_space<vmem>>, vector<1x1x201x201xbf16>
    %400 = vector.shape_cast %399 : vector<1x1x201x201xbf16> to vector<201x201xbf16>
    %cst_320 = arith.constant dense<0.000000e+00> : vector<16x201xf32>
    %401 = tpu.matmul %398, %400, %cst_320 {dimension_numbers = #tpu.dot_dimension_numbers<[1], [0], [0], [1], [0, 0, 1, 1], [], []>} : vector<16x201xbf16>, vector<201x201xbf16>, vector<16x201xf32> -> vector<16x201xf32>
    %402 = arith.addf %396, %401 : vector<16x201xf32>
    %403 = vector.extract_strided_slice %354 {offsets = [0, 12, 0], sizes = [1, 16, 201], strides = [1, 1, 1]} : vector<1x28x201xbf16> to vector<1x16x201xbf16>
    %404 = vector.shape_cast %403 : vector<1x16x201xbf16> to vector<16x201xbf16>
    %c8_321 = arith.constant 8 : index
    %c4_322 = arith.constant 4 : index
    %c0_323 = arith.constant 0 : index
    %c0_324 = arith.constant 0 : index
    %405 = vector.load %arg4[%c8_321, %c4_322, %c0_323, %c0_324] : memref<9x5x201x201xbf16, #tpu.memory_space<vmem>>, vector<1x1x201x201xbf16>
    %406 = vector.shape_cast %405 : vector<1x1x201x201xbf16> to vector<201x201xbf16>
    %cst_325 = arith.constant dense<0.000000e+00> : vector<16x201xf32>
    %407 = tpu.matmul %404, %406, %cst_325 {dimension_numbers = #tpu.dot_dimension_numbers<[1], [0], [0], [1], [0, 0, 1, 1], [], []>} : vector<16x201xbf16>, vector<201x201xbf16>, vector<16x201xf32> -> vector<16x201xf32>
    %408 = arith.addf %402, %407 : vector<16x201xf32>
    %c0_326 = arith.constant 0 : index
    %c0_327 = arith.constant 0 : index
    %409 = vector.load %arg5[%c0_326, %c0_327] : memref<1x201xf32, #tpu.memory_space<vmem>>, vector<1x201xf32>
    %410 = vector.broadcast %409 : vector<1x201xf32> to vector<16x201xf32>
    %411 = arith.addf %408, %410 : vector<16x201xf32>
    %cst_328 = arith.constant 0.000000e+00 : f32
    %412 = vector.broadcast %cst_328 : f32 to vector<16x201xf32>
    %413 = arith.maximumf %411, %412 : vector<16x201xf32>
    %414 = vector.shape_cast %413 : vector<16x201xf32> to vector<1x16x201xf32>
    %c0_329 = arith.constant 0 : index
    %c0_330 = arith.constant 0 : index
    %c0_331 = arith.constant 0 : index
    %415 = vector.load %arg6[%c0_329, %c0_330, %c0_331] : memref<1x16x201xf32, #tpu.memory_space<vmem>>, vector<1x16x201xf32>
    tpu.vector_store %arg6[%c0_329, %c0_330, %c0_331], %414 {strides = array<i32>} : memref<1x16x201xf32, #tpu.memory_space<vmem>>, vector<1x16x201xf32>,
    return
  }
  func.func @transform_0(%arg0: i32) -> (i32, i32, i32, i32) {
    %c0_i32 = arith.constant 0 : i32
    %c0_i32_0 = arith.constant 0 : i32
    %c0_i32_1 = arith.constant 0 : i32
    %c0_i32_2 = arith.constant 0 : i32
    return %arg0, %c0_i32, %c0_i32_0, %c0_i32_1 : i32, i32, i32, i32
  }
  func.func @transform_1(%arg0: i32) -> (i32, i32) {
    %c0_i32 = arith.constant 0 : i32
    %c0_i32_0 = arith.constant 0 : i32
    %c0_i32_1 = arith.constant 0 : i32
    return %c0_i32, %c0_i32_0 : i32, i32
  }
  func.func @transform_2(%arg0: i32) -> i32 {
    %c0_i32 = arith.constant 0 : i32
    %c0_i32_0 = arith.constant 0 : i32
    return %c0_i32 : i32
  }
  func.func @transform_3(%arg0: i32) -> (i32, i32, i32, i32) {
    %c0_i32 = arith.constant 0 : i32
    %c0_i32_0 = arith.constant 0 : i32
    %c0_i32_1 = arith.constant 0 : i32
    %c0_i32_2 = arith.constant 0 : i32
    %c0_i32_3 = arith.constant 0 : i32
    return %c0_i32, %c0_i32_0, %c0_i32_1, %c0_i32_2 : i32, i32, i32, i32
  }
  func.func @transform_4(%arg0: i32) -> (i32, i32) {
    %c0_i32 = arith.constant 0 : i32
    %c0_i32_0 = arith.constant 0 : i32
    %c0_i32_1 = arith.constant 0 : i32
    return %c0_i32, %c0_i32_0 : i32, i32
  }
  func.func @transform_5(%arg0: i32) -> (i32, i32, i32) {
    %c0_i32 = arith.constant 0 : i32
    %c0_i32_0 = arith.constant 0 : i32
    %c0_i32_1 = arith.constant 0 : i32
    return %arg0, %c0_i32, %c0_i32_0 : i32, i32, i32
  }
}

</mosaic_0001>

<llo_original>
// kernel: attention_forward.1
$region0: #{attention_forward.1}
  #allocation0 [shape = 'u32[]', space=smem, size = 0x4, offset = 0x4, fixed_abs, tag = 'smem constant byte address 0x4 - core index']
  #allocation1 [shape = 'u32[72,128]{1,0:T(1,128)}', space=vmem, size = 0x9000, scoped, tag = 'internal scratch']
  #allocation2 [shape = 'f32[5,1,28,201]{3,2,1,0:T(8,128)}', space=vmem, size = 0x28000, scoped, tag = 'scratch operand']
  %s0 = inlined_call_operand.hbm [shape: f32[2,4,16,201], index: 0, kind: input, shape index: {}]
  %s1 = inlined_call_operand.vmem [shape: f32[5,4], index: 1, kind: input, shape index: {}]
  %s2 = inlined_call_operand.hbm [shape: f32[5], index: 2, kind: input, shape index: {}]
  %s3 = inlined_call_operand.hbm [shape: bf16[9,5,201,201], index: 3, kind: input, shape index: {}]
  %s4 = inlined_call_operand.hbm [shape: f32[1,201], index: 4, kind: input, shape index: {}]
  %s5 = inlined_call_operand.hbm [shape: f32[2,16,201], index: 5, kind: output, shape index: {}]
  %s6 = sld [smem:[#allocation0]]
  $region73: #{attention_forward.1} parent=0
    _
  %s8 = ssub.s32 1, %s6
  %s9 = scalar_select 0, %s8, %s6
  $region1: #{attention_forward.1} parent=0
    #allocation3 [shape = 'u8[131072]{0}', space=vmem, size = 0x20000, scoped, tag = 'input window, operand 0']
    #allocation4 [shape = 's32[2]{0}', space=sflag, size = 0x8, scoped, tag = 'scoped memory for attention_forward.1']
    #allocation5 [shape = 's32[2]{0}', space=sflag, size = 0x8, scoped, tag = 'scoped memory for attention_forward.1']
    #allocation6 [shape = 's32[2]{0}', space=sflag, size = 0x8, scoped, tag = 'scoped memory for attention_forward.1']
    #allocation7 [shape = 's32[2]{0}', space=sflag, size = 0x8, scoped, tag = 'scoped memory for attention_forward.1']
    #allocation8 [shape = 'u8[4096]{0}', space=smem, size = 0x1000, scoped, tag = 'input window, operand 1, single buffered']
    #allocation9 [shape = 'u8[512]{0}', space=smem, size = 0x200, scoped, tag = 'input window, operand 2, single buffered']
    #allocation10 [shape = 'u8[4792320]{0}', space=vmem, size = 0x492000, scoped, tag = 'input window, operand 3, single buffered']
    #allocation11 [shape = 's32[1]{0}', space=sflag, size = 0x4, scoped, tag = 'scoped memory for attention_forward.1']
    #allocation12 [shape = 'u8[1024]{0}', space=vmem, size = 0x400, scoped, tag = 'input window, operand 4, single buffered']
    #allocation13 [shape = 'u8[32768]{0}', space=vmem, size = 0x8000, scoped, tag = 'output window, operand 0']
    %10 = vsyncpa [#allocation4], 0
    %s11 = scalar_lea.sflag [#allocation4], 1
    %12 = vsyncpa %s11, 0
    %13 = vsyncpa [#allocation7], 0
    %14 = vsyncpa [#allocation6], 0
    %15 = vsyncpa [#allocation11], 0
    %16 = vsyncpa [#allocation5], 0
    %s17 = scalar_lea.sflag [#allocation5], 1
    %18 = vsyncpa %s17, 0
    loop: start=0, step=1, limit=4
    $region2: #{attention_forward.1} parent=1 // loop_pre_header
      _
    $region3: #{attention_forward.1} parent=1 // loop_header
      %s20 = sphi 0, %s24
      %p21 = scmp.ge.s32.totalorder %s20, 4
      %s30 = sphi 0, %s32
      %s33 = sphi 0, %s30
      %s34 = sphi 0, %s33
      %s50 = sphi 0, %s34
      %s54 = sphi 0, %s54
      %s56 = sphi 0, %s54
      %s57 = sphi 0, %s56
      %s71 = sphi 0, %s57
      %s75 = sphi 0, %s75
      %s77 = sphi 0, %s75
      %s78 = sphi 0, %s77
      %s92 = sphi 0, %s78
      %s96 = sphi 0, %s96
      %s98 = sphi 0, %s96
      %s99 = sphi 0, %s98
      %s113 = sphi 0, %s99
      %s117 = sphi 0, %s117
      %s119 = sphi 0, %s117
      %s120 = sphi 0, %s119
      %s134 = sphi 0, %s120
      %s140 = sphi 0, %s142
      %s143 = sphi 0, %s140
      %s144 = sphi 0, %s143
      %s160 = sphi 0, %s144
    $region4: #{attention_forward.1} parent=1 // loop_header_branch
      %23 = sbr.rel (%p21) target = $region8
    $region5: #{attention_forward.1} parent=1 // loop_body
      %s25 = ssub.s32 %s20, 1
      %s26 = ssub.s32 %s20, 2
      %s27 = sadd.s32 %s20, 1
      %s28 = ssub.s32 %s20, %s27
      %p29 = scmp.eq.s32.totalorder %s28, 0
      %s31 = sadd.s32 %s30, 1
      %s32 = scalar_select %p29, %s30, %s31
      %p35 = pneg %p29
      %p36 = scmp.eq.s32.totalorder %s20, 1
      %p37 = por %p35, %p36
      %p38 = scmp.ne.s32.totalorder %s30, %s33
      %p39 = scmp.eq.s32.totalorder %s20, 0
      %p40 = por %p38, %p39
      %p41 = scmp.ne.s32.totalorder %s30, %s33
      %p42 = scmp.eq.s32.totalorder %s25, 1
      %p43 = por %p41, %p42
      %p44 = scmp.ne.s32.totalorder %s33, %s34
      %p45 = scmp.eq.s32.totalorder %s25, 0
      %p46 = por %p44, %p45
      %p47 = scmp.ne.s32.totalorder %s33, %s34
      %p48 = scmp.eq.s32.totalorder %s26, 1
      %p49 = por %p47, %p48
      %p51 = scmp.ne.s32.totalorder %s34, %s50
      %p52 = scmp.eq.s32.totalorder %s26, 0
      %p53 = por %p51, %p52
      %s55 = sadd.s32 %s54, 1
      %p58 = scmp.eq.s32.totalorder %s20, 1
      %p59 = scmp.ne.s32.totalorder %s54, %s56
      %p60 = scmp.eq.s32.totalorder %s20, 0
      %p61 = por %p59, %p60
      %p62 = scmp.ne.s32.totalorder %s54, %s56
      %p63 = scmp.eq.s32.totalorder %s25, 1
      %p64 = por %p62, %p63
      %p65 = scmp.ne.s32.totalorder %s56, %s57
      %p66 = scmp.eq.s32.totalorder %s25, 0
      %p67 = por %p65, %p66
      %p68 = scmp.ne.s32.totalorder %s56, %s57
      %p69 = scmp.eq.s32.totalorder %s26, 1
      %p70 = por %p68, %p69
      %p72 = scmp.ne.s32.totalorder %s57, %s71
      %p73 = scmp.eq.s32.totalorder %s26, 0
      %p74 = por %p72, %p73
      %s76 = sadd.s32 %s75, 1
      %p79 = scmp.eq.s32.totalorder %s20, 1
      %p80 = scmp.ne.s32.totalorder %s75, %s77
      %p81 = scmp.eq.s32.totalorder %s20, 0
      %p82 = por %p80, %p81
      %p83 = scmp.ne.s32.totalorder %s75, %s77
      %p84 = scmp.eq.s32.totalorder %s25, 1
      %p85 = por %p83, %p84
      %p86 = scmp.ne.s32.totalorder %s77, %s78
      %p87 = scmp.eq.s32.totalorder %s25, 0
      %p88 = por %p86, %p87
      %p89 = scmp.ne.s32.totalorder %s77, %s78
      %p90 = scmp.eq.s32.totalorder %s26, 1
      %p91 = por %p89, %p90
      %p93 = scmp.ne.s32.totalorder %s78, %s92
      %p94 = scmp.eq.s32.totalorder %s26, 0
      %p95 = por %p93, %p94
      %s97 = sadd.s32 %s96, 1
      %p100 = scmp.eq.s32.totalorder %s20, 1
      %p101 = scmp.ne.s32.totalorder %s96, %s98
      %p102 = scmp.eq.s32.totalorder %s20, 0
      %p103 = por %p101, %p102
      %p104 = scmp.ne.s32.totalorder %s96, %s98
      %p105 = scmp.eq.s32.totalorder %s25, 1
      %p106 = por %p104, %p105
      %p107 = scmp.ne.s32.totalorder %s98, %s99
      %p108 = scmp.eq.s32.totalorder %s25, 0
      %p109 = por %p107, %p108
      %p110 = scmp.ne.s32.totalorder %s98, %s99
      %p111 = scmp.eq.s32.totalorder %s26, 1
      %p112 = por %p110, %p111
      %p114 = scmp.ne.s32.totalorder %s99, %s113
      %p115 = scmp.eq.s32.totalorder %s26, 0
      %p116 = por %p114, %p115
      %s118 = sadd.s32 %s117, 1
      %p121 = scmp.eq.s32.totalorder %s20, 1
      %p122 = scmp.ne.s32.totalorder %s117, %s119
      %p123 = scmp.eq.s32.totalorder %s20, 0
      %p124 = por %p122, %p123
      %p125 = scmp.ne.s32.totalorder %s117, %s119
      %p126 = scmp.eq.s32.totalorder %s25, 1
      %p127 = por %p125, %p126
      %p128 = scmp.ne.s32.totalorder %s119, %s120
      %p129 = scmp.eq.s32.totalorder %s25, 0
      %p130 = por %p128, %p129
      %p131 = scmp.ne.s32.totalorder %s119, %s120
      %p132 = scmp.eq.s32.totalorder %s26, 1
      %p133 = por %p131, %p132
      %p135 = scmp.ne.s32.totalorder %s120, %s134
      %p136 = scmp.eq.s32.totalorder %s26, 0
      %p137 = por %p135, %p136
      %s138 = ssub.s32 %s20, %s27
      %p139 = scmp.eq.s32.totalorder %s138, 0
      %s141 = sadd.s32 %s140, 1
      %s142 = scalar_select %p139, %s140, %s141
      %p145 = pneg %p139
      %p146 = scmp.eq.s32.totalorder %s20, 1
      %p147 = por %p145, %p146
      %p148 = scmp.ne.s32.totalorder %s140, %s143
      %p149 = scmp.eq.s32.totalorder %s20, 0
      %p150 = por %p148, %p149
      %p151 = scmp.ne.s32.totalorder %s140, %s143
      %p152 = scmp.eq.s32.totalorder %s25, 1
      %p153 = por %p151, %p152
      %p154 = scmp.ne.s32.totalorder %s143, %s144
      %p155 = scmp.eq.s32.totalorder %s25, 0
      %p156 = por %p154, %p155
      %p157 = scmp.ne.s32.totalorder %s143, %s144
      %p158 = scmp.eq.s32.totalorder %s26, 1
      %p159 = por %p157, %p158
      %p161 = scmp.ne.s32.totalorder %s144, %s160
      %p162 = scmp.eq.s32.totalorder %s26, 0
      %p163 = por %p161, %p162
      %p164 = scmp.le.s32.totalorder 1, %s20
      %p165 = scmp.lt.s32.totalorder %s20, 3
      %p166 = pnand %p164, %p165
      %p167 = pneg %p166
      // Predicated region
      $region9: #{attention_forward.1} parent=5 // pred_check
        _
      $region10: #{attention_forward.1} parent=5 // pred_check_branch
        %169 = sbr.rel (%p166) target = $region12
      $region11: #{attention_forward.1} parent=5 // pred_region
        %s170 = ssub.s32 %s20, 1
        // Predicated region
        $region13: #{attention_forward.1} parent=11 // pred_check
          %p171 = pneg %p67
        $region14: #{attention_forward.1} parent=11 // pred_check_branch
          %173 = sbr.rel (%p171) target = $region16
        $region15: #{attention_forward.1} parent=11 // pred_region
          %175 = vsyncadd [#allocation7], 0
          %s177 = sshll.u32 %s1, 4
          %s178 = int_to_ptr.vmem [resolvable:$true] %s177
          %180 = dma.vmem_to_smem %s178, 128, [#allocation8], [#allocation7]
        $region16: #{attention_forward.1} parent=11 // pred_fallthru
          _
        // Predicated region
        $region17: #{attention_forward.1} parent=11 // pred_check
          %p181 = pneg %p88
        $region18: #{attention_forward.1} parent=11 // pred_check_branch
          %183 = sbr.rel (%p181) target = $region20
        $region19: #{attention_forward.1} parent=11 // pred_region
          %185 = vsyncadd [#allocation6], 0
          %s187 = sshll.u32 %s2, 4
          %s188 = int_to_ptr.hbm [resolvable:$true] %s187
          %190 = dma.hbm_to_smem %s188, 16, [#allocation9], [#allocation6]
        $region20: #{attention_forward.1} parent=11 // pred_fallthru
          _
        // Predicated region
        $region21: #{attention_forward.1} parent=11 // pred_check
          %p191 = pneg %p109
        $region22: #{attention_forward.1} parent=11 // pred_check_branch
          %193 = sbr.rel (%p191) target = $region24
        $region23: #{attention_forward.1} parent=11 // pred_region
          %195 = vsyncadd [#allocation11], 0
          %s196 = sshll.u32 %s3, 4
          %s197 = int_to_ptr.hbm [resolvable:$true] %s196
          %s198 = sshll.u32 [#allocation10], 4
          %s199 = int_to_ptr.vmem [resolvable:$true] %s198
          %204 = dma.hbm_to_vmem [thread:$0]  %s197, 149760, %s199, [#allocation11], 128, 128, 8
        $region24: #{attention_forward.1} parent=11 // pred_fallthru
          _
        // Predicated region
        $region25: #{attention_forward.1} parent=11 // pred_check
          %p205 = pneg %p130
        $region26: #{attention_forward.1} parent=11 // pred_check_branch
          %207 = sbr.rel (%p205) target = $region28
        $region27: #{attention_forward.1} parent=11 // pred_region
          %209 = vsyncadd [#allocation11], 0
          %s211 = sshll.u32 %s4, 4
          %s212 = int_to_ptr.hbm [resolvable:$true] %s211
          %s213 = sshll.u32 [#allocation12], 4
          %s214 = int_to_ptr.vmem [resolvable:$true] %s213
          %216 = dma.hbm_to_vmem [thread:$0]  %s212, 32, %s214, [#allocation11]
        $region28: #{attention_forward.1} parent=11 // pred_fallthru
          _
      $region12: #{attention_forward.1} parent=5 // pred_fallthru
        _
      %p217 = scmp.lt.s32.totalorder %s20, 2
      // Predicated region
      $region29: #{attention_forward.1} parent=5 // pred_check
        %p218 = pneg %p217
      $region30: #{attention_forward.1} parent=5 // pred_check_branch
        %220 = sbr.rel (%p218) target = $region32
      $region31: #{attention_forward.1} parent=5 // pred_region
        // Predicated region
        $region33: #{attention_forward.1} parent=31 // pred_check
          %p221 = pneg %p40
        $region34: #{attention_forward.1} parent=31 // pred_check_branch
          %223 = sbr.rel (%p221) target = $region36
        $region35: #{attention_forward.1} parent=31 // pred_region
          %s224 = sand.u32 %s30, 1
          %s225 = scalar_lea.sflag [#allocation4], %s224
          %s226 = sand.u32 %s30, 1
          %s227 = smul.addr %s226, 128
          %s228 = scalar_lea.vmem [#allocation3], %s227
          %230 = vsyncadd %s225, 0
          %s231 = smul.addr %s20, 16
          %s232 = smul.addr %s231, 8
          %s233 = scalar_lea.hbm %s0, %s232
          %s234 = sshll.u32 %s233, 4
          %s235 = int_to_ptr.hbm [resolvable:$true] %s234
          %s236 = sshll.u32 %s228, 4
          %s237 = int_to_ptr.vmem [resolvable:$true] %s236
          %242 = dma.hbm_to_vmem [thread:$0]  %s235, 2048, %s237, %s225, 256, 256, 16
        $region36: #{attention_forward.1} parent=31 // pred_fallthru
          _
      $region32: #{attention_forward.1} parent=5 // pred_fallthru
        _
      %p243 = scmp.le.s32.totalorder 1, %s20
      %p244 = scmp.lt.s32.totalorder %s20, 3
      %p245 = pnand %p243, %p244
      %p246 = pneg %p245
      // Predicated region
      $region37: #{attention_forward.1} parent=5 // pred_check
        _
      $region38: #{attention_forward.1} parent=5 // pred_check_branch
        %248 = sbr.rel (%p245) target = $region40
      $region39: #{attention_forward.1} parent=5 // pred_region
        %s249 = ssub.s32 %s20, 1
        %s250 = sand.u32 %s33, 1
        %s251 = scalar_lea.sflag [#allocation4], %s250
        %s252 = sand.u32 %s33, 1
        %s253 = smul.addr %s252, 128
        %s254 = scalar_lea.vmem [#allocation3], %s253
        // Predicated region
        $region41: #{attention_forward.1} parent=39 // pred_check
          %p255 = pneg %p46
        $region42: #{attention_forward.1} parent=39 // pred_check_branch
          %257 = sbr.rel (%p255) target = $region44
        $region43: #{attention_forward.1} parent=39 // pred_region
          %259 = dma.done %s251, 2048
        $region44: #{attention_forward.1} parent=39 // pred_fallthru
          _
        // Predicated region
        $region45: #{attention_forward.1} parent=39 // pred_check
          %p260 = pneg %p67
        $region46: #{attention_forward.1} parent=39 // pred_check_branch
          %262 = sbr.rel (%p260) target = $region48
        $region47: #{attention_forward.1} parent=39 // pred_region
          %264 = dma.done [#allocation7], 128
        $region48: #{attention_forward.1} parent=39 // pred_fallthru
          _
        // Predicated region
        $region49: #{attention_forward.1} parent=39 // pred_check
          %p265 = pneg %p88
        $region50: #{attention_forward.1} parent=39 // pred_check_branch
          %267 = sbr.rel (%p265) target = $region52
        $region51: #{attention_forward.1} parent=39 // pred_region
          %269 = dma.done [#allocation6], 16
        $region52: #{attention_forward.1} parent=39 // pred_fallthru
          _
        // Predicated region
        $region53: #{attention_forward.1} parent=39 // pred_check
          %p270 = pneg %p109
        $region54: #{attention_forward.1} parent=39 // pred_check_branch
          %272 = sbr.rel (%p270) target = $region56
        $region55: #{attention_forward.1} parent=39 // pred_region
          %274 = dma.done [#allocation11], 149760
        $region56: #{attention_forward.1} parent=39 // pred_fallthru
          _
        // Predicated region
        $region57: #{attention_forward.1} parent=39 // pred_check
          %p275 = pneg %p130
        $region58: #{attention_forward.1} parent=39 // pred_check_branch
          %277 = sbr.rel (%p275) target = $region60
        $region59: #{attention_forward.1} parent=39 // pred_region
          %279 = dma.done [#allocation11], 32
        $region60: #{attention_forward.1} parent=39 // pred_fallthru
          _
        %280 = sfence
        %s281 = sand.u32 %s33, 1
        %s282 = scalar_lea.sflag [#allocation4], %s281
        %s283 = sand.u32 %s33, 1
        %s284 = smul.addr %s283, 128
        %s285 = scalar_lea.vmem [#allocation3], %s284
        %p286 = pneg %p46
        %p287 = pneg %p43
        %p288 = pneg %p67
        %p289 = pneg %p64
        %p290 = pneg %p88
        %p291 = pneg %p85
        %p292 = pneg %p109
        %p293 = pneg %p106
        %p294 = pneg %p130
        %p295 = pneg %p127
        %p296 = pneg %p156
        %p297 = pneg %p153
        %s298 = sand.u32 %s143, 1
        %s299 = scalar_lea.sflag [#allocation5], %s298
        %s300 = sand.u32 %s143, 1
        %s301 = smul.addr %s300, 32
        %s302 = scalar_lea.vmem [#allocation13], %s301
        %304 = vst [vmem:[#allocation2] sm:$0xff] 0.0
        %vm305 = vcmask 596992
        %306 = vst.msk [vmem:[#allocation2 + $0x8] sm:$0xff] %vm305, 0.0
        %307 = vst [vmem:[#allocation2 + $0x10] sm:$0xff] 0.0
        %308 = vst.msk [vmem:[#allocation2 + $0x18] sm:$0xff] %vm305, 0.0
        %309 = vst [vmem:[#allocation2 + $0x20] sm:$0xff] 0.0
        %310 = vst.msk [vmem:[#allocation2 + $0x28] sm:$0xff] %vm305, 0.0
        %311 = vst [vmem:[#allocation2 + $0x30] sm:$0xf] 0.0
        %vm312 = vcmask 592896
        %313 = vst.msk [vmem:[#allocation2 + $0x38] sm:$0xf] %vm312, 0.0
        %314 = vst [vmem:[#allocation2 + $0x40] sm:$0xff] 0.0
        %315 = vst.msk [vmem:[#allocation2 + $0x48] sm:$0xff] %vm305, 0.0
        %316 = vst [vmem:[#allocation2 + $0x50] sm:$0xff] 0.0
        %317 = vst.msk [vmem:[#allocation2 + $0x58] sm:$0xff] %vm305, 0.0
        %318 = vst [vmem:[#allocation2 + $0x60] sm:$0xff] 0.0
        %319 = vst.msk [vmem:[#allocation2 + $0x68] sm:$0xff] %vm305, 0.0
        %320 = vst [vmem:[#allocation2 + $0x70] sm:$0xf] 0.0
        %321 = vst.msk [vmem:[#allocation2 + $0x78] sm:$0xf] %vm312, 0.0
        %322 = vst [vmem:[#allocation2 + $0x80] sm:$0xff] 0.0
        %323 = vst.msk [vmem:[#allocation2 + $0x88] sm:$0xff] %vm305, 0.0
        %324 = vst [vmem:[#allocation2 + $0x90] sm:$0xff] 0.0
        %325 = vst.msk [vmem:[#allocation2 + $0x98] sm:$0xff] %vm305, 0.0
        %326 = vst [vmem:[#allocation2 + $0xa0] sm:$0xff] 0.0
        %327 = vst.msk [vmem:[#allocation2 + $0xa8] sm:$0xff] %vm305, 0.0
        %328 = vst [vmem:[#allocation2 + $0xb0] sm:$0xf] 0.0
        %329 = vst.msk [vmem:[#allocation2 + $0xb8] sm:$0xf] %vm312, 0.0
        %330 = vst [vmem:[#allocation2 + $0xc0] sm:$0xff] 0.0
        %331 = vst.msk [vmem:[#allocation2 + $0xc8] sm:$0xff] %vm305, 0.0
        %332 = vst [vmem:[#allocation2 + $0xd0] sm:$0xff] 0.0
        %333 = vst.msk [vmem:[#allocation2 + $0xd8] sm:$0xff] %vm305, 0.0
        %334 = vst [vmem:[#allocation2 + $0xe0] sm:$0xff] 0.0
        %335 = vst.msk [vmem:[#allocation2 + $0xe8] sm:$0xff] %vm305, 0.0
        %336 = vst [vmem:[#allocation2 + $0xf0] sm:$0xf] 0.0
        %337 = vst.msk [vmem:[#allocation2 + $0xf8] sm:$0xf] %vm312, 0.0
        %338 = vst [vmem:[#allocation2 + $0x100] sm:$0xff] 0.0
        %339 = vst.msk [vmem:[#allocation2 + $0x108] sm:$0xff] %vm305, 0.0
        %340 = vst [vmem:[#allocation2 + $0x110] sm:$0xff] 0.0
        %341 = vst.msk [vmem:[#allocation2 + $0x118] sm:$0xff] %vm305, 0.0
        %342 = vst [vmem:[#allocation2 + $0x120] sm:$0xff] 0.0
        %343 = vst.msk [vmem:[#allocation2 + $0x128] sm:$0xff] %vm305, 0.0
        %344 = vst [vmem:[#allocation2 + $0x130] sm:$0xf] 0.0
        %345 = vst.msk [vmem:[#allocation2 + $0x138] sm:$0xf] %vm312, 0.0
        %v346 = vld [vmem:[%s254] sm:$0xff]
        %v347 = vld [vmem:[%s254 + $0x8] sm:$0xff]
        %v348 = vld [vmem:[%s254 + $0x10] sm:$0xff]
        %v349 = vld [vmem:[%s254 + $0x18] sm:$0xff]
        %s350 = scalar_lea.vmem %s254, 32 [#allocation3]
        %v351 = vld [vmem:[%s350] sm:$0xff]
        %v352 = vld [vmem:[%s350 + $0x8] sm:$0xff]
        %v353 = vld [vmem:[%s350 + $0x10] sm:$0xff]
        %v354 = vld [vmem:[%s350 + $0x18] sm:$0xff]
        %s355 = scalar_lea.vmem %s254, 64 [#allocation3]
        %v356 = vld [vmem:[%s355] sm:$0xff]
        %v357 = vld [vmem:[%s355 + $0x8] sm:$0xff]
        %v358 = vld [vmem:[%s355 + $0x10] sm:$0xff]
        %v359 = vld [vmem:[%s355 + $0x18] sm:$0xff]
        %s360 = scalar_lea.vmem %s254, 96 [#allocation3]
        %v361 = vld [vmem:[%s360] sm:$0xff]
        %v362 = vld [vmem:[%s360 + $0x8] sm:$0xff]
        %v363 = vld [vmem:[%s360 + $0x10] sm:$0xff]
        %v364 = vld [vmem:[%s360 + $0x18] sm:$0xff]
        %s365 = sld [smem:[#allocation8]]
        %v366 = vstv %s365
        %v367 = vmul.f32 %v346, %v366
        %v368 = vmul.f32 %v347, %v366
        %v369 = vmul.f32 %v348, %v366
        %v370 = vmul.f32 %v349, %v366
        %s371 = sld [smem:[#allocation8 + $0x1]]
        %v372 = vstv %s371
        %v373 = vmul.f32 %v351, %v372
        %v374 = vmul.f32 %v352, %v372
        %v375 = vmul.f32 %v353, %v372
        %v376 = vmul.f32 %v354, %v372
        %v377 = vadd.f32 %v367, %v373
        %v378 = vadd.f32 %v368, %v374
        %v379 = vadd.f32 %v369, %v375
        %v380 = vadd.f32 %v370, %v376
        %s381 = sld [smem:[#allocation8 + $0x2]]
        %v382 = vstv %s381
        %v383 = vmul.f32 %v356, %v382
        %v384 = vmul.f32 %v357, %v382
        %v385 = vmul.f32 %v358, %v382
        %v386 = vmul.f32 %v359, %v382
        %v387 = vadd.f32 %v377, %v383
        %v388 = vadd.f32 %v378, %v384
        %v389 = vadd.f32 %v379, %v385
        %v390 = vadd.f32 %v380, %v386
        %s391 = sld [smem:[#allocation8 + $0x3]]
        %v392 = vstv %s391
        %v393 = vmul.f32 %v361, %v392
        %v394 = vmul.f32 %v362, %v392
        %v395 = vmul.f32 %v363, %v392
        %v396 = vmul.f32 %v364, %v392
        %v397 = vadd.f32 %v387, %v393
        %v398 = vadd.f32 %v388, %v394
        %v399 = vadd.f32 %v389, %v395
        %v400 = vadd.f32 %v390, %v396
        %s401 = sld [smem:[#allocation9]]
        %v402 = vstv %s401
        %v403 = vadd.f32 %v397, %v402
        %v404 = vadd.f32 %v398, %v402
        %v405 = vadd.f32 %v399, %v402
        %v406 = vadd.f32 %v400, %v402
        %v407 = vmax.f32 %v403, 0.0
        %v408 = vmax.f32 %v404, 0.0
        %v409 = vmax.f32 %v405, 0.0
        %v410 = vmax.f32 %v406, 0.0
        %411 = vst [vmem:[#allocation2 + $0x10] sm:$0xff] %v407
        %412 = vst.msk [vmem:[#allocation2 + $0x18] sm:$0xff] %vm305, %v408
        %413 = vst [vmem:[#allocation2 + $0x20] sm:$0xff] %v409
        %414 = vst.msk [vmem:[#allocation2 + $0x28] sm:$0xff] %vm305, %v410
        %s415 = sld [smem:[#allocation8 + $0x80]]
        %v416 = vstv %s415
        %v417 = vmul.f32 %v346, %v416
        %v418 = vmul.f32 %v347, %v416
        %v419 = vmul.f32 %v348, %v416
        %v420 = vmul.f32 %v349, %v416
        %s421 = sld [smem:[#allocation8 + $0x81]]
        %v422 = vstv %s421
        %v423 = vmul.f32 %v351, %v422
        %v424 = vmul.f32 %v352, %v422
        %v425 = vmul.f32 %v353, %v422
        %v426 = vmul.f32 %v354, %v422
        %v427 = vadd.f32 %v417, %v423
        %v428 = vadd.f32 %v418, %v424
        %v429 = vadd.f32 %v419, %v425
        %v430 = vadd.f32 %v420, %v426
        %s431 = sld [smem:[#allocation8 + $0x82]]
        %v432 = vstv %s431
        %v433 = vmul.f32 %v356, %v432
        %v434 = vmul.f32 %v357, %v432
        %v435 = vmul.f32 %v358, %v432
        %v436 = vmul.f32 %v359, %v432
        %v437 = vadd.f32 %v427, %v433
        %v438 = vadd.f32 %v428, %v434
        %v439 = vadd.f32 %v429, %v435
        %v440 = vadd.f32 %v430, %v436
        %s441 = sld [smem:[#allocation8 + $0x83]]
        %v442 = vstv %s441
        %v443 = vmul.f32 %v361, %v442
        %v444 = vmul.f32 %v362, %v442
        %v445 = vmul.f32 %v363, %v442
        %v446 = vmul.f32 %v364, %v442
        %v447 = vadd.f32 %v437, %v443
        %v448 = vadd.f32 %v438, %v444
        %v449 = vadd.f32 %v439, %v445
        %v450 = vadd.f32 %v440, %v446
        %s451 = sld [smem:[#allocation9 + $0x1]]
        %v452 = vstv %s451
        %v453 = vadd.f32 %v447, %v452
        %v454 = vadd.f32 %v448, %v452
        %v455 = vadd.f32 %v449, %v452
        %v456 = vadd.f32 %v450, %v452
        %v457 = vmax.f32 %v453, 0.0
        %v458 = vmax.f32 %v454, 0.0
        %v459 = vmax.f32 %v455, 0.0
        %v460 = vmax.f32 %v456, 0.0
        %s461 = scalar_lea.vmem [#allocation2], 64
        %462 = vst [vmem:[%s461 + $0x10] sm:$0xff] %v457
        %463 = vst.msk [vmem:[%s461 + $0x18] sm:$0xff] %vm305, %v458
        %464 = vst [vmem:[%s461 + $0x20] sm:$0xff] %v459
        %465 = vst.msk [vmem:[%s461 + $0x28] sm:$0xff] %vm305, %v460
        %s466 = sld [smem:[#allocation8 + $0x100]]
        %v467 = vstv %s466
        %v468 = vmul.f32 %v346, %v467
        %v469 = vmul.f32 %v347, %v467
        %v470 = vmul.f32 %v348, %v467
        %v471 = vmul.f32 %v349, %v467
        %s472 = sld [smem:[#allocation8 + $0x101]]
        %v473 = vstv %s472
        %v474 = vmul.f32 %v351, %v473
        %v475 = vmul.f32 %v352, %v473
        %v476 = vmul.f32 %v353, %v473
        %v477 = vmul.f32 %v354, %v473
        %v478 = vadd.f32 %v468, %v474
        %v479 = vadd.f32 %v469, %v475
        %v480 = vadd.f32 %v470, %v476
        %v481 = vadd.f32 %v471, %v477
        %s482 = sld [smem:[#allocation8 + $0x102]]
        %v483 = vstv %s482
        %v484 = vmul.f32 %v356, %v483
        %v485 = vmul.f32 %v357, %v483
        %v486 = vmul.f32 %v358, %v483
        %v487 = vmul.f32 %v359, %v483
        %v488 = vadd.f32 %v478, %v484
        %v489 = vadd.f32 %v479, %v485
        %v490 = vadd.f32 %v480, %v486
        %v491 = vadd.f32 %v481, %v487
        %s492 = sld [smem:[#allocation8 + $0x103]]
        %v493 = vstv %s492
        %v494 = vmul.f32 %v361, %v493
        %v495 = vmul.f32 %v362, %v493
        %v496 = vmul.f32 %v363, %v493
        %v497 = vmul.f32 %v364, %v493
        %v498 = vadd.f32 %v488, %v494
        %v499 = vadd.f32 %v489, %v495
        %v500 = vadd.f32 %v490, %v496
        %v501 = vadd.f32 %v491, %v497
        %s502 = sld [smem:[#allocation9 + $0x2]]
        %v503 = vstv %s502
        %v504 = vadd.f32 %v498, %v503
        %v505 = vadd.f32 %v499, %v503
        %v506 = vadd.f32 %v500, %v503
        %v507 = vadd.f32 %v501, %v503
        %v508 = vmax.f32 %v504, 0.0
        %v509 = vmax.f32 %v505, 0.0
        %v510 = vmax.f32 %v506, 0.0
        %v511 = vmax.f32 %v507, 0.0
        %s512 = scalar_lea.vmem [#allocation2], 128
        %513 = vst [vmem:[%s512 + $0x10] sm:$0xff] %v508
        %514 = vst.msk [vmem:[%s512 + $0x18] sm:$0xff] %vm305, %v509
        %515 = vst [vmem:[%s512 + $0x20] sm:$0xff] %v510
        %516 = vst.msk [vmem:[%s512 + $0x28] sm:$0xff] %vm305, %v511
        %s517 = sld [smem:[#allocation8 + $0x180]]
        %v518 = vstv %s517
        %v519 = vmul.f32 %v346, %v518
        %v520 = vmul.f32 %v347, %v518
        %v521 = vmul.f32 %v348, %v518
        %v522 = vmul.f32 %v349, %v518
        %s523 = sld [smem:[#allocation8 + $0x181]]
        %v524 = vstv %s523
        %v525 = vmul.f32 %v351, %v524
        %v526 = vmul.f32 %v352, %v524
        %v527 = vmul.f32 %v353, %v524
        %v528 = vmul.f32 %v354, %v524
        %v529 = vadd.f32 %v519, %v525
        %v530 = vadd.f32 %v520, %v526
        %v531 = vadd.f32 %v521, %v527
        %v532 = vadd.f32 %v522, %v528
        %s533 = sld [smem:[#allocation8 + $0x182]]
        %v534 = vstv %s533
        %v535 = vmul.f32 %v356, %v534
        %v536 = vmul.f32 %v357, %v534
        %v537 = vmul.f32 %v358, %v534
        %v538 = vmul.f32 %v359, %v534
        %v539 = vadd.f32 %v529, %v535
        %v540 = vadd.f32 %v530, %v536
        %v541 = vadd.f32 %v531, %v537
        %v542 = vadd.f32 %v532, %v538
        %s543 = sld [smem:[#allocation8 + $0x183]]
        %v544 = vstv %s543
        %v545 = vmul.f32 %v361, %v544
        %v546 = vmul.f32 %v362, %v544
        %v547 = vmul.f32 %v363, %v544
        %v548 = vmul.f32 %v364, %v544
        %v549 = vadd.f32 %v539, %v545
        %v550 = vadd.f32 %v540, %v546
        %v551 = vadd.f32 %v541, %v547
        %v552 = vadd.f32 %v542, %v548
        %s553 = sld [smem:[#allocation9 + $0x3]]
        %v554 = vstv %s553
        %v555 = vadd.f32 %v549, %v554
        %v556 = vadd.f32 %v550, %v554
        %v557 = vadd.f32 %v551, %v554
        %v558 = vadd.f32 %v552, %v554
        %v559 = vmax.f32 %v555, 0.0
        %v560 = vmax.f32 %v556, 0.0
        %v561 = vmax.f32 %v557, 0.0
        %v562 = vmax.f32 %v558, 0.0
        %s563 = scalar_lea.vmem [#allocation2], 192
        %564 = vst [vmem:[%s563 + $0x10] sm:$0xff] %v559
        %565 = vst.msk [vmem:[%s563 + $0x18] sm:$0xff] %vm305, %v560
        %566 = vst [vmem:[%s563 + $0x20] sm:$0xff] %v561
        %567 = vst.msk [vmem:[%s563 + $0x28] sm:$0xff] %vm305, %v562
        %s568 = sld [smem:[#allocation8 + $0x200]]
        %v569 = vstv %s568
        %v570 = vmul.f32 %v346, %v569
        %v571 = vmul.f32 %v347, %v569
        %v572 = vmul.f32 %v348, %v569
        %v573 = vmul.f32 %v349, %v569
        %s574 = sld [smem:[#allocation8 + $0x201]]
        %v575 = vstv %s574
        %v576 = vmul.f32 %v351, %v575
        %v577 = vmul.f32 %v352, %v575
        %v578 = vmul.f32 %v353, %v575
        %v579 = vmul.f32 %v354, %v575
        %v580 = vadd.f32 %v570, %v576
        %v581 = vadd.f32 %v571, %v577
        %v582 = vadd.f32 %v572, %v578
        %v583 = vadd.f32 %v573, %v579
        %s584 = sld [smem:[#allocation8 + $0x202]]
        %v585 = vstv %s584
        %v586 = vmul.f32 %v356, %v585
        %v587 = vmul.f32 %v357, %v585
        %v588 = vmul.f32 %v358, %v585
        %v589 = vmul.f32 %v359, %v585
        %v590 = vadd.f32 %v580, %v586
        %v591 = vadd.f32 %v581, %v587
        %v592 = vadd.f32 %v582, %v588
        %v593 = vadd.f32 %v583, %v589
        %s594 = sld [smem:[#allocation8 + $0x203]]
        %v595 = vstv %s594
        %v596 = vmul.f32 %v361, %v595
        %v597 = vmul.f32 %v362, %v595
        %v598 = vmul.f32 %v363, %v595
        %v599 = vmul.f32 %v364, %v595
        %v600 = vadd.f32 %v590, %v596
        %v601 = vadd.f32 %v591, %v597
        %v602 = vadd.f32 %v592, %v598
        %v603 = vadd.f32 %v593, %v599
        %s604 = sld [smem:[#allocation9 + $0x4]]
        %v605 = vstv %s604
        %v606 = vadd.f32 %v600, %v605
        %v607 = vadd.f32 %v601, %v605
        %v608 = vadd.f32 %v602, %v605
        %v609 = vadd.f32 %v603, %v605
        %v610 = vmax.f32 %v606, 0.0
        %v611 = vmax.f32 %v607, 0.0
        %v612 = vmax.f32 %v608, 0.0
        %v613 = vmax.f32 %v609, 0.0
        %s614 = scalar_lea.vmem [#allocation2], 256
        %615 = vst [vmem:[%s614 + $0x10] sm:$0xff] %v610
        %616 = vst.msk [vmem:[%s614 + $0x18] sm:$0xff] %vm305, %v611
        %617 = vst [vmem:[%s614 + $0x20] sm:$0xff] %v612
        %618 = vst.msk [vmem:[%s614 + $0x28] sm:$0xff] %vm305, %v613
        %v619 = vld [vmem:[#allocation2] sm:$0xff]
        %v620 = vld [vmem:[#allocation2 + $0x8] sm:$0xff]
        %v621 = vld [vmem:[#allocation2 + $0x10] sm:$0xff]
        %v622 = vld [vmem:[#allocation2 + $0x18] sm:$0xff]
        %v623 = vld [vmem:[#allocation2 + $0x20] sm:$0xff]
        %v624 = vld [vmem:[#allocation2 + $0x28] sm:$0xff]
        %v625 = vld [vmem:[#allocation2 + $0x30] sm:$0xf]
        %v626 = vld [vmem:[#allocation2 + $0x38] sm:$0xf]
        %v627 = vpack.c.bf16 %v620, %v619
        %v628 = vpack.c.bf16 %v622, %v621
        %v629 = vpack.c.bf16 %v624, %v623
        %v630 = vpack.c.bf16 %v626, %v625
        %v631 = vld [vmem:[#allocation10] sm:$0xff]
        %v632 = vld [vmem:[#allocation10 + $0x8] sm:$0xff]
        %v633 = vld [vmem:[#allocation10 + $0x10] sm:$0xff]
        %v634 = vld [vmem:[#allocation10 + $0x18] sm:$0xff]
        %v635 = vld [vmem:[#allocation10 + $0x20] sm:$0xff]
        %v636 = vld [vmem:[#allocation10 + $0x28] sm:$0xff]
        %v637 = vld [vmem:[#allocation10 + $0x30] sm:$0xff]
        %v638 = vld [vmem:[#allocation10 + $0x38] sm:$0xff]
        %v639 = vld [vmem:[#allocation10 + $0x40] sm:$0xff]
        %v640 = vld [vmem:[#allocation10 + $0x48] sm:$0xff]
        %v641 = vld [vmem:[#allocation10 + $0x50] sm:$0xff]
        %v642 = vld [vmem:[#allocation10 + $0x58] sm:$0xff]
        %v643 = vld [vmem:[#allocation10 + $0x60] sm:$0xff]
        %v644 = vld [vmem:[#allocation10 + $0x68] sm:$0xff]
        %v645 = vld [vmem:[#allocation10 + $0x70] sm:$0xff]
        %v646 = vld [vmem:[#allocation10 + $0x78] sm:$0xff]
        %v647 = vld [vmem:[#allocation10 + $0x80] sm:$0xff]
        %v648 = vld [vmem:[#allocation10 + $0x88] sm:$0xff]
        %v649 = vld [vmem:[#allocation10 + $0x90] sm:$0xff]
        %v650 = vld [vmem:[#allocation10 + $0x98] sm:$0xff]
        %v651 = vld [vmem:[#allocation10 + $0xa0] sm:$0xff]
        %v652 = vld [vmem:[#allocation10 + $0xa8] sm:$0xff]
        %v653 = vld [vmem:[#allocation10 + $0xb0] sm:$0xff]
        %v654 = vld [vmem:[#allocation10 + $0xb8] sm:$0xff]
        %v655 = vld [vmem:[#allocation10 + $0xc0] sm:$0xff]
        %v656 = vld [vmem:[#allocation10 + $0xc8] sm:$0x11]
        %s657 = scalar_lea.vmem [#allocation10], 1040
        %v658 = vld [vmem:[%s657] sm:$0xff]
        %v659 = vld [vmem:[%s657 + $0x8] sm:$0xff]
        %v660 = vld [vmem:[%s657 + $0x10] sm:$0xff]
        %v661 = vld [vmem:[%s657 + $0x18] sm:$0xff]
        %v662 = vld [vmem:[%s657 + $0x20] sm:$0xff]
        %v663 = vld [vmem:[%s657 + $0x28] sm:$0xff]
        %v664 = vld [vmem:[%s657 + $0x30] sm:$0xff]
        %v665 = vld [vmem:[%s657 + $0x38] sm:$0xff]
        %v666 = vld [vmem:[%s657 + $0x40] sm:$0xff]
        %v667 = vld [vmem:[%s657 + $0x48] sm:$0xff]
        %v668 = vld [vmem:[%s657 + $0x50] sm:$0xff]
        %v669 = vld [vmem:[%s657 + $0x58] sm:$0xff]
        %v670 = vld [vmem:[%s657 + $0x60] sm:$0xff]
        %v671 = vld [vmem:[%s657 + $0x68] sm:$0xff]
        %v672 = vld [vmem:[%s657 + $0x70] sm:$0xff]
        %v673 = vld [vmem:[%s657 + $0x78] sm:$0xff]
        %v674 = vld [vmem:[%s657 + $0x80] sm:$0xff]
        %v675 = vld [vmem:[%s657 + $0x88] sm:$0xff]
        %v676 = vld [vmem:[%s657 + $0x90] sm:$0xff]
        %v677 = vld [vmem:[%s657 + $0x98] sm:$0xff]
        %v678 = vld [vmem:[%s657 + $0xa0] sm:$0xff]
        %v679 = vld [vmem:[%s657 + $0xa8] sm:$0xff]
        %v680 = vld [vmem:[%s657 + $0xb0] sm:$0xff]
        %v681 = vld [vmem:[%s657 + $0xb8] sm:$0xff]
        %v682 = vld [vmem:[%s657 + $0xc0] sm:$0xff]
        %v683 = vld [vmem:[%s657 + $0xc8] sm:$0x11]
        %v687 = vunpack.c.l.b16 %v627
        %v688 = vunpack.c.h.b16 %v627
        %v689 = vunpack.c.l.b16 %v628
        %v690 = vunpack.c.h.b16 %v628
        %v691 = vunpack.c.l.b16 %v629
        %v692 = vunpack.c.h.b16 %v629
        %v693 = vpack.c.b16 %v689, %v687
        %v694 = vpack.c.b16 %v690, %v688
        %v695 = vpack.c.b16 %v691, %v691
        %v696 = vpack.c.b16 %v692, %v692
        %vm697 = vsmask.f32 5376
        %v699 = vshrl.u32 %v693, 16
        %v701 = vrot.slane %v699, 2
        %v702 = vshll.u32 %v693, 16
        %v704 = vrot.slane %v702, 3
        %v705 = vor.u32 %v701, %v704
        %v707 = vshrl.u32 %v695, 16
        %v709 = vrot.slane %v707, 2
        %v710 = vshll.u32 %v695, 16
        %v712 = vrot.slane %v710, 3
        %v713 = vor.u32 %v709, %v712
        %v714 = vsel %vm697, %v705, %v713
        %v716 = vshrl.u32 %v694, 16
        %v718 = vrot.slane %v716, 2
        %v719 = vshll.u32 %v694, 16
        %v721 = vrot.slane %v719, 3
        %v722 = vor.u32 %v718, %v721
        %v724 = vshrl.u32 %v696, 16
        %v726 = vrot.slane %v724, 2
        %v727 = vshll.u32 %v696, 16
        %v729 = vrot.slane %v727, 3
        %v730 = vor.u32 %v726, %v729
        %v731 = vsel %vm697, %v722, %v730
        %v759 = vunpack.c.l.b16 %v658
        %v760 = vunpack.c.h.b16 %v658
        %v761 = vunpack.c.l.b16 %v659
        %v762 = vunpack.c.h.b16 %v659
        %v763 = vunpack.c.l.b16 %v660
        %v764 = vunpack.c.h.b16 %v660
        %v765 = vunpack.c.l.b16 %v661
        %v766 = vunpack.c.h.b16 %v661
        %v767 = vunpack.c.l.b16 %v662
        %v768 = vunpack.c.h.b16 %v662
        %v769 = vunpack.c.l.b16 %v663
        %v770 = vunpack.c.h.b16 %v663
        %v771 = vunpack.c.l.b16 %v664
        %v772 = vunpack.c.h.b16 %v664
        %v773 = vunpack.c.l.b16 %v665
        %v774 = vunpack.c.h.b16 %v665
        %v775 = vunpack.c.l.b16 %v666
        %v776 = vunpack.c.h.b16 %v666
        %v777 = vunpack.c.l.b16 %v667
        %v778 = vunpack.c.h.b16 %v667
        %v779 = vunpack.c.l.b16 %v668
        %v780 = vunpack.c.h.b16 %v668
        %v781 = vunpack.c.l.b16 %v669
        %v782 = vunpack.c.h.b16 %v669
        %v783 = vunpack.c.l.b16 %v670
        %v784 = vunpack.c.h.b16 %v670
        %v785 = vunpack.c.l.b16 %v671
        %v786 = vunpack.c.h.b16 %v671
        %v787 = vunpack.c.l.b16 %v672
        %v788 = vunpack.c.h.b16 %v672
        %v789 = vunpack.c.l.b16 %v673
        %v790 = vunpack.c.h.b16 %v673
        %v791 = vunpack.c.l.b16 %v674
        %v792 = vunpack.c.h.b16 %v674
        %v793 = vunpack.c.l.b16 %v675
        %v794 = vunpack.c.h.b16 %v675
        %v795 = vunpack.c.l.b16 %v676
        %v796 = vunpack.c.h.b16 %v676
        %v797 = vunpack.c.l.b16 %v677
        %v798 = vunpack.c.h.b16 %v677
        %v799 = vunpack.c.l.b16 %v678
        %v800 = vunpack.c.h.b16 %v678
        %v801 = vunpack.c.l.b16 %v679
        %v802 = vunpack.c.h.b16 %v679
        %v803 = vunpack.c.l.b16 %v680
        %v804 = vunpack.c.h.b16 %v680
        %v805 = vunpack.c.l.b16 %v681
        %v806 = vunpack.c.h.b16 %v681
        %v807 = vunpack.c.l.b16 %v682
        %v808 = vunpack.c.h.b16 %v682
        %v809 = vunpack.c.l.b16 %v683
        %v810 = vunpack.c.h.b16 %v683
        %v811 = vpack.c.b16 %v761, %v759
        %v812 = vpack.c.b16 %v762, %v760
        %v813 = vpack.c.b16 %v765, %v763
        %v814 = vpack.c.b16 %v766, %v764
        %v815 = vpack.c.b16 %v769, %v767
        %v816 = vpack.c.b16 %v770, %v768
        %v817 = vpack.c.b16 %v773, %v771
        %v818 = vpack.c.b16 %v774, %v772
        %v819 = vpack.c.b16 %v777, %v775
        %v820 = vpack.c.b16 %v778, %v776
        %v821 = vpack.c.b16 %v781, %v779
        %v822 = vpack.c.b16 %v782, %v780
        %v823 = vpack.c.b16 %v785, %v783
        %v824 = vpack.c.b16 %v786, %v784
        %v825 = vpack.c.b16 %v789, %v787
        %v826 = vpack.c.b16 %v790, %v788
        %v827 = vpack.c.b16 %v793, %v791
        %v828 = vpack.c.b16 %v794, %v792
        %v829 = vpack.c.b16 %v797, %v795
        %v830 = vpack.c.b16 %v798, %v796
        %v831 = vpack.c.b16 %v801, %v799
        %v832 = vpack.c.b16 %v802, %v800
        %v833 = vpack.c.b16 %v805, %v803
        %v834 = vpack.c.b16 %v806, %v804
        %v835 = vpack.c.b16 %v809, %v807
        %v836 = vpack.c.b16 %v810, %v808
        %v862 = vsel %vm305, %v731, 0
        %vm864 = vcmask 1043456
        %vm865 = vcmask 1044480
        %v866 = vsel %vm864, 4294967295, 65535
        %v867 = vsel %vm865, %v866, 0
        %v869 = vand.u32 %v835, %v867
        %v872 = vand.u32 %v836, %v867
        %874 = vmatpush.bf16.msra.mxu0 %v825
        %875 = vmatpush.bf16.msra.mxu0 %v823
        %876 = vmatpush.bf16.msra.mxu0 %v821
        %877 = vmatpush.bf16.msra.mxu0 %v819
        %878 = vmatpush.bf16.msra.mxu0 %v817
        %879 = vmatpush.bf16.msra.mxu0 %v815
        %880 = vmatpush.bf16.msra.mxu0 %v813
        %881 = vmatpush.bf16.msra.mxu0 %v811
        %882 = vmatmul.bf16.gmra.mxu0 %v714
        %v883 = vpop.f32.mrf.mxu0
        %v884 = vadd.f32 0.0, %v883
        %v885 = vpop.f32.mrf.mxu0
        %v886 = vadd.f32 0.0, %v885
        %887 = vdwg.mxu0
        %888 = vmatpush.bf16.msra.mxu0 0
        %889 = vmatpush.bf16.msra.mxu0 0
        %890 = vmatpush.bf16.msra.mxu0 0
        %891 = vmatpush.bf16.msra.mxu0 %v869
        %892 = vmatpush.bf16.msra.mxu0 %v833
        %893 = vmatpush.bf16.msra.mxu0 %v831
        %894 = vmatpush.bf16.msra.mxu0 %v829
        %895 = vmatpush.bf16.msra.mxu0 %v827
        %896 = vmatmul.bf16.gmra.mxu0 %v862
        %v897 = vpop.f32.mrf.mxu0
        %v898 = vadd.f32 %v884, %v897
        %v899 = vpop.f32.mrf.mxu0
        %v900 = vadd.f32 %v886, %v899
        %901 = vdwg.mxu0
        %902 = vmatpush.bf16.msra.mxu0 %v826
        %903 = vmatpush.bf16.msra.mxu0 %v824
        %904 = vmatpush.bf16.msra.mxu0 %v822
        %905 = vmatpush.bf16.msra.mxu0 %v820
        %906 = vmatpush.bf16.msra.mxu0 %v818
        %907 = vmatpush.bf16.msra.mxu0 %v816
        %908 = vmatpush.bf16.msra.mxu0 %v814
        %909 = vmatpush.bf16.msra.mxu0 %v812
        %910 = vmatmul.bf16.gmra.mxu0 %v714
        %v911 = vpop.f32.mrf.mxu0
        %v912 = vadd.f32 0.0, %v911
        %v913 = vpop.f32.mrf.mxu0
        %v914 = vadd.f32 0.0, %v913
        %915 = vdwg.mxu0
        %916 = vmatpush.bf16.msra.mxu0 0
        %917 = vmatpush.bf16.msra.mxu0 0
        %918 = vmatpush.bf16.msra.mxu0 0
        %919 = vmatpush.bf16.msra.mxu0 %v872
        %920 = vmatpush.bf16.msra.mxu0 %v834
        %921 = vmatpush.bf16.msra.mxu0 %v832
        %922 = vmatpush.bf16.msra.mxu0 %v830
        %923 = vmatpush.bf16.msra.mxu0 %v828
        %924 = vmatmul.bf16.gmra.mxu0 %v862
        %v925 = vpop.f32.mrf.mxu0
        %v926 = vadd.f32 %v912, %v925
        %v927 = vpop.f32.mrf.mxu0
        %v928 = vadd.f32 %v914, %v927
        %929 = vdwg.mxu0
        %vm930 = vcmask 1045504
        %v931 = vrot.slane %v693, 2
        %v932 = vrot.slane %v695, 2
        %v933 = vsel %vm930, %v931, %v932
        %v934 = vrot.slane %v694, 2
        %v935 = vrot.slane %v696, 2
        %v936 = vsel %vm930, %v934, %v935
        %v964 = vunpack.c.l.b16 %v631
        %v965 = vunpack.c.h.b16 %v631
        %v966 = vunpack.c.l.b16 %v632
        %v967 = vunpack.c.h.b16 %v632
        %v968 = vunpack.c.l.b16 %v633
        %v969 = vunpack.c.h.b16 %v633
        %v970 = vunpack.c.l.b16 %v634
        %v971 = vunpack.c.h.b16 %v634
        %v972 = vunpack.c.l.b16 %v635
        %v973 = vunpack.c.h.b16 %v635
        %v974 = vunpack.c.l.b16 %v636
        %v975 = vunpack.c.h.b16 %v636
        %v976 = vunpack.c.l.b16 %v637
        %v977 = vunpack.c.h.b16 %v637
        %v978 = vunpack.c.l.b16 %v638
        %v979 = vunpack.c.h.b16 %v638
        %v980 = vunpack.c.l.b16 %v639
        %v981 = vunpack.c.h.b16 %v639
        %v982 = vunpack.c.l.b16 %v640
        %v983 = vunpack.c.h.b16 %v640
        %v984 = vunpack.c.l.b16 %v641
        %v985 = vunpack.c.h.b16 %v641
        %v986 = vunpack.c.l.b16 %v642
        %v987 = vunpack.c.h.b16 %v642
        %v988 = vunpack.c.l.b16 %v643
        %v989 = vunpack.c.h.b16 %v643
        %v990 = vunpack.c.l.b16 %v644
        %v991 = vunpack.c.h.b16 %v644
        %v992 = vunpack.c.l.b16 %v645
        %v993 = vunpack.c.h.b16 %v645
        %v994 = vunpack.c.l.b16 %v646
        %v995 = vunpack.c.h.b16 %v646
        %v996 = vunpack.c.l.b16 %v647
        %v997 = vunpack.c.h.b16 %v647
        %v998 = vunpack.c.l.b16 %v648
        %v999 = vunpack.c.h.b16 %v648
        %v1000 = vunpack.c.l.b16 %v649
        %v1001 = vunpack.c.h.b16 %v649
        %v1002 = vunpack.c.l.b16 %v650
        %v1003 = vunpack.c.h.b16 %v650
        %v1004 = vunpack.c.l.b16 %v651
        %v1005 = vunpack.c.h.b16 %v651
        %v1006 = vunpack.c.l.b16 %v652
        %v1007 = vunpack.c.h.b16 %v652
        %v1008 = vunpack.c.l.b16 %v653
        %v1009 = vunpack.c.h.b16 %v653
        %v1010 = vunpack.c.l.b16 %v654
        %v1011 = vunpack.c.h.b16 %v654
        %v1012 = vunpack.c.l.b16 %v655
        %v1013 = vunpack.c.h.b16 %v655
        %v1014 = vunpack.c.l.b16 %v656
        %v1015 = vunpack.c.h.b16 %v656
        %v1016 = vpack.c.b16 %v966, %v964
        %v1017 = vpack.c.b16 %v967, %v965
        %v1018 = vpack.c.b16 %v970, %v968
        %v1019 = vpack.c.b16 %v971, %v969
        %v1020 = vpack.c.b16 %v974, %v972
        %v1021 = vpack.c.b16 %v975, %v973
        %v1022 = vpack.c.b16 %v978, %v976
        %v1023 = vpack.c.b16 %v979, %v977
        %v1024 = vpack.c.b16 %v982, %v980
        %v1025 = vpack.c.b16 %v983, %v981
        %v1026 = vpack.c.b16 %v986, %v984
        %v1027 = vpack.c.b16 %v987, %v985
        %v1028 = vpack.c.b16 %v990, %v988
        %v1029 = vpack.c.b16 %v991, %v989
        %v1030 = vpack.c.b16 %v994, %v992
        %v1031 = vpack.c.b16 %v995, %v993
        %v1032 = vpack.c.b16 %v998, %v996
        %v1033 = vpack.c.b16 %v999, %v997
        %v1034 = vpack.c.b16 %v1002, %v1000
        %v1035 = vpack.c.b16 %v1003, %v1001
        %v1036 = vpack.c.b16 %v1006, %v1004
        %v1037 = vpack.c.b16 %v1007, %v1005
        %v1038 = vpack.c.b16 %v1010, %v1008
        %v1039 = vpack.c.b16 %v1011, %v1009
        %v1040 = vpack.c.b16 %v1014, %v1012
        %v1041 = vpack.c.b16 %v1015, %v1013
        %v1067 = vsel %vm305, %v936, 0
        %v1070 = vand.u32 %v1040, %v867
        %v1073 = vand.u32 %v1041, %v867
        %1075 = vmatpush.bf16.msra.mxu0 %v1030
        %1076 = vmatpush.bf16.msra.mxu0 %v1028
        %1077 = vmatpush.bf16.msra.mxu0 %v1026
        %1078 = vmatpush.bf16.msra.mxu0 %v1024
        %1079 = vmatpush.bf16.msra.mxu0 %v1022
        %1080 = vmatpush.bf16.msra.mxu0 %v1020
        %1081 = vmatpush.bf16.msra.mxu0 %v1018
        %1082 = vmatpush.bf16.msra.mxu0 %v1016
        %1083 = vmatmul.bf16.gmra.mxu0 %v933
        %v1084 = vpop.f32.mrf.mxu0
        %v1085 = vadd.f32 %v898, %v1084
        %v1086 = vpop.f32.mrf.mxu0
        %v1087 = vadd.f32 %v900, %v1086
        %1088 = vdwg.mxu0
        %1089 = vmatpush.bf16.msra.mxu0 0
        %1090 = vmatpush.bf16.msra.mxu0 0
        %1091 = vmatpush.bf16.msra.mxu0 0
        %1092 = vmatpush.bf16.msra.mxu0 %v1070
        %1093 = vmatpush.bf16.msra.mxu0 %v1038
        %1094 = vmatpush.bf16.msra.mxu0 %v1036
        %1095 = vmatpush.bf16.msra.mxu0 %v1034
        %1096 = vmatpush.bf16.msra.mxu0 %v1032
        %1097 = vmatmul.bf16.gmra.mxu0 %v1067
        %v1098 = vpop.f32.mrf.mxu0
        %v1099 = vadd.f32 %v1085, %v1098
        %v1100 = vpop.f32.mrf.mxu0
        %v1101 = vadd.f32 %v1087, %v1100
        %1102 = vdwg.mxu0
        %1103 = vmatpush.bf16.msra.mxu0 %v1031
        %1104 = vmatpush.bf16.msra.mxu0 %v1029
        %1105 = vmatpush.bf16.msra.mxu0 %v1027
        %1106 = vmatpush.bf16.msra.mxu0 %v1025
        %1107 = vmatpush.bf16.msra.mxu0 %v1023
        %1108 = vmatpush.bf16.msra.mxu0 %v1021
        %1109 = vmatpush.bf16.msra.mxu0 %v1019
        %1110 = vmatpush.bf16.msra.mxu0 %v1017
        %1111 = vmatmul.bf16.gmra.mxu0 %v933
        %v1112 = vpop.f32.mrf.mxu0
        %v1113 = vadd.f32 %v926, %v1112
        %v1114 = vpop.f32.mrf.mxu0
        %v1115 = vadd.f32 %v928, %v1114
        %1116 = vdwg.mxu0
        %1117 = vmatpush.bf16.msra.mxu0 0
        %1118 = vmatpush.bf16.msra.mxu0 0
        %1119 = vmatpush.bf16.msra.mxu0 0
        %1120 = vmatpush.bf16.msra.mxu0 %v1073
        %1121 = vmatpush.bf16.msra.mxu0 %v1039
        %1122 = vmatpush.bf16.msra.mxu0 %v1037
        %1123 = vmatpush.bf16.msra.mxu0 %v1035
        %1124 = vmatpush.bf16.msra.mxu0 %v1033
        %1125 = vmatmul.bf16.gmra.mxu0 %v1067
        %v1126 = vpop.f32.mrf.mxu0
        %v1127 = vadd.f32 %v1113, %v1126
        %v1128 = vpop.f32.mrf.mxu0
        %v1129 = vadd.f32 %v1115, %v1128
        %1130 = vdwg.mxu0
        %s1131 = scalar_lea.vmem [#allocation10], 2080
        %v1132 = vld [vmem:[%s1131] sm:$0xff]
        %v1133 = vld [vmem:[%s1131 + $0x8] sm:$0xff]
        %v1134 = vld [vmem:[%s1131 + $0x10] sm:$0xff]
        %v1135 = vld [vmem:[%s1131 + $0x18] sm:$0xff]
        %v1136 = vld [vmem:[%s1131 + $0x20] sm:$0xff]
        %v1137 = vld [vmem:[%s1131 + $0x28] sm:$0xff]
        %v1138 = vld [vmem:[%s1131 + $0x30] sm:$0xff]
        %v1139 = vld [vmem:[%s1131 + $0x38] sm:$0xff]
        %v1140 = vld [vmem:[%s1131 + $0x40] sm:$0xff]
        %v1141 = vld [vmem:[%s1131 + $0x48] sm:$0xff]
        %v1142 = vld [vmem:[%s1131 + $0x50] sm:$0xff]
        %v1143 = vld [vmem:[%s1131 + $0x58] sm:$0xff]
        %v1144 = vld [vmem:[%s1131 + $0x60] sm:$0xff]
        %v1145 = vld [vmem:[%s1131 + $0x68] sm:$0xff]
        %v1146 = vld [vmem:[%s1131 + $0x70] sm:$0xff]
        %v1147 = vld [vmem:[%s1131 + $0x78] sm:$0xff]
        %v1148 = vld [vmem:[%s1131 + $0x80] sm:$0xff]
        %v1149 = vld [vmem:[%s1131 + $0x88] sm:$0xff]
        %v1150 = vld [vmem:[%s1131 + $0x90] sm:$0xff]
        %v1151 = vld [vmem:[%s1131 + $0x98] sm:$0xff]
        %v1152 = vld [vmem:[%s1131 + $0xa0] sm:$0xff]
        %v1153 = vld [vmem:[%s1131 + $0xa8] sm:$0xff]
        %v1154 = vld [vmem:[%s1131 + $0xb0] sm:$0xff]
        %v1155 = vld [vmem:[%s1131 + $0xb8] sm:$0xff]
        %v1156 = vld [vmem:[%s1131 + $0xc0] sm:$0xff]
        %v1157 = vld [vmem:[%s1131 + $0xc8] sm:$0x11]
        %vm1158 = vcmask 1044480
        %v1159 = vrot.slane %v693, 3
        %v1160 = vrot.slane %v695, 3
        %v1161 = vsel %vm1158, %v1159, %v1160
        %v1162 = vrot.slane %v694, 3
        %v1163 = vrot.slane %v696, 3
        %v1164 = vsel %vm1158, %v1162, %v1163
        %v1192 = vunpack.c.l.b16 %v1132
        %v1193 = vunpack.c.h.b16 %v1132
        %v1194 = vunpack.c.l.b16 %v1133
        %v1195 = vunpack.c.h.b16 %v1133
        %v1196 = vunpack.c.l.b16 %v1134
        %v1197 = vunpack.c.h.b16 %v1134
        %v1198 = vunpack.c.l.b16 %v1135
        %v1199 = vunpack.c.h.b16 %v1135
        %v1200 = vunpack.c.l.b16 %v1136
        %v1201 = vunpack.c.h.b16 %v1136
        %v1202 = vunpack.c.l.b16 %v1137
        %v1203 = vunpack.c.h.b16 %v1137
        %v1204 = vunpack.c.l.b16 %v1138
        %v1205 = vunpack.c.h.b16 %v1138
        %v1206 = vunpack.c.l.b16 %v1139
        %v1207 = vunpack.c.h.b16 %v1139
        %v1208 = vunpack.c.l.b16 %v1140
        %v1209 = vunpack.c.h.b16 %v1140
        %v1210 = vunpack.c.l.b16 %v1141
        %v1211 = vunpack.c.h.b16 %v1141
        %v1212 = vunpack.c.l.b16 %v1142
        %v1213 = vunpack.c.h.b16 %v1142
        %v1214 = vunpack.c.l.b16 %v1143
        %v1215 = vunpack.c.h.b16 %v1143
        %v1216 = vunpack.c.l.b16 %v1144
        %v1217 = vunpack.c.h.b16 %v1144
        %v1218 = vunpack.c.l.b16 %v1145
        %v1219 = vunpack.c.h.b16 %v1145
        %v1220 = vunpack.c.l.b16 %v1146
        %v1221 = vunpack.c.h.b16 %v1146
        %v1222 = vunpack.c.l.b16 %v1147
        %v1223 = vunpack.c.h.b16 %v1147
        %v1224 = vunpack.c.l.b16 %v1148
        %v1225 = vunpack.c.h.b16 %v1148
        %v1226 = vunpack.c.l.b16 %v1149
        %v1227 = vunpack.c.h.b16 %v1149
        %v1228 = vunpack.c.l.b16 %v1150
        %v1229 = vunpack.c.h.b16 %v1150
        %v1230 = vunpack.c.l.b16 %v1151
        %v1231 = vunpack.c.h.b16 %v1151
        %v1232 = vunpack.c.l.b16 %v1152
        %v1233 = vunpack.c.h.b16 %v1152
        %v1234 = vunpack.c.l.b16 %v1153
        %v1235 = vunpack.c.h.b16 %v1153
        %v1236 = vunpack.c.l.b16 %v1154
        %v1237 = vunpack.c.h.b16 %v1154
        %v1238 = vunpack.c.l.b16 %v1155
        %v1239 = vunpack.c.h.b16 %v1155
        %v1240 = vunpack.c.l.b16 %v1156
        %v1241 = vunpack.c.h.b16 %v1156
        %v1242 = vunpack.c.l.b16 %v1157
        %v1243 = vunpack.c.h.b16 %v1157
        %v1244 = vpack.c.b16 %v1194, %v1192
        %v1245 = vpack.c.b16 %v1195, %v1193
        %v1246 = vpack.c.b16 %v1198, %v1196
        %v1247 = vpack.c.b16 %v1199, %v1197
        %v1248 = vpack.c.b16 %v1202, %v1200
        %v1249 = vpack.c.b16 %v1203, %v1201
        %v1250 = vpack.c.b16 %v1206, %v1204
        %v1251 = vpack.c.b16 %v1207, %v1205
        %v1252 = vpack.c.b16 %v1210, %v1208
        %v1253 = vpack.c.b16 %v1211, %v1209
        %v1254 = vpack.c.b16 %v1214, %v1212
        %v1255 = vpack.c.b16 %v1215, %v1213
        %v1256 = vpack.c.b16 %v1218, %v1216
        %v1257 = vpack.c.b16 %v1219, %v1217
        %v1258 = vpack.c.b16 %v1222, %v1220
        %v1259 = vpack.c.b16 %v1223, %v1221
        %v1260 = vpack.c.b16 %v1226, %v1224
        %v1261 = vpack.c.b16 %v1227, %v1225
        %v1262 = vpack.c.b16 %v1230, %v1228
        %v1263 = vpack.c.b16 %v1231, %v1229
        %v1264 = vpack.c.b16 %v1234, %v1232
        %v1265 = vpack.c.b16 %v1235, %v1233
        %v1266 = vpack.c.b16 %v1238, %v1236
        %v1267 = vpack.c.b16 %v1239, %v1237
        %v1268 = vpack.c.b16 %v1242, %v1240
        %v1269 = vpack.c.b16 %v1243, %v1241
        %v1295 = vsel %vm305, %v1164, 0
        %v1298 = vand.u32 %v1268, %v867
        %v1301 = vand.u32 %v1269, %v867
        %1303 = vmatpush.bf16.msra.mxu0 %v1258
        %1304 = vmatpush.bf16.msra.mxu0 %v1256
        %1305 = vmatpush.bf16.msra.mxu0 %v1254
        %1306 = vmatpush.bf16.msra.mxu0 %v1252
        %1307 = vmatpush.bf16.msra.mxu0 %v1250
        %1308 = vmatpush.bf16.msra.mxu0 %v1248
        %1309 = vmatpush.bf16.msra.mxu0 %v1246
        %1310 = vmatpush.bf16.msra.mxu0 %v1244
        %1311 = vmatmul.bf16.gmra.mxu0 %v1161
        %v1312 = vpop.f32.mrf.mxu0
        %v1313 = vadd.f32 0.0, %v1312
        %v1314 = vpop.f32.mrf.mxu0
        %v1315 = vadd.f32 0.0, %v1314
        %1316 = vdwg.mxu0
        %1317 = vmatpush.bf16.msra.mxu0 0
        %1318 = vmatpush.bf16.msra.mxu0 0
        %1319 = vmatpush.bf16.msra.mxu0 0
        %1320 = vmatpush.bf16.msra.mxu0 %v1298
        %1321 = vmatpush.bf16.msra.mxu0 %v1266
        %1322 = vmatpush.bf16.msra.mxu0 %v1264
        %1323 = vmatpush.bf16.msra.mxu0 %v1262
        %1324 = vmatpush.bf16.msra.mxu0 %v1260
        %1325 = vmatmul.bf16.gmra.mxu0 %v1295
        %v1326 = vpop.f32.mrf.mxu0
        %v1327 = vadd.f32 %v1313, %v1326
        %v1328 = vpop.f32.mrf.mxu0
        %v1329 = vadd.f32 %v1315, %v1328
        %1330 = vdwg.mxu0
        %1331 = vmatpush.bf16.msra.mxu0 %v1259
        %1332 = vmatpush.bf16.msra.mxu0 %v1257
        %1333 = vmatpush.bf16.msra.mxu0 %v1255
        %1334 = vmatpush.bf16.msra.mxu0 %v1253
        %1335 = vmatpush.bf16.msra.mxu0 %v1251
        %1336 = vmatpush.bf16.msra.mxu0 %v1249
        %1337 = vmatpush.bf16.msra.mxu0 %v1247
        %1338 = vmatpush.bf16.msra.mxu0 %v1245
        %1339 = vmatmul.bf16.gmra.mxu0 %v1161
        %v1340 = vpop.f32.mrf.mxu0
        %v1341 = vadd.f32 0.0, %v1340
        %v1342 = vpop.f32.mrf.mxu0
        %v1343 = vadd.f32 0.0, %v1342
        %1344 = vdwg.mxu0
        %1345 = vmatpush.bf16.msra.mxu0 0
        %1346 = vmatpush.bf16.msra.mxu0 0
        %1347 = vmatpush.bf16.msra.mxu0 0
        %1348 = vmatpush.bf16.msra.mxu0 %v1301
        %1349 = vmatpush.bf16.msra.mxu0 %v1267
        %1350 = vmatpush.bf16.msra.mxu0 %v1265
        %1351 = vmatpush.bf16.msra.mxu0 %v1263
        %1352 = vmatpush.bf16.msra.mxu0 %v1261
        %1353 = vmatmul.bf16.gmra.mxu0 %v1295
        %v1354 = vpop.f32.mrf.mxu0
        %v1355 = vadd.f32 %v1341, %v1354
        %v1356 = vpop.f32.mrf.mxu0
        %v1357 = vadd.f32 %v1343, %v1356
        %1358 = vdwg.mxu0
        %v1359 = vadd.f32 %v1099, %v1327
        %v1360 = vadd.f32 %v1127, %v1355
        %v1361 = vadd.f32 %v1101, %v1329
        %v1362 = vadd.f32 %v1129, %v1357
        %s1363 = scalar_lea.vmem [#allocation10], 3120
        %v1364 = vld [vmem:[%s1363] sm:$0xff]
        %v1365 = vld [vmem:[%s1363 + $0x8] sm:$0xff]
        %v1366 = vld [vmem:[%s1363 + $0x10] sm:$0xff]
        %v1367 = vld [vmem:[%s1363 + $0x18] sm:$0xff]
        %v1368 = vld [vmem:[%s1363 + $0x20] sm:$0xff]
        %v1369 = vld [vmem:[%s1363 + $0x28] sm:$0xff]
        %v1370 = vld [vmem:[%s1363 + $0x30] sm:$0xff]
        %v1371 = vld [vmem:[%s1363 + $0x38] sm:$0xff]
        %v1372 = vld [vmem:[%s1363 + $0x40] sm:$0xff]
        %v1373 = vld [vmem:[%s1363 + $0x48] sm:$0xff]
        %v1374 = vld [vmem:[%s1363 + $0x50] sm:$0xff]
        %v1375 = vld [vmem:[%s1363 + $0x58] sm:$0xff]
        %v1376 = vld [vmem:[%s1363 + $0x60] sm:$0xff]
        %v1377 = vld [vmem:[%s1363 + $0x68] sm:$0xff]
        %v1378 = vld [vmem:[%s1363 + $0x70] sm:$0xff]
        %v1379 = vld [vmem:[%s1363 + $0x78] sm:$0xff]
        %v1380 = vld [vmem:[%s1363 + $0x80] sm:$0xff]
        %v1381 = vld [vmem:[%s1363 + $0x88] sm:$0xff]
        %v1382 = vld [vmem:[%s1363 + $0x90] sm:$0xff]
        %v1383 = vld [vmem:[%s1363 + $0x98] sm:$0xff]
        %v1384 = vld [vmem:[%s1363 + $0xa0] sm:$0xff]
        %v1385 = vld [vmem:[%s1363 + $0xa8] sm:$0xff]
        %v1386 = vld [vmem:[%s1363 + $0xb0] sm:$0xff]
        %v1387 = vld [vmem:[%s1363 + $0xb8] sm:$0xff]
        %v1388 = vld [vmem:[%s1363 + $0xc0] sm:$0xff]
        %v1389 = vld [vmem:[%s1363 + $0xc8] sm:$0x11]
        %vm1390 = vsmask.f32 4352
        %v1391 = vrot.slane %v699, 3
        %v1392 = vrot.slane %v702, 4
        %v1393 = vor.u32 %v1391, %v1392
        %v1394 = vrot.slane %v707, 3
        %v1395 = vrot.slane %v710, 4
        %v1396 = vor.u32 %v1394, %v1395
        %v1397 = vsel %vm1390, %v1393, %v1396
        %v1398 = vrot.slane %v716, 3
        %v1399 = vrot.slane %v719, 4
        %v1400 = vor.u32 %v1398, %v1399
        %v1401 = vrot.slane %v724, 3
        %v1402 = vrot.slane %v727, 4
        %v1403 = vor.u32 %v1401, %v1402
        %v1404 = vsel %vm1390, %v1400, %v1403
        %v1432 = vunpack.c.l.b16 %v1364
        %v1433 = vunpack.c.h.b16 %v1364
        %v1434 = vunpack.c.l.b16 %v1365
        %v1435 = vunpack.c.h.b16 %v1365
        %v1436 = vunpack.c.l.b16 %v1366
        %v1437 = vunpack.c.h.b16 %v1366
        %v1438 = vunpack.c.l.b16 %v1367
        %v1439 = vunpack.c.h.b16 %v1367
        %v1440 = vunpack.c.l.b16 %v1368
        %v1441 = vunpack.c.h.b16 %v1368
        %v1442 = vunpack.c.l.b16 %v1369
        %v1443 = vunpack.c.h.b16 %v1369
        %v1444 = vunpack.c.l.b16 %v1370
        %v1445 = vunpack.c.h.b16 %v1370
        %v1446 = vunpack.c.l.b16 %v1371
        %v1447 = vunpack.c.h.b16 %v1371
        %v1448 = vunpack.c.l.b16 %v1372
        %v1449 = vunpack.c.h.b16 %v1372
        %v1450 = vunpack.c.l.b16 %v1373
        %v1451 = vunpack.c.h.b16 %v1373
        %v1452 = vunpack.c.l.b16 %v1374
        %v1453 = vunpack.c.h.b16 %v1374
        %v1454 = vunpack.c.l.b16 %v1375
        %v1455 = vunpack.c.h.b16 %v1375
        %v1456 = vunpack.c.l.b16 %v1376
        %v1457 = vunpack.c.h.b16 %v1376
        %v1458 = vunpack.c.l.b16 %v1377
        %v1459 = vunpack.c.h.b16 %v1377
        %v1460 = vunpack.c.l.b16 %v1378
        %v1461 = vunpack.c.h.b16 %v1378
        %v1462 = vunpack.c.l.b16 %v1379
        %v1463 = vunpack.c.h.b16 %v1379
        %v1464 = vunpack.c.l.b16 %v1380
        %v1465 = vunpack.c.h.b16 %v1380
        %v1466 = vunpack.c.l.b16 %v1381
        %v1467 = vunpack.c.h.b16 %v1381
        %v1468 = vunpack.c.l.b16 %v1382
        %v1469 = vunpack.c.h.b16 %v1382
        %v1470 = vunpack.c.l.b16 %v1383
        %v1471 = vunpack.c.h.b16 %v1383
        %v1472 = vunpack.c.l.b16 %v1384
        %v1473 = vunpack.c.h.b16 %v1384
        %v1474 = vunpack.c.l.b16 %v1385
        %v1475 = vunpack.c.h.b16 %v1385
        %v1476 = vunpack.c.l.b16 %v1386
        %v1477 = vunpack.c.h.b16 %v1386
        %v1478 = vunpack.c.l.b16 %v1387
        %v1479 = vunpack.c.h.b16 %v1387
        %v1480 = vunpack.c.l.b16 %v1388
        %v1481 = vunpack.c.h.b16 %v1388
        %v1482 = vunpack.c.l.b16 %v1389
        %v1483 = vunpack.c.h.b16 %v1389
        %v1484 = vpack.c.b16 %v1434, %v1432
        %v1485 = vpack.c.b16 %v1435, %v1433
        %v1486 = vpack.c.b16 %v1438, %v1436
        %v1487 = vpack.c.b16 %v1439, %v1437
        %v1488 = vpack.c.b16 %v1442, %v1440
        %v1489 = vpack.c.b16 %v1443, %v1441
        %v1490 = vpack.c.b16 %v1446, %v1444
        %v1491 = vpack.c.b16 %v1447, %v1445
        %v1492 = vpack.c.b16 %v1450, %v1448
        %v1493 = vpack.c.b16 %v1451, %v1449
        %v1494 = vpack.c.b16 %v1454, %v1452
        %v1495 = vpack.c.b16 %v1455, %v1453
        %v1496 = vpack.c.b16 %v1458, %v1456
        %v1497 = vpack.c.b16 %v1459, %v1457
        %v1498 = vpack.c.b16 %v1462, %v1460
        %v1499 = vpack.c.b16 %v1463, %v1461
        %v1500 = vpack.c.b16 %v1466, %v1464
        %v1501 = vpack.c.b16 %v1467, %v1465
        %v1502 = vpack.c.b16 %v1470, %v1468
        %v1503 = vpack.c.b16 %v1471, %v1469
        %v1504 = vpack.c.b16 %v1474, %v1472
        %v1505 = vpack.c.b16 %v1475, %v1473
        %v1506 = vpack.c.b16 %v1478, %v1476
        %v1507 = vpack.c.b16 %v1479, %v1477
        %v1508 = vpack.c.b16 %v1482, %v1480
        %v1509 = vpack.c.b16 %v1483, %v1481
        %v1535 = vsel %vm305, %v1404, 0
        %v1538 = vand.u32 %v1508, %v867
        %v1541 = vand.u32 %v1509, %v867
        %1543 = vmatpush.bf16.msra.mxu0 %v1498
        %1544 = vmatpush.bf16.msra.mxu0 %v1496
        %1545 = vmatpush.bf16.msra.mxu0 %v1494
        %1546 = vmatpush.bf16.msra.mxu0 %v1492
        %1547 = vmatpush.bf16.msra.mxu0 %v1490
        %1548 = vmatpush.bf16.msra.mxu0 %v1488
        %1549 = vmatpush.bf16.msra.mxu0 %v1486
        %1550 = vmatpush.bf16.msra.mxu0 %v1484
        %1551 = vmatmul.bf16.gmra.mxu0 %v1397
        %v1552 = vpop.f32.mrf.mxu0
        %v1553 = vadd.f32 0.0, %v1552
        %v1554 = vpop.f32.mrf.mxu0
        %v1555 = vadd.f32 0.0, %v1554
        %1556 = vdwg.mxu0
        %1557 = vmatpush.bf16.msra.mxu0 0
        %1558 = vmatpush.bf16.msra.mxu0 0
        %1559 = vmatpush.bf16.msra.mxu0 0
        %1560 = vmatpush.bf16.msra.mxu0 %v1538
        %1561 = vmatpush.bf16.msra.mxu0 %v1506
        %1562 = vmatpush.bf16.msra.mxu0 %v1504
        %1563 = vmatpush.bf16.msra.mxu0 %v1502
        %1564 = vmatpush.bf16.msra.mxu0 %v1500
        %1565 = vmatmul.bf16.gmra.mxu0 %v1535
        %v1566 = vpop.f32.mrf.mxu0
        %v1567 = vadd.f32 %v1553, %v1566
        %v1568 = vpop.f32.mrf.mxu0
        %v1569 = vadd.f32 %v1555, %v1568
        %1570 = vdwg.mxu0
        %1571 = vmatpush.bf16.msra.mxu0 %v1499
        %1572 = vmatpush.bf16.msra.mxu0 %v1497
        %1573 = vmatpush.bf16.msra.mxu0 %v1495
        %1574 = vmatpush.bf16.msra.mxu0 %v1493
        %1575 = vmatpush.bf16.msra.mxu0 %v1491
        %1576 = vmatpush.bf16.msra.mxu0 %v1489
        %1577 = vmatpush.bf16.msra.mxu0 %v1487
        %1578 = vmatpush.bf16.msra.mxu0 %v1485
        %1579 = vmatmul.bf16.gmra.mxu0 %v1397
        %v1580 = vpop.f32.mrf.mxu0
        %v1581 = vadd.f32 0.0, %v1580
        %v1582 = vpop.f32.mrf.mxu0
        %v1583 = vadd.f32 0.0, %v1582
        %1584 = vdwg.mxu0
        %1585 = vmatpush.bf16.msra.mxu0 0
        %1586 = vmatpush.bf16.msra.mxu0 0
        %1587 = vmatpush.bf16.msra.mxu0 0
        %1588 = vmatpush.bf16.msra.mxu0 %v1541
        %1589 = vmatpush.bf16.msra.mxu0 %v1507
        %1590 = vmatpush.bf16.msra.mxu0 %v1505
        %1591 = vmatpush.bf16.msra.mxu0 %v1503
        %1592 = vmatpush.bf16.msra.mxu0 %v1501
        %1593 = vmatmul.bf16.gmra.mxu0 %v1535
        %v1594 = vpop.f32.mrf.mxu0
        %v1595 = vadd.f32 %v1581, %v1594
        %v1596 = vpop.f32.mrf.mxu0
        %v1597 = vadd.f32 %v1583, %v1596
        %1598 = vdwg.mxu0
        %v1599 = vadd.f32 %v1359, %v1567
        %v1600 = vadd.f32 %v1360, %v1595
        %v1601 = vadd.f32 %v1361, %v1569
        %v1602 = vadd.f32 %v1362, %v1597
        %s1603 = scalar_lea.vmem [#allocation10], 4160
        %v1604 = vld [vmem:[%s1603] sm:$0xff]
        %v1605 = vld [vmem:[%s1603 + $0x8] sm:$0xff]
        %v1606 = vld [vmem:[%s1603 + $0x10] sm:$0xff]
        %v1607 = vld [vmem:[%s1603 + $0x18] sm:$0xff]
        %v1608 = vld [vmem:[%s1603 + $0x20] sm:$0xff]
        %v1609 = vld [vmem:[%s1603 + $0x28] sm:$0xff]
        %v1610 = vld [vmem:[%s1603 + $0x30] sm:$0xff]
        %v1611 = vld [vmem:[%s1603 + $0x38] sm:$0xff]
        %v1612 = vld [vmem:[%s1603 + $0x40] sm:$0xff]
        %v1613 = vld [vmem:[%s1603 + $0x48] sm:$0xff]
        %v1614 = vld [vmem:[%s1603 + $0x50] sm:$0xff]
        %v1615 = vld [vmem:[%s1603 + $0x58] sm:$0xff]
        %v1616 = vld [vmem:[%s1603 + $0x60] sm:$0xff]
        %v1617 = vld [vmem:[%s1603 + $0x68] sm:$0xff]
        %v1618 = vld [vmem:[%s1603 + $0x70] sm:$0xff]
        %v1619 = vld [vmem:[%s1603 + $0x78] sm:$0xff]
        %v1620 = vld [vmem:[%s1603 + $0x80] sm:$0xff]
        %v1621 = vld [vmem:[%s1603 + $0x88] sm:$0xff]
        %v1622 = vld [vmem:[%s1603 + $0x90] sm:$0xff]
        %v1623 = vld [vmem:[%s1603 + $0x98] sm:$0xff]
        %v1624 = vld [vmem:[%s1603 + $0xa0] sm:$0xff]
        %v1625 = vld [vmem:[%s1603 + $0xa8] sm:$0xff]
        %v1626 = vld [vmem:[%s1603 + $0xb0] sm:$0xff]
        %v1627 = vld [vmem:[%s1603 + $0xb8] sm:$0xff]
        %v1628 = vld [vmem:[%s1603 + $0xc0] sm:$0xff]
        %v1629 = vld [vmem:[%s1603 + $0xc8] sm:$0x11]
        %v1630 = vpack.c.b16 %v691, %v689
        %v1631 = vpack.c.b16 %v692, %v690
        %v1659 = vunpack.c.l.b16 %v1604
        %v1660 = vunpack.c.h.b16 %v1604
        %v1661 = vunpack.c.l.b16 %v1605
        %v1662 = vunpack.c.h.b16 %v1605
        %v1663 = vunpack.c.l.b16 %v1606
        %v1664 = vunpack.c.h.b16 %v1606
        %v1665 = vunpack.c.l.b16 %v1607
        %v1666 = vunpack.c.h.b16 %v1607
        %v1667 = vunpack.c.l.b16 %v1608
        %v1668 = vunpack.c.h.b16 %v1608
        %v1669 = vunpack.c.l.b16 %v1609
        %v1670 = vunpack.c.h.b16 %v1609
        %v1671 = vunpack.c.l.b16 %v1610
        %v1672 = vunpack.c.h.b16 %v1610
        %v1673 = vunpack.c.l.b16 %v1611
        %v1674 = vunpack.c.h.b16 %v1611
        %v1675 = vunpack.c.l.b16 %v1612
        %v1676 = vunpack.c.h.b16 %v1612
        %v1677 = vunpack.c.l.b16 %v1613
        %v1678 = vunpack.c.h.b16 %v1613
        %v1679 = vunpack.c.l.b16 %v1614
        %v1680 = vunpack.c.h.b16 %v1614
        %v1681 = vunpack.c.l.b16 %v1615
        %v1682 = vunpack.c.h.b16 %v1615
        %v1683 = vunpack.c.l.b16 %v1616
        %v1684 = vunpack.c.h.b16 %v1616
        %v1685 = vunpack.c.l.b16 %v1617
        %v1686 = vunpack.c.h.b16 %v1617
        %v1687 = vunpack.c.l.b16 %v1618
        %v1688 = vunpack.c.h.b16 %v1618
        %v1689 = vunpack.c.l.b16 %v1619
        %v1690 = vunpack.c.h.b16 %v1619
        %v1691 = vunpack.c.l.b16 %v1620
        %v1692 = vunpack.c.h.b16 %v1620
        %v1693 = vunpack.c.l.b16 %v1621
        %v1694 = vunpack.c.h.b16 %v1621
        %v1695 = vunpack.c.l.b16 %v1622
        %v1696 = vunpack.c.h.b16 %v1622
        %v1697 = vunpack.c.l.b16 %v1623
        %v1698 = vunpack.c.h.b16 %v1623
        %v1699 = vunpack.c.l.b16 %v1624
        %v1700 = vunpack.c.h.b16 %v1624
        %v1701 = vunpack.c.l.b16 %v1625
        %v1702 = vunpack.c.h.b16 %v1625
        %v1703 = vunpack.c.l.b16 %v1626
        %v1704 = vunpack.c.h.b16 %v1626
        %v1705 = vunpack.c.l.b16 %v1627
        %v1706 = vunpack.c.h.b16 %v1627
        %v1707 = vunpack.c.l.b16 %v1628
        %v1708 = vunpack.c.h.b16 %v1628
        %v1709 = vunpack.c.l.b16 %v1629
        %v1710 = vunpack.c.h.b16 %v1629
        %v1711 = vpack.c.b16 %v1661, %v1659
        %v1712 = vpack.c.b16 %v1662, %v1660
        %v1713 = vpack.c.b16 %v1665, %v1663
        %v1714 = vpack.c.b16 %v1666, %v1664
        %v1715 = vpack.c.b16 %v1669, %v1667
        %v1716 = vpack.c.b16 %v1670, %v1668
        %v1717 = vpack.c.b16 %v1673, %v1671
        %v1718 = vpack.c.b16 %v1674, %v1672
        %v1719 = vpack.c.b16 %v1677, %v1675
        %v1720 = vpack.c.b16 %v1678, %v1676
        %v1721 = vpack.c.b16 %v1681, %v1679
        %v1722 = vpack.c.b16 %v1682, %v1680
        %v1723 = vpack.c.b16 %v1685, %v1683
        %v1724 = vpack.c.b16 %v1686, %v1684
        %v1725 = vpack.c.b16 %v1689, %v1687
        %v1726 = vpack.c.b16 %v1690, %v1688
        %v1727 = vpack.c.b16 %v1693, %v1691
        %v1728 = vpack.c.b16 %v1694, %v1692
        %v1729 = vpack.c.b16 %v1697, %v1695
        %v1730 = vpack.c.b16 %v1698, %v1696
        %v1731 = vpack.c.b16 %v1701, %v1699
        %v1732 = vpack.c.b16 %v1702, %v1700
        %v1733 = vpack.c.b16 %v1705, %v1703
        %v1734 = vpack.c.b16 %v1706, %v1704
        %v1735 = vpack.c.b16 %v1709, %v1707
        %v1736 = vpack.c.b16 %v1710, %v1708
        %v1762 = vsel %vm305, %v1631, 0
        %v1765 = vand.u32 %v1735, %v867
        %v1768 = vand.u32 %v1736, %v867
        %1770 = vmatpush.bf16.msra.mxu0 %v1725
        %1771 = vmatpush.bf16.msra.mxu0 %v1723
        %1772 = vmatpush.bf16.msra.mxu0 %v1721
        %1773 = vmatpush.bf16.msra.mxu0 %v1719
        %1774 = vmatpush.bf16.msra.mxu0 %v1717
        %1775 = vmatpush.bf16.msra.mxu0 %v1715
        %1776 = vmatpush.bf16.msra.mxu0 %v1713
        %1777 = vmatpush.bf16.msra.mxu0 %v1711
        %1778 = vmatmul.bf16.gmra.mxu0 %v1630
        %v1779 = vpop.f32.mrf.mxu0
        %v1780 = vadd.f32 0.0, %v1779
        %v1781 = vpop.f32.mrf.mxu0
        %v1782 = vadd.f32 0.0, %v1781
        %1783 = vdwg.mxu0
        %1784 = vmatpush.bf16.msra.mxu0 0
        %1785 = vmatpush.bf16.msra.mxu0 0
        %1786 = vmatpush.bf16.msra.mxu0 0
        %1787 = vmatpush.bf16.msra.mxu0 %v1765
        %1788 = vmatpush.bf16.msra.mxu0 %v1733
        %1789 = vmatpush.bf16.msra.mxu0 %v1731
        %1790 = vmatpush.bf16.msra.mxu0 %v1729
        %1791 = vmatpush.bf16.msra.mxu0 %v1727
        %1792 = vmatmul.bf16.gmra.mxu0 %v1762
        %v1793 = vpop.f32.mrf.mxu0
        %v1794 = vadd.f32 %v1780, %v1793
        %v1795 = vpop.f32.mrf.mxu0
        %v1796 = vadd.f32 %v1782, %v1795
        %1797 = vdwg.mxu0
        %1798 = vmatpush.bf16.msra.mxu0 %v1726
        %1799 = vmatpush.bf16.msra.mxu0 %v1724
        %1800 = vmatpush.bf16.msra.mxu0 %v1722
        %1801 = vmatpush.bf16.msra.mxu0 %v1720
        %1802 = vmatpush.bf16.msra.mxu0 %v1718
        %1803 = vmatpush.bf16.msra.mxu0 %v1716
        %1804 = vmatpush.bf16.msra.mxu0 %v1714
        %1805 = vmatpush.bf16.msra.mxu0 %v1712
        %1806 = vmatmul.bf16.gmra.mxu0 %v1630
        %v1807 = vpop.f32.mrf.mxu0
        %v1808 = vadd.f32 0.0, %v1807
        %v1809 = vpop.f32.mrf.mxu0
        %v1810 = vadd.f32 0.0, %v1809
        %1811 = vdwg.mxu0
        %1812 = vmatpush.bf16.msra.mxu0 0
        %1813 = vmatpush.bf16.msra.mxu0 0
        %1814 = vmatpush.bf16.msra.mxu0 0
        %1815 = vmatpush.bf16.msra.mxu0 %v1768
        %1816 = vmatpush.bf16.msra.mxu0 %v1734
        %1817 = vmatpush.bf16.msra.mxu0 %v1732
        %1818 = vmatpush.bf16.msra.mxu0 %v1730
        %1819 = vmatpush.bf16.msra.mxu0 %v1728
        %1820 = vmatmul.bf16.gmra.mxu0 %v1762
        %v1821 = vpop.f32.mrf.mxu0
        %v1822 = vadd.f32 %v1808, %v1821
        %v1823 = vpop.f32.mrf.mxu0
        %v1824 = vadd.f32 %v1810, %v1823
        %1825 = vdwg.mxu0
        %v1826 = vadd.f32 %v1599, %v1794
        %v1827 = vadd.f32 %v1600, %v1822
        %v1828 = vadd.f32 %v1601, %v1796
        %v1829 = vadd.f32 %v1602, %v1824
        %s1830 = scalar_lea.vmem [#allocation10], 5200
        %v1831 = vld [vmem:[%s1830] sm:$0xff]
        %v1832 = vld [vmem:[%s1830 + $0x8] sm:$0xff]
        %v1833 = vld [vmem:[%s1830 + $0x10] sm:$0xff]
        %v1834 = vld [vmem:[%s1830 + $0x18] sm:$0xff]
        %v1835 = vld [vmem:[%s1830 + $0x20] sm:$0xff]
        %v1836 = vld [vmem:[%s1830 + $0x28] sm:$0xff]
        %v1837 = vld [vmem:[%s1830 + $0x30] sm:$0xff]
        %v1838 = vld [vmem:[%s1830 + $0x38] sm:$0xff]
        %v1839 = vld [vmem:[%s1830 + $0x40] sm:$0xff]
        %v1840 = vld [vmem:[%s1830 + $0x48] sm:$0xff]
        %v1841 = vld [vmem:[%s1830 + $0x50] sm:$0xff]
        %v1842 = vld [vmem:[%s1830 + $0x58] sm:$0xff]
        %v1843 = vld [vmem:[%s1830 + $0x60] sm:$0xff]
        %v1844 = vld [vmem:[%s1830 + $0x68] sm:$0xff]
        %v1845 = vld [vmem:[%s1830 + $0x70] sm:$0xff]
        %v1846 = vld [vmem:[%s1830 + $0x78] sm:$0xff]
        %v1847 = vld [vmem:[%s1830 + $0x80] sm:$0xff]
        %v1848 = vld [vmem:[%s1830 + $0x88] sm:$0xff]
        %v1849 = vld [vmem:[%s1830 + $0x90] sm:$0xff]
        %v1850 = vld [vmem:[%s1830 + $0x98] sm:$0xff]
        %v1851 = vld [vmem:[%s1830 + $0xa0] sm:$0xff]
        %v1852 = vld [vmem:[%s1830 + $0xa8] sm:$0xff]
        %v1853 = vld [vmem:[%s1830 + $0xb0] sm:$0xff]
        %v1854 = vld [vmem:[%s1830 + $0xb8] sm:$0xff]
        %v1855 = vld [vmem:[%s1830 + $0xc0] sm:$0xff]
        %v1856 = vld [vmem:[%s1830 + $0xc8] sm:$0x11]
        %v1858 = vunpack.c.l.b16 %v630
        %v1859 = vunpack.c.h.b16 %v630
        %v1860 = vpack.c.b16 %v1858, %v1858
        %v1861 = vpack.c.b16 %v1859, %v1859
        %vm1862 = vsmask.f32 7424
        %v1864 = vshrl.u32 %v1630, 16
        %v1866 = vshll.u32 %v1630, 16
        %v1868 = vrot.slane %v1866, 1
        %v1869 = vor.u32 %v1864, %v1868
        %v1871 = vshll.u32 %v1860, 16
        %v1873 = vrot.slane %v1871, 1
        %v1874 = vsel %vm1862, %v1869, %v1873
        %v1875 = vshrl.u32 %v1631, 16
        %v1877 = vshll.u32 %v1631, 16
        %v1879 = vrot.slane %v1877, 1
        %v1880 = vor.u32 %v1875, %v1879
        %v1882 = vshll.u32 %v1861, 16
        %v1884 = vrot.slane %v1882, 1
        %v1885 = vsel %vm1862, %v1880, %v1884
        %v1913 = vunpack.c.l.b16 %v1831
        %v1914 = vunpack.c.h.b16 %v1831
        %v1915 = vunpack.c.l.b16 %v1832
        %v1916 = vunpack.c.h.b16 %v1832
        %v1917 = vunpack.c.l.b16 %v1833
        %v1918 = vunpack.c.h.b16 %v1833
        %v1919 = vunpack.c.l.b16 %v1834
        %v1920 = vunpack.c.h.b16 %v1834
        %v1921 = vunpack.c.l.b16 %v1835
        %v1922 = vunpack.c.h.b16 %v1835
        %v1923 = vunpack.c.l.b16 %v1836
        %v1924 = vunpack.c.h.b16 %v1836
        %v1925 = vunpack.c.l.b16 %v1837
        %v1926 = vunpack.c.h.b16 %v1837
        %v1927 = vunpack.c.l.b16 %v1838
        %v1928 = vunpack.c.h.b16 %v1838
        %v1929 = vunpack.c.l.b16 %v1839
        %v1930 = vunpack.c.h.b16 %v1839
        %v1931 = vunpack.c.l.b16 %v1840
        %v1932 = vunpack.c.h.b16 %v1840
        %v1933 = vunpack.c.l.b16 %v1841
        %v1934 = vunpack.c.h.b16 %v1841
        %v1935 = vunpack.c.l.b16 %v1842
        %v1936 = vunpack.c.h.b16 %v1842
        %v1937 = vunpack.c.l.b16 %v1843
        %v1938 = vunpack.c.h.b16 %v1843
        %v1939 = vunpack.c.l.b16 %v1844
        %v1940 = vunpack.c.h.b16 %v1844
        %v1941 = vunpack.c.l.b16 %v1845
        %v1942 = vunpack.c.h.b16 %v1845
        %v1943 = vunpack.c.l.b16 %v1846
        %v1944 = vunpack.c.h.b16 %v1846
        %v1945 = vunpack.c.l.b16 %v1847
        %v1946 = vunpack.c.h.b16 %v1847
        %v1947 = vunpack.c.l.b16 %v1848
        %v1948 = vunpack.c.h.b16 %v1848
        %v1949 = vunpack.c.l.b16 %v1849
        %v1950 = vunpack.c.h.b16 %v1849
        %v1951 = vunpack.c.l.b16 %v1850
        %v1952 = vunpack.c.h.b16 %v1850
        %v1953 = vunpack.c.l.b16 %v1851
        %v1954 = vunpack.c.h.b16 %v1851
        %v1955 = vunpack.c.l.b16 %v1852
        %v1956 = vunpack.c.h.b16 %v1852
        %v1957 = vunpack.c.l.b16 %v1853
        %v1958 = vunpack.c.h.b16 %v1853
        %v1959 = vunpack.c.l.b16 %v1854
        %v1960 = vunpack.c.h.b16 %v1854
        %v1961 = vunpack.c.l.b16 %v1855
        %v1962 = vunpack.c.h.b16 %v1855
        %v1963 = vunpack.c.l.b16 %v1856
        %v1964 = vunpack.c.h.b16 %v1856
        %v1965 = vpack.c.b16 %v1915, %v1913
        %v1966 = vpack.c.b16 %v1916, %v1914
        %v1967 = vpack.c.b16 %v1919, %v1917
        %v1968 = vpack.c.b16 %v1920, %v1918
        %v1969 = vpack.c.b16 %v1923, %v1921
        %v1970 = vpack.c.b16 %v1924, %v1922
        %v1971 = vpack.c.b16 %v1927, %v1925
        %v1972 = vpack.c.b16 %v1928, %v1926
        %v1973 = vpack.c.b16 %v1931, %v1929
        %v1974 = vpack.c.b16 %v1932, %v1930
        %v1975 = vpack.c.b16 %v1935, %v1933
        %v1976 = vpack.c.b16 %v1936, %v1934
        %v1977 = vpack.c.b16 %v1939, %v1937
        %v1978 = vpack.c.b16 %v1940, %v1938
        %v1979 = vpack.c.b16 %v1943, %v1941
        %v1980 = vpack.c.b16 %v1944, %v1942
        %v1981 = vpack.c.b16 %v1947, %v1945
        %v1982 = vpack.c.b16 %v1948, %v1946
        %v1983 = vpack.c.b16 %v1951, %v1949
        %v1984 = vpack.c.b16 %v1952, %v1950
        %v1985 = vpack.c.b16 %v1955, %v1953
        %v1986 = vpack.c.b16 %v1956, %v1954
        %v1987 = vpack.c.b16 %v1959, %v1957
        %v1988 = vpack.c.b16 %v1960, %v1958
        %v1989 = vpack.c.b16 %v1963, %v1961
        %v1990 = vpack.c.b16 %v1964, %v1962
        %v2016 = vsel %vm305, %v1885, 0
        %v2019 = vand.u32 %v1989, %v867
        %v2022 = vand.u32 %v1990, %v867
        %2024 = vmatpush.bf16.msra.mxu0 %v1979
        %2025 = vmatpush.bf16.msra.mxu0 %v1977
        %2026 = vmatpush.bf16.msra.mxu0 %v1975
        %2027 = vmatpush.bf16.msra.mxu0 %v1973
        %2028 = vmatpush.bf16.msra.mxu0 %v1971
        %2029 = vmatpush.bf16.msra.mxu0 %v1969
        %2030 = vmatpush.bf16.msra.mxu0 %v1967
        %2031 = vmatpush.bf16.msra.mxu0 %v1965
        %2032 = vmatmul.bf16.gmra.mxu0 %v1874
        %v2033 = vpop.f32.mrf.mxu0
        %v2034 = vadd.f32 0.0, %v2033
        %v2035 = vpop.f32.mrf.mxu0
        %v2036 = vadd.f32 0.0, %v2035
        %2037 = vdwg.mxu0
        %2038 = vmatpush.bf16.msra.mxu0 0
        %2039 = vmatpush.bf16.msra.mxu0 0
        %2040 = vmatpush.bf16.msra.mxu0 0
        %2041 = vmatpush.bf16.msra.mxu0 %v2019
        %2042 = vmatpush.bf16.msra.mxu0 %v1987
        %2043 = vmatpush.bf16.msra.mxu0 %v1985
        %2044 = vmatpush.bf16.msra.mxu0 %v1983
        %2045 = vmatpush.bf16.msra.mxu0 %v1981
        %2046 = vmatmul.bf16.gmra.mxu0 %v2016
        %v2047 = vpop.f32.mrf.mxu0
        %v2048 = vadd.f32 %v2034, %v2047
        %v2049 = vpop.f32.mrf.mxu0
        %v2050 = vadd.f32 %v2036, %v2049
        %2051 = vdwg.mxu0
        %2052 = vmatpush.bf16.msra.mxu0 %v1980
        %2053 = vmatpush.bf16.msra.mxu0 %v1978
        %2054 = vmatpush.bf16.msra.mxu0 %v1976
        %2055 = vmatpush.bf16.msra.mxu0 %v1974
        %2056 = vmatpush.bf16.msra.mxu0 %v1972
        %2057 = vmatpush.bf16.msra.mxu0 %v1970
        %2058 = vmatpush.bf16.msra.mxu0 %v1968
        %2059 = vmatpush.bf16.msra.mxu0 %v1966
        %2060 = vmatmul.bf16.gmra.mxu0 %v1874
        %v2061 = vpop.f32.mrf.mxu0
        %v2062 = vadd.f32 0.0, %v2061
        %v2063 = vpop.f32.mrf.mxu0
        %v2064 = vadd.f32 0.0, %v2063
        %2065 = vdwg.mxu0
        %2066 = vmatpush.bf16.msra.mxu0 0
        %2067 = vmatpush.bf16.msra.mxu0 0
        %2068 = vmatpush.bf16.msra.mxu0 0
        %2069 = vmatpush.bf16.msra.mxu0 %v2022
        %2070 = vmatpush.bf16.msra.mxu0 %v1988
        %2071 = vmatpush.bf16.msra.mxu0 %v1986
        %2072 = vmatpush.bf16.msra.mxu0 %v1984
        %2073 = vmatpush.bf16.msra.mxu0 %v1982
        %2074 = vmatmul.bf16.gmra.mxu0 %v2016
        %v2075 = vpop.f32.mrf.mxu0
        %v2076 = vadd.f32 %v2062, %v2075
        %v2077 = vpop.f32.mrf.mxu0
        %v2078 = vadd.f32 %v2064, %v2077
        %2079 = vdwg.mxu0
        %v2080 = vadd.f32 %v1826, %v2048
        %v2081 = vadd.f32 %v1827, %v2076
        %v2082 = vadd.f32 %v1828, %v2050
        %v2083 = vadd.f32 %v1829, %v2078
        %s2084 = scalar_lea.vmem [#allocation10], 6240
        %v2085 = vld [vmem:[%s2084] sm:$0xff]
        %v2086 = vld [vmem:[%s2084 + $0x8] sm:$0xff]
        %v2087 = vld [vmem:[%s2084 + $0x10] sm:$0xff]
        %v2088 = vld [vmem:[%s2084 + $0x18] sm:$0xff]
        %v2089 = vld [vmem:[%s2084 + $0x20] sm:$0xff]
        %v2090 = vld [vmem:[%s2084 + $0x28] sm:$0xff]
        %v2091 = vld [vmem:[%s2084 + $0x30] sm:$0xff]
        %v2092 = vld [vmem:[%s2084 + $0x38] sm:$0xff]
        %v2093 = vld [vmem:[%s2084 + $0x40] sm:$0xff]
        %v2094 = vld [vmem:[%s2084 + $0x48] sm:$0xff]
        %v2095 = vld [vmem:[%s2084 + $0x50] sm:$0xff]
        %v2096 = vld [vmem:[%s2084 + $0x58] sm:$0xff]
        %v2097 = vld [vmem:[%s2084 + $0x60] sm:$0xff]
        %v2098 = vld [vmem:[%s2084 + $0x68] sm:$0xff]
        %v2099 = vld [vmem:[%s2084 + $0x70] sm:$0xff]
        %v2100 = vld [vmem:[%s2084 + $0x78] sm:$0xff]
        %v2101 = vld [vmem:[%s2084 + $0x80] sm:$0xff]
        %v2102 = vld [vmem:[%s2084 + $0x88] sm:$0xff]
        %v2103 = vld [vmem:[%s2084 + $0x90] sm:$0xff]
        %v2104 = vld [vmem:[%s2084 + $0x98] sm:$0xff]
        %v2105 = vld [vmem:[%s2084 + $0xa0] sm:$0xff]
        %v2106 = vld [vmem:[%s2084 + $0xa8] sm:$0xff]
        %v2107 = vld [vmem:[%s2084 + $0xb0] sm:$0xff]
        %v2108 = vld [vmem:[%s2084 + $0xb8] sm:$0xff]
        %v2109 = vld [vmem:[%s2084 + $0xc0] sm:$0xff]
        %v2110 = vld [vmem:[%s2084 + $0xc8] sm:$0x11]
        %vm2111 = vcmask 1046528
        %v2112 = vrot.slane %v1630, 1
        %v2113 = vrot.slane %v1860, 1
        %v2114 = vsel %vm2111, %v2112, %v2113
        %v2115 = vrot.slane %v1631, 1
        %v2116 = vrot.slane %v1861, 1
        %v2117 = vsel %vm2111, %v2115, %v2116
        %v2145 = vunpack.c.l.b16 %v2085
        %v2146 = vunpack.c.h.b16 %v2085
        %v2147 = vunpack.c.l.b16 %v2086
        %v2148 = vunpack.c.h.b16 %v2086
        %v2149 = vunpack.c.l.b16 %v2087
        %v2150 = vunpack.c.h.b16 %v2087
        %v2151 = vunpack.c.l.b16 %v2088
        %v2152 = vunpack.c.h.b16 %v2088
        %v2153 = vunpack.c.l.b16 %v2089
        %v2154 = vunpack.c.h.b16 %v2089
        %v2155 = vunpack.c.l.b16 %v2090
        %v2156 = vunpack.c.h.b16 %v2090
        %v2157 = vunpack.c.l.b16 %v2091
        %v2158 = vunpack.c.h.b16 %v2091
        %v2159 = vunpack.c.l.b16 %v2092
        %v2160 = vunpack.c.h.b16 %v2092
        %v2161 = vunpack.c.l.b16 %v2093
        %v2162 = vunpack.c.h.b16 %v2093
        %v2163 = vunpack.c.l.b16 %v2094
        %v2164 = vunpack.c.h.b16 %v2094
        %v2165 = vunpack.c.l.b16 %v2095
        %v2166 = vunpack.c.h.b16 %v2095
        %v2167 = vunpack.c.l.b16 %v2096
        %v2168 = vunpack.c.h.b16 %v2096
        %v2169 = vunpack.c.l.b16 %v2097
        %v2170 = vunpack.c.h.b16 %v2097
        %v2171 = vunpack.c.l.b16 %v2098
        %v2172 = vunpack.c.h.b16 %v2098
        %v2173 = vunpack.c.l.b16 %v2099
        %v2174 = vunpack.c.h.b16 %v2099
        %v2175 = vunpack.c.l.b16 %v2100
        %v2176 = vunpack.c.h.b16 %v2100
        %v2177 = vunpack.c.l.b16 %v2101
        %v2178 = vunpack.c.h.b16 %v2101
        %v2179 = vunpack.c.l.b16 %v2102
        %v2180 = vunpack.c.h.b16 %v2102
        %v2181 = vunpack.c.l.b16 %v2103
        %v2182 = vunpack.c.h.b16 %v2103
        %v2183 = vunpack.c.l.b16 %v2104
        %v2184 = vunpack.c.h.b16 %v2104
        %v2185 = vunpack.c.l.b16 %v2105
        %v2186 = vunpack.c.h.b16 %v2105
        %v2187 = vunpack.c.l.b16 %v2106
        %v2188 = vunpack.c.h.b16 %v2106
        %v2189 = vunpack.c.l.b16 %v2107
        %v2190 = vunpack.c.h.b16 %v2107
        %v2191 = vunpack.c.l.b16 %v2108
        %v2192 = vunpack.c.h.b16 %v2108
        %v2193 = vunpack.c.l.b16 %v2109
        %v2194 = vunpack.c.h.b16 %v2109
        %v2195 = vunpack.c.l.b16 %v2110
        %v2196 = vunpack.c.h.b16 %v2110
        %v2197 = vpack.c.b16 %v2147, %v2145
        %v2198 = vpack.c.b16 %v2148, %v2146
        %v2199 = vpack.c.b16 %v2151, %v2149
        %v2200 = vpack.c.b16 %v2152, %v2150
        %v2201 = vpack.c.b16 %v2155, %v2153
        %v2202 = vpack.c.b16 %v2156, %v2154
        %v2203 = vpack.c.b16 %v2159, %v2157
        %v2204 = vpack.c.b16 %v2160, %v2158
        %v2205 = vpack.c.b16 %v2163, %v2161
        %v2206 = vpack.c.b16 %v2164, %v2162
        %v2207 = vpack.c.b16 %v2167, %v2165
        %v2208 = vpack.c.b16 %v2168, %v2166
        %v2209 = vpack.c.b16 %v2171, %v2169
        %v2210 = vpack.c.b16 %v2172, %v2170
        %v2211 = vpack.c.b16 %v2175, %v2173
        %v2212 = vpack.c.b16 %v2176, %v2174
        %v2213 = vpack.c.b16 %v2179, %v2177
        %v2214 = vpack.c.b16 %v2180, %v2178
        %v2215 = vpack.c.b16 %v2183, %v2181
        %v2216 = vpack.c.b16 %v2184, %v2182
        %v2217 = vpack.c.b16 %v2187, %v2185
        %v2218 = vpack.c.b16 %v2188, %v2186
        %v2219 = vpack.c.b16 %v2191, %v2189
        %v2220 = vpack.c.b16 %v2192, %v2190
        %v2221 = vpack.c.b16 %v2195, %v2193
        %v2222 = vpack.c.b16 %v2196, %v2194
        %v2248 = vsel %vm305, %v2117, 0
        %v2251 = vand.u32 %v2221, %v867
        %v2254 = vand.u32 %v2222, %v867
        %2256 = vmatpush.bf16.msra.mxu0 %v2211
        %2257 = vmatpush.bf16.msra.mxu0 %v2209
        %2258 = vmatpush.bf16.msra.mxu0 %v2207
        %2259 = vmatpush.bf16.msra.mxu0 %v2205
        %2260 = vmatpush.bf16.msra.mxu0 %v2203
        %2261 = vmatpush.bf16.msra.mxu0 %v2201
        %2262 = vmatpush.bf16.msra.mxu0 %v2199
        %2263 = vmatpush.bf16.msra.mxu0 %v2197
        %2264 = vmatmul.bf16.gmra.mxu0 %v2114
        %v2265 = vpop.f32.mrf.mxu0
        %v2266 = vadd.f32 0.0, %v2265
        %v2267 = vpop.f32.mrf.mxu0
        %v2268 = vadd.f32 0.0, %v2267
        %2269 = vdwg.mxu0
        %2270 = vmatpush.bf16.msra.mxu0 0
        %2271 = vmatpush.bf16.msra.mxu0 0
        %2272 = vmatpush.bf16.msra.mxu0 0
        %2273 = vmatpush.bf16.msra.mxu0 %v2251
        %2274 = vmatpush.bf16.msra.mxu0 %v2219
        %2275 = vmatpush.bf16.msra.mxu0 %v2217
        %2276 = vmatpush.bf16.msra.mxu0 %v2215
        %2277 = vmatpush.bf16.msra.mxu0 %v2213
        %2278 = vmatmul.bf16.gmra.mxu0 %v2248
        %v2279 = vpop.f32.mrf.mxu0
        %v2280 = vadd.f32 %v2266, %v2279
        %v2281 = vpop.f32.mrf.mxu0
        %v2282 = vadd.f32 %v2268, %v2281
        %2283 = vdwg.mxu0
        %2284 = vmatpush.bf16.msra.mxu0 %v2212
        %2285 = vmatpush.bf16.msra.mxu0 %v2210
        %2286 = vmatpush.bf16.msra.mxu0 %v2208
        %2287 = vmatpush.bf16.msra.mxu0 %v2206
        %2288 = vmatpush.bf16.msra.mxu0 %v2204
        %2289 = vmatpush.bf16.msra.mxu0 %v2202
        %2290 = vmatpush.bf16.msra.mxu0 %v2200
        %2291 = vmatpush.bf16.msra.mxu0 %v2198
        %2292 = vmatmul.bf16.gmra.mxu0 %v2114
        %v2293 = vpop.f32.mrf.mxu0
        %v2294 = vadd.f32 0.0, %v2293
        %v2295 = vpop.f32.mrf.mxu0
        %v2296 = vadd.f32 0.0, %v2295
        %2297 = vdwg.mxu0
        %2298 = vmatpush.bf16.msra.mxu0 0
        %2299 = vmatpush.bf16.msra.mxu0 0
        %2300 = vmatpush.bf16.msra.mxu0 0
        %2301 = vmatpush.bf16.msra.mxu0 %v2254
        %2302 = vmatpush.bf16.msra.mxu0 %v2220
        %2303 = vmatpush.bf16.msra.mxu0 %v2218
        %2304 = vmatpush.bf16.msra.mxu0 %v2216
        %2305 = vmatpush.bf16.msra.mxu0 %v2214
        %2306 = vmatmul.bf16.gmra.mxu0 %v2248
        %v2307 = vpop.f32.mrf.mxu0
        %v2308 = vadd.f32 %v2294, %v2307
        %v2309 = vpop.f32.mrf.mxu0
        %v2310 = vadd.f32 %v2296, %v2309
        %2311 = vdwg.mxu0
        %v2312 = vadd.f32 %v2080, %v2280
        %v2313 = vadd.f32 %v2081, %v2308
        %v2314 = vadd.f32 %v2082, %v2282
        %v2315 = vadd.f32 %v2083, %v2310
        %s2316 = scalar_lea.vmem [#allocation10], 7280
        %v2317 = vld [vmem:[%s2316] sm:$0xff]
        %v2318 = vld [vmem:[%s2316 + $0x8] sm:$0xff]
        %v2319 = vld [vmem:[%s2316 + $0x10] sm:$0xff]
        %v2320 = vld [vmem:[%s2316 + $0x18] sm:$0xff]
        %v2321 = vld [vmem:[%s2316 + $0x20] sm:$0xff]
        %v2322 = vld [vmem:[%s2316 + $0x28] sm:$0xff]
        %v2323 = vld [vmem:[%s2316 + $0x30] sm:$0xff]
        %v2324 = vld [vmem:[%s2316 + $0x38] sm:$0xff]
        %v2325 = vld [vmem:[%s2316 + $0x40] sm:$0xff]
        %v2326 = vld [vmem:[%s2316 + $0x48] sm:$0xff]
        %v2327 = vld [vmem:[%s2316 + $0x50] sm:$0xff]
        %v2328 = vld [vmem:[%s2316 + $0x58] sm:$0xff]
        %v2329 = vld [vmem:[%s2316 + $0x60] sm:$0xff]
        %v2330 = vld [vmem:[%s2316 + $0x68] sm:$0xff]
        %v2331 = vld [vmem:[%s2316 + $0x70] sm:$0xff]
        %v2332 = vld [vmem:[%s2316 + $0x78] sm:$0xff]
        %v2333 = vld [vmem:[%s2316 + $0x80] sm:$0xff]
        %v2334 = vld [vmem:[%s2316 + $0x88] sm:$0xff]
        %v2335 = vld [vmem:[%s2316 + $0x90] sm:$0xff]
        %v2336 = vld [vmem:[%s2316 + $0x98] sm:$0xff]
        %v2337 = vld [vmem:[%s2316 + $0xa0] sm:$0xff]
        %v2338 = vld [vmem:[%s2316 + $0xa8] sm:$0xff]
        %v2339 = vld [vmem:[%s2316 + $0xb0] sm:$0xff]
        %v2340 = vld [vmem:[%s2316 + $0xb8] sm:$0xff]
        %v2341 = vld [vmem:[%s2316 + $0xc0] sm:$0xff]
        %v2342 = vld [vmem:[%s2316 + $0xc8] sm:$0x11]
        %vm2343 = vsmask.f32 6400
        %v2344 = vrot.slane %v1864, 1
        %v2345 = vrot.slane %v1866, 2
        %v2346 = vor.u32 %v2344, %v2345
        %v2347 = vshrl.u32 %v1860, 16
        %v2349 = vrot.slane %v2347, 1
        %v2350 = vrot.slane %v1871, 2
        %v2351 = vor.u32 %v2349, %v2350
        %v2352 = vsel %vm2343, %v2346, %v2351
        %v2353 = vrot.slane %v1875, 1
        %v2354 = vrot.slane %v1877, 2
        %v2355 = vor.u32 %v2353, %v2354
        %v2356 = vshrl.u32 %v1861, 16
        %v2358 = vrot.slane %v2356, 1
        %v2359 = vrot.slane %v1882, 2
        %v2360 = vor.u32 %v2358, %v2359
        %v2361 = vsel %vm2343, %v2355, %v2360
        %v2389 = vunpack.c.l.b16 %v2317
        %v2390 = vunpack.c.h.b16 %v2317
        %v2391 = vunpack.c.l.b16 %v2318
        %v2392 = vunpack.c.h.b16 %v2318
        %v2393 = vunpack.c.l.b16 %v2319
        %v2394 = vunpack.c.h.b16 %v2319
        %v2395 = vunpack.c.l.b16 %v2320
        %v2396 = vunpack.c.h.b16 %v2320
        %v2397 = vunpack.c.l.b16 %v2321
        %v2398 = vunpack.c.h.b16 %v2321
        %v2399 = vunpack.c.l.b16 %v2322
        %v2400 = vunpack.c.h.b16 %v2322
        %v2401 = vunpack.c.l.b16 %v2323
        %v2402 = vunpack.c.h.b16 %v2323
        %v2403 = vunpack.c.l.b16 %v2324
        %v2404 = vunpack.c.h.b16 %v2324
        %v2405 = vunpack.c.l.b16 %v2325
        %v2406 = vunpack.c.h.b16 %v2325
        %v2407 = vunpack.c.l.b16 %v2326
        %v2408 = vunpack.c.h.b16 %v2326
        %v2409 = vunpack.c.l.b16 %v2327
        %v2410 = vunpack.c.h.b16 %v2327
        %v2411 = vunpack.c.l.b16 %v2328
        %v2412 = vunpack.c.h.b16 %v2328
        %v2413 = vunpack.c.l.b16 %v2329
        %v2414 = vunpack.c.h.b16 %v2329
        %v2415 = vunpack.c.l.b16 %v2330
        %v2416 = vunpack.c.h.b16 %v2330
        %v2417 = vunpack.c.l.b16 %v2331
        %v2418 = vunpack.c.h.b16 %v2331
        %v2419 = vunpack.c.l.b16 %v2332
        %v2420 = vunpack.c.h.b16 %v2332
        %v2421 = vunpack.c.l.b16 %v2333
        %v2422 = vunpack.c.h.b16 %v2333
        %v2423 = vunpack.c.l.b16 %v2334
        %v2424 = vunpack.c.h.b16 %v2334
        %v2425 = vunpack.c.l.b16 %v2335
        %v2426 = vunpack.c.h.b16 %v2335
        %v2427 = vunpack.c.l.b16 %v2336
        %v2428 = vunpack.c.h.b16 %v2336
        %v2429 = vunpack.c.l.b16 %v2337
        %v2430 = vunpack.c.h.b16 %v2337
        %v2431 = vunpack.c.l.b16 %v2338
        %v2432 = vunpack.c.h.b16 %v2338
        %v2433 = vunpack.c.l.b16 %v2339
        %v2434 = vunpack.c.h.b16 %v2339
        %v2435 = vunpack.c.l.b16 %v2340
        %v2436 = vunpack.c.h.b16 %v2340
        %v2437 = vunpack.c.l.b16 %v2341
        %v2438 = vunpack.c.h.b16 %v2341
        %v2439 = vunpack.c.l.b16 %v2342
        %v2440 = vunpack.c.h.b16 %v2342
        %v2441 = vpack.c.b16 %v2391, %v2389
        %v2442 = vpack.c.b16 %v2392, %v2390
        %v2443 = vpack.c.b16 %v2395, %v2393
        %v2444 = vpack.c.b16 %v2396, %v2394
        %v2445 = vpack.c.b16 %v2399, %v2397
        %v2446 = vpack.c.b16 %v2400, %v2398
        %v2447 = vpack.c.b16 %v2403, %v2401
        %v2448 = vpack.c.b16 %v2404, %v2402
        %v2449 = vpack.c.b16 %v2407, %v2405
        %v2450 = vpack.c.b16 %v2408, %v2406
        %v2451 = vpack.c.b16 %v2411, %v2409
        %v2452 = vpack.c.b16 %v2412, %v2410
        %v2453 = vpack.c.b16 %v2415, %v2413
        %v2454 = vpack.c.b16 %v2416, %v2414
        %v2455 = vpack.c.b16 %v2419, %v2417
        %v2456 = vpack.c.b16 %v2420, %v2418
        %v2457 = vpack.c.b16 %v2423, %v2421
        %v2458 = vpack.c.b16 %v2424, %v2422
        %v2459 = vpack.c.b16 %v2427, %v2425
        %v2460 = vpack.c.b16 %v2428, %v2426
        %v2461 = vpack.c.b16 %v2431, %v2429
        %v2462 = vpack.c.b16 %v2432, %v2430
        %v2463 = vpack.c.b16 %v2435, %v2433
        %v2464 = vpack.c.b16 %v2436, %v2434
        %v2465 = vpack.c.b16 %v2439, %v2437
        %v2466 = vpack.c.b16 %v2440, %v2438
        %v2492 = vsel %vm305, %v2361, 0
        %v2495 = vand.u32 %v2465, %v867
        %v2498 = vand.u32 %v2466, %v867
        %2500 = vmatpush.bf16.msra.mxu0 %v2455
        %2501 = vmatpush.bf16.msra.mxu0 %v2453
        %2502 = vmatpush.bf16.msra.mxu0 %v2451
        %2503 = vmatpush.bf16.msra.mxu0 %v2449
        %2504 = vmatpush.bf16.msra.mxu0 %v2447
        %2505 = vmatpush.bf16.msra.mxu0 %v2445
        %2506 = vmatpush.bf16.msra.mxu0 %v2443
        %2507 = vmatpush.bf16.msra.mxu0 %v2441
        %2508 = vmatmul.bf16.gmra.mxu0 %v2352
        %v2509 = vpop.f32.mrf.mxu0
        %v2510 = vadd.f32 0.0, %v2509
        %v2511 = vpop.f32.mrf.mxu0
        %v2512 = vadd.f32 0.0, %v2511
        %2513 = vdwg.mxu0
        %2514 = vmatpush.bf16.msra.mxu0 0
        %2515 = vmatpush.bf16.msra.mxu0 0
        %2516 = vmatpush.bf16.msra.mxu0 0
        %2517 = vmatpush.bf16.msra.mxu0 %v2495
        %2518 = vmatpush.bf16.msra.mxu0 %v2463
        %2519 = vmatpush.bf16.msra.mxu0 %v2461
        %2520 = vmatpush.bf16.msra.mxu0 %v2459
        %2521 = vmatpush.bf16.msra.mxu0 %v2457
        %2522 = vmatmul.bf16.gmra.mxu0 %v2492
        %v2523 = vpop.f32.mrf.mxu0
        %v2524 = vadd.f32 %v2510, %v2523
        %v2525 = vpop.f32.mrf.mxu0
        %v2526 = vadd.f32 %v2512, %v2525
        %2527 = vdwg.mxu0
        %2528 = vmatpush.bf16.msra.mxu0 %v2456
        %2529 = vmatpush.bf16.msra.mxu0 %v2454
        %2530 = vmatpush.bf16.msra.mxu0 %v2452
        %2531 = vmatpush.bf16.msra.mxu0 %v2450
        %2532 = vmatpush.bf16.msra.mxu0 %v2448
        %2533 = vmatpush.bf16.msra.mxu0 %v2446
        %2534 = vmatpush.bf16.msra.mxu0 %v2444
        %2535 = vmatpush.bf16.msra.mxu0 %v2442
        %2536 = vmatmul.bf16.gmra.mxu0 %v2352
        %v2537 = vpop.f32.mrf.mxu0
        %v2538 = vadd.f32 0.0, %v2537
        %v2539 = vpop.f32.mrf.mxu0
        %v2540 = vadd.f32 0.0, %v2539
        %2541 = vdwg.mxu0
        %2542 = vmatpush.bf16.msra.mxu0 0
        %2543 = vmatpush.bf16.msra.mxu0 0
        %2544 = vmatpush.bf16.msra.mxu0 0
        %2545 = vmatpush.bf16.msra.mxu0 %v2498
        %2546 = vmatpush.bf16.msra.mxu0 %v2464
        %2547 = vmatpush.bf16.msra.mxu0 %v2462
        %2548 = vmatpush.bf16.msra.mxu0 %v2460
        %2549 = vmatpush.bf16.msra.mxu0 %v2458
        %2550 = vmatmul.bf16.gmra.mxu0 %v2492
        %v2551 = vpop.f32.mrf.mxu0
        %v2552 = vadd.f32 %v2538, %v2551
        %v2553 = vpop.f32.mrf.mxu0
        %v2554 = vadd.f32 %v2540, %v2553
        %2555 = vdwg.mxu0
        %v2556 = vadd.f32 %v2312, %v2524
        %v2557 = vadd.f32 %v2313, %v2552
        %v2558 = vadd.f32 %v2314, %v2526
        %v2559 = vadd.f32 %v2315, %v2554
        %s2560 = scalar_lea.vmem [#allocation10], 8320
        %v2561 = vld [vmem:[%s2560] sm:$0xff]
        %v2562 = vld [vmem:[%s2560 + $0x8] sm:$0xff]
        %v2563 = vld [vmem:[%s2560 + $0x10] sm:$0xff]
        %v2564 = vld [vmem:[%s2560 + $0x18] sm:$0xff]
        %v2565 = vld [vmem:[%s2560 + $0x20] sm:$0xff]
        %v2566 = vld [vmem:[%s2560 + $0x28] sm:$0xff]
        %v2567 = vld [vmem:[%s2560 + $0x30] sm:$0xff]
        %v2568 = vld [vmem:[%s2560 + $0x38] sm:$0xff]
        %v2569 = vld [vmem:[%s2560 + $0x40] sm:$0xff]
        %v2570 = vld [vmem:[%s2560 + $0x48] sm:$0xff]
        %v2571 = vld [vmem:[%s2560 + $0x50] sm:$0xff]
        %v2572 = vld [vmem:[%s2560 + $0x58] sm:$0xff]
        %v2573 = vld [vmem:[%s2560 + $0x60] sm:$0xff]
        %v2574 = vld [vmem:[%s2560 + $0x68] sm:$0xff]
        %v2575 = vld [vmem:[%s2560 + $0x70] sm:$0xff]
        %v2576 = vld [vmem:[%s2560 + $0x78] sm:$0xff]
        %v2577 = vld [vmem:[%s2560 + $0x80] sm:$0xff]
        %v2578 = vld [vmem:[%s2560 + $0x88] sm:$0xff]
        %v2579 = vld [vmem:[%s2560 + $0x90] sm:$0xff]
        %v2580 = vld [vmem:[%s2560 + $0x98] sm:$0xff]
        %v2581 = vld [vmem:[%s2560 + $0xa0] sm:$0xff]
        %v2582 = vld [vmem:[%s2560 + $0xa8] sm:$0xff]
        %v2583 = vld [vmem:[%s2560 + $0xb0] sm:$0xff]
        %v2584 = vld [vmem:[%s2560 + $0xb8] sm:$0xff]
        %v2585 = vld [vmem:[%s2560 + $0xc0] sm:$0xff]
        %v2586 = vld [vmem:[%s2560 + $0xc8] sm:$0x11]
        %v2587 = vrot.slane %v1630, 2
        %v2588 = vrot.slane %v1860, 2
        %v2589 = vsel %vm930, %v2587, %v2588
        %v2590 = vrot.slane %v1631, 2
        %v2591 = vrot.slane %v1861, 2
        %v2592 = vsel %vm930, %v2590, %v2591
        %v2620 = vunpack.c.l.b16 %v2561
        %v2621 = vunpack.c.h.b16 %v2561
        %v2622 = vunpack.c.l.b16 %v2562
        %v2623 = vunpack.c.h.b16 %v2562
        %v2624 = vunpack.c.l.b16 %v2563
        %v2625 = vunpack.c.h.b16 %v2563
        %v2626 = vunpack.c.l.b16 %v2564
        %v2627 = vunpack.c.h.b16 %v2564
        %v2628 = vunpack.c.l.b16 %v2565
        %v2629 = vunpack.c.h.b16 %v2565
        %v2630 = vunpack.c.l.b16 %v2566
        %v2631 = vunpack.c.h.b16 %v2566
        %v2632 = vunpack.c.l.b16 %v2567
        %v2633 = vunpack.c.h.b16 %v2567
        %v2634 = vunpack.c.l.b16 %v2568
        %v2635 = vunpack.c.h.b16 %v2568
        %v2636 = vunpack.c.l.b16 %v2569
        %v2637 = vunpack.c.h.b16 %v2569
        %v2638 = vunpack.c.l.b16 %v2570
        %v2639 = vunpack.c.h.b16 %v2570
        %v2640 = vunpack.c.l.b16 %v2571
        %v2641 = vunpack.c.h.b16 %v2571
        %v2642 = vunpack.c.l.b16 %v2572
        %v2643 = vunpack.c.h.b16 %v2572
        %v2644 = vunpack.c.l.b16 %v2573
        %v2645 = vunpack.c.h.b16 %v2573
        %v2646 = vunpack.c.l.b16 %v2574
        %v2647 = vunpack.c.h.b16 %v2574
        %v2648 = vunpack.c.l.b16 %v2575
        %v2649 = vunpack.c.h.b16 %v2575
        %v2650 = vunpack.c.l.b16 %v2576
        %v2651 = vunpack.c.h.b16 %v2576
        %v2652 = vunpack.c.l.b16 %v2577
        %v2653 = vunpack.c.h.b16 %v2577
        %v2654 = vunpack.c.l.b16 %v2578
        %v2655 = vunpack.c.h.b16 %v2578
        %v2656 = vunpack.c.l.b16 %v2579
        %v2657 = vunpack.c.h.b16 %v2579
        %v2658 = vunpack.c.l.b16 %v2580
        %v2659 = vunpack.c.h.b16 %v2580
        %v2660 = vunpack.c.l.b16 %v2581
        %v2661 = vunpack.c.h.b16 %v2581
        %v2662 = vunpack.c.l.b16 %v2582
        %v2663 = vunpack.c.h.b16 %v2582
        %v2664 = vunpack.c.l.b16 %v2583
        %v2665 = vunpack.c.h.b16 %v2583
        %v2666 = vunpack.c.l.b16 %v2584
        %v2667 = vunpack.c.h.b16 %v2584
        %v2668 = vunpack.c.l.b16 %v2585
        %v2669 = vunpack.c.h.b16 %v2585
        %v2670 = vunpack.c.l.b16 %v2586
        %v2671 = vunpack.c.h.b16 %v2586
        %v2672 = vpack.c.b16 %v2622, %v2620
        %v2673 = vpack.c.b16 %v2623, %v2621
        %v2674 = vpack.c.b16 %v2626, %v2624
        %v2675 = vpack.c.b16 %v2627, %v2625
        %v2676 = vpack.c.b16 %v2630, %v2628
        %v2677 = vpack.c.b16 %v2631, %v2629
        %v2678 = vpack.c.b16 %v2634, %v2632
        %v2679 = vpack.c.b16 %v2635, %v2633
        %v2680 = vpack.c.b16 %v2638, %v2636
        %v2681 = vpack.c.b16 %v2639, %v2637
        %v2682 = vpack.c.b16 %v2642, %v2640
        %v2683 = vpack.c.b16 %v2643, %v2641
        %v2684 = vpack.c.b16 %v2646, %v2644
        %v2685 = vpack.c.b16 %v2647, %v2645
        %v2686 = vpack.c.b16 %v2650, %v2648
        %v2687 = vpack.c.b16 %v2651, %v2649
        %v2688 = vpack.c.b16 %v2654, %v2652
        %v2689 = vpack.c.b16 %v2655, %v2653
        %v2690 = vpack.c.b16 %v2658, %v2656
        %v2691 = vpack.c.b16 %v2659, %v2657
        %v2692 = vpack.c.b16 %v2662, %v2660
        %v2693 = vpack.c.b16 %v2663, %v2661
        %v2694 = vpack.c.b16 %v2666, %v2664
        %v2695 = vpack.c.b16 %v2667, %v2665
        %v2696 = vpack.c.b16 %v2670, %v2668
        %v2697 = vpack.c.b16 %v2671, %v2669
        %v2723 = vsel %vm305, %v2592, 0
        %v2726 = vand.u32 %v2696, %v867
        %v2729 = vand.u32 %v2697, %v867
        %2731 = vmatpush.bf16.msra.mxu0 %v2686
        %2732 = vmatpush.bf16.msra.mxu0 %v2684
        %2733 = vmatpush.bf16.msra.mxu0 %v2682
        %2734 = vmatpush.bf16.msra.mxu0 %v2680
        %2735 = vmatpush.bf16.msra.mxu0 %v2678
        %2736 = vmatpush.bf16.msra.mxu0 %v2676
        %2737 = vmatpush.bf16.msra.mxu0 %v2674
        %2738 = vmatpush.bf16.msra.mxu0 %v2672
        %2739 = vmatmul.bf16.gmra.mxu0 %v2589
        %v2740 = vpop.f32.mrf.mxu0
        %v2741 = vadd.f32 0.0, %v2740
        %v2742 = vpop.f32.mrf.mxu0
        %v2743 = vadd.f32 0.0, %v2742
        %2744 = vdwg.mxu0
        %2745 = vmatpush.bf16.msra.mxu0 0
        %2746 = vmatpush.bf16.msra.mxu0 0
        %2747 = vmatpush.bf16.msra.mxu0 0
        %2748 = vmatpush.bf16.msra.mxu0 %v2726
        %2749 = vmatpush.bf16.msra.mxu0 %v2694
        %2750 = vmatpush.bf16.msra.mxu0 %v2692
        %2751 = vmatpush.bf16.msra.mxu0 %v2690
        %2752 = vmatpush.bf16.msra.mxu0 %v2688
        %2753 = vmatmul.bf16.gmra.mxu0 %v2723
        %v2754 = vpop.f32.mrf.mxu0
        %v2755 = vadd.f32 %v2741, %v2754
        %v2756 = vpop.f32.mrf.mxu0
        %v2757 = vadd.f32 %v2743, %v2756
        %2758 = vdwg.mxu0
        %2759 = vmatpush.bf16.msra.mxu0 %v2687
        %2760 = vmatpush.bf16.msra.mxu0 %v2685
        %2761 = vmatpush.bf16.msra.mxu0 %v2683
        %2762 = vmatpush.bf16.msra.mxu0 %v2681
        %2763 = vmatpush.bf16.msra.mxu0 %v2679
        %2764 = vmatpush.bf16.msra.mxu0 %v2677
        %2765 = vmatpush.bf16.msra.mxu0 %v2675
        %2766 = vmatpush.bf16.msra.mxu0 %v2673
        %2767 = vmatmul.bf16.gmra.mxu0 %v2589
        %v2768 = vpop.f32.mrf.mxu0
        %v2769 = vadd.f32 0.0, %v2768
        %v2770 = vpop.f32.mrf.mxu0
        %v2771 = vadd.f32 0.0, %v2770
        %2772 = vdwg.mxu0
        %2773 = vmatpush.bf16.msra.mxu0 0
        %2774 = vmatpush.bf16.msra.mxu0 0
        %2775 = vmatpush.bf16.msra.mxu0 0
        %2776 = vmatpush.bf16.msra.mxu0 %v2729
        %2777 = vmatpush.bf16.msra.mxu0 %v2695
        %2778 = vmatpush.bf16.msra.mxu0 %v2693
        %2779 = vmatpush.bf16.msra.mxu0 %v2691
        %2780 = vmatpush.bf16.msra.mxu0 %v2689
        %2781 = vmatmul.bf16.gmra.mxu0 %v2723
        %v2782 = vpop.f32.mrf.mxu0
        %v2783 = vadd.f32 %v2769, %v2782
        %v2784 = vpop.f32.mrf.mxu0
        %v2785 = vadd.f32 %v2771, %v2784
        %2786 = vdwg.mxu0
        %v2787 = vadd.f32 %v2556, %v2755
        %v2788 = vadd.f32 %v2557, %v2783
        %v2789 = vadd.f32 %v2558, %v2757
        %v2790 = vadd.f32 %v2559, %v2785
        %v2791 = vld [vmem:[%s461] sm:$0xff]
        %v2792 = vld [vmem:[%s461 + $0x8] sm:$0xff]
        %v2793 = vld [vmem:[%s461 + $0x10] sm:$0xff]
        %v2794 = vld [vmem:[%s461 + $0x18] sm:$0xff]
        %v2795 = vld [vmem:[%s461 + $0x20] sm:$0xff]
        %v2796 = vld [vmem:[%s461 + $0x28] sm:$0xff]
        %v2797 = vld [vmem:[%s461 + $0x30] sm:$0xf]
        %v2798 = vld [vmem:[%s461 + $0x38] sm:$0xf]
        %v2799 = vpack.c.bf16 %v2792, %v2791
        %v2800 = vpack.c.bf16 %v2794, %v2793
        %v2801 = vpack.c.bf16 %v2796, %v2795
        %v2802 = vpack.c.bf16 %v2798, %v2797
        %s2803 = scalar_lea.vmem [#allocation10], 208
        %v2804 = vld [vmem:[%s2803] sm:$0xff]
        %v2805 = vld [vmem:[%s2803 + $0x8] sm:$0xff]
        %v2806 = vld [vmem:[%s2803 + $0x10] sm:$0xff]
        %v2807 = vld [vmem:[%s2803 + $0x18] sm:$0xff]
        %v2808 = vld [vmem:[%s2803 + $0x20] sm:$0xff]
        %v2809 = vld [vmem:[%s2803 + $0x28] sm:$0xff]
        %v2810 = vld [vmem:[%s2803 + $0x30] sm:$0xff]
        %v2811 = vld [vmem:[%s2803 + $0x38] sm:$0xff]
        %v2812 = vld [vmem:[%s2803 + $0x40] sm:$0xff]
        %v2813 = vld [vmem:[%s2803 + $0x48] sm:$0xff]
        %v2814 = vld [vmem:[%s2803 + $0x50] sm:$0xff]
        %v2815 = vld [vmem:[%s2803 + $0x58] sm:$0xff]
        %v2816 = vld [vmem:[%s2803 + $0x60] sm:$0xff]
        %v2817 = vld [vmem:[%s2803 + $0x68] sm:$0xff]
        %v2818 = vld [vmem:[%s2803 + $0x70] sm:$0xff]
        %v2819 = vld [vmem:[%s2803 + $0x78] sm:$0xff]
        %v2820 = vld [vmem:[%s2803 + $0x80] sm:$0xff]
        %v2821 = vld [vmem:[%s2803 + $0x88] sm:$0xff]
        %v2822 = vld [vmem:[%s2803 + $0x90] sm:$0xff]
        %v2823 = vld [vmem:[%s2803 + $0x98] sm:$0xff]
        %v2824 = vld [vmem:[%s2803 + $0xa0] sm:$0xff]
        %v2825 = vld [vmem:[%s2803 + $0xa8] sm:$0xff]
        %v2826 = vld [vmem:[%s2803 + $0xb0] sm:$0xff]
        %v2827 = vld [vmem:[%s2803 + $0xb8] sm:$0xff]
        %v2828 = vld [vmem:[%s2803 + $0xc0] sm:$0xff]
        %v2829 = vld [vmem:[%s2803 + $0xc8] sm:$0x11]
        %v2833 = vunpack.c.l.b16 %v2799
        %v2834 = vunpack.c.h.b16 %v2799
        %v2835 = vunpack.c.l.b16 %v2800
        %v2836 = vunpack.c.h.b16 %v2800
        %v2837 = vunpack.c.l.b16 %v2801
        %v2838 = vunpack.c.h.b16 %v2801
        %v2839 = vpack.c.b16 %v2835, %v2833
        %v2840 = vpack.c.b16 %v2836, %v2834
        %v2841 = vpack.c.b16 %v2837, %v2837
        %v2842 = vpack.c.b16 %v2838, %v2838
        %v2843 = vrot.slane %v2839, 2
        %v2844 = vrot.slane %v2841, 2
        %v2845 = vsel %vm930, %v2843, %v2844
        %v2846 = vrot.slane %v2840, 2
        %v2847 = vrot.slane %v2842, 2
        %v2848 = vsel %vm930, %v2846, %v2847
        %v2876 = vunpack.c.l.b16 %v2804
        %v2877 = vunpack.c.h.b16 %v2804
        %v2878 = vunpack.c.l.b16 %v2805
        %v2879 = vunpack.c.h.b16 %v2805
        %v2880 = vunpack.c.l.b16 %v2806
        %v2881 = vunpack.c.h.b16 %v2806
        %v2882 = vunpack.c.l.b16 %v2807
        %v2883 = vunpack.c.h.b16 %v2807
        %v2884 = vunpack.c.l.b16 %v2808
        %v2885 = vunpack.c.h.b16 %v2808
        %v2886 = vunpack.c.l.b16 %v2809
        %v2887 = vunpack.c.h.b16 %v2809
        %v2888 = vunpack.c.l.b16 %v2810
        %v2889 = vunpack.c.h.b16 %v2810
        %v2890 = vunpack.c.l.b16 %v2811
        %v2891 = vunpack.c.h.b16 %v2811
        %v2892 = vunpack.c.l.b16 %v2812
        %v2893 = vunpack.c.h.b16 %v2812
        %v2894 = vunpack.c.l.b16 %v2813
        %v2895 = vunpack.c.h.b16 %v2813
        %v2896 = vunpack.c.l.b16 %v2814
        %v2897 = vunpack.c.h.b16 %v2814
        %v2898 = vunpack.c.l.b16 %v2815
        %v2899 = vunpack.c.h.b16 %v2815
        %v2900 = vunpack.c.l.b16 %v2816
        %v2901 = vunpack.c.h.b16 %v2816
        %v2902 = vunpack.c.l.b16 %v2817
        %v2903 = vunpack.c.h.b16 %v2817
        %v2904 = vunpack.c.l.b16 %v2818
        %v2905 = vunpack.c.h.b16 %v2818
        %v2906 = vunpack.c.l.b16 %v2819
        %v2907 = vunpack.c.h.b16 %v2819
        %v2908 = vunpack.c.l.b16 %v2820
        %v2909 = vunpack.c.h.b16 %v2820
        %v2910 = vunpack.c.l.b16 %v2821
        %v2911 = vunpack.c.h.b16 %v2821
        %v2912 = vunpack.c.l.b16 %v2822
        %v2913 = vunpack.c.h.b16 %v2822
        %v2914 = vunpack.c.l.b16 %v2823
        %v2915 = vunpack.c.h.b16 %v2823
        %v2916 = vunpack.c.l.b16 %v2824
        %v2917 = vunpack.c.h.b16 %v2824
        %v2918 = vunpack.c.l.b16 %v2825
        %v2919 = vunpack.c.h.b16 %v2825
        %v2920 = vunpack.c.l.b16 %v2826
        %v2921 = vunpack.c.h.b16 %v2826
        %v2922 = vunpack.c.l.b16 %v2827
        %v2923 = vunpack.c.h.b16 %v2827
        %v2924 = vunpack.c.l.b16 %v2828
        %v2925 = vunpack.c.h.b16 %v2828
        %v2926 = vunpack.c.l.b16 %v2829
        %v2927 = vunpack.c.h.b16 %v2829
        %v2928 = vpack.c.b16 %v2878, %v2876
        %v2929 = vpack.c.b16 %v2879, %v2877
        %v2930 = vpack.c.b16 %v2882, %v2880
        %v2931 = vpack.c.b16 %v2883, %v2881
        %v2932 = vpack.c.b16 %v2886, %v2884
        %v2933 = vpack.c.b16 %v2887, %v2885
        %v2934 = vpack.c.b16 %v2890, %v2888
        %v2935 = vpack.c.b16 %v2891, %v2889
        %v2936 = vpack.c.b16 %v2894, %v2892
        %v2937 = vpack.c.b16 %v2895, %v2893
        %v2938 = vpack.c.b16 %v2898, %v2896
        %v2939 = vpack.c.b16 %v2899, %v2897
        %v2940 = vpack.c.b16 %v2902, %v2900
        %v2941 = vpack.c.b16 %v2903, %v2901
        %v2942 = vpack.c.b16 %v2906, %v2904
        %v2943 = vpack.c.b16 %v2907, %v2905
        %v2944 = vpack.c.b16 %v2910, %v2908
        %v2945 = vpack.c.b16 %v2911, %v2909
        %v2946 = vpack.c.b16 %v2914, %v2912
        %v2947 = vpack.c.b16 %v2915, %v2913
        %v2948 = vpack.c.b16 %v2918, %v2916
        %v2949 = vpack.c.b16 %v2919, %v2917
        %v2950 = vpack.c.b16 %v2922, %v2920
        %v2951 = vpack.c.b16 %v2923, %v2921
        %v2952 = vpack.c.b16 %v2926, %v2924
        %v2953 = vpack.c.b16 %v2927, %v2925
        %v2979 = vsel %vm305, %v2848, 0
        %v2982 = vand.u32 %v2952, %v867
        %v2985 = vand.u32 %v2953, %v867
        %2987 = vmatpush.bf16.msra.mxu0 %v2942
        %2988 = vmatpush.bf16.msra.mxu0 %v2940
        %2989 = vmatpush.bf16.msra.mxu0 %v2938
        %2990 = vmatpush.bf16.msra.mxu0 %v2936
        %2991 = vmatpush.bf16.msra.mxu0 %v2934
        %2992 = vmatpush.bf16.msra.mxu0 %v2932
        %2993 = vmatpush.bf16.msra.mxu0 %v2930
        %2994 = vmatpush.bf16.msra.mxu0 %v2928
        %2995 = vmatmul.bf16.gmra.mxu0 %v2845
        %v2996 = vpop.f32.mrf.mxu0
        %v2997 = vadd.f32 0.0, %v2996
        %v2998 = vpop.f32.mrf.mxu0
        %v2999 = vadd.f32 0.0, %v2998
        %3000 = vdwg.mxu0
        %3001 = vmatpush.bf16.msra.mxu0 0
        %3002 = vmatpush.bf16.msra.mxu0 0
        %3003 = vmatpush.bf16.msra.mxu0 0
        %3004 = vmatpush.bf16.msra.mxu0 %v2982
        %3005 = vmatpush.bf16.msra.mxu0 %v2950
        %3006 = vmatpush.bf16.msra.mxu0 %v2948
        %3007 = vmatpush.bf16.msra.mxu0 %v2946
        %3008 = vmatpush.bf16.msra.mxu0 %v2944
        %3009 = vmatmul.bf16.gmra.mxu0 %v2979
        %v3010 = vpop.f32.mrf.mxu0
        %v3011 = vadd.f32 %v2997, %v3010
        %v3012 = vpop.f32.mrf.mxu0
        %v3013 = vadd.f32 %v2999, %v3012
        %3014 = vdwg.mxu0
        %3015 = vmatpush.bf16.msra.mxu0 %v2943
        %3016 = vmatpush.bf16.msra.mxu0 %v2941
        %3017 = vmatpush.bf16.msra.mxu0 %v2939
        %3018 = vmatpush.bf16.msra.mxu0 %v2937
        %3019 = vmatpush.bf16.msra.mxu0 %v2935
        %3020 = vmatpush.bf16.msra.mxu0 %v2933
        %3021 = vmatpush.bf16.msra.mxu0 %v2931
        %3022 = vmatpush.bf16.msra.mxu0 %v2929
        %3023 = vmatmul.bf16.gmra.mxu0 %v2845
        %v3024 = vpop.f32.mrf.mxu0
        %v3025 = vadd.f32 0.0, %v3024
        %v3026 = vpop.f32.mrf.mxu0
        %v3027 = vadd.f32 0.0, %v3026
        %3028 = vdwg.mxu0
        %3029 = vmatpush.bf16.msra.mxu0 0
        %3030 = vmatpush.bf16.msra.mxu0 0
        %3031 = vmatpush.bf16.msra.mxu0 0
        %3032 = vmatpush.bf16.msra.mxu0 %v2985
        %3033 = vmatpush.bf16.msra.mxu0 %v2951
        %3034 = vmatpush.bf16.msra.mxu0 %v2949
        %3035 = vmatpush.bf16.msra.mxu0 %v2947
        %3036 = vmatpush.bf16.msra.mxu0 %v2945
        %3037 = vmatmul.bf16.gmra.mxu0 %v2979
        %v3038 = vpop.f32.mrf.mxu0
        %v3039 = vadd.f32 %v3025, %v3038
        %v3040 = vpop.f32.mrf.mxu0
        %v3041 = vadd.f32 %v3027, %v3040
        %3042 = vdwg.mxu0
        %v3043 = vadd.f32 %v2787, %v3011
        %v3044 = vadd.f32 %v2788, %v3039
        %v3045 = vadd.f32 %v2789, %v3013
        %v3046 = vadd.f32 %v2790, %v3041
        %s3047 = scalar_lea.vmem [#allocation10], 1248
        %v3048 = vld [vmem:[%s3047] sm:$0xff]
        %v3049 = vld [vmem:[%s3047 + $0x8] sm:$0xff]
        %v3050 = vld [vmem:[%s3047 + $0x10] sm:$0xff]
        %v3051 = vld [vmem:[%s3047 + $0x18] sm:$0xff]
        %v3052 = vld [vmem:[%s3047 + $0x20] sm:$0xff]
        %v3053 = vld [vmem:[%s3047 + $0x28] sm:$0xff]
        %v3054 = vld [vmem:[%s3047 + $0x30] sm:$0xff]
        %v3055 = vld [vmem:[%s3047 + $0x38] sm:$0xff]
        %v3056 = vld [vmem:[%s3047 + $0x40] sm:$0xff]
        %v3057 = vld [vmem:[%s3047 + $0x48] sm:$0xff]
        %v3058 = vld [vmem:[%s3047 + $0x50] sm:$0xff]
        %v3059 = vld [vmem:[%s3047 + $0x58] sm:$0xff]
        %v3060 = vld [vmem:[%s3047 + $0x60] sm:$0xff]
        %v3061 = vld [vmem:[%s3047 + $0x68] sm:$0xff]
        %v3062 = vld [vmem:[%s3047 + $0x70] sm:$0xff]
        %v3063 = vld [vmem:[%s3047 + $0x78] sm:$0xff]
        %v3064 = vld [vmem:[%s3047 + $0x80] sm:$0xff]
        %v3065 = vld [vmem:[%s3047 + $0x88] sm:$0xff]
        %v3066 = vld [vmem:[%s3047 + $0x90] sm:$0xff]
        %v3067 = vld [vmem:[%s3047 + $0x98] sm:$0xff]
        %v3068 = vld [vmem:[%s3047 + $0xa0] sm:$0xff]
        %v3069 = vld [vmem:[%s3047 + $0xa8] sm:$0xff]
        %v3070 = vld [vmem:[%s3047 + $0xb0] sm:$0xff]
        %v3071 = vld [vmem:[%s3047 + $0xb8] sm:$0xff]
        %v3072 = vld [vmem:[%s3047 + $0xc0] sm:$0xff]
        %v3073 = vld [vmem:[%s3047 + $0xc8] sm:$0x11]
        %v3075 = vshrl.u32 %v2839, 16
        %v3077 = vrot.slane %v3075, 2
        %v3078 = vshll.u32 %v2839, 16
        %v3080 = vrot.slane %v3078, 3
        %v3081 = vor.u32 %v3077, %v3080
        %v3083 = vshrl.u32 %v2841, 16
        %v3085 = vrot.slane %v3083, 2
        %v3086 = vshll.u32 %v2841, 16
        %v3088 = vrot.slane %v3086, 3
        %v3089 = vor.u32 %v3085, %v3088
        %v3090 = vsel %vm697, %v3081, %v3089
        %v3092 = vshrl.u32 %v2840, 16
        %v3094 = vrot.slane %v3092, 2
        %v3095 = vshll.u32 %v2840, 16
        %v3097 = vrot.slane %v3095, 3
        %v3098 = vor.u32 %v3094, %v3097
        %v3100 = vshrl.u32 %v2842, 16
        %v3102 = vrot.slane %v3100, 2
        %v3103 = vshll.u32 %v2842, 16
        %v3105 = vrot.slane %v3103, 3
        %v3106 = vor.u32 %v3102, %v3105
        %v3107 = vsel %vm697, %v3098, %v3106
        %v3135 = vunpack.c.l.b16 %v3048
        %v3136 = vunpack.c.h.b16 %v3048
        %v3137 = vunpack.c.l.b16 %v3049
        %v3138 = vunpack.c.h.b16 %v3049
        %v3139 = vunpack.c.l.b16 %v3050
        %v3140 = vunpack.c.h.b16 %v3050
        %v3141 = vunpack.c.l.b16 %v3051
        %v3142 = vunpack.c.h.b16 %v3051
        %v3143 = vunpack.c.l.b16 %v3052
        %v3144 = vunpack.c.h.b16 %v3052
        %v3145 = vunpack.c.l.b16 %v3053
        %v3146 = vunpack.c.h.b16 %v3053
        %v3147 = vunpack.c.l.b16 %v3054
        %v3148 = vunpack.c.h.b16 %v3054
        %v3149 = vunpack.c.l.b16 %v3055
        %v3150 = vunpack.c.h.b16 %v3055
        %v3151 = vunpack.c.l.b16 %v3056
        %v3152 = vunpack.c.h.b16 %v3056
        %v3153 = vunpack.c.l.b16 %v3057
        %v3154 = vunpack.c.h.b16 %v3057
        %v3155 = vunpack.c.l.b16 %v3058
        %v3156 = vunpack.c.h.b16 %v3058
        %v3157 = vunpack.c.l.b16 %v3059
        %v3158 = vunpack.c.h.b16 %v3059
        %v3159 = vunpack.c.l.b16 %v3060
        %v3160 = vunpack.c.h.b16 %v3060
        %v3161 = vunpack.c.l.b16 %v3061
        %v3162 = vunpack.c.h.b16 %v3061
        %v3163 = vunpack.c.l.b16 %v3062
        %v3164 = vunpack.c.h.b16 %v3062
        %v3165 = vunpack.c.l.b16 %v3063
        %v3166 = vunpack.c.h.b16 %v3063
        %v3167 = vunpack.c.l.b16 %v3064
        %v3168 = vunpack.c.h.b16 %v3064
        %v3169 = vunpack.c.l.b16 %v3065
        %v3170 = vunpack.c.h.b16 %v3065
        %v3171 = vunpack.c.l.b16 %v3066
        %v3172 = vunpack.c.h.b16 %v3066
        %v3173 = vunpack.c.l.b16 %v3067
        %v3174 = vunpack.c.h.b16 %v3067
        %v3175 = vunpack.c.l.b16 %v3068
        %v3176 = vunpack.c.h.b16 %v3068
        %v3177 = vunpack.c.l.b16 %v3069
        %v3178 = vunpack.c.h.b16 %v3069
        %v3179 = vunpack.c.l.b16 %v3070
        %v3180 = vunpack.c.h.b16 %v3070
        %v3181 = vunpack.c.l.b16 %v3071
        %v3182 = vunpack.c.h.b16 %v3071
        %v3183 = vunpack.c.l.b16 %v3072
        %v3184 = vunpack.c.h.b16 %v3072
        %v3185 = vunpack.c.l.b16 %v3073
        %v3186 = vunpack.c.h.b16 %v3073
        %v3187 = vpack.c.b16 %v3137, %v3135
        %v3188 = vpack.c.b16 %v3138, %v3136
        %v3189 = vpack.c.b16 %v3141, %v3139
        %v3190 = vpack.c.b16 %v3142, %v3140
        %v3191 = vpack.c.b16 %v3145, %v3143
        %v3192 = vpack.c.b16 %v3146, %v3144
        %v3193 = vpack.c.b16 %v3149, %v3147
        %v3194 = vpack.c.b16 %v3150, %v3148
        %v3195 = vpack.c.b16 %v3153, %v3151
        %v3196 = vpack.c.b16 %v3154, %v3152
        %v3197 = vpack.c.b16 %v3157, %v3155
        %v3198 = vpack.c.b16 %v3158, %v3156
        %v3199 = vpack.c.b16 %v3161, %v3159
        %v3200 = vpack.c.b16 %v3162, %v3160
        %v3201 = vpack.c.b16 %v3165, %v3163
        %v3202 = vpack.c.b16 %v3166, %v3164
        %v3203 = vpack.c.b16 %v3169, %v3167
        %v3204 = vpack.c.b16 %v3170, %v3168
        %v3205 = vpack.c.b16 %v3173, %v3171
        %v3206 = vpack.c.b16 %v3174, %v3172
        %v3207 = vpack.c.b16 %v3177, %v3175
        %v3208 = vpack.c.b16 %v3178, %v3176
        %v3209 = vpack.c.b16 %v3181, %v3179
        %v3210 = vpack.c.b16 %v3182, %v3180
        %v3211 = vpack.c.b16 %v3185, %v3183
        %v3212 = vpack.c.b16 %v3186, %v3184
        %v3238 = vsel %vm305, %v3107, 0
        %v3241 = vand.u32 %v3211, %v867
        %v3244 = vand.u32 %v3212, %v867
        %3246 = vmatpush.bf16.msra.mxu0 %v3201
        %3247 = vmatpush.bf16.msra.mxu0 %v3199
        %3248 = vmatpush.bf16.msra.mxu0 %v3197
        %3249 = vmatpush.bf16.msra.mxu0 %v3195
        %3250 = vmatpush.bf16.msra.mxu0 %v3193
        %3251 = vmatpush.bf16.msra.mxu0 %v3191
        %3252 = vmatpush.bf16.msra.mxu0 %v3189
        %3253 = vmatpush.bf16.msra.mxu0 %v3187
        %3254 = vmatmul.bf16.gmra.mxu0 %v3090
        %v3255 = vpop.f32.mrf.mxu0
        %v3256 = vadd.f32 0.0, %v3255
        %v3257 = vpop.f32.mrf.mxu0
        %v3258 = vadd.f32 0.0, %v3257
        %3259 = vdwg.mxu0
        %3260 = vmatpush.bf16.msra.mxu0 0
        %3261 = vmatpush.bf16.msra.mxu0 0
        %3262 = vmatpush.bf16.msra.mxu0 0
        %3263 = vmatpush.bf16.msra.mxu0 %v3241
        %3264 = vmatpush.bf16.msra.mxu0 %v3209
        %3265 = vmatpush.bf16.msra.mxu0 %v3207
        %3266 = vmatpush.bf16.msra.mxu0 %v3205
        %3267 = vmatpush.bf16.msra.mxu0 %v3203
        %3268 = vmatmul.bf16.gmra.mxu0 %v3238
        %v3269 = vpop.f32.mrf.mxu0
        %v3270 = vadd.f32 %v3256, %v3269
        %v3271 = vpop.f32.mrf.mxu0
        %v3272 = vadd.f32 %v3258, %v3271
        %3273 = vdwg.mxu0
        %3274 = vmatpush.bf16.msra.mxu0 %v3202
        %3275 = vmatpush.bf16.msra.mxu0 %v3200
        %3276 = vmatpush.bf16.msra.mxu0 %v3198
        %3277 = vmatpush.bf16.msra.mxu0 %v3196
        %3278 = vmatpush.bf16.msra.mxu0 %v3194
        %3279 = vmatpush.bf16.msra.mxu0 %v3192
        %3280 = vmatpush.bf16.msra.mxu0 %v3190
        %3281 = vmatpush.bf16.msra.mxu0 %v3188
        %3282 = vmatmul.bf16.gmra.mxu0 %v3090
        %v3283 = vpop.f32.mrf.mxu0
        %v3284 = vadd.f32 0.0, %v3283
        %v3285 = vpop.f32.mrf.mxu0
        %v3286 = vadd.f32 0.0, %v3285
        %3287 = vdwg.mxu0
        %3288 = vmatpush.bf16.msra.mxu0 0
        %3289 = vmatpush.bf16.msra.mxu0 0
        %3290 = vmatpush.bf16.msra.mxu0 0
        %3291 = vmatpush.bf16.msra.mxu0 %v3244
        %3292 = vmatpush.bf16.msra.mxu0 %v3210
        %3293 = vmatpush.bf16.msra.mxu0 %v3208
        %3294 = vmatpush.bf16.msra.mxu0 %v3206
        %3295 = vmatpush.bf16.msra.mxu0 %v3204
        %3296 = vmatmul.bf16.gmra.mxu0 %v3238
        %v3297 = vpop.f32.mrf.mxu0
        %v3298 = vadd.f32 %v3284, %v3297
        %v3299 = vpop.f32.mrf.mxu0
        %v3300 = vadd.f32 %v3286, %v3299
        %3301 = vdwg.mxu0
        %v3302 = vadd.f32 %v3043, %v3270
        %v3303 = vadd.f32 %v3044, %v3298
        %v3304 = vadd.f32 %v3045, %v3272
        %v3305 = vadd.f32 %v3046, %v3300
        %s3306 = scalar_lea.vmem [#allocation10], 2288
        %v3307 = vld [vmem:[%s3306] sm:$0xff]
        %v3308 = vld [vmem:[%s3306 + $0x8] sm:$0xff]
        %v3309 = vld [vmem:[%s3306 + $0x10] sm:$0xff]
        %v3310 = vld [vmem:[%s3306 + $0x18] sm:$0xff]
        %v3311 = vld [vmem:[%s3306 + $0x20] sm:$0xff]
        %v3312 = vld [vmem:[%s3306 + $0x28] sm:$0xff]
        %v3313 = vld [vmem:[%s3306 + $0x30] sm:$0xff]
        %v3314 = vld [vmem:[%s3306 + $0x38] sm:$0xff]
        %v3315 = vld [vmem:[%s3306 + $0x40] sm:$0xff]
        %v3316 = vld [vmem:[%s3306 + $0x48] sm:$0xff]
        %v3317 = vld [vmem:[%s3306 + $0x50] sm:$0xff]
        %v3318 = vld [vmem:[%s3306 + $0x58] sm:$0xff]
        %v3319 = vld [vmem:[%s3306 + $0x60] sm:$0xff]
        %v3320 = vld [vmem:[%s3306 + $0x68] sm:$0xff]
        %v3321 = vld [vmem:[%s3306 + $0x70] sm:$0xff]
        %v3322 = vld [vmem:[%s3306 + $0x78] sm:$0xff]
        %v3323 = vld [vmem:[%s3306 + $0x80] sm:$0xff]
        %v3324 = vld [vmem:[%s3306 + $0x88] sm:$0xff]
        %v3325 = vld [vmem:[%s3306 + $0x90] sm:$0xff]
        %v3326 = vld [vmem:[%s3306 + $0x98] sm:$0xff]
        %v3327 = vld [vmem:[%s3306 + $0xa0] sm:$0xff]
        %v3328 = vld [vmem:[%s3306 + $0xa8] sm:$0xff]
        %v3329 = vld [vmem:[%s3306 + $0xb0] sm:$0xff]
        %v3330 = vld [vmem:[%s3306 + $0xb8] sm:$0xff]
        %v3331 = vld [vmem:[%s3306 + $0xc0] sm:$0xff]
        %v3332 = vld [vmem:[%s3306 + $0xc8] sm:$0x11]
        %v3333 = vrot.slane %v2839, 3
        %v3334 = vrot.slane %v2841, 3
        %v3335 = vsel %vm1158, %v3333, %v3334
        %v3336 = vrot.slane %v2840, 3
        %v3337 = vrot.slane %v2842, 3
        %v3338 = vsel %vm1158, %v3336, %v3337
        %v3366 = vunpack.c.l.b16 %v3307
        %v3367 = vunpack.c.h.b16 %v3307
        %v3368 = vunpack.c.l.b16 %v3308
        %v3369 = vunpack.c.h.b16 %v3308
        %v3370 = vunpack.c.l.b16 %v3309
        %v3371 = vunpack.c.h.b16 %v3309
        %v3372 = vunpack.c.l.b16 %v3310
        %v3373 = vunpack.c.h.b16 %v3310
        %v3374 = vunpack.c.l.b16 %v3311
        %v3375 = vunpack.c.h.b16 %v3311
        %v3376 = vunpack.c.l.b16 %v3312
        %v3377 = vunpack.c.h.b16 %v3312
        %v3378 = vunpack.c.l.b16 %v3313
        %v3379 = vunpack.c.h.b16 %v3313
        %v3380 = vunpack.c.l.b16 %v3314
        %v3381 = vunpack.c.h.b16 %v3314
        %v3382 = vunpack.c.l.b16 %v3315
        %v3383 = vunpack.c.h.b16 %v3315
        %v3384 = vunpack.c.l.b16 %v3316
        %v3385 = vunpack.c.h.b16 %v3316
        %v3386 = vunpack.c.l.b16 %v3317
        %v3387 = vunpack.c.h.b16 %v3317
        %v3388 = vunpack.c.l.b16 %v3318
        %v3389 = vunpack.c.h.b16 %v3318
        %v3390 = vunpack.c.l.b16 %v3319
        %v3391 = vunpack.c.h.b16 %v3319
        %v3392 = vunpack.c.l.b16 %v3320
        %v3393 = vunpack.c.h.b16 %v3320
        %v3394 = vunpack.c.l.b16 %v3321
        %v3395 = vunpack.c.h.b16 %v3321
        %v3396 = vunpack.c.l.b16 %v3322
        %v3397 = vunpack.c.h.b16 %v3322
        %v3398 = vunpack.c.l.b16 %v3323
        %v3399 = vunpack.c.h.b16 %v3323
        %v3400 = vunpack.c.l.b16 %v3324
        %v3401 = vunpack.c.h.b16 %v3324
        %v3402 = vunpack.c.l.b16 %v3325
        %v3403 = vunpack.c.h.b16 %v3325
        %v3404 = vunpack.c.l.b16 %v3326
        %v3405 = vunpack.c.h.b16 %v3326
        %v3406 = vunpack.c.l.b16 %v3327
        %v3407 = vunpack.c.h.b16 %v3327
        %v3408 = vunpack.c.l.b16 %v3328
        %v3409 = vunpack.c.h.b16 %v3328
        %v3410 = vunpack.c.l.b16 %v3329
        %v3411 = vunpack.c.h.b16 %v3329
        %v3412 = vunpack.c.l.b16 %v3330
        %v3413 = vunpack.c.h.b16 %v3330
        %v3414 = vunpack.c.l.b16 %v3331
        %v3415 = vunpack.c.h.b16 %v3331
        %v3416 = vunpack.c.l.b16 %v3332
        %v3417 = vunpack.c.h.b16 %v3332
        %v3418 = vpack.c.b16 %v3368, %v3366
        %v3419 = vpack.c.b16 %v3369, %v3367
        %v3420 = vpack.c.b16 %v3372, %v3370
        %v3421 = vpack.c.b16 %v3373, %v3371
        %v3422 = vpack.c.b16 %v3376, %v3374
        %v3423 = vpack.c.b16 %v3377, %v3375
        %v3424 = vpack.c.b16 %v3380, %v3378
        %v3425 = vpack.c.b16 %v3381, %v3379
        %v3426 = vpack.c.b16 %v3384, %v3382
        %v3427 = vpack.c.b16 %v3385, %v3383
        %v3428 = vpack.c.b16 %v3388, %v3386
        %v3429 = vpack.c.b16 %v3389, %v3387
        %v3430 = vpack.c.b16 %v3392, %v3390
        %v3431 = vpack.c.b16 %v3393, %v3391
        %v3432 = vpack.c.b16 %v3396, %v3394
        %v3433 = vpack.c.b16 %v3397, %v3395
        %v3434 = vpack.c.b16 %v3400, %v3398
        %v3435 = vpack.c.b16 %v3401, %v3399
        %v3436 = vpack.c.b16 %v3404, %v3402
        %v3437 = vpack.c.b16 %v3405, %v3403
        %v3438 = vpack.c.b16 %v3408, %v3406
        %v3439 = vpack.c.b16 %v3409, %v3407
        %v3440 = vpack.c.b16 %v3412, %v3410
        %v3441 = vpack.c.b16 %v3413, %v3411
        %v3442 = vpack.c.b16 %v3416, %v3414
        %v3443 = vpack.c.b16 %v3417, %v3415
        %v3469 = vsel %vm305, %v3338, 0
        %v3472 = vand.u32 %v3442, %v867
        %v3475 = vand.u32 %v3443, %v867
        %3477 = vmatpush.bf16.msra.mxu0 %v3432
        %3478 = vmatpush.bf16.msra.mxu0 %v3430
        %3479 = vmatpush.bf16.msra.mxu0 %v3428
        %3480 = vmatpush.bf16.msra.mxu0 %v3426
        %3481 = vmatpush.bf16.msra.mxu0 %v3424
        %3482 = vmatpush.bf16.msra.mxu0 %v3422
        %3483 = vmatpush.bf16.msra.mxu0 %v3420
        %3484 = vmatpush.bf16.msra.mxu0 %v3418
        %3485 = vmatmul.bf16.gmra.mxu0 %v3335
        %v3486 = vpop.f32.mrf.mxu0
        %v3487 = vadd.f32 0.0, %v3486
        %v3488 = vpop.f32.mrf.mxu0
        %v3489 = vadd.f32 0.0, %v3488
        %3490 = vdwg.mxu0
        %3491 = vmatpush.bf16.msra.mxu0 0
        %3492 = vmatpush.bf16.msra.mxu0 0
        %3493 = vmatpush.bf16.msra.mxu0 0
        %3494 = vmatpush.bf16.msra.mxu0 %v3472
        %3495 = vmatpush.bf16.msra.mxu0 %v3440
        %3496 = vmatpush.bf16.msra.mxu0 %v3438
        %3497 = vmatpush.bf16.msra.mxu0 %v3436
        %3498 = vmatpush.bf16.msra.mxu0 %v3434
        %3499 = vmatmul.bf16.gmra.mxu0 %v3469
        %v3500 = vpop.f32.mrf.mxu0
        %v3501 = vadd.f32 %v3487, %v3500
        %v3502 = vpop.f32.mrf.mxu0
        %v3503 = vadd.f32 %v3489, %v3502
        %3504 = vdwg.mxu0
        %3505 = vmatpush.bf16.msra.mxu0 %v3433
        %3506 = vmatpush.bf16.msra.mxu0 %v3431
        %3507 = vmatpush.bf16.msra.mxu0 %v3429
        %3508 = vmatpush.bf16.msra.mxu0 %v3427
        %3509 = vmatpush.bf16.msra.mxu0 %v3425
        %3510 = vmatpush.bf16.msra.mxu0 %v3423
        %3511 = vmatpush.bf16.msra.mxu0 %v3421
        %3512 = vmatpush.bf16.msra.mxu0 %v3419
        %3513 = vmatmul.bf16.gmra.mxu0 %v3335
        %v3514 = vpop.f32.mrf.mxu0
        %v3515 = vadd.f32 0.0, %v3514
        %v3516 = vpop.f32.mrf.mxu0
        %v3517 = vadd.f32 0.0, %v3516
        %3518 = vdwg.mxu0
        %3519 = vmatpush.bf16.msra.mxu0 0
        %3520 = vmatpush.bf16.msra.mxu0 0
        %3521 = vmatpush.bf16.msra.mxu0 0
        %3522 = vmatpush.bf16.msra.mxu0 %v3475
        %3523 = vmatpush.bf16.msra.mxu0 %v3441
        %3524 = vmatpush.bf16.msra.mxu0 %v3439
        %3525 = vmatpush.bf16.msra.mxu0 %v3437
        %3526 = vmatpush.bf16.msra.mxu0 %v3435
        %3527 = vmatmul.bf16.gmra.mxu0 %v3469
        %v3528 = vpop.f32.mrf.mxu0
        %v3529 = vadd.f32 %v3515, %v3528
        %v3530 = vpop.f32.mrf.mxu0
        %v3531 = vadd.f32 %v3517, %v3530
        %3532 = vdwg.mxu0
        %v3533 = vadd.f32 %v3302, %v3501
        %v3534 = vadd.f32 %v3303, %v3529
        %v3535 = vadd.f32 %v3304, %v3503
        %v3536 = vadd.f32 %v3305, %v3531
        %s3537 = scalar_lea.vmem [#allocation10], 3328
        %v3538 = vld [vmem:[%s3537] sm:$0xff]
        %v3539 = vld [vmem:[%s3537 + $0x8] sm:$0xff]
        %v3540 = vld [vmem:[%s3537 + $0x10] sm:$0xff]
        %v3541 = vld [vmem:[%s3537 + $0x18] sm:$0xff]
        %v3542 = vld [vmem:[%s3537 + $0x20] sm:$0xff]
        %v3543 = vld [vmem:[%s3537 + $0x28] sm:$0xff]
        %v3544 = vld [vmem:[%s3537 + $0x30] sm:$0xff]
        %v3545 = vld [vmem:[%s3537 + $0x38] sm:$0xff]
        %v3546 = vld [vmem:[%s3537 + $0x40] sm:$0xff]
        %v3547 = vld [vmem:[%s3537 + $0x48] sm:$0xff]
        %v3548 = vld [vmem:[%s3537 + $0x50] sm:$0xff]
        %v3549 = vld [vmem:[%s3537 + $0x58] sm:$0xff]
        %v3550 = vld [vmem:[%s3537 + $0x60] sm:$0xff]
        %v3551 = vld [vmem:[%s3537 + $0x68] sm:$0xff]
        %v3552 = vld [vmem:[%s3537 + $0x70] sm:$0xff]
        %v3553 = vld [vmem:[%s3537 + $0x78] sm:$0xff]
        %v3554 = vld [vmem:[%s3537 + $0x80] sm:$0xff]
        %v3555 = vld [vmem:[%s3537 + $0x88] sm:$0xff]
        %v3556 = vld [vmem:[%s3537 + $0x90] sm:$0xff]
        %v3557 = vld [vmem:[%s3537 + $0x98] sm:$0xff]
        %v3558 = vld [vmem:[%s3537 + $0xa0] sm:$0xff]
        %v3559 = vld [vmem:[%s3537 + $0xa8] sm:$0xff]
        %v3560 = vld [vmem:[%s3537 + $0xb0] sm:$0xff]
        %v3561 = vld [vmem:[%s3537 + $0xb8] sm:$0xff]
        %v3562 = vld [vmem:[%s3537 + $0xc0] sm:$0xff]
        %v3563 = vld [vmem:[%s3537 + $0xc8] sm:$0x11]
        %v3564 = vrot.slane %v3075, 3
        %v3565 = vrot.slane %v3078, 4
        %v3566 = vor.u32 %v3564, %v3565
        %v3567 = vrot.slane %v3083, 3
        %v3568 = vrot.slane %v3086, 4
        %v3569 = vor.u32 %v3567, %v3568
        %v3570 = vsel %vm1390, %v3566, %v3569
        %v3571 = vrot.slane %v3092, 3
        %v3572 = vrot.slane %v3095, 4
        %v3573 = vor.u32 %v3571, %v3572
        %v3574 = vrot.slane %v3100, 3
        %v3575 = vrot.slane %v3103, 4
        %v3576 = vor.u32 %v3574, %v3575
        %v3577 = vsel %vm1390, %v3573, %v3576
        %v3605 = vunpack.c.l.b16 %v3538
        %v3606 = vunpack.c.h.b16 %v3538
        %v3607 = vunpack.c.l.b16 %v3539
        %v3608 = vunpack.c.h.b16 %v3539
        %v3609 = vunpack.c.l.b16 %v3540
        %v3610 = vunpack.c.h.b16 %v3540
        %v3611 = vunpack.c.l.b16 %v3541
        %v3612 = vunpack.c.h.b16 %v3541
        %v3613 = vunpack.c.l.b16 %v3542
        %v3614 = vunpack.c.h.b16 %v3542
        %v3615 = vunpack.c.l.b16 %v3543
        %v3616 = vunpack.c.h.b16 %v3543
        %v3617 = vunpack.c.l.b16 %v3544
        %v3618 = vunpack.c.h.b16 %v3544
        %v3619 = vunpack.c.l.b16 %v3545
        %v3620 = vunpack.c.h.b16 %v3545
        %v3621 = vunpack.c.l.b16 %v3546
        %v3622 = vunpack.c.h.b16 %v3546
        %v3623 = vunpack.c.l.b16 %v3547
        %v3624 = vunpack.c.h.b16 %v3547
        %v3625 = vunpack.c.l.b16 %v3548
        %v3626 = vunpack.c.h.b16 %v3548
        %v3627 = vunpack.c.l.b16 %v3549
        %v3628 = vunpack.c.h.b16 %v3549
        %v3629 = vunpack.c.l.b16 %v3550
        %v3630 = vunpack.c.h.b16 %v3550
        %v3631 = vunpack.c.l.b16 %v3551
        %v3632 = vunpack.c.h.b16 %v3551
        %v3633 = vunpack.c.l.b16 %v3552
        %v3634 = vunpack.c.h.b16 %v3552
        %v3635 = vunpack.c.l.b16 %v3553
        %v3636 = vunpack.c.h.b16 %v3553
        %v3637 = vunpack.c.l.b16 %v3554
        %v3638 = vunpack.c.h.b16 %v3554
        %v3639 = vunpack.c.l.b16 %v3555
        %v3640 = vunpack.c.h.b16 %v3555
        %v3641 = vunpack.c.l.b16 %v3556
        %v3642 = vunpack.c.h.b16 %v3556
        %v3643 = vunpack.c.l.b16 %v3557
        %v3644 = vunpack.c.h.b16 %v3557
        %v3645 = vunpack.c.l.b16 %v3558
        %v3646 = vunpack.c.h.b16 %v3558
        %v3647 = vunpack.c.l.b16 %v3559
        %v3648 = vunpack.c.h.b16 %v3559
        %v3649 = vunpack.c.l.b16 %v3560
        %v3650 = vunpack.c.h.b16 %v3560
        %v3651 = vunpack.c.l.b16 %v3561
        %v3652 = vunpack.c.h.b16 %v3561
        %v3653 = vunpack.c.l.b16 %v3562
        %v3654 = vunpack.c.h.b16 %v3562
        %v3655 = vunpack.c.l.b16 %v3563
        %v3656 = vunpack.c.h.b16 %v3563
        %v3657 = vpack.c.b16 %v3607, %v3605
        %v3658 = vpack.c.b16 %v3608, %v3606
        %v3659 = vpack.c.b16 %v3611, %v3609
        %v3660 = vpack.c.b16 %v3612, %v3610
        %v3661 = vpack.c.b16 %v3615, %v3613
        %v3662 = vpack.c.b16 %v3616, %v3614
        %v3663 = vpack.c.b16 %v3619, %v3617
        %v3664 = vpack.c.b16 %v3620, %v3618
        %v3665 = vpack.c.b16 %v3623, %v3621
        %v3666 = vpack.c.b16 %v3624, %v3622
        %v3667 = vpack.c.b16 %v3627, %v3625
        %v3668 = vpack.c.b16 %v3628, %v3626
        %v3669 = vpack.c.b16 %v3631, %v3629
        %v3670 = vpack.c.b16 %v3632, %v3630
        %v3671 = vpack.c.b16 %v3635, %v3633
        %v3672 = vpack.c.b16 %v3636, %v3634
        %v3673 = vpack.c.b16 %v3639, %v3637
        %v3674 = vpack.c.b16 %v3640, %v3638
        %v3675 = vpack.c.b16 %v3643, %v3641
        %v3676 = vpack.c.b16 %v3644, %v3642
        %v3677 = vpack.c.b16 %v3647, %v3645
        %v3678 = vpack.c.b16 %v3648, %v3646
        %v3679 = vpack.c.b16 %v3651, %v3649
        %v3680 = vpack.c.b16 %v3652, %v3650
        %v3681 = vpack.c.b16 %v3655, %v3653
        %v3682 = vpack.c.b16 %v3656, %v3654
        %v3708 = vsel %vm305, %v3577, 0
        %v3711 = vand.u32 %v3681, %v867
        %v3714 = vand.u32 %v3682, %v867
        %3716 = vmatpush.bf16.msra.mxu0 %v3671
        %3717 = vmatpush.bf16.msra.mxu0 %v3669
        %3718 = vmatpush.bf16.msra.mxu0 %v3667
        %3719 = vmatpush.bf16.msra.mxu0 %v3665
        %3720 = vmatpush.bf16.msra.mxu0 %v3663
        %3721 = vmatpush.bf16.msra.mxu0 %v3661
        %3722 = vmatpush.bf16.msra.mxu0 %v3659
        %3723 = vmatpush.bf16.msra.mxu0 %v3657
        %3724 = vmatmul.bf16.gmra.mxu0 %v3570
        %v3725 = vpop.f32.mrf.mxu0
        %v3726 = vadd.f32 0.0, %v3725
        %v3727 = vpop.f32.mrf.mxu0
        %v3728 = vadd.f32 0.0, %v3727
        %3729 = vdwg.mxu0
        %3730 = vmatpush.bf16.msra.mxu0 0
        %3731 = vmatpush.bf16.msra.mxu0 0
        %3732 = vmatpush.bf16.msra.mxu0 0
        %3733 = vmatpush.bf16.msra.mxu0 %v3711
        %3734 = vmatpush.bf16.msra.mxu0 %v3679
        %3735 = vmatpush.bf16.msra.mxu0 %v3677
        %3736 = vmatpush.bf16.msra.mxu0 %v3675
        %3737 = vmatpush.bf16.msra.mxu0 %v3673
        %3738 = vmatmul.bf16.gmra.mxu0 %v3708
        %v3739 = vpop.f32.mrf.mxu0
        %v3740 = vadd.f32 %v3726, %v3739
        %v3741 = vpop.f32.mrf.mxu0
        %v3742 = vadd.f32 %v3728, %v3741
        %3743 = vdwg.mxu0
        %3744 = vmatpush.bf16.msra.mxu0 %v3672
        %3745 = vmatpush.bf16.msra.mxu0 %v3670
        %3746 = vmatpush.bf16.msra.mxu0 %v3668
        %3747 = vmatpush.bf16.msra.mxu0 %v3666
        %3748 = vmatpush.bf16.msra.mxu0 %v3664
        %3749 = vmatpush.bf16.msra.mxu0 %v3662
        %3750 = vmatpush.bf16.msra.mxu0 %v3660
        %3751 = vmatpush.bf16.msra.mxu0 %v3658
        %3752 = vmatmul.bf16.gmra.mxu0 %v3570
        %v3753 = vpop.f32.mrf.mxu0
        %v3754 = vadd.f32 0.0, %v3753
        %v3755 = vpop.f32.mrf.mxu0
        %v3756 = vadd.f32 0.0, %v3755
        %3757 = vdwg.mxu0
        %3758 = vmatpush.bf16.msra.mxu0 0
        %3759 = vmatpush.bf16.msra.mxu0 0
        %3760 = vmatpush.bf16.msra.mxu0 0
        %3761 = vmatpush.bf16.msra.mxu0 %v3714
        %3762 = vmatpush.bf16.msra.mxu0 %v3680
        %3763 = vmatpush.bf16.msra.mxu0 %v3678
        %3764 = vmatpush.bf16.msra.mxu0 %v3676
        %3765 = vmatpush.bf16.msra.mxu0 %v3674
        %3766 = vmatmul.bf16.gmra.mxu0 %v3708
        %v3767 = vpop.f32.mrf.mxu0
        %v3768 = vadd.f32 %v3754, %v3767
        %v3769 = vpop.f32.mrf.mxu0
        %v3770 = vadd.f32 %v3756, %v3769
        %3771 = vdwg.mxu0
        %v3772 = vadd.f32 %v3533, %v3740
        %v3773 = vadd.f32 %v3534, %v3768
        %v3774 = vadd.f32 %v3535, %v3742
        %v3775 = vadd.f32 %v3536, %v3770
        %s3776 = scalar_lea.vmem [#allocation10], 4368
        %v3777 = vld [vmem:[%s3776] sm:$0xff]
        %v3778 = vld [vmem:[%s3776 + $0x8] sm:$0xff]
        %v3779 = vld [vmem:[%s3776 + $0x10] sm:$0xff]
        %v3780 = vld [vmem:[%s3776 + $0x18] sm:$0xff]
        %v3781 = vld [vmem:[%s3776 + $0x20] sm:$0xff]
        %v3782 = vld [vmem:[%s3776 + $0x28] sm:$0xff]
        %v3783 = vld [vmem:[%s3776 + $0x30] sm:$0xff]
        %v3784 = vld [vmem:[%s3776 + $0x38] sm:$0xff]
        %v3785 = vld [vmem:[%s3776 + $0x40] sm:$0xff]
        %v3786 = vld [vmem:[%s3776 + $0x48] sm:$0xff]
        %v3787 = vld [vmem:[%s3776 + $0x50] sm:$0xff]
        %v3788 = vld [vmem:[%s3776 + $0x58] sm:$0xff]
        %v3789 = vld [vmem:[%s3776 + $0x60] sm:$0xff]
        %v3790 = vld [vmem:[%s3776 + $0x68] sm:$0xff]
        %v3791 = vld [vmem:[%s3776 + $0x70] sm:$0xff]
        %v3792 = vld [vmem:[%s3776 + $0x78] sm:$0xff]
        %v3793 = vld [vmem:[%s3776 + $0x80] sm:$0xff]
        %v3794 = vld [vmem:[%s3776 + $0x88] sm:$0xff]
        %v3795 = vld [vmem:[%s3776 + $0x90] sm:$0xff]
        %v3796 = vld [vmem:[%s3776 + $0x98] sm:$0xff]
        %v3797 = vld [vmem:[%s3776 + $0xa0] sm:$0xff]
        %v3798 = vld [vmem:[%s3776 + $0xa8] sm:$0xff]
        %v3799 = vld [vmem:[%s3776 + $0xb0] sm:$0xff]
        %v3800 = vld [vmem:[%s3776 + $0xb8] sm:$0xff]
        %v3801 = vld [vmem:[%s3776 + $0xc0] sm:$0xff]
        %v3802 = vld [vmem:[%s3776 + $0xc8] sm:$0x11]
        %v3803 = vpack.c.b16 %v2837, %v2835
        %v3804 = vpack.c.b16 %v2838, %v2836
        %v3832 = vunpack.c.l.b16 %v3777
        %v3833 = vunpack.c.h.b16 %v3777
        %v3834 = vunpack.c.l.b16 %v3778
        %v3835 = vunpack.c.h.b16 %v3778
        %v3836 = vunpack.c.l.b16 %v3779
        %v3837 = vunpack.c.h.b16 %v3779
        %v3838 = vunpack.c.l.b16 %v3780
        %v3839 = vunpack.c.h.b16 %v3780
        %v3840 = vunpack.c.l.b16 %v3781
        %v3841 = vunpack.c.h.b16 %v3781
        %v3842 = vunpack.c.l.b16 %v3782
        %v3843 = vunpack.c.h.b16 %v3782
        %v3844 = vunpack.c.l.b16 %v3783
        %v3845 = vunpack.c.h.b16 %v3783
        %v3846 = vunpack.c.l.b16 %v3784
        %v3847 = vunpack.c.h.b16 %v3784
        %v3848 = vunpack.c.l.b16 %v3785
        %v3849 = vunpack.c.h.b16 %v3785
        %v3850 = vunpack.c.l.b16 %v3786
        %v3851 = vunpack.c.h.b16 %v3786
        %v3852 = vunpack.c.l.b16 %v3787
        %v3853 = vunpack.c.h.b16 %v3787
        %v3854 = vunpack.c.l.b16 %v3788
        %v3855 = vunpack.c.h.b16 %v3788
        %v3856 = vunpack.c.l.b16 %v3789
        %v3857 = vunpack.c.h.b16 %v3789
        %v3858 = vunpack.c.l.b16 %v3790
        %v3859 = vunpack.c.h.b16 %v3790
        %v3860 = vunpack.c.l.b16 %v3791
        %v3861 = vunpack.c.h.b16 %v3791
        %v3862 = vunpack.c.l.b16 %v3792
        %v3863 = vunpack.c.h.b16 %v3792
        %v3864 = vunpack.c.l.b16 %v3793
        %v3865 = vunpack.c.h.b16 %v3793
        %v3866 = vunpack.c.l.b16 %v3794
        %v3867 = vunpack.c.h.b16 %v3794
        %v3868 = vunpack.c.l.b16 %v3795
        %v3869 = vunpack.c.h.b16 %v3795
        %v3870 = vunpack.c.l.b16 %v3796
        %v3871 = vunpack.c.h.b16 %v3796
        %v3872 = vunpack.c.l.b16 %v3797
        %v3873 = vunpack.c.h.b16 %v3797
        %v3874 = vunpack.c.l.b16 %v3798
        %v3875 = vunpack.c.h.b16 %v3798
        %v3876 = vunpack.c.l.b16 %v3799
        %v3877 = vunpack.c.h.b16 %v3799
        %v3878 = vunpack.c.l.b16 %v3800
        %v3879 = vunpack.c.h.b16 %v3800
        %v3880 = vunpack.c.l.b16 %v3801
        %v3881 = vunpack.c.h.b16 %v3801
        %v3882 = vunpack.c.l.b16 %v3802
        %v3883 = vunpack.c.h.b16 %v3802
        %v3884 = vpack.c.b16 %v3834, %v3832
        %v3885 = vpack.c.b16 %v3835, %v3833
        %v3886 = vpack.c.b16 %v3838, %v3836
        %v3887 = vpack.c.b16 %v3839, %v3837
        %v3888 = vpack.c.b16 %v3842, %v3840
        %v3889 = vpack.c.b16 %v3843, %v3841
        %v3890 = vpack.c.b16 %v3846, %v3844
        %v3891 = vpack.c.b16 %v3847, %v3845
        %v3892 = vpack.c.b16 %v3850, %v3848
        %v3893 = vpack.c.b16 %v3851, %v3849
        %v3894 = vpack.c.b16 %v3854, %v3852
        %v3895 = vpack.c.b16 %v3855, %v3853
        %v3896 = vpack.c.b16 %v3858, %v3856
        %v3897 = vpack.c.b16 %v3859, %v3857
        %v3898 = vpack.c.b16 %v3862, %v3860
        %v3899 = vpack.c.b16 %v3863, %v3861
        %v3900 = vpack.c.b16 %v3866, %v3864
        %v3901 = vpack.c.b16 %v3867, %v3865
        %v3902 = vpack.c.b16 %v3870, %v3868
        %v3903 = vpack.c.b16 %v3871, %v3869
        %v3904 = vpack.c.b16 %v3874, %v3872
        %v3905 = vpack.c.b16 %v3875, %v3873
        %v3906 = vpack.c.b16 %v3878, %v3876
        %v3907 = vpack.c.b16 %v3879, %v3877
        %v3908 = vpack.c.b16 %v3882, %v3880
        %v3909 = vpack.c.b16 %v3883, %v3881
        %v3935 = vsel %vm305, %v3804, 0
        %v3938 = vand.u32 %v3908, %v867
        %v3941 = vand.u32 %v3909, %v867
        %3943 = vmatpush.bf16.msra.mxu0 %v3898
        %3944 = vmatpush.bf16.msra.mxu0 %v3896
        %3945 = vmatpush.bf16.msra.mxu0 %v3894
        %3946 = vmatpush.bf16.msra.mxu0 %v3892
        %3947 = vmatpush.bf16.msra.mxu0 %v3890
        %3948 = vmatpush.bf16.msra.mxu0 %v3888
        %3949 = vmatpush.bf16.msra.mxu0 %v3886
        %3950 = vmatpush.bf16.msra.mxu0 %v3884
        %3951 = vmatmul.bf16.gmra.mxu0 %v3803
        %v3952 = vpop.f32.mrf.mxu0
        %v3953 = vadd.f32 0.0, %v3952
        %v3954 = vpop.f32.mrf.mxu0
        %v3955 = vadd.f32 0.0, %v3954
        %3956 = vdwg.mxu0
        %3957 = vmatpush.bf16.msra.mxu0 0
        %3958 = vmatpush.bf16.msra.mxu0 0
        %3959 = vmatpush.bf16.msra.mxu0 0
        %3960 = vmatpush.bf16.msra.mxu0 %v3938
        %3961 = vmatpush.bf16.msra.mxu0 %v3906
        %3962 = vmatpush.bf16.msra.mxu0 %v3904
        %3963 = vmatpush.bf16.msra.mxu0 %v3902
        %3964 = vmatpush.bf16.msra.mxu0 %v3900
        %3965 = vmatmul.bf16.gmra.mxu0 %v3935
        %v3966 = vpop.f32.mrf.mxu0
        %v3967 = vadd.f32 %v3953, %v3966
        %v3968 = vpop.f32.mrf.mxu0
        %v3969 = vadd.f32 %v3955, %v3968
        %3970 = vdwg.mxu0
        %3971 = vmatpush.bf16.msra.mxu0 %v3899
        %3972 = vmatpush.bf16.msra.mxu0 %v3897
        %3973 = vmatpush.bf16.msra.mxu0 %v3895
        %3974 = vmatpush.bf16.msra.mxu0 %v3893
        %3975 = vmatpush.bf16.msra.mxu0 %v3891
        %3976 = vmatpush.bf16.msra.mxu0 %v3889
        %3977 = vmatpush.bf16.msra.mxu0 %v3887
        %3978 = vmatpush.bf16.msra.mxu0 %v3885
        %3979 = vmatmul.bf16.gmra.mxu0 %v3803
        %v3980 = vpop.f32.mrf.mxu0
        %v3981 = vadd.f32 0.0, %v3980
        %v3982 = vpop.f32.mrf.mxu0
        %v3983 = vadd.f32 0.0, %v3982
        %3984 = vdwg.mxu0
        %3985 = vmatpush.bf16.msra.mxu0 0
        %3986 = vmatpush.bf16.msra.mxu0 0
        %3987 = vmatpush.bf16.msra.mxu0 0
        %3988 = vmatpush.bf16.msra.mxu0 %v3941
        %3989 = vmatpush.bf16.msra.mxu0 %v3907
        %3990 = vmatpush.bf16.msra.mxu0 %v3905
        %3991 = vmatpush.bf16.msra.mxu0 %v3903
        %3992 = vmatpush.bf16.msra.mxu0 %v3901
        %3993 = vmatmul.bf16.gmra.mxu0 %v3935
        %v3994 = vpop.f32.mrf.mxu0
        %v3995 = vadd.f32 %v3981, %v3994
        %v3996 = vpop.f32.mrf.mxu0
        %v3997 = vadd.f32 %v3983, %v3996
        %3998 = vdwg.mxu0
        %v3999 = vadd.f32 %v3772, %v3967
        %v4000 = vadd.f32 %v3773, %v3995
        %v4001 = vadd.f32 %v3774, %v3969
        %v4002 = vadd.f32 %v3775, %v3997
        %s4003 = scalar_lea.vmem [#allocation10], 5408
        %v4004 = vld [vmem:[%s4003] sm:$0xff]
        %v4005 = vld [vmem:[%s4003 + $0x8] sm:$0xff]
        %v4006 = vld [vmem:[%s4003 + $0x10] sm:$0xff]
        %v4007 = vld [vmem:[%s4003 + $0x18] sm:$0xff]
        %v4008 = vld [vmem:[%s4003 + $0x20] sm:$0xff]
        %v4009 = vld [vmem:[%s4003 + $0x28] sm:$0xff]
        %v4010 = vld [vmem:[%s4003 + $0x30] sm:$0xff]
        %v4011 = vld [vmem:[%s4003 + $0x38] sm:$0xff]
        %v4012 = vld [vmem:[%s4003 + $0x40] sm:$0xff]
        %v4013 = vld [vmem:[%s4003 + $0x48] sm:$0xff]
        %v4014 = vld [vmem:[%s4003 + $0x50] sm:$0xff]
        %v4015 = vld [vmem:[%s4003 + $0x58] sm:$0xff]
        %v4016 = vld [vmem:[%s4003 + $0x60] sm:$0xff]
        %v4017 = vld [vmem:[%s4003 + $0x68] sm:$0xff]
        %v4018 = vld [vmem:[%s4003 + $0x70] sm:$0xff]
        %v4019 = vld [vmem:[%s4003 + $0x78] sm:$0xff]
        %v4020 = vld [vmem:[%s4003 + $0x80] sm:$0xff]
        %v4021 = vld [vmem:[%s4003 + $0x88] sm:$0xff]
        %v4022 = vld [vmem:[%s4003 + $0x90] sm:$0xff]
        %v4023 = vld [vmem:[%s4003 + $0x98] sm:$0xff]
        %v4024 = vld [vmem:[%s4003 + $0xa0] sm:$0xff]
        %v4025 = vld [vmem:[%s4003 + $0xa8] sm:$0xff]
        %v4026 = vld [vmem:[%s4003 + $0xb0] sm:$0xff]
        %v4027 = vld [vmem:[%s4003 + $0xb8] sm:$0xff]
        %v4028 = vld [vmem:[%s4003 + $0xc0] sm:$0xff]
        %v4029 = vld [vmem:[%s4003 + $0xc8] sm:$0x11]
        %v4031 = vunpack.c.l.b16 %v2802
        %v4032 = vunpack.c.h.b16 %v2802
        %v4033 = vpack.c.b16 %v4031, %v4031
        %v4034 = vpack.c.b16 %v4032, %v4032
        %v4036 = vshrl.u32 %v3803, 16
        %v4038 = vshll.u32 %v3803, 16
        %v4040 = vrot.slane %v4038, 1
        %v4041 = vor.u32 %v4036, %v4040
        %v4043 = vshll.u32 %v4033, 16
        %v4045 = vrot.slane %v4043, 1
        %v4046 = vsel %vm1862, %v4041, %v4045
        %v4047 = vshrl.u32 %v3804, 16
        %v4049 = vshll.u32 %v3804, 16
        %v4051 = vrot.slane %v4049, 1
        %v4052 = vor.u32 %v4047, %v4051
        %v4054 = vshll.u32 %v4034, 16
        %v4056 = vrot.slane %v4054, 1
        %v4057 = vsel %vm1862, %v4052, %v4056
        %v4085 = vunpack.c.l.b16 %v4004
        %v4086 = vunpack.c.h.b16 %v4004
        %v4087 = vunpack.c.l.b16 %v4005
        %v4088 = vunpack.c.h.b16 %v4005
        %v4089 = vunpack.c.l.b16 %v4006
        %v4090 = vunpack.c.h.b16 %v4006
        %v4091 = vunpack.c.l.b16 %v4007
        %v4092 = vunpack.c.h.b16 %v4007
        %v4093 = vunpack.c.l.b16 %v4008
        %v4094 = vunpack.c.h.b16 %v4008
        %v4095 = vunpack.c.l.b16 %v4009
        %v4096 = vunpack.c.h.b16 %v4009
        %v4097 = vunpack.c.l.b16 %v4010
        %v4098 = vunpack.c.h.b16 %v4010
        %v4099 = vunpack.c.l.b16 %v4011
        %v4100 = vunpack.c.h.b16 %v4011
        %v4101 = vunpack.c.l.b16 %v4012
        %v4102 = vunpack.c.h.b16 %v4012
        %v4103 = vunpack.c.l.b16 %v4013
        %v4104 = vunpack.c.h.b16 %v4013
        %v4105 = vunpack.c.l.b16 %v4014
        %v4106 = vunpack.c.h.b16 %v4014
        %v4107 = vunpack.c.l.b16 %v4015
        %v4108 = vunpack.c.h.b16 %v4015
        %v4109 = vunpack.c.l.b16 %v4016
        %v4110 = vunpack.c.h.b16 %v4016
        %v4111 = vunpack.c.l.b16 %v4017
        %v4112 = vunpack.c.h.b16 %v4017
        %v4113 = vunpack.c.l.b16 %v4018
        %v4114 = vunpack.c.h.b16 %v4018
        %v4115 = vunpack.c.l.b16 %v4019
        %v4116 = vunpack.c.h.b16 %v4019
        %v4117 = vunpack.c.l.b16 %v4020
        %v4118 = vunpack.c.h.b16 %v4020
        %v4119 = vunpack.c.l.b16 %v4021
        %v4120 = vunpack.c.h.b16 %v4021
        %v4121 = vunpack.c.l.b16 %v4022
        %v4122 = vunpack.c.h.b16 %v4022
        %v4123 = vunpack.c.l.b16 %v4023
        %v4124 = vunpack.c.h.b16 %v4023
        %v4125 = vunpack.c.l.b16 %v4024
        %v4126 = vunpack.c.h.b16 %v4024
        %v4127 = vunpack.c.l.b16 %v4025
        %v4128 = vunpack.c.h.b16 %v4025
        %v4129 = vunpack.c.l.b16 %v4026
        %v4130 = vunpack.c.h.b16 %v4026
        %v4131 = vunpack.c.l.b16 %v4027
        %v4132 = vunpack.c.h.b16 %v4027
        %v4133 = vunpack.c.l.b16 %v4028
        %v4134 = vunpack.c.h.b16 %v4028
        %v4135 = vunpack.c.l.b16 %v4029
        %v4136 = vunpack.c.h.b16 %v4029
        %v4137 = vpack.c.b16 %v4087, %v4085
        %v4138 = vpack.c.b16 %v4088, %v4086
        %v4139 = vpack.c.b16 %v4091, %v4089
        %v4140 = vpack.c.b16 %v4092, %v4090
        %v4141 = vpack.c.b16 %v4095, %v4093
        %v4142 = vpack.c.b16 %v4096, %v4094
        %v4143 = vpack.c.b16 %v4099, %v4097
        %v4144 = vpack.c.b16 %v4100, %v4098
        %v4145 = vpack.c.b16 %v4103, %v4101
        %v4146 = vpack.c.b16 %v4104, %v4102
        %v4147 = vpack.c.b16 %v4107, %v4105
        %v4148 = vpack.c.b16 %v4108, %v4106
        %v4149 = vpack.c.b16 %v4111, %v4109
        %v4150 = vpack.c.b16 %v4112, %v4110
        %v4151 = vpack.c.b16 %v4115, %v4113
        %v4152 = vpack.c.b16 %v4116, %v4114
        %v4153 = vpack.c.b16 %v4119, %v4117
        %v4154 = vpack.c.b16 %v4120, %v4118
        %v4155 = vpack.c.b16 %v4123, %v4121
        %v4156 = vpack.c.b16 %v4124, %v4122
        %v4157 = vpack.c.b16 %v4127, %v4125
        %v4158 = vpack.c.b16 %v4128, %v4126
        %v4159 = vpack.c.b16 %v4131, %v4129
        %v4160 = vpack.c.b16 %v4132, %v4130
        %v4161 = vpack.c.b16 %v4135, %v4133
        %v4162 = vpack.c.b16 %v4136, %v4134
        %v4188 = vsel %vm305, %v4057, 0
        %v4191 = vand.u32 %v4161, %v867
        %v4194 = vand.u32 %v4162, %v867
        %4196 = vmatpush.bf16.msra.mxu0 %v4151
        %4197 = vmatpush.bf16.msra.mxu0 %v4149
        %4198 = vmatpush.bf16.msra.mxu0 %v4147
        %4199 = vmatpush.bf16.msra.mxu0 %v4145
        %4200 = vmatpush.bf16.msra.mxu0 %v4143
        %4201 = vmatpush.bf16.msra.mxu0 %v4141
        %4202 = vmatpush.bf16.msra.mxu0 %v4139
        %4203 = vmatpush.bf16.msra.mxu0 %v4137
        %4204 = vmatmul.bf16.gmra.mxu0 %v4046
        %v4205 = vpop.f32.mrf.mxu0
        %v4206 = vadd.f32 0.0, %v4205
        %v4207 = vpop.f32.mrf.mxu0
        %v4208 = vadd.f32 0.0, %v4207
        %4209 = vdwg.mxu0
        %4210 = vmatpush.bf16.msra.mxu0 0
        %4211 = vmatpush.bf16.msra.mxu0 0
        %4212 = vmatpush.bf16.msra.mxu0 0
        %4213 = vmatpush.bf16.msra.mxu0 %v4191
        %4214 = vmatpush.bf16.msra.mxu0 %v4159
        %4215 = vmatpush.bf16.msra.mxu0 %v4157
        %4216 = vmatpush.bf16.msra.mxu0 %v4155
        %4217 = vmatpush.bf16.msra.mxu0 %v4153
        %4218 = vmatmul.bf16.gmra.mxu0 %v4188
        %v4219 = vpop.f32.mrf.mxu0
        %v4220 = vadd.f32 %v4206, %v4219
        %v4221 = vpop.f32.mrf.mxu0
        %v4222 = vadd.f32 %v4208, %v4221
        %4223 = vdwg.mxu0
        %4224 = vmatpush.bf16.msra.mxu0 %v4152
        %4225 = vmatpush.bf16.msra.mxu0 %v4150
        %4226 = vmatpush.bf16.msra.mxu0 %v4148
        %4227 = vmatpush.bf16.msra.mxu0 %v4146
        %4228 = vmatpush.bf16.msra.mxu0 %v4144
        %4229 = vmatpush.bf16.msra.mxu0 %v4142
        %4230 = vmatpush.bf16.msra.mxu0 %v4140
        %4231 = vmatpush.bf16.msra.mxu0 %v4138
        %4232 = vmatmul.bf16.gmra.mxu0 %v4046
        %v4233 = vpop.f32.mrf.mxu0
        %v4234 = vadd.f32 0.0, %v4233
        %v4235 = vpop.f32.mrf.mxu0
        %v4236 = vadd.f32 0.0, %v4235
        %4237 = vdwg.mxu0
        %4238 = vmatpush.bf16.msra.mxu0 0
        %4239 = vmatpush.bf16.msra.mxu0 0
        %4240 = vmatpush.bf16.msra.mxu0 0
        %4241 = vmatpush.bf16.msra.mxu0 %v4194
        %4242 = vmatpush.bf16.msra.mxu0 %v4160
        %4243 = vmatpush.bf16.msra.mxu0 %v4158
        %4244 = vmatpush.bf16.msra.mxu0 %v4156
        %4245 = vmatpush.bf16.msra.mxu0 %v4154
        %4246 = vmatmul.bf16.gmra.mxu0 %v4188
        %v4247 = vpop.f32.mrf.mxu0
        %v4248 = vadd.f32 %v4234, %v4247
        %v4249 = vpop.f32.mrf.mxu0
        %v4250 = vadd.f32 %v4236, %v4249
        %4251 = vdwg.mxu0
        %v4252 = vadd.f32 %v3999, %v4220
        %v4253 = vadd.f32 %v4000, %v4248
        %v4254 = vadd.f32 %v4001, %v4222
        %v4255 = vadd.f32 %v4002, %v4250
        %s4256 = scalar_lea.vmem [#allocation10], 6448
        %v4257 = vld [vmem:[%s4256] sm:$0xff]
        %v4258 = vld [vmem:[%s4256 + $0x8] sm:$0xff]
        %v4259 = vld [vmem:[%s4256 + $0x10] sm:$0xff]
        %v4260 = vld [vmem:[%s4256 + $0x18] sm:$0xff]
        %v4261 = vld [vmem:[%s4256 + $0x20] sm:$0xff]
        %v4262 = vld [vmem:[%s4256 + $0x28] sm:$0xff]
        %v4263 = vld [vmem:[%s4256 + $0x30] sm:$0xff]
        %v4264 = vld [vmem:[%s4256 + $0x38] sm:$0xff]
        %v4265 = vld [vmem:[%s4256 + $0x40] sm:$0xff]
        %v4266 = vld [vmem:[%s4256 + $0x48] sm:$0xff]
        %v4267 = vld [vmem:[%s4256 + $0x50] sm:$0xff]
        %v4268 = vld [vmem:[%s4256 + $0x58] sm:$0xff]
        %v4269 = vld [vmem:[%s4256 + $0x60] sm:$0xff]
        %v4270 = vld [vmem:[%s4256 + $0x68] sm:$0xff]
        %v4271 = vld [vmem:[%s4256 + $0x70] sm:$0xff]
        %v4272 = vld [vmem:[%s4256 + $0x78] sm:$0xff]
        %v4273 = vld [vmem:[%s4256 + $0x80] sm:$0xff]
        %v4274 = vld [vmem:[%s4256 + $0x88] sm:$0xff]
        %v4275 = vld [vmem:[%s4256 + $0x90] sm:$0xff]
        %v4276 = vld [vmem:[%s4256 + $0x98] sm:$0xff]
        %v4277 = vld [vmem:[%s4256 + $0xa0] sm:$0xff]
        %v4278 = vld [vmem:[%s4256 + $0xa8] sm:$0xff]
        %v4279 = vld [vmem:[%s4256 + $0xb0] sm:$0xff]
        %v4280 = vld [vmem:[%s4256 + $0xb8] sm:$0xff]
        %v4281 = vld [vmem:[%s4256 + $0xc0] sm:$0xff]
        %v4282 = vld [vmem:[%s4256 + $0xc8] sm:$0x11]
        %v4283 = vrot.slane %v3803, 1
        %v4284 = vrot.slane %v4033, 1
        %v4285 = vsel %vm2111, %v4283, %v4284
        %v4286 = vrot.slane %v3804, 1
        %v4287 = vrot.slane %v4034, 1
        %v4288 = vsel %vm2111, %v4286, %v4287
        %v4316 = vunpack.c.l.b16 %v4257
        %v4317 = vunpack.c.h.b16 %v4257
        %v4318 = vunpack.c.l.b16 %v4258
        %v4319 = vunpack.c.h.b16 %v4258
        %v4320 = vunpack.c.l.b16 %v4259
        %v4321 = vunpack.c.h.b16 %v4259
        %v4322 = vunpack.c.l.b16 %v4260
        %v4323 = vunpack.c.h.b16 %v4260
        %v4324 = vunpack.c.l.b16 %v4261
        %v4325 = vunpack.c.h.b16 %v4261
        %v4326 = vunpack.c.l.b16 %v4262
        %v4327 = vunpack.c.h.b16 %v4262
        %v4328 = vunpack.c.l.b16 %v4263
        %v4329 = vunpack.c.h.b16 %v4263
        %v4330 = vunpack.c.l.b16 %v4264
        %v4331 = vunpack.c.h.b16 %v4264
        %v4332 = vunpack.c.l.b16 %v4265
        %v4333 = vunpack.c.h.b16 %v4265
        %v4334 = vunpack.c.l.b16 %v4266
        %v4335 = vunpack.c.h.b16 %v4266
        %v4336 = vunpack.c.l.b16 %v4267
        %v4337 = vunpack.c.h.b16 %v4267
        %v4338 = vunpack.c.l.b16 %v4268
        %v4339 = vunpack.c.h.b16 %v4268
        %v4340 = vunpack.c.l.b16 %v4269
        %v4341 = vunpack.c.h.b16 %v4269
        %v4342 = vunpack.c.l.b16 %v4270
        %v4343 = vunpack.c.h.b16 %v4270
        %v4344 = vunpack.c.l.b16 %v4271
        %v4345 = vunpack.c.h.b16 %v4271
        %v4346 = vunpack.c.l.b16 %v4272
        %v4347 = vunpack.c.h.b16 %v4272
        %v4348 = vunpack.c.l.b16 %v4273
        %v4349 = vunpack.c.h.b16 %v4273
        %v4350 = vunpack.c.l.b16 %v4274
        %v4351 = vunpack.c.h.b16 %v4274
        %v4352 = vunpack.c.l.b16 %v4275
        %v4353 = vunpack.c.h.b16 %v4275
        %v4354 = vunpack.c.l.b16 %v4276
        %v4355 = vunpack.c.h.b16 %v4276
        %v4356 = vunpack.c.l.b16 %v4277
        %v4357 = vunpack.c.h.b16 %v4277
        %v4358 = vunpack.c.l.b16 %v4278
        %v4359 = vunpack.c.h.b16 %v4278
        %v4360 = vunpack.c.l.b16 %v4279
        %v4361 = vunpack.c.h.b16 %v4279
        %v4362 = vunpack.c.l.b16 %v4280
        %v4363 = vunpack.c.h.b16 %v4280
        %v4364 = vunpack.c.l.b16 %v4281
        %v4365 = vunpack.c.h.b16 %v4281
        %v4366 = vunpack.c.l.b16 %v4282
        %v4367 = vunpack.c.h.b16 %v4282
        %v4368 = vpack.c.b16 %v4318, %v4316
        %v4369 = vpack.c.b16 %v4319, %v4317
        %v4370 = vpack.c.b16 %v4322, %v4320
        %v4371 = vpack.c.b16 %v4323, %v4321
        %v4372 = vpack.c.b16 %v4326, %v4324
        %v4373 = vpack.c.b16 %v4327, %v4325
        %v4374 = vpack.c.b16 %v4330, %v4328
        %v4375 = vpack.c.b16 %v4331, %v4329
        %v4376 = vpack.c.b16 %v4334, %v4332
        %v4377 = vpack.c.b16 %v4335, %v4333
        %v4378 = vpack.c.b16 %v4338, %v4336
        %v4379 = vpack.c.b16 %v4339, %v4337
        %v4380 = vpack.c.b16 %v4342, %v4340
        %v4381 = vpack.c.b16 %v4343, %v4341
        %v4382 = vpack.c.b16 %v4346, %v4344
        %v4383 = vpack.c.b16 %v4347, %v4345
        %v4384 = vpack.c.b16 %v4350, %v4348
        %v4385 = vpack.c.b16 %v4351, %v4349
        %v4386 = vpack.c.b16 %v4354, %v4352
        %v4387 = vpack.c.b16 %v4355, %v4353
        %v4388 = vpack.c.b16 %v4358, %v4356
        %v4389 = vpack.c.b16 %v4359, %v4357
        %v4390 = vpack.c.b16 %v4362, %v4360
        %v4391 = vpack.c.b16 %v4363, %v4361
        %v4392 = vpack.c.b16 %v4366, %v4364
        %v4393 = vpack.c.b16 %v4367, %v4365
        %v4419 = vsel %vm305, %v4288, 0
        %v4422 = vand.u32 %v4392, %v867
        %v4425 = vand.u32 %v4393, %v867
        %4427 = vmatpush.bf16.msra.mxu0 %v4382
        %4428 = vmatpush.bf16.msra.mxu0 %v4380
        %4429 = vmatpush.bf16.msra.mxu0 %v4378
        %4430 = vmatpush.bf16.msra.mxu0 %v4376
        %4431 = vmatpush.bf16.msra.mxu0 %v4374
        %4432 = vmatpush.bf16.msra.mxu0 %v4372
        %4433 = vmatpush.bf16.msra.mxu0 %v4370
        %4434 = vmatpush.bf16.msra.mxu0 %v4368
        %4435 = vmatmul.bf16.gmra.mxu0 %v4285
        %v4436 = vpop.f32.mrf.mxu0
        %v4437 = vadd.f32 0.0, %v4436
        %v4438 = vpop.f32.mrf.mxu0
        %v4439 = vadd.f32 0.0, %v4438
        %4440 = vdwg.mxu0
        %4441 = vmatpush.bf16.msra.mxu0 0
        %4442 = vmatpush.bf16.msra.mxu0 0
        %4443 = vmatpush.bf16.msra.mxu0 0
        %4444 = vmatpush.bf16.msra.mxu0 %v4422
        %4445 = vmatpush.bf16.msra.mxu0 %v4390
        %4446 = vmatpush.bf16.msra.mxu0 %v4388
        %4447 = vmatpush.bf16.msra.mxu0 %v4386
        %4448 = vmatpush.bf16.msra.mxu0 %v4384
        %4449 = vmatmul.bf16.gmra.mxu0 %v4419
        %v4450 = vpop.f32.mrf.mxu0
        %v4451 = vadd.f32 %v4437, %v4450
        %v4452 = vpop.f32.mrf.mxu0
        %v4453 = vadd.f32 %v4439, %v4452
        %4454 = vdwg.mxu0
        %4455 = vmatpush.bf16.msra.mxu0 %v4383
        %4456 = vmatpush.bf16.msra.mxu0 %v4381
        %4457 = vmatpush.bf16.msra.mxu0 %v4379
        %4458 = vmatpush.bf16.msra.mxu0 %v4377
        %4459 = vmatpush.bf16.msra.mxu0 %v4375
        %4460 = vmatpush.bf16.msra.mxu0 %v4373
        %4461 = vmatpush.bf16.msra.mxu0 %v4371
        %4462 = vmatpush.bf16.msra.mxu0 %v4369
        %4463 = vmatmul.bf16.gmra.mxu0 %v4285
        %v4464 = vpop.f32.mrf.mxu0
        %v4465 = vadd.f32 0.0, %v4464
        %v4466 = vpop.f32.mrf.mxu0
        %v4467 = vadd.f32 0.0, %v4466
        %4468 = vdwg.mxu0
        %4469 = vmatpush.bf16.msra.mxu0 0
        %4470 = vmatpush.bf16.msra.mxu0 0
        %4471 = vmatpush.bf16.msra.mxu0 0
        %4472 = vmatpush.bf16.msra.mxu0 %v4425
        %4473 = vmatpush.bf16.msra.mxu0 %v4391
        %4474 = vmatpush.bf16.msra.mxu0 %v4389
        %4475 = vmatpush.bf16.msra.mxu0 %v4387
        %4476 = vmatpush.bf16.msra.mxu0 %v4385
        %4477 = vmatmul.bf16.gmra.mxu0 %v4419
        %v4478 = vpop.f32.mrf.mxu0
        %v4479 = vadd.f32 %v4465, %v4478
        %v4480 = vpop.f32.mrf.mxu0
        %v4481 = vadd.f32 %v4467, %v4480
        %4482 = vdwg.mxu0
        %v4483 = vadd.f32 %v4252, %v4451
        %v4484 = vadd.f32 %v4253, %v4479
        %v4485 = vadd.f32 %v4254, %v4453
        %v4486 = vadd.f32 %v4255, %v4481
        %s4487 = scalar_lea.vmem [#allocation10], 7488
        %v4488 = vld [vmem:[%s4487] sm:$0xff]
        %v4489 = vld [vmem:[%s4487 + $0x8] sm:$0xff]
        %v4490 = vld [vmem:[%s4487 + $0x10] sm:$0xff]
        %v4491 = vld [vmem:[%s4487 + $0x18] sm:$0xff]
        %v4492 = vld [vmem:[%s4487 + $0x20] sm:$0xff]
        %v4493 = vld [vmem:[%s4487 + $0x28] sm:$0xff]
        %v4494 = vld [vmem:[%s4487 + $0x30] sm:$0xff]
        %v4495 = vld [vmem:[%s4487 + $0x38] sm:$0xff]
        %v4496 = vld [vmem:[%s4487 + $0x40] sm:$0xff]
        %v4497 = vld [vmem:[%s4487 + $0x48] sm:$0xff]
        %v4498 = vld [vmem:[%s4487 + $0x50] sm:$0xff]
        %v4499 = vld [vmem:[%s4487 + $0x58] sm:$0xff]
        %v4500 = vld [vmem:[%s4487 + $0x60] sm:$0xff]
        %v4501 = vld [vmem:[%s4487 + $0x68] sm:$0xff]
        %v4502 = vld [vmem:[%s4487 + $0x70] sm:$0xff]
        %v4503 = vld [vmem:[%s4487 + $0x78] sm:$0xff]
        %v4504 = vld [vmem:[%s4487 + $0x80] sm:$0xff]
        %v4505 = vld [vmem:[%s4487 + $0x88] sm:$0xff]
        %v4506 = vld [vmem:[%s4487 + $0x90] sm:$0xff]
        %v4507 = vld [vmem:[%s4487 + $0x98] sm:$0xff]
        %v4508 = vld [vmem:[%s4487 + $0xa0] sm:$0xff]
        %v4509 = vld [vmem:[%s4487 + $0xa8] sm:$0xff]
        %v4510 = vld [vmem:[%s4487 + $0xb0] sm:$0xff]
        %v4511 = vld [vmem:[%s4487 + $0xb8] sm:$0xff]
        %v4512 = vld [vmem:[%s4487 + $0xc0] sm:$0xff]
        %v4513 = vld [vmem:[%s4487 + $0xc8] sm:$0x11]
        %v4514 = vrot.slane %v4036, 1
        %v4515 = vrot.slane %v4038, 2
        %v4516 = vor.u32 %v4514, %v4515
        %v4517 = vshrl.u32 %v4033, 16
        %v4519 = vrot.slane %v4517, 1
        %v4520 = vrot.slane %v4043, 2
        %v4521 = vor.u32 %v4519, %v4520
        %v4522 = vsel %vm2343, %v4516, %v4521
        %v4523 = vrot.slane %v4047, 1
        %v4524 = vrot.slane %v4049, 2
        %v4525 = vor.u32 %v4523, %v4524
        %v4526 = vshrl.u32 %v4034, 16
        %v4528 = vrot.slane %v4526, 1
        %v4529 = vrot.slane %v4054, 2
        %v4530 = vor.u32 %v4528, %v4529
        %v4531 = vsel %vm2343, %v4525, %v4530
        %v4559 = vunpack.c.l.b16 %v4488
        %v4560 = vunpack.c.h.b16 %v4488
        %v4561 = vunpack.c.l.b16 %v4489
        %v4562 = vunpack.c.h.b16 %v4489
        %v4563 = vunpack.c.l.b16 %v4490
        %v4564 = vunpack.c.h.b16 %v4490
        %v4565 = vunpack.c.l.b16 %v4491
        %v4566 = vunpack.c.h.b16 %v4491
        %v4567 = vunpack.c.l.b16 %v4492
        %v4568 = vunpack.c.h.b16 %v4492
        %v4569 = vunpack.c.l.b16 %v4493
        %v4570 = vunpack.c.h.b16 %v4493
        %v4571 = vunpack.c.l.b16 %v4494
        %v4572 = vunpack.c.h.b16 %v4494
        %v4573 = vunpack.c.l.b16 %v4495
        %v4574 = vunpack.c.h.b16 %v4495
        %v4575 = vunpack.c.l.b16 %v4496
        %v4576 = vunpack.c.h.b16 %v4496
        %v4577 = vunpack.c.l.b16 %v4497
        %v4578 = vunpack.c.h.b16 %v4497
        %v4579 = vunpack.c.l.b16 %v4498
        %v4580 = vunpack.c.h.b16 %v4498
        %v4581 = vunpack.c.l.b16 %v4499
        %v4582 = vunpack.c.h.b16 %v4499
        %v4583 = vunpack.c.l.b16 %v4500
        %v4584 = vunpack.c.h.b16 %v4500
        %v4585 = vunpack.c.l.b16 %v4501
        %v4586 = vunpack.c.h.b16 %v4501
        %v4587 = vunpack.c.l.b16 %v4502
        %v4588 = vunpack.c.h.b16 %v4502
        %v4589 = vunpack.c.l.b16 %v4503
        %v4590 = vunpack.c.h.b16 %v4503
        %v4591 = vunpack.c.l.b16 %v4504
        %v4592 = vunpack.c.h.b16 %v4504
        %v4593 = vunpack.c.l.b16 %v4505
        %v4594 = vunpack.c.h.b16 %v4505
        %v4595 = vunpack.c.l.b16 %v4506
        %v4596 = vunpack.c.h.b16 %v4506
        %v4597 = vunpack.c.l.b16 %v4507
        %v4598 = vunpack.c.h.b16 %v4507
        %v4599 = vunpack.c.l.b16 %v4508
        %v4600 = vunpack.c.h.b16 %v4508
        %v4601 = vunpack.c.l.b16 %v4509
        %v4602 = vunpack.c.h.b16 %v4509
        %v4603 = vunpack.c.l.b16 %v4510
        %v4604 = vunpack.c.h.b16 %v4510
        %v4605 = vunpack.c.l.b16 %v4511
        %v4606 = vunpack.c.h.b16 %v4511
        %v4607 = vunpack.c.l.b16 %v4512
        %v4608 = vunpack.c.h.b16 %v4512
        %v4609 = vunpack.c.l.b16 %v4513
        %v4610 = vunpack.c.h.b16 %v4513
        %v4611 = vpack.c.b16 %v4561, %v4559
        %v4612 = vpack.c.b16 %v4562, %v4560
        %v4613 = vpack.c.b16 %v4565, %v4563
        %v4614 = vpack.c.b16 %v4566, %v4564
        %v4615 = vpack.c.b16 %v4569, %v4567
        %v4616 = vpack.c.b16 %v4570, %v4568
        %v4617 = vpack.c.b16 %v4573, %v4571
        %v4618 = vpack.c.b16 %v4574, %v4572
        %v4619 = vpack.c.b16 %v4577, %v4575
        %v4620 = vpack.c.b16 %v4578, %v4576
        %v4621 = vpack.c.b16 %v4581, %v4579
        %v4622 = vpack.c.b16 %v4582, %v4580
        %v4623 = vpack.c.b16 %v4585, %v4583
        %v4624 = vpack.c.b16 %v4586, %v4584
        %v4625 = vpack.c.b16 %v4589, %v4587
        %v4626 = vpack.c.b16 %v4590, %v4588
        %v4627 = vpack.c.b16 %v4593, %v4591
        %v4628 = vpack.c.b16 %v4594, %v4592
        %v4629 = vpack.c.b16 %v4597, %v4595
        %v4630 = vpack.c.b16 %v4598, %v4596
        %v4631 = vpack.c.b16 %v4601, %v4599
        %v4632 = vpack.c.b16 %v4602, %v4600
        %v4633 = vpack.c.b16 %v4605, %v4603
        %v4634 = vpack.c.b16 %v4606, %v4604
        %v4635 = vpack.c.b16 %v4609, %v4607
        %v4636 = vpack.c.b16 %v4610, %v4608
        %v4662 = vsel %vm305, %v4531, 0
        %v4665 = vand.u32 %v4635, %v867
        %v4668 = vand.u32 %v4636, %v867
        %4670 = vmatpush.bf16.msra.mxu0 %v4625
        %4671 = vmatpush.bf16.msra.mxu0 %v4623
        %4672 = vmatpush.bf16.msra.mxu0 %v4621
        %4673 = vmatpush.bf16.msra.mxu0 %v4619
        %4674 = vmatpush.bf16.msra.mxu0 %v4617
        %4675 = vmatpush.bf16.msra.mxu0 %v4615
        %4676 = vmatpush.bf16.msra.mxu0 %v4613
        %4677 = vmatpush.bf16.msra.mxu0 %v4611
        %4678 = vmatmul.bf16.gmra.mxu0 %v4522
        %v4679 = vpop.f32.mrf.mxu0
        %v4680 = vadd.f32 0.0, %v4679
        %v4681 = vpop.f32.mrf.mxu0
        %v4682 = vadd.f32 0.0, %v4681
        %4683 = vdwg.mxu0
        %4684 = vmatpush.bf16.msra.mxu0 0
        %4685 = vmatpush.bf16.msra.mxu0 0
        %4686 = vmatpush.bf16.msra.mxu0 0
        %4687 = vmatpush.bf16.msra.mxu0 %v4665
        %4688 = vmatpush.bf16.msra.mxu0 %v4633
        %4689 = vmatpush.bf16.msra.mxu0 %v4631
        %4690 = vmatpush.bf16.msra.mxu0 %v4629
        %4691 = vmatpush.bf16.msra.mxu0 %v4627
        %4692 = vmatmul.bf16.gmra.mxu0 %v4662
        %v4693 = vpop.f32.mrf.mxu0
        %v4694 = vadd.f32 %v4680, %v4693
        %v4695 = vpop.f32.mrf.mxu0
        %v4696 = vadd.f32 %v4682, %v4695
        %4697 = vdwg.mxu0
        %4698 = vmatpush.bf16.msra.mxu0 %v4626
        %4699 = vmatpush.bf16.msra.mxu0 %v4624
        %4700 = vmatpush.bf16.msra.mxu0 %v4622
        %4701 = vmatpush.bf16.msra.mxu0 %v4620
        %4702 = vmatpush.bf16.msra.mxu0 %v4618
        %4703 = vmatpush.bf16.msra.mxu0 %v4616
        %4704 = vmatpush.bf16.msra.mxu0 %v4614
        %4705 = vmatpush.bf16.msra.mxu0 %v4612
        %4706 = vmatmul.bf16.gmra.mxu0 %v4522
        %v4707 = vpop.f32.mrf.mxu0
        %v4708 = vadd.f32 0.0, %v4707
        %v4709 = vpop.f32.mrf.mxu0
        %v4710 = vadd.f32 0.0, %v4709
        %4711 = vdwg.mxu0
        %4712 = vmatpush.bf16.msra.mxu0 0
        %4713 = vmatpush.bf16.msra.mxu0 0
        %4714 = vmatpush.bf16.msra.mxu0 0
        %4715 = vmatpush.bf16.msra.mxu0 %v4668
        %4716 = vmatpush.bf16.msra.mxu0 %v4634
        %4717 = vmatpush.bf16.msra.mxu0 %v4632
        %4718 = vmatpush.bf16.msra.mxu0 %v4630
        %4719 = vmatpush.bf16.msra.mxu0 %v4628
        %4720 = vmatmul.bf16.gmra.mxu0 %v4662
        %v4721 = vpop.f32.mrf.mxu0
        %v4722 = vadd.f32 %v4708, %v4721
        %v4723 = vpop.f32.mrf.mxu0
        %v4724 = vadd.f32 %v4710, %v4723
        %4725 = vdwg.mxu0
        %v4726 = vadd.f32 %v4483, %v4694
        %v4727 = vadd.f32 %v4484, %v4722
        %v4728 = vadd.f32 %v4485, %v4696
        %v4729 = vadd.f32 %v4486, %v4724
        %s4730 = scalar_lea.vmem [#allocation10], 8528
        %v4731 = vld [vmem:[%s4730] sm:$0xff]
        %v4732 = vld [vmem:[%s4730 + $0x8] sm:$0xff]
        %v4733 = vld [vmem:[%s4730 + $0x10] sm:$0xff]
        %v4734 = vld [vmem:[%s4730 + $0x18] sm:$0xff]
        %v4735 = vld [vmem:[%s4730 + $0x20] sm:$0xff]
        %v4736 = vld [vmem:[%s4730 + $0x28] sm:$0xff]
        %v4737 = vld [vmem:[%s4730 + $0x30] sm:$0xff]
        %v4738 = vld [vmem:[%s4730 + $0x38] sm:$0xff]
        %v4739 = vld [vmem:[%s4730 + $0x40] sm:$0xff]
        %v4740 = vld [vmem:[%s4730 + $0x48] sm:$0xff]
        %v4741 = vld [vmem:[%s4730 + $0x50] sm:$0xff]
        %v4742 = vld [vmem:[%s4730 + $0x58] sm:$0xff]
        %v4743 = vld [vmem:[%s4730 + $0x60] sm:$0xff]
        %v4744 = vld [vmem:[%s4730 + $0x68] sm:$0xff]
        %v4745 = vld [vmem:[%s4730 + $0x70] sm:$0xff]
        %v4746 = vld [vmem:[%s4730 + $0x78] sm:$0xff]
        %v4747 = vld [vmem:[%s4730 + $0x80] sm:$0xff]
        %v4748 = vld [vmem:[%s4730 + $0x88] sm:$0xff]
        %v4749 = vld [vmem:[%s4730 + $0x90] sm:$0xff]
        %v4750 = vld [vmem:[%s4730 + $0x98] sm:$0xff]
        %v4751 = vld [vmem:[%s4730 + $0xa0] sm:$0xff]
        %v4752 = vld [vmem:[%s4730 + $0xa8] sm:$0xff]
        %v4753 = vld [vmem:[%s4730 + $0xb0] sm:$0xff]
        %v4754 = vld [vmem:[%s4730 + $0xb8] sm:$0xff]
        %v4755 = vld [vmem:[%s4730 + $0xc0] sm:$0xff]
        %v4756 = vld [vmem:[%s4730 + $0xc8] sm:$0x11]
        %v4757 = vrot.slane %v3803, 2
        %v4758 = vrot.slane %v4033, 2
        %v4759 = vsel %vm930, %v4757, %v4758
        %v4760 = vrot.slane %v3804, 2
        %v4761 = vrot.slane %v4034, 2
        %v4762 = vsel %vm930, %v4760, %v4761
        %v4790 = vunpack.c.l.b16 %v4731
        %v4791 = vunpack.c.h.b16 %v4731
        %v4792 = vunpack.c.l.b16 %v4732
        %v4793 = vunpack.c.h.b16 %v4732
        %v4794 = vunpack.c.l.b16 %v4733
        %v4795 = vunpack.c.h.b16 %v4733
        %v4796 = vunpack.c.l.b16 %v4734
        %v4797 = vunpack.c.h.b16 %v4734
        %v4798 = vunpack.c.l.b16 %v4735
        %v4799 = vunpack.c.h.b16 %v4735
        %v4800 = vunpack.c.l.b16 %v4736
        %v4801 = vunpack.c.h.b16 %v4736
        %v4802 = vunpack.c.l.b16 %v4737
        %v4803 = vunpack.c.h.b16 %v4737
        %v4804 = vunpack.c.l.b16 %v4738
        %v4805 = vunpack.c.h.b16 %v4738
        %v4806 = vunpack.c.l.b16 %v4739
        %v4807 = vunpack.c.h.b16 %v4739
        %v4808 = vunpack.c.l.b16 %v4740
        %v4809 = vunpack.c.h.b16 %v4740
        %v4810 = vunpack.c.l.b16 %v4741
        %v4811 = vunpack.c.h.b16 %v4741
        %v4812 = vunpack.c.l.b16 %v4742
        %v4813 = vunpack.c.h.b16 %v4742
        %v4814 = vunpack.c.l.b16 %v4743
        %v4815 = vunpack.c.h.b16 %v4743
        %v4816 = vunpack.c.l.b16 %v4744
        %v4817 = vunpack.c.h.b16 %v4744
        %v4818 = vunpack.c.l.b16 %v4745
        %v4819 = vunpack.c.h.b16 %v4745
        %v4820 = vunpack.c.l.b16 %v4746
        %v4821 = vunpack.c.h.b16 %v4746
        %v4822 = vunpack.c.l.b16 %v4747
        %v4823 = vunpack.c.h.b16 %v4747
        %v4824 = vunpack.c.l.b16 %v4748
        %v4825 = vunpack.c.h.b16 %v4748
        %v4826 = vunpack.c.l.b16 %v4749
        %v4827 = vunpack.c.h.b16 %v4749
        %v4828 = vunpack.c.l.b16 %v4750
        %v4829 = vunpack.c.h.b16 %v4750
        %v4830 = vunpack.c.l.b16 %v4751
        %v4831 = vunpack.c.h.b16 %v4751
        %v4832 = vunpack.c.l.b16 %v4752
        %v4833 = vunpack.c.h.b16 %v4752
        %v4834 = vunpack.c.l.b16 %v4753
        %v4835 = vunpack.c.h.b16 %v4753
        %v4836 = vunpack.c.l.b16 %v4754
        %v4837 = vunpack.c.h.b16 %v4754
        %v4838 = vunpack.c.l.b16 %v4755
        %v4839 = vunpack.c.h.b16 %v4755
        %v4840 = vunpack.c.l.b16 %v4756
        %v4841 = vunpack.c.h.b16 %v4756
        %v4842 = vpack.c.b16 %v4792, %v4790
        %v4843 = vpack.c.b16 %v4793, %v4791
        %v4844 = vpack.c.b16 %v4796, %v4794
        %v4845 = vpack.c.b16 %v4797, %v4795
        %v4846 = vpack.c.b16 %v4800, %v4798
        %v4847 = vpack.c.b16 %v4801, %v4799
        %v4848 = vpack.c.b16 %v4804, %v4802
        %v4849 = vpack.c.b16 %v4805, %v4803
        %v4850 = vpack.c.b16 %v4808, %v4806
        %v4851 = vpack.c.b16 %v4809, %v4807
        %v4852 = vpack.c.b16 %v4812, %v4810
        %v4853 = vpack.c.b16 %v4813, %v4811
        %v4854 = vpack.c.b16 %v4816, %v4814
        %v4855 = vpack.c.b16 %v4817, %v4815
        %v4856 = vpack.c.b16 %v4820, %v4818
        %v4857 = vpack.c.b16 %v4821, %v4819
        %v4858 = vpack.c.b16 %v4824, %v4822
        %v4859 = vpack.c.b16 %v4825, %v4823
        %v4860 = vpack.c.b16 %v4828, %v4826
        %v4861 = vpack.c.b16 %v4829, %v4827
        %v4862 = vpack.c.b16 %v4832, %v4830
        %v4863 = vpack.c.b16 %v4833, %v4831
        %v4864 = vpack.c.b16 %v4836, %v4834
        %v4865 = vpack.c.b16 %v4837, %v4835
        %v4866 = vpack.c.b16 %v4840, %v4838
        %v4867 = vpack.c.b16 %v4841, %v4839
        %v4893 = vsel %vm305, %v4762, 0
        %v4896 = vand.u32 %v4866, %v867
        %v4899 = vand.u32 %v4867, %v867
        %4901 = vmatpush.bf16.msra.mxu0 %v4856
        %4902 = vmatpush.bf16.msra.mxu0 %v4854
        %4903 = vmatpush.bf16.msra.mxu0 %v4852
        %4904 = vmatpush.bf16.msra.mxu0 %v4850
        %4905 = vmatpush.bf16.msra.mxu0 %v4848
        %4906 = vmatpush.bf16.msra.mxu0 %v4846
        %4907 = vmatpush.bf16.msra.mxu0 %v4844
        %4908 = vmatpush.bf16.msra.mxu0 %v4842
        %4909 = vmatmul.bf16.gmra.mxu0 %v4759
        %v4910 = vpop.f32.mrf.mxu0
        %v4911 = vadd.f32 0.0, %v4910
        %v4912 = vpop.f32.mrf.mxu0
        %v4913 = vadd.f32 0.0, %v4912
        %4914 = vdwg.mxu0
        %4915 = vmatpush.bf16.msra.mxu0 0
        %4916 = vmatpush.bf16.msra.mxu0 0
        %4917 = vmatpush.bf16.msra.mxu0 0
        %4918 = vmatpush.bf16.msra.mxu0 %v4896
        %4919 = vmatpush.bf16.msra.mxu0 %v4864
        %4920 = vmatpush.bf16.msra.mxu0 %v4862
        %4921 = vmatpush.bf16.msra.mxu0 %v4860
        %4922 = vmatpush.bf16.msra.mxu0 %v4858
        %4923 = vmatmul.bf16.gmra.mxu0 %v4893
        %v4924 = vpop.f32.mrf.mxu0
        %v4925 = vadd.f32 %v4911, %v4924
        %v4926 = vpop.f32.mrf.mxu0
        %v4927 = vadd.f32 %v4913, %v4926
        %4928 = vdwg.mxu0
        %4929 = vmatpush.bf16.msra.mxu0 %v4857
        %4930 = vmatpush.bf16.msra.mxu0 %v4855
        %4931 = vmatpush.bf16.msra.mxu0 %v4853
        %4932 = vmatpush.bf16.msra.mxu0 %v4851
        %4933 = vmatpush.bf16.msra.mxu0 %v4849
        %4934 = vmatpush.bf16.msra.mxu0 %v4847
        %4935 = vmatpush.bf16.msra.mxu0 %v4845
        %4936 = vmatpush.bf16.msra.mxu0 %v4843
        %4937 = vmatmul.bf16.gmra.mxu0 %v4759
        %v4938 = vpop.f32.mrf.mxu0
        %v4939 = vadd.f32 0.0, %v4938
        %v4940 = vpop.f32.mrf.mxu0
        %v4941 = vadd.f32 0.0, %v4940
        %4942 = vdwg.mxu0
        %4943 = vmatpush.bf16.msra.mxu0 0
        %4944 = vmatpush.bf16.msra.mxu0 0
        %4945 = vmatpush.bf16.msra.mxu0 0
        %4946 = vmatpush.bf16.msra.mxu0 %v4899
        %4947 = vmatpush.bf16.msra.mxu0 %v4865
        %4948 = vmatpush.bf16.msra.mxu0 %v4863
        %4949 = vmatpush.bf16.msra.mxu0 %v4861
        %4950 = vmatpush.bf16.msra.mxu0 %v4859
        %4951 = vmatmul.bf16.gmra.mxu0 %v4893
        %v4952 = vpop.f32.mrf.mxu0
        %v4953 = vadd.f32 %v4939, %v4952
        %v4954 = vpop.f32.mrf.mxu0
        %v4955 = vadd.f32 %v4941, %v4954
        %4956 = vdwg.mxu0
        %v4957 = vadd.f32 %v4726, %v4925
        %v4958 = vadd.f32 %v4727, %v4953
        %v4959 = vadd.f32 %v4728, %v4927
        %v4960 = vadd.f32 %v4729, %v4955
        %v4961 = vld [vmem:[%s512] sm:$0xff]
        %v4962 = vld [vmem:[%s512 + $0x8] sm:$0xff]
        %v4963 = vld [vmem:[%s512 + $0x10] sm:$0xff]
        %v4964 = vld [vmem:[%s512 + $0x18] sm:$0xff]
        %v4965 = vld [vmem:[%s512 + $0x20] sm:$0xff]
        %v4966 = vld [vmem:[%s512 + $0x28] sm:$0xff]
        %v4967 = vld [vmem:[%s512 + $0x30] sm:$0xf]
        %v4968 = vld [vmem:[%s512 + $0x38] sm:$0xf]
        %v4969 = vpack.c.bf16 %v4962, %v4961
        %v4970 = vpack.c.bf16 %v4964, %v4963
        %v4971 = vpack.c.bf16 %v4966, %v4965
        %v4972 = vpack.c.bf16 %v4968, %v4967
        %s4973 = scalar_lea.vmem [#allocation10], 416
        %v4974 = vld [vmem:[%s4973] sm:$0xff]
        %v4975 = vld [vmem:[%s4973 + $0x8] sm:$0xff]
        %v4976 = vld [vmem:[%s4973 + $0x10] sm:$0xff]
        %v4977 = vld [vmem:[%s4973 + $0x18] sm:$0xff]
        %v4978 = vld [vmem:[%s4973 + $0x20] sm:$0xff]
        %v4979 = vld [vmem:[%s4973 + $0x28] sm:$0xff]
        %v4980 = vld [vmem:[%s4973 + $0x30] sm:$0xff]
        %v4981 = vld [vmem:[%s4973 + $0x38] sm:$0xff]
        %v4982 = vld [vmem:[%s4973 + $0x40] sm:$0xff]
        %v4983 = vld [vmem:[%s4973 + $0x48] sm:$0xff]
        %v4984 = vld [vmem:[%s4973 + $0x50] sm:$0xff]
        %v4985 = vld [vmem:[%s4973 + $0x58] sm:$0xff]
        %v4986 = vld [vmem:[%s4973 + $0x60] sm:$0xff]
        %v4987 = vld [vmem:[%s4973 + $0x68] sm:$0xff]
        %v4988 = vld [vmem:[%s4973 + $0x70] sm:$0xff]
        %v4989 = vld [vmem:[%s4973 + $0x78] sm:$0xff]
        %v4990 = vld [vmem:[%s4973 + $0x80] sm:$0xff]
        %v4991 = vld [vmem:[%s4973 + $0x88] sm:$0xff]
        %v4992 = vld [vmem:[%s4973 + $0x90] sm:$0xff]
        %v4993 = vld [vmem:[%s4973 + $0x98] sm:$0xff]
        %v4994 = vld [vmem:[%s4973 + $0xa0] sm:$0xff]
        %v4995 = vld [vmem:[%s4973 + $0xa8] sm:$0xff]
        %v4996 = vld [vmem:[%s4973 + $0xb0] sm:$0xff]
        %v4997 = vld [vmem:[%s4973 + $0xb8] sm:$0xff]
        %v4998 = vld [vmem:[%s4973 + $0xc0] sm:$0xff]
        %v4999 = vld [vmem:[%s4973 + $0xc8] sm:$0x11]
        %v5003 = vunpack.c.l.b16 %v4969
        %v5004 = vunpack.c.h.b16 %v4969
        %v5005 = vunpack.c.l.b16 %v4970
        %v5006 = vunpack.c.h.b16 %v4970
        %v5007 = vunpack.c.l.b16 %v4971
        %v5008 = vunpack.c.h.b16 %v4971
        %v5009 = vpack.c.b16 %v5005, %v5003
        %v5010 = vpack.c.b16 %v5006, %v5004
        %v5011 = vpack.c.b16 %v5007, %v5007
        %v5012 = vpack.c.b16 %v5008, %v5008
        %v5013 = vrot.slane %v5009, 2
        %v5014 = vrot.slane %v5011, 2
        %v5015 = vsel %vm930, %v5013, %v5014
        %v5016 = vrot.slane %v5010, 2
        %v5017 = vrot.slane %v5012, 2
        %v5018 = vsel %vm930, %v5016, %v5017
        %v5046 = vunpack.c.l.b16 %v4974
        %v5047 = vunpack.c.h.b16 %v4974
        %v5048 = vunpack.c.l.b16 %v4975
        %v5049 = vunpack.c.h.b16 %v4975
        %v5050 = vunpack.c.l.b16 %v4976
        %v5051 = vunpack.c.h.b16 %v4976
        %v5052 = vunpack.c.l.b16 %v4977
        %v5053 = vunpack.c.h.b16 %v4977
        %v5054 = vunpack.c.l.b16 %v4978
        %v5055 = vunpack.c.h.b16 %v4978
        %v5056 = vunpack.c.l.b16 %v4979
        %v5057 = vunpack.c.h.b16 %v4979
        %v5058 = vunpack.c.l.b16 %v4980
        %v5059 = vunpack.c.h.b16 %v4980
        %v5060 = vunpack.c.l.b16 %v4981
        %v5061 = vunpack.c.h.b16 %v4981
        %v5062 = vunpack.c.l.b16 %v4982
        %v5063 = vunpack.c.h.b16 %v4982
        %v5064 = vunpack.c.l.b16 %v4983
        %v5065 = vunpack.c.h.b16 %v4983
        %v5066 = vunpack.c.l.b16 %v4984
        %v5067 = vunpack.c.h.b16 %v4984
        %v5068 = vunpack.c.l.b16 %v4985
        %v5069 = vunpack.c.h.b16 %v4985
        %v5070 = vunpack.c.l.b16 %v4986
        %v5071 = vunpack.c.h.b16 %v4986
        %v5072 = vunpack.c.l.b16 %v4987
        %v5073 = vunpack.c.h.b16 %v4987
        %v5074 = vunpack.c.l.b16 %v4988
        %v5075 = vunpack.c.h.b16 %v4988
        %v5076 = vunpack.c.l.b16 %v4989
        %v5077 = vunpack.c.h.b16 %v4989
        %v5078 = vunpack.c.l.b16 %v4990
        %v5079 = vunpack.c.h.b16 %v4990
        %v5080 = vunpack.c.l.b16 %v4991
        %v5081 = vunpack.c.h.b16 %v4991
        %v5082 = vunpack.c.l.b16 %v4992
        %v5083 = vunpack.c.h.b16 %v4992
        %v5084 = vunpack.c.l.b16 %v4993
        %v5085 = vunpack.c.h.b16 %v4993
        %v5086 = vunpack.c.l.b16 %v4994
        %v5087 = vunpack.c.h.b16 %v4994
        %v5088 = vunpack.c.l.b16 %v4995
        %v5089 = vunpack.c.h.b16 %v4995
        %v5090 = vunpack.c.l.b16 %v4996
        %v5091 = vunpack.c.h.b16 %v4996
        %v5092 = vunpack.c.l.b16 %v4997
        %v5093 = vunpack.c.h.b16 %v4997
        %v5094 = vunpack.c.l.b16 %v4998
        %v5095 = vunpack.c.h.b16 %v4998
        %v5096 = vunpack.c.l.b16 %v4999
        %v5097 = vunpack.c.h.b16 %v4999
        %v5098 = vpack.c.b16 %v5048, %v5046
        %v5099 = vpack.c.b16 %v5049, %v5047
        %v5100 = vpack.c.b16 %v5052, %v5050
        %v5101 = vpack.c.b16 %v5053, %v5051
        %v5102 = vpack.c.b16 %v5056, %v5054
        %v5103 = vpack.c.b16 %v5057, %v5055
        %v5104 = vpack.c.b16 %v5060, %v5058
        %v5105 = vpack.c.b16 %v5061, %v5059
        %v5106 = vpack.c.b16 %v5064, %v5062
        %v5107 = vpack.c.b16 %v5065, %v5063
        %v5108 = vpack.c.b16 %v5068, %v5066
        %v5109 = vpack.c.b16 %v5069, %v5067
        %v5110 = vpack.c.b16 %v5072, %v5070
        %v5111 = vpack.c.b16 %v5073, %v5071
        %v5112 = vpack.c.b16 %v5076, %v5074
        %v5113 = vpack.c.b16 %v5077, %v5075
        %v5114 = vpack.c.b16 %v5080, %v5078
        %v5115 = vpack.c.b16 %v5081, %v5079
        %v5116 = vpack.c.b16 %v5084, %v5082
        %v5117 = vpack.c.b16 %v5085, %v5083
        %v5118 = vpack.c.b16 %v5088, %v5086
        %v5119 = vpack.c.b16 %v5089, %v5087
        %v5120 = vpack.c.b16 %v5092, %v5090
        %v5121 = vpack.c.b16 %v5093, %v5091
        %v5122 = vpack.c.b16 %v5096, %v5094
        %v5123 = vpack.c.b16 %v5097, %v5095
        %v5149 = vsel %vm305, %v5018, 0
        %v5152 = vand.u32 %v5122, %v867
        %v5155 = vand.u32 %v5123, %v867
        %5157 = vmatpush.bf16.msra.mxu0 %v5112
        %5158 = vmatpush.bf16.msra.mxu0 %v5110
        %5159 = vmatpush.bf16.msra.mxu0 %v5108
        %5160 = vmatpush.bf16.msra.mxu0 %v5106
        %5161 = vmatpush.bf16.msra.mxu0 %v5104
        %5162 = vmatpush.bf16.msra.mxu0 %v5102
        %5163 = vmatpush.bf16.msra.mxu0 %v5100
        %5164 = vmatpush.bf16.msra.mxu0 %v5098
        %5165 = vmatmul.bf16.gmra.mxu0 %v5015
        %v5166 = vpop.f32.mrf.mxu0
        %v5167 = vadd.f32 0.0, %v5166
        %v5168 = vpop.f32.mrf.mxu0
        %v5169 = vadd.f32 0.0, %v5168
        %5170 = vdwg.mxu0
        %5171 = vmatpush.bf16.msra.mxu0 0
        %5172 = vmatpush.bf16.msra.mxu0 0
        %5173 = vmatpush.bf16.msra.mxu0 0
        %5174 = vmatpush.bf16.msra.mxu0 %v5152
        %5175 = vmatpush.bf16.msra.mxu0 %v5120
        %5176 = vmatpush.bf16.msra.mxu0 %v5118
        %5177 = vmatpush.bf16.msra.mxu0 %v5116
        %5178 = vmatpush.bf16.msra.mxu0 %v5114
        %5179 = vmatmul.bf16.gmra.mxu0 %v5149
        %v5180 = vpop.f32.mrf.mxu0
        %v5181 = vadd.f32 %v5167, %v5180
        %v5182 = vpop.f32.mrf.mxu0
        %v5183 = vadd.f32 %v5169, %v5182
        %5184 = vdwg.mxu0
        %5185 = vmatpush.bf16.msra.mxu0 %v5113
        %5186 = vmatpush.bf16.msra.mxu0 %v5111
        %5187 = vmatpush.bf16.msra.mxu0 %v5109
        %5188 = vmatpush.bf16.msra.mxu0 %v5107
        %5189 = vmatpush.bf16.msra.mxu0 %v5105
        %5190 = vmatpush.bf16.msra.mxu0 %v5103
        %5191 = vmatpush.bf16.msra.mxu0 %v5101
        %5192 = vmatpush.bf16.msra.mxu0 %v5099
        %5193 = vmatmul.bf16.gmra.mxu0 %v5015
        %v5194 = vpop.f32.mrf.mxu0
        %v5195 = vadd.f32 0.0, %v5194
        %v5196 = vpop.f32.mrf.mxu0
        %v5197 = vadd.f32 0.0, %v5196
        %5198 = vdwg.mxu0
        %5199 = vmatpush.bf16.msra.mxu0 0
        %5200 = vmatpush.bf16.msra.mxu0 0
        %5201 = vmatpush.bf16.msra.mxu0 0
        %5202 = vmatpush.bf16.msra.mxu0 %v5155
        %5203 = vmatpush.bf16.msra.mxu0 %v5121
        %5204 = vmatpush.bf16.msra.mxu0 %v5119
        %5205 = vmatpush.bf16.msra.mxu0 %v5117
        %5206 = vmatpush.bf16.msra.mxu0 %v5115
        %5207 = vmatmul.bf16.gmra.mxu0 %v5149
        %v5208 = vpop.f32.mrf.mxu0
        %v5209 = vadd.f32 %v5195, %v5208
        %v5210 = vpop.f32.mrf.mxu0
        %v5211 = vadd.f32 %v5197, %v5210
        %5212 = vdwg.mxu0
        %v5213 = vadd.f32 %v4957, %v5181
        %v5214 = vadd.f32 %v4958, %v5209
        %v5215 = vadd.f32 %v4959, %v5183
        %v5216 = vadd.f32 %v4960, %v5211
        %s5217 = scalar_lea.vmem [#allocation10], 1456
        %v5218 = vld [vmem:[%s5217] sm:$0xff]
        %v5219 = vld [vmem:[%s5217 + $0x8] sm:$0xff]
        %v5220 = vld [vmem:[%s5217 + $0x10] sm:$0xff]
        %v5221 = vld [vmem:[%s5217 + $0x18] sm:$0xff]
        %v5222 = vld [vmem:[%s5217 + $0x20] sm:$0xff]
        %v5223 = vld [vmem:[%s5217 + $0x28] sm:$0xff]
        %v5224 = vld [vmem:[%s5217 + $0x30] sm:$0xff]
        %v5225 = vld [vmem:[%s5217 + $0x38] sm:$0xff]
        %v5226 = vld [vmem:[%s5217 + $0x40] sm:$0xff]
        %v5227 = vld [vmem:[%s5217 + $0x48] sm:$0xff]
        %v5228 = vld [vmem:[%s5217 + $0x50] sm:$0xff]
        %v5229 = vld [vmem:[%s5217 + $0x58] sm:$0xff]
        %v5230 = vld [vmem:[%s5217 + $0x60] sm:$0xff]
        %v5231 = vld [vmem:[%s5217 + $0x68] sm:$0xff]
        %v5232 = vld [vmem:[%s5217 + $0x70] sm:$0xff]
        %v5233 = vld [vmem:[%s5217 + $0x78] sm:$0xff]
        %v5234 = vld [vmem:[%s5217 + $0x80] sm:$0xff]
        %v5235 = vld [vmem:[%s5217 + $0x88] sm:$0xff]
        %v5236 = vld [vmem:[%s5217 + $0x90] sm:$0xff]
        %v5237 = vld [vmem:[%s5217 + $0x98] sm:$0xff]
        %v5238 = vld [vmem:[%s5217 + $0xa0] sm:$0xff]
        %v5239 = vld [vmem:[%s5217 + $0xa8] sm:$0xff]
        %v5240 = vld [vmem:[%s5217 + $0xb0] sm:$0xff]
        %v5241 = vld [vmem:[%s5217 + $0xb8] sm:$0xff]
        %v5242 = vld [vmem:[%s5217 + $0xc0] sm:$0xff]
        %v5243 = vld [vmem:[%s5217 + $0xc8] sm:$0x11]
        %v5245 = vshrl.u32 %v5009, 16
        %v5247 = vrot.slane %v5245, 2
        %v5248 = vshll.u32 %v5009, 16
        %v5250 = vrot.slane %v5248, 3
        %v5251 = vor.u32 %v5247, %v5250
        %v5253 = vshrl.u32 %v5011, 16
        %v5255 = vrot.slane %v5253, 2
        %v5256 = vshll.u32 %v5011, 16
        %v5258 = vrot.slane %v5256, 3
        %v5259 = vor.u32 %v5255, %v5258
        %v5260 = vsel %vm697, %v5251, %v5259
        %v5262 = vshrl.u32 %v5010, 16
        %v5264 = vrot.slane %v5262, 2
        %v5265 = vshll.u32 %v5010, 16
        %v5267 = vrot.slane %v5265, 3
        %v5268 = vor.u32 %v5264, %v5267
        %v5270 = vshrl.u32 %v5012, 16
        %v5272 = vrot.slane %v5270, 2
        %v5273 = vshll.u32 %v5012, 16
        %v5275 = vrot.slane %v5273, 3
        %v5276 = vor.u32 %v5272, %v5275
        %v5277 = vsel %vm697, %v5268, %v5276
        %v5305 = vunpack.c.l.b16 %v5218
        %v5306 = vunpack.c.h.b16 %v5218
        %v5307 = vunpack.c.l.b16 %v5219
        %v5308 = vunpack.c.h.b16 %v5219
        %v5309 = vunpack.c.l.b16 %v5220
        %v5310 = vunpack.c.h.b16 %v5220
        %v5311 = vunpack.c.l.b16 %v5221
        %v5312 = vunpack.c.h.b16 %v5221
        %v5313 = vunpack.c.l.b16 %v5222
        %v5314 = vunpack.c.h.b16 %v5222
        %v5315 = vunpack.c.l.b16 %v5223
        %v5316 = vunpack.c.h.b16 %v5223
        %v5317 = vunpack.c.l.b16 %v5224
        %v5318 = vunpack.c.h.b16 %v5224
        %v5319 = vunpack.c.l.b16 %v5225
        %v5320 = vunpack.c.h.b16 %v5225
        %v5321 = vunpack.c.l.b16 %v5226
        %v5322 = vunpack.c.h.b16 %v5226
        %v5323 = vunpack.c.l.b16 %v5227
        %v5324 = vunpack.c.h.b16 %v5227
        %v5325 = vunpack.c.l.b16 %v5228
        %v5326 = vunpack.c.h.b16 %v5228
        %v5327 = vunpack.c.l.b16 %v5229
        %v5328 = vunpack.c.h.b16 %v5229
        %v5329 = vunpack.c.l.b16 %v5230
        %v5330 = vunpack.c.h.b16 %v5230
        %v5331 = vunpack.c.l.b16 %v5231
        %v5332 = vunpack.c.h.b16 %v5231
        %v5333 = vunpack.c.l.b16 %v5232
        %v5334 = vunpack.c.h.b16 %v5232
        %v5335 = vunpack.c.l.b16 %v5233
        %v5336 = vunpack.c.h.b16 %v5233
        %v5337 = vunpack.c.l.b16 %v5234
        %v5338 = vunpack.c.h.b16 %v5234
        %v5339 = vunpack.c.l.b16 %v5235
        %v5340 = vunpack.c.h.b16 %v5235
        %v5341 = vunpack.c.l.b16 %v5236
        %v5342 = vunpack.c.h.b16 %v5236
        %v5343 = vunpack.c.l.b16 %v5237
        %v5344 = vunpack.c.h.b16 %v5237
        %v5345 = vunpack.c.l.b16 %v5238
        %v5346 = vunpack.c.h.b16 %v5238
        %v5347 = vunpack.c.l.b16 %v5239
        %v5348 = vunpack.c.h.b16 %v5239
        %v5349 = vunpack.c.l.b16 %v5240
        %v5350 = vunpack.c.h.b16 %v5240
        %v5351 = vunpack.c.l.b16 %v5241
        %v5352 = vunpack.c.h.b16 %v5241
        %v5353 = vunpack.c.l.b16 %v5242
        %v5354 = vunpack.c.h.b16 %v5242
        %v5355 = vunpack.c.l.b16 %v5243
        %v5356 = vunpack.c.h.b16 %v5243
        %v5357 = vpack.c.b16 %v5307, %v5305
        %v5358 = vpack.c.b16 %v5308, %v5306
        %v5359 = vpack.c.b16 %v5311, %v5309
        %v5360 = vpack.c.b16 %v5312, %v5310
        %v5361 = vpack.c.b16 %v5315, %v5313
        %v5362 = vpack.c.b16 %v5316, %v5314
        %v5363 = vpack.c.b16 %v5319, %v5317
        %v5364 = vpack.c.b16 %v5320, %v5318
        %v5365 = vpack.c.b16 %v5323, %v5321
        %v5366 = vpack.c.b16 %v5324, %v5322
        %v5367 = vpack.c.b16 %v5327, %v5325
        %v5368 = vpack.c.b16 %v5328, %v5326
        %v5369 = vpack.c.b16 %v5331, %v5329
        %v5370 = vpack.c.b16 %v5332, %v5330
        %v5371 = vpack.c.b16 %v5335, %v5333
        %v5372 = vpack.c.b16 %v5336, %v5334
        %v5373 = vpack.c.b16 %v5339, %v5337
        %v5374 = vpack.c.b16 %v5340, %v5338
        %v5375 = vpack.c.b16 %v5343, %v5341
        %v5376 = vpack.c.b16 %v5344, %v5342
        %v5377 = vpack.c.b16 %v5347, %v5345
        %v5378 = vpack.c.b16 %v5348, %v5346
        %v5379 = vpack.c.b16 %v5351, %v5349
        %v5380 = vpack.c.b16 %v5352, %v5350
        %v5381 = vpack.c.b16 %v5355, %v5353
        %v5382 = vpack.c.b16 %v5356, %v5354
        %v5408 = vsel %vm305, %v5277, 0
        %v5411 = vand.u32 %v5381, %v867
        %v5414 = vand.u32 %v5382, %v867
        %5416 = vmatpush.bf16.msra.mxu0 %v5371
        %5417 = vmatpush.bf16.msra.mxu0 %v5369
        %5418 = vmatpush.bf16.msra.mxu0 %v5367
        %5419 = vmatpush.bf16.msra.mxu0 %v5365
        %5420 = vmatpush.bf16.msra.mxu0 %v5363
        %5421 = vmatpush.bf16.msra.mxu0 %v5361
        %5422 = vmatpush.bf16.msra.mxu0 %v5359
        %5423 = vmatpush.bf16.msra.mxu0 %v5357
        %5424 = vmatmul.bf16.gmra.mxu0 %v5260
        %v5425 = vpop.f32.mrf.mxu0
        %v5426 = vadd.f32 0.0, %v5425
        %v5427 = vpop.f32.mrf.mxu0
        %v5428 = vadd.f32 0.0, %v5427
        %5429 = vdwg.mxu0
        %5430 = vmatpush.bf16.msra.mxu0 0
        %5431 = vmatpush.bf16.msra.mxu0 0
        %5432 = vmatpush.bf16.msra.mxu0 0
        %5433 = vmatpush.bf16.msra.mxu0 %v5411
        %5434 = vmatpush.bf16.msra.mxu0 %v5379
        %5435 = vmatpush.bf16.msra.mxu0 %v5377
        %5436 = vmatpush.bf16.msra.mxu0 %v5375
        %5437 = vmatpush.bf16.msra.mxu0 %v5373
        %5438 = vmatmul.bf16.gmra.mxu0 %v5408
        %v5439 = vpop.f32.mrf.mxu0
        %v5440 = vadd.f32 %v5426, %v5439
        %v5441 = vpop.f32.mrf.mxu0
        %v5442 = vadd.f32 %v5428, %v5441
        %5443 = vdwg.mxu0
        %5444 = vmatpush.bf16.msra.mxu0 %v5372
        %5445 = vmatpush.bf16.msra.mxu0 %v5370
        %5446 = vmatpush.bf16.msra.mxu0 %v5368
        %5447 = vmatpush.bf16.msra.mxu0 %v5366
        %5448 = vmatpush.bf16.msra.mxu0 %v5364
        %5449 = vmatpush.bf16.msra.mxu0 %v5362
        %5450 = vmatpush.bf16.msra.mxu0 %v5360
        %5451 = vmatpush.bf16.msra.mxu0 %v5358
        %5452 = vmatmul.bf16.gmra.mxu0 %v5260
        %v5453 = vpop.f32.mrf.mxu0
        %v5454 = vadd.f32 0.0, %v5453
        %v5455 = vpop.f32.mrf.mxu0
        %v5456 = vadd.f32 0.0, %v5455
        %5457 = vdwg.mxu0
        %5458 = vmatpush.bf16.msra.mxu0 0
        %5459 = vmatpush.bf16.msra.mxu0 0
        %5460 = vmatpush.bf16.msra.mxu0 0
        %5461 = vmatpush.bf16.msra.mxu0 %v5414
        %5462 = vmatpush.bf16.msra.mxu0 %v5380
        %5463 = vmatpush.bf16.msra.mxu0 %v5378
        %5464 = vmatpush.bf16.msra.mxu0 %v5376
        %5465 = vmatpush.bf16.msra.mxu0 %v5374
        %5466 = vmatmul.bf16.gmra.mxu0 %v5408
        %v5467 = vpop.f32.mrf.mxu0
        %v5468 = vadd.f32 %v5454, %v5467
        %v5469 = vpop.f32.mrf.mxu0
        %v5470 = vadd.f32 %v5456, %v5469
        %5471 = vdwg.mxu0
        %v5472 = vadd.f32 %v5213, %v5440
        %v5473 = vadd.f32 %v5214, %v5468
        %v5474 = vadd.f32 %v5215, %v5442
        %v5475 = vadd.f32 %v5216, %v5470
        %s5476 = scalar_lea.vmem [#allocation10], 2496
        %v5477 = vld [vmem:[%s5476] sm:$0xff]
        %v5478 = vld [vmem:[%s5476 + $0x8] sm:$0xff]
        %v5479 = vld [vmem:[%s5476 + $0x10] sm:$0xff]
        %v5480 = vld [vmem:[%s5476 + $0x18] sm:$0xff]
        %v5481 = vld [vmem:[%s5476 + $0x20] sm:$0xff]
        %v5482 = vld [vmem:[%s5476 + $0x28] sm:$0xff]
        %v5483 = vld [vmem:[%s5476 + $0x30] sm:$0xff]
        %v5484 = vld [vmem:[%s5476 + $0x38] sm:$0xff]
        %v5485 = vld [vmem:[%s5476 + $0x40] sm:$0xff]
        %v5486 = vld [vmem:[%s5476 + $0x48] sm:$0xff]
        %v5487 = vld [vmem:[%s5476 + $0x50] sm:$0xff]
        %v5488 = vld [vmem:[%s5476 + $0x58] sm:$0xff]
        %v5489 = vld [vmem:[%s5476 + $0x60] sm:$0xff]
        %v5490 = vld [vmem:[%s5476 + $0x68] sm:$0xff]
        %v5491 = vld [vmem:[%s5476 + $0x70] sm:$0xff]
        %v5492 = vld [vmem:[%s5476 + $0x78] sm:$0xff]
        %v5493 = vld [vmem:[%s5476 + $0x80] sm:$0xff]
        %v5494 = vld [vmem:[%s5476 + $0x88] sm:$0xff]
        %v5495 = vld [vmem:[%s5476 + $0x90] sm:$0xff]
        %v5496 = vld [vmem:[%s5476 + $0x98] sm:$0xff]
        %v5497 = vld [vmem:[%s5476 + $0xa0] sm:$0xff]
        %v5498 = vld [vmem:[%s5476 + $0xa8] sm:$0xff]
        %v5499 = vld [vmem:[%s5476 + $0xb0] sm:$0xff]
        %v5500 = vld [vmem:[%s5476 + $0xb8] sm:$0xff]
        %v5501 = vld [vmem:[%s5476 + $0xc0] sm:$0xff]
        %v5502 = vld [vmem:[%s5476 + $0xc8] sm:$0x11]
        %v5503 = vrot.slane %v5009, 3
        %v5504 = vrot.slane %v5011, 3
        %v5505 = vsel %vm1158, %v5503, %v5504
        %v5506 = vrot.slane %v5010, 3
        %v5507 = vrot.slane %v5012, 3
        %v5508 = vsel %vm1158, %v5506, %v5507
        %v5536 = vunpack.c.l.b16 %v5477
        %v5537 = vunpack.c.h.b16 %v5477
        %v5538 = vunpack.c.l.b16 %v5478
        %v5539 = vunpack.c.h.b16 %v5478
        %v5540 = vunpack.c.l.b16 %v5479
        %v5541 = vunpack.c.h.b16 %v5479
        %v5542 = vunpack.c.l.b16 %v5480
        %v5543 = vunpack.c.h.b16 %v5480
        %v5544 = vunpack.c.l.b16 %v5481
        %v5545 = vunpack.c.h.b16 %v5481
        %v5546 = vunpack.c.l.b16 %v5482
        %v5547 = vunpack.c.h.b16 %v5482
        %v5548 = vunpack.c.l.b16 %v5483
        %v5549 = vunpack.c.h.b16 %v5483
        %v5550 = vunpack.c.l.b16 %v5484
        %v5551 = vunpack.c.h.b16 %v5484
        %v5552 = vunpack.c.l.b16 %v5485
        %v5553 = vunpack.c.h.b16 %v5485
        %v5554 = vunpack.c.l.b16 %v5486
        %v5555 = vunpack.c.h.b16 %v5486
        %v5556 = vunpack.c.l.b16 %v5487
        %v5557 = vunpack.c.h.b16 %v5487
        %v5558 = vunpack.c.l.b16 %v5488
        %v5559 = vunpack.c.h.b16 %v5488
        %v5560 = vunpack.c.l.b16 %v5489
        %v5561 = vunpack.c.h.b16 %v5489
        %v5562 = vunpack.c.l.b16 %v5490
        %v5563 = vunpack.c.h.b16 %v5490
        %v5564 = vunpack.c.l.b16 %v5491
        %v5565 = vunpack.c.h.b16 %v5491
        %v5566 = vunpack.c.l.b16 %v5492
        %v5567 = vunpack.c.h.b16 %v5492
        %v5568 = vunpack.c.l.b16 %v5493
        %v5569 = vunpack.c.h.b16 %v5493
        %v5570 = vunpack.c.l.b16 %v5494
        %v5571 = vunpack.c.h.b16 %v5494
        %v5572 = vunpack.c.l.b16 %v5495
        %v5573 = vunpack.c.h.b16 %v5495
        %v5574 = vunpack.c.l.b16 %v5496
        %v5575 = vunpack.c.h.b16 %v5496
        %v5576 = vunpack.c.l.b16 %v5497
        %v5577 = vunpack.c.h.b16 %v5497
        %v5578 = vunpack.c.l.b16 %v5498
        %v5579 = vunpack.c.h.b16 %v5498
        %v5580 = vunpack.c.l.b16 %v5499
        %v5581 = vunpack.c.h.b16 %v5499
        %v5582 = vunpack.c.l.b16 %v5500
        %v5583 = vunpack.c.h.b16 %v5500
        %v5584 = vunpack.c.l.b16 %v5501
        %v5585 = vunpack.c.h.b16 %v5501
        %v5586 = vunpack.c.l.b16 %v5502
        %v5587 = vunpack.c.h.b16 %v5502
        %v5588 = vpack.c.b16 %v5538, %v5536
        %v5589 = vpack.c.b16 %v5539, %v5537
        %v5590 = vpack.c.b16 %v5542, %v5540
        %v5591 = vpack.c.b16 %v5543, %v5541
        %v5592 = vpack.c.b16 %v5546, %v5544
        %v5593 = vpack.c.b16 %v5547, %v5545
        %v5594 = vpack.c.b16 %v5550, %v5548
        %v5595 = vpack.c.b16 %v5551, %v5549
        %v5596 = vpack.c.b16 %v5554, %v5552
        %v5597 = vpack.c.b16 %v5555, %v5553
        %v5598 = vpack.c.b16 %v5558, %v5556
        %v5599 = vpack.c.b16 %v5559, %v5557
        %v5600 = vpack.c.b16 %v5562, %v5560
        %v5601 = vpack.c.b16 %v5563, %v5561
        %v5602 = vpack.c.b16 %v5566, %v5564
        %v5603 = vpack.c.b16 %v5567, %v5565
        %v5604 = vpack.c.b16 %v5570, %v5568
        %v5605 = vpack.c.b16 %v5571, %v5569
        %v5606 = vpack.c.b16 %v5574, %v5572
        %v5607 = vpack.c.b16 %v5575, %v5573
        %v5608 = vpack.c.b16 %v5578, %v5576
        %v5609 = vpack.c.b16 %v5579, %v5577
        %v5610 = vpack.c.b16 %v5582, %v5580
        %v5611 = vpack.c.b16 %v5583, %v5581
        %v5612 = vpack.c.b16 %v5586, %v5584
        %v5613 = vpack.c.b16 %v5587, %v5585
        %v5639 = vsel %vm305, %v5508, 0
        %v5642 = vand.u32 %v5612, %v867
        %v5645 = vand.u32 %v5613, %v867
        %5647 = vmatpush.bf16.msra.mxu0 %v5602
        %5648 = vmatpush.bf16.msra.mxu0 %v5600
        %5649 = vmatpush.bf16.msra.mxu0 %v5598
        %5650 = vmatpush.bf16.msra.mxu0 %v5596
        %5651 = vmatpush.bf16.msra.mxu0 %v5594
        %5652 = vmatpush.bf16.msra.mxu0 %v5592
        %5653 = vmatpush.bf16.msra.mxu0 %v5590
        %5654 = vmatpush.bf16.msra.mxu0 %v5588
        %5655 = vmatmul.bf16.gmra.mxu0 %v5505
        %v5656 = vpop.f32.mrf.mxu0
        %v5657 = vadd.f32 0.0, %v5656
        %v5658 = vpop.f32.mrf.mxu0
        %v5659 = vadd.f32 0.0, %v5658
        %5660 = vdwg.mxu0
        %5661 = vmatpush.bf16.msra.mxu0 0
        %5662 = vmatpush.bf16.msra.mxu0 0
        %5663 = vmatpush.bf16.msra.mxu0 0
        %5664 = vmatpush.bf16.msra.mxu0 %v5642
        %5665 = vmatpush.bf16.msra.mxu0 %v5610
        %5666 = vmatpush.bf16.msra.mxu0 %v5608
        %5667 = vmatpush.bf16.msra.mxu0 %v5606
        %5668 = vmatpush.bf16.msra.mxu0 %v5604
        %5669 = vmatmul.bf16.gmra.mxu0 %v5639
        %v5670 = vpop.f32.mrf.mxu0
        %v5671 = vadd.f32 %v5657, %v5670
        %v5672 = vpop.f32.mrf.mxu0
        %v5673 = vadd.f32 %v5659, %v5672
        %5674 = vdwg.mxu0
        %5675 = vmatpush.bf16.msra.mxu0 %v5603
        %5676 = vmatpush.bf16.msra.mxu0 %v5601
        %5677 = vmatpush.bf16.msra.mxu0 %v5599
        %5678 = vmatpush.bf16.msra.mxu0 %v5597
        %5679 = vmatpush.bf16.msra.mxu0 %v5595
        %5680 = vmatpush.bf16.msra.mxu0 %v5593
        %5681 = vmatpush.bf16.msra.mxu0 %v5591
        %5682 = vmatpush.bf16.msra.mxu0 %v5589
        %5683 = vmatmul.bf16.gmra.mxu0 %v5505
        %v5684 = vpop.f32.mrf.mxu0
        %v5685 = vadd.f32 0.0, %v5684
        %v5686 = vpop.f32.mrf.mxu0
        %v5687 = vadd.f32 0.0, %v5686
        %5688 = vdwg.mxu0
        %5689 = vmatpush.bf16.msra.mxu0 0
        %5690 = vmatpush.bf16.msra.mxu0 0
        %5691 = vmatpush.bf16.msra.mxu0 0
        %5692 = vmatpush.bf16.msra.mxu0 %v5645
        %5693 = vmatpush.bf16.msra.mxu0 %v5611
        %5694 = vmatpush.bf16.msra.mxu0 %v5609
        %5695 = vmatpush.bf16.msra.mxu0 %v5607
        %5696 = vmatpush.bf16.msra.mxu0 %v5605
        %5697 = vmatmul.bf16.gmra.mxu0 %v5639
        %v5698 = vpop.f32.mrf.mxu0
        %v5699 = vadd.f32 %v5685, %v5698
        %v5700 = vpop.f32.mrf.mxu0
        %v5701 = vadd.f32 %v5687, %v5700
        %5702 = vdwg.mxu0
        %v5703 = vadd.f32 %v5472, %v5671
        %v5704 = vadd.f32 %v5473, %v5699
        %v5705 = vadd.f32 %v5474, %v5673
        %v5706 = vadd.f32 %v5475, %v5701
        %s5707 = scalar_lea.vmem [#allocation10], 3536
        %v5708 = vld [vmem:[%s5707] sm:$0xff]
        %v5709 = vld [vmem:[%s5707 + $0x8] sm:$0xff]
        %v5710 = vld [vmem:[%s5707 + $0x10] sm:$0xff]
        %v5711 = vld [vmem:[%s5707 + $0x18] sm:$0xff]
        %v5712 = vld [vmem:[%s5707 + $0x20] sm:$0xff]
        %v5713 = vld [vmem:[%s5707 + $0x28] sm:$0xff]
        %v5714 = vld [vmem:[%s5707 + $0x30] sm:$0xff]
        %v5715 = vld [vmem:[%s5707 + $0x38] sm:$0xff]
        %v5716 = vld [vmem:[%s5707 + $0x40] sm:$0xff]
        %v5717 = vld [vmem:[%s5707 + $0x48] sm:$0xff]
        %v5718 = vld [vmem:[%s5707 + $0x50] sm:$0xff]
        %v5719 = vld [vmem:[%s5707 + $0x58] sm:$0xff]
        %v5720 = vld [vmem:[%s5707 + $0x60] sm:$0xff]
        %v5721 = vld [vmem:[%s5707 + $0x68] sm:$0xff]
        %v5722 = vld [vmem:[%s5707 + $0x70] sm:$0xff]
        %v5723 = vld [vmem:[%s5707 + $0x78] sm:$0xff]
        %v5724 = vld [vmem:[%s5707 + $0x80] sm:$0xff]
        %v5725 = vld [vmem:[%s5707 + $0x88] sm:$0xff]
        %v5726 = vld [vmem:[%s5707 + $0x90] sm:$0xff]
        %v5727 = vld [vmem:[%s5707 + $0x98] sm:$0xff]
        %v5728 = vld [vmem:[%s5707 + $0xa0] sm:$0xff]
        %v5729 = vld [vmem:[%s5707 + $0xa8] sm:$0xff]
        %v5730 = vld [vmem:[%s5707 + $0xb0] sm:$0xff]
        %v5731 = vld [vmem:[%s5707 + $0xb8] sm:$0xff]
        %v5732 = vld [vmem:[%s5707 + $0xc0] sm:$0xff]
        %v5733 = vld [vmem:[%s5707 + $0xc8] sm:$0x11]
        %v5734 = vrot.slane %v5245, 3
        %v5735 = vrot.slane %v5248, 4
        %v5736 = vor.u32 %v5734, %v5735
        %v5737 = vrot.slane %v5253, 3
        %v5738 = vrot.slane %v5256, 4
        %v5739 = vor.u32 %v5737, %v5738
        %v5740 = vsel %vm1390, %v5736, %v5739
        %v5741 = vrot.slane %v5262, 3
        %v5742 = vrot.slane %v5265, 4
        %v5743 = vor.u32 %v5741, %v5742
        %v5744 = vrot.slane %v5270, 3
        %v5745 = vrot.slane %v5273, 4
        %v5746 = vor.u32 %v5744, %v5745
        %v5747 = vsel %vm1390, %v5743, %v5746
        %v5775 = vunpack.c.l.b16 %v5708
        %v5776 = vunpack.c.h.b16 %v5708
        %v5777 = vunpack.c.l.b16 %v5709
        %v5778 = vunpack.c.h.b16 %v5709
        %v5779 = vunpack.c.l.b16 %v5710
        %v5780 = vunpack.c.h.b16 %v5710
        %v5781 = vunpack.c.l.b16 %v5711
        %v5782 = vunpack.c.h.b16 %v5711
        %v5783 = vunpack.c.l.b16 %v5712
        %v5784 = vunpack.c.h.b16 %v5712
        %v5785 = vunpack.c.l.b16 %v5713
        %v5786 = vunpack.c.h.b16 %v5713
        %v5787 = vunpack.c.l.b16 %v5714
        %v5788 = vunpack.c.h.b16 %v5714
        %v5789 = vunpack.c.l.b16 %v5715
        %v5790 = vunpack.c.h.b16 %v5715
        %v5791 = vunpack.c.l.b16 %v5716
        %v5792 = vunpack.c.h.b16 %v5716
        %v5793 = vunpack.c.l.b16 %v5717
        %v5794 = vunpack.c.h.b16 %v5717
        %v5795 = vunpack.c.l.b16 %v5718
        %v5796 = vunpack.c.h.b16 %v5718
        %v5797 = vunpack.c.l.b16 %v5719
        %v5798 = vunpack.c.h.b16 %v5719
        %v5799 = vunpack.c.l.b16 %v5720
        %v5800 = vunpack.c.h.b16 %v5720
        %v5801 = vunpack.c.l.b16 %v5721
        %v5802 = vunpack.c.h.b16 %v5721
        %v5803 = vunpack.c.l.b16 %v5722
        %v5804 = vunpack.c.h.b16 %v5722
        %v5805 = vunpack.c.l.b16 %v5723
        %v5806 = vunpack.c.h.b16 %v5723
        %v5807 = vunpack.c.l.b16 %v5724
        %v5808 = vunpack.c.h.b16 %v5724
        %v5809 = vunpack.c.l.b16 %v5725
        %v5810 = vunpack.c.h.b16 %v5725
        %v5811 = vunpack.c.l.b16 %v5726
        %v5812 = vunpack.c.h.b16 %v5726
        %v5813 = vunpack.c.l.b16 %v5727
        %v5814 = vunpack.c.h.b16 %v5727
        %v5815 = vunpack.c.l.b16 %v5728
        %v5816 = vunpack.c.h.b16 %v5728
        %v5817 = vunpack.c.l.b16 %v5729
        %v5818 = vunpack.c.h.b16 %v5729
        %v5819 = vunpack.c.l.b16 %v5730
        %v5820 = vunpack.c.h.b16 %v5730
        %v5821 = vunpack.c.l.b16 %v5731
        %v5822 = vunpack.c.h.b16 %v5731
        %v5823 = vunpack.c.l.b16 %v5732
        %v5824 = vunpack.c.h.b16 %v5732
        %v5825 = vunpack.c.l.b16 %v5733
        %v5826 = vunpack.c.h.b16 %v5733
        %v5827 = vpack.c.b16 %v5777, %v5775
        %v5828 = vpack.c.b16 %v5778, %v5776
        %v5829 = vpack.c.b16 %v5781, %v5779
        %v5830 = vpack.c.b16 %v5782, %v5780
        %v5831 = vpack.c.b16 %v5785, %v5783
        %v5832 = vpack.c.b16 %v5786, %v5784
        %v5833 = vpack.c.b16 %v5789, %v5787
        %v5834 = vpack.c.b16 %v5790, %v5788
        %v5835 = vpack.c.b16 %v5793, %v5791
        %v5836 = vpack.c.b16 %v5794, %v5792
        %v5837 = vpack.c.b16 %v5797, %v5795
        %v5838 = vpack.c.b16 %v5798, %v5796
        %v5839 = vpack.c.b16 %v5801, %v5799
        %v5840 = vpack.c.b16 %v5802, %v5800
        %v5841 = vpack.c.b16 %v5805, %v5803
        %v5842 = vpack.c.b16 %v5806, %v5804
        %v5843 = vpack.c.b16 %v5809, %v5807
        %v5844 = vpack.c.b16 %v5810, %v5808
        %v5845 = vpack.c.b16 %v5813, %v5811
        %v5846 = vpack.c.b16 %v5814, %v5812
        %v5847 = vpack.c.b16 %v5817, %v5815
        %v5848 = vpack.c.b16 %v5818, %v5816
        %v5849 = vpack.c.b16 %v5821, %v5819
        %v5850 = vpack.c.b16 %v5822, %v5820
        %v5851 = vpack.c.b16 %v5825, %v5823
        %v5852 = vpack.c.b16 %v5826, %v5824
        %v5878 = vsel %vm305, %v5747, 0
        %v5881 = vand.u32 %v5851, %v867
        %v5884 = vand.u32 %v5852, %v867
        %5886 = vmatpush.bf16.msra.mxu0 %v5841
        %5887 = vmatpush.bf16.msra.mxu0 %v5839
        %5888 = vmatpush.bf16.msra.mxu0 %v5837
        %5889 = vmatpush.bf16.msra.mxu0 %v5835
        %5890 = vmatpush.bf16.msra.mxu0 %v5833
        %5891 = vmatpush.bf16.msra.mxu0 %v5831
        %5892 = vmatpush.bf16.msra.mxu0 %v5829
        %5893 = vmatpush.bf16.msra.mxu0 %v5827
        %5894 = vmatmul.bf16.gmra.mxu0 %v5740
        %v5895 = vpop.f32.mrf.mxu0
        %v5896 = vadd.f32 0.0, %v5895
        %v5897 = vpop.f32.mrf.mxu0
        %v5898 = vadd.f32 0.0, %v5897
        %5899 = vdwg.mxu0
        %5900 = vmatpush.bf16.msra.mxu0 0
        %5901 = vmatpush.bf16.msra.mxu0 0
        %5902 = vmatpush.bf16.msra.mxu0 0
        %5903 = vmatpush.bf16.msra.mxu0 %v5881
        %5904 = vmatpush.bf16.msra.mxu0 %v5849
        %5905 = vmatpush.bf16.msra.mxu0 %v5847
        %5906 = vmatpush.bf16.msra.mxu0 %v5845
        %5907 = vmatpush.bf16.msra.mxu0 %v5843
        %5908 = vmatmul.bf16.gmra.mxu0 %v5878
        %v5909 = vpop.f32.mrf.mxu0
        %v5910 = vadd.f32 %v5896, %v5909
        %v5911 = vpop.f32.mrf.mxu0
        %v5912 = vadd.f32 %v5898, %v5911
        %5913 = vdwg.mxu0
        %5914 = vmatpush.bf16.msra.mxu0 %v5842
        %5915 = vmatpush.bf16.msra.mxu0 %v5840
        %5916 = vmatpush.bf16.msra.mxu0 %v5838
        %5917 = vmatpush.bf16.msra.mxu0 %v5836
        %5918 = vmatpush.bf16.msra.mxu0 %v5834
        %5919 = vmatpush.bf16.msra.mxu0 %v5832
        %5920 = vmatpush.bf16.msra.mxu0 %v5830
        %5921 = vmatpush.bf16.msra.mxu0 %v5828
        %5922 = vmatmul.bf16.gmra.mxu0 %v5740
        %v5923 = vpop.f32.mrf.mxu0
        %v5924 = vadd.f32 0.0, %v5923
        %v5925 = vpop.f32.mrf.mxu0
        %v5926 = vadd.f32 0.0, %v5925
        %5927 = vdwg.mxu0
        %5928 = vmatpush.bf16.msra.mxu0 0
        %5929 = vmatpush.bf16.msra.mxu0 0
        %5930 = vmatpush.bf16.msra.mxu0 0
        %5931 = vmatpush.bf16.msra.mxu0 %v5884
        %5932 = vmatpush.bf16.msra.mxu0 %v5850
        %5933 = vmatpush.bf16.msra.mxu0 %v5848
        %5934 = vmatpush.bf16.msra.mxu0 %v5846
        %5935 = vmatpush.bf16.msra.mxu0 %v5844
        %5936 = vmatmul.bf16.gmra.mxu0 %v5878
        %v5937 = vpop.f32.mrf.mxu0
        %v5938 = vadd.f32 %v5924, %v5937
        %v5939 = vpop.f32.mrf.mxu0
        %v5940 = vadd.f32 %v5926, %v5939
        %5941 = vdwg.mxu0
        %v5942 = vadd.f32 %v5703, %v5910
        %v5943 = vadd.f32 %v5704, %v5938
        %v5944 = vadd.f32 %v5705, %v5912
        %v5945 = vadd.f32 %v5706, %v5940
        %s5946 = scalar_lea.vmem [#allocation10], 4576
        %v5947 = vld [vmem:[%s5946] sm:$0xff]
        %v5948 = vld [vmem:[%s5946 + $0x8] sm:$0xff]
        %v5949 = vld [vmem:[%s5946 + $0x10] sm:$0xff]
        %v5950 = vld [vmem:[%s5946 + $0x18] sm:$0xff]
        %v5951 = vld [vmem:[%s5946 + $0x20] sm:$0xff]
        %v5952 = vld [vmem:[%s5946 + $0x28] sm:$0xff]
        %v5953 = vld [vmem:[%s5946 + $0x30] sm:$0xff]
        %v5954 = vld [vmem:[%s5946 + $0x38] sm:$0xff]
        %v5955 = vld [vmem:[%s5946 + $0x40] sm:$0xff]
        %v5956 = vld [vmem:[%s5946 + $0x48] sm:$0xff]
        %v5957 = vld [vmem:[%s5946 + $0x50] sm:$0xff]
        %v5958 = vld [vmem:[%s5946 + $0x58] sm:$0xff]
        %v5959 = vld [vmem:[%s5946 + $0x60] sm:$0xff]
        %v5960 = vld [vmem:[%s5946 + $0x68] sm:$0xff]
        %v5961 = vld [vmem:[%s5946 + $0x70] sm:$0xff]
        %v5962 = vld [vmem:[%s5946 + $0x78] sm:$0xff]
        %v5963 = vld [vmem:[%s5946 + $0x80] sm:$0xff]
        %v5964 = vld [vmem:[%s5946 + $0x88] sm:$0xff]
        %v5965 = vld [vmem:[%s5946 + $0x90] sm:$0xff]
        %v5966 = vld [vmem:[%s5946 + $0x98] sm:$0xff]
        %v5967 = vld [vmem:[%s5946 + $0xa0] sm:$0xff]
        %v5968 = vld [vmem:[%s5946 + $0xa8] sm:$0xff]
        %v5969 = vld [vmem:[%s5946 + $0xb0] sm:$0xff]
        %v5970 = vld [vmem:[%s5946 + $0xb8] sm:$0xff]
        %v5971 = vld [vmem:[%s5946 + $0xc0] sm:$0xff]
        %v5972 = vld [vmem:[%s5946 + $0xc8] sm:$0x11]
        %v5973 = vpack.c.b16 %v5007, %v5005
        %v5974 = vpack.c.b16 %v5008, %v5006
        %v6002 = vunpack.c.l.b16 %v5947
        %v6003 = vunpack.c.h.b16 %v5947
        %v6004 = vunpack.c.l.b16 %v5948
        %v6005 = vunpack.c.h.b16 %v5948
        %v6006 = vunpack.c.l.b16 %v5949
        %v6007 = vunpack.c.h.b16 %v5949
        %v6008 = vunpack.c.l.b16 %v5950
        %v6009 = vunpack.c.h.b16 %v5950
        %v6010 = vunpack.c.l.b16 %v5951
        %v6011 = vunpack.c.h.b16 %v5951
        %v6012 = vunpack.c.l.b16 %v5952
        %v6013 = vunpack.c.h.b16 %v5952
        %v6014 = vunpack.c.l.b16 %v5953
        %v6015 = vunpack.c.h.b16 %v5953
        %v6016 = vunpack.c.l.b16 %v5954
        %v6017 = vunpack.c.h.b16 %v5954
        %v6018 = vunpack.c.l.b16 %v5955
        %v6019 = vunpack.c.h.b16 %v5955
        %v6020 = vunpack.c.l.b16 %v5956
        %v6021 = vunpack.c.h.b16 %v5956
        %v6022 = vunpack.c.l.b16 %v5957
        %v6023 = vunpack.c.h.b16 %v5957
        %v6024 = vunpack.c.l.b16 %v5958
        %v6025 = vunpack.c.h.b16 %v5958
        %v6026 = vunpack.c.l.b16 %v5959
        %v6027 = vunpack.c.h.b16 %v5959
        %v6028 = vunpack.c.l.b16 %v5960
        %v6029 = vunpack.c.h.b16 %v5960
        %v6030 = vunpack.c.l.b16 %v5961
        %v6031 = vunpack.c.h.b16 %v5961
        %v6032 = vunpack.c.l.b16 %v5962
        %v6033 = vunpack.c.h.b16 %v5962
        %v6034 = vunpack.c.l.b16 %v5963
        %v6035 = vunpack.c.h.b16 %v5963
        %v6036 = vunpack.c.l.b16 %v5964
        %v6037 = vunpack.c.h.b16 %v5964
        %v6038 = vunpack.c.l.b16 %v5965
        %v6039 = vunpack.c.h.b16 %v5965
        %v6040 = vunpack.c.l.b16 %v5966
        %v6041 = vunpack.c.h.b16 %v5966
        %v6042 = vunpack.c.l.b16 %v5967
        %v6043 = vunpack.c.h.b16 %v5967
        %v6044 = vunpack.c.l.b16 %v5968
        %v6045 = vunpack.c.h.b16 %v5968
        %v6046 = vunpack.c.l.b16 %v5969
        %v6047 = vunpack.c.h.b16 %v5969
        %v6048 = vunpack.c.l.b16 %v5970
        %v6049 = vunpack.c.h.b16 %v5970
        %v6050 = vunpack.c.l.b16 %v5971
        %v6051 = vunpack.c.h.b16 %v5971
        %v6052 = vunpack.c.l.b16 %v5972
        %v6053 = vunpack.c.h.b16 %v5972
        %v6054 = vpack.c.b16 %v6004, %v6002
        %v6055 = vpack.c.b16 %v6005, %v6003
        %v6056 = vpack.c.b16 %v6008, %v6006
        %v6057 = vpack.c.b16 %v6009, %v6007
        %v6058 = vpack.c.b16 %v6012, %v6010
        %v6059 = vpack.c.b16 %v6013, %v6011
        %v6060 = vpack.c.b16 %v6016, %v6014
        %v6061 = vpack.c.b16 %v6017, %v6015
        %v6062 = vpack.c.b16 %v6020, %v6018
        %v6063 = vpack.c.b16 %v6021, %v6019
        %v6064 = vpack.c.b16 %v6024, %v6022
        %v6065 = vpack.c.b16 %v6025, %v6023
        %v6066 = vpack.c.b16 %v6028, %v6026
        %v6067 = vpack.c.b16 %v6029, %v6027
        %v6068 = vpack.c.b16 %v6032, %v6030
        %v6069 = vpack.c.b16 %v6033, %v6031
        %v6070 = vpack.c.b16 %v6036, %v6034
        %v6071 = vpack.c.b16 %v6037, %v6035
        %v6072 = vpack.c.b16 %v6040, %v6038
        %v6073 = vpack.c.b16 %v6041, %v6039
        %v6074 = vpack.c.b16 %v6044, %v6042
        %v6075 = vpack.c.b16 %v6045, %v6043
        %v6076 = vpack.c.b16 %v6048, %v6046
        %v6077 = vpack.c.b16 %v6049, %v6047
        %v6078 = vpack.c.b16 %v6052, %v6050
        %v6079 = vpack.c.b16 %v6053, %v6051
        %v6105 = vsel %vm305, %v5974, 0
        %v6108 = vand.u32 %v6078, %v867
        %v6111 = vand.u32 %v6079, %v867
        %6113 = vmatpush.bf16.msra.mxu0 %v6068
        %6114 = vmatpush.bf16.msra.mxu0 %v6066
        %6115 = vmatpush.bf16.msra.mxu0 %v6064
        %6116 = vmatpush.bf16.msra.mxu0 %v6062
        %6117 = vmatpush.bf16.msra.mxu0 %v6060
        %6118 = vmatpush.bf16.msra.mxu0 %v6058
        %6119 = vmatpush.bf16.msra.mxu0 %v6056
        %6120 = vmatpush.bf16.msra.mxu0 %v6054
        %6121 = vmatmul.bf16.gmra.mxu0 %v5973
        %v6122 = vpop.f32.mrf.mxu0
        %v6123 = vadd.f32 0.0, %v6122
        %v6124 = vpop.f32.mrf.mxu0
        %v6125 = vadd.f32 0.0, %v6124
        %6126 = vdwg.mxu0
        %6127 = vmatpush.bf16.msra.mxu0 0
        %6128 = vmatpush.bf16.msra.mxu0 0
        %6129 = vmatpush.bf16.msra.mxu0 0
        %6130 = vmatpush.bf16.msra.mxu0 %v6108
        %6131 = vmatpush.bf16.msra.mxu0 %v6076
        %6132 = vmatpush.bf16.msra.mxu0 %v6074
        %6133 = vmatpush.bf16.msra.mxu0 %v6072
        %6134 = vmatpush.bf16.msra.mxu0 %v6070
        %6135 = vmatmul.bf16.gmra.mxu0 %v6105
        %v6136 = vpop.f32.mrf.mxu0
        %v6137 = vadd.f32 %v6123, %v6136
        %v6138 = vpop.f32.mrf.mxu0
        %v6139 = vadd.f32 %v6125, %v6138
        %6140 = vdwg.mxu0
        %6141 = vmatpush.bf16.msra.mxu0 %v6069
        %6142 = vmatpush.bf16.msra.mxu0 %v6067
        %6143 = vmatpush.bf16.msra.mxu0 %v6065
        %6144 = vmatpush.bf16.msra.mxu0 %v6063
        %6145 = vmatpush.bf16.msra.mxu0 %v6061
        %6146 = vmatpush.bf16.msra.mxu0 %v6059
        %6147 = vmatpush.bf16.msra.mxu0 %v6057
        %6148 = vmatpush.bf16.msra.mxu0 %v6055
        %6149 = vmatmul.bf16.gmra.mxu0 %v5973
        %v6150 = vpop.f32.mrf.mxu0
        %v6151 = vadd.f32 0.0, %v6150
        %v6152 = vpop.f32.mrf.mxu0
        %v6153 = vadd.f32 0.0, %v6152
        %6154 = vdwg.mxu0
        %6155 = vmatpush.bf16.msra.mxu0 0
        %6156 = vmatpush.bf16.msra.mxu0 0
        %6157 = vmatpush.bf16.msra.mxu0 0
        %6158 = vmatpush.bf16.msra.mxu0 %v6111
        %6159 = vmatpush.bf16.msra.mxu0 %v6077
        %6160 = vmatpush.bf16.msra.mxu0 %v6075
        %6161 = vmatpush.bf16.msra.mxu0 %v6073
        %6162 = vmatpush.bf16.msra.mxu0 %v6071
        %6163 = vmatmul.bf16.gmra.mxu0 %v6105
        %v6164 = vpop.f32.mrf.mxu0
        %v6165 = vadd.f32 %v6151, %v6164
        %v6166 = vpop.f32.mrf.mxu0
        %v6167 = vadd.f32 %v6153, %v6166
        %6168 = vdwg.mxu0
        %v6169 = vadd.f32 %v5942, %v6137
        %v6170 = vadd.f32 %v5943, %v6165
        %v6171 = vadd.f32 %v5944, %v6139
        %v6172 = vadd.f32 %v5945, %v6167
        %s6173 = scalar_lea.vmem [#allocation10], 5616
        %v6174 = vld [vmem:[%s6173] sm:$0xff]
        %v6175 = vld [vmem:[%s6173 + $0x8] sm:$0xff]
        %v6176 = vld [vmem:[%s6173 + $0x10] sm:$0xff]
        %v6177 = vld [vmem:[%s6173 + $0x18] sm:$0xff]
        %v6178 = vld [vmem:[%s6173 + $0x20] sm:$0xff]
        %v6179 = vld [vmem:[%s6173 + $0x28] sm:$0xff]
        %v6180 = vld [vmem:[%s6173 + $0x30] sm:$0xff]
        %v6181 = vld [vmem:[%s6173 + $0x38] sm:$0xff]
        %v6182 = vld [vmem:[%s6173 + $0x40] sm:$0xff]
        %v6183 = vld [vmem:[%s6173 + $0x48] sm:$0xff]
        %v6184 = vld [vmem:[%s6173 + $0x50] sm:$0xff]
        %v6185 = vld [vmem:[%s6173 + $0x58] sm:$0xff]
        %v6186 = vld [vmem:[%s6173 + $0x60] sm:$0xff]
        %v6187 = vld [vmem:[%s6173 + $0x68] sm:$0xff]
        %v6188 = vld [vmem:[%s6173 + $0x70] sm:$0xff]
        %v6189 = vld [vmem:[%s6173 + $0x78] sm:$0xff]
        %v6190 = vld [vmem:[%s6173 + $0x80] sm:$0xff]
        %v6191 = vld [vmem:[%s6173 + $0x88] sm:$0xff]
        %v6192 = vld [vmem:[%s6173 + $0x90] sm:$0xff]
        %v6193 = vld [vmem:[%s6173 + $0x98] sm:$0xff]
        %v6194 = vld [vmem:[%s6173 + $0xa0] sm:$0xff]
        %v6195 = vld [vmem:[%s6173 + $0xa8] sm:$0xff]
        %v6196 = vld [vmem:[%s6173 + $0xb0] sm:$0xff]
        %v6197 = vld [vmem:[%s6173 + $0xb8] sm:$0xff]
        %v6198 = vld [vmem:[%s6173 + $0xc0] sm:$0xff]
        %v6199 = vld [vmem:[%s6173 + $0xc8] sm:$0x11]
        %v6201 = vunpack.c.l.b16 %v4972
        %v6202 = vunpack.c.h.b16 %v4972
        %v6203 = vpack.c.b16 %v6201, %v6201
        %v6204 = vpack.c.b16 %v6202, %v6202
        %v6206 = vshrl.u32 %v5973, 16
        %v6208 = vshll.u32 %v5973, 16
        %v6210 = vrot.slane %v6208, 1
        %v6211 = vor.u32 %v6206, %v6210
        %v6213 = vshll.u32 %v6203, 16
        %v6215 = vrot.slane %v6213, 1
        %v6216 = vsel %vm1862, %v6211, %v6215
        %v6217 = vshrl.u32 %v5974, 16
        %v6219 = vshll.u32 %v5974, 16
        %v6221 = vrot.slane %v6219, 1
        %v6222 = vor.u32 %v6217, %v6221
        %v6224 = vshll.u32 %v6204, 16
        %v6226 = vrot.slane %v6224, 1
        %v6227 = vsel %vm1862, %v6222, %v6226
        %v6255 = vunpack.c.l.b16 %v6174
        %v6256 = vunpack.c.h.b16 %v6174
        %v6257 = vunpack.c.l.b16 %v6175
        %v6258 = vunpack.c.h.b16 %v6175
        %v6259 = vunpack.c.l.b16 %v6176
        %v6260 = vunpack.c.h.b16 %v6176
        %v6261 = vunpack.c.l.b16 %v6177
        %v6262 = vunpack.c.h.b16 %v6177
        %v6263 = vunpack.c.l.b16 %v6178
        %v6264 = vunpack.c.h.b16 %v6178
        %v6265 = vunpack.c.l.b16 %v6179
        %v6266 = vunpack.c.h.b16 %v6179
        %v6267 = vunpack.c.l.b16 %v6180
        %v6268 = vunpack.c.h.b16 %v6180
        %v6269 = vunpack.c.l.b16 %v6181
        %v6270 = vunpack.c.h.b16 %v6181
        %v6271 = vunpack.c.l.b16 %v6182
        %v6272 = vunpack.c.h.b16 %v6182
        %v6273 = vunpack.c.l.b16 %v6183
        %v6274 = vunpack.c.h.b16 %v6183
        %v6275 = vunpack.c.l.b16 %v6184
        %v6276 = vunpack.c.h.b16 %v6184
        %v6277 = vunpack.c.l.b16 %v6185
        %v6278 = vunpack.c.h.b16 %v6185
        %v6279 = vunpack.c.l.b16 %v6186
        %v6280 = vunpack.c.h.b16 %v6186
        %v6281 = vunpack.c.l.b16 %v6187
        %v6282 = vunpack.c.h.b16 %v6187
        %v6283 = vunpack.c.l.b16 %v6188
        %v6284 = vunpack.c.h.b16 %v6188
        %v6285 = vunpack.c.l.b16 %v6189
        %v6286 = vunpack.c.h.b16 %v6189
        %v6287 = vunpack.c.l.b16 %v6190
        %v6288 = vunpack.c.h.b16 %v6190
        %v6289 = vunpack.c.l.b16 %v6191
        %v6290 = vunpack.c.h.b16 %v6191
        %v6291 = vunpack.c.l.b16 %v6192
        %v6292 = vunpack.c.h.b16 %v6192
        %v6293 = vunpack.c.l.b16 %v6193
        %v6294 = vunpack.c.h.b16 %v6193
        %v6295 = vunpack.c.l.b16 %v6194
        %v6296 = vunpack.c.h.b16 %v6194
        %v6297 = vunpack.c.l.b16 %v6195
        %v6298 = vunpack.c.h.b16 %v6195
        %v6299 = vunpack.c.l.b16 %v6196
        %v6300 = vunpack.c.h.b16 %v6196
        %v6301 = vunpack.c.l.b16 %v6197
        %v6302 = vunpack.c.h.b16 %v6197
        %v6303 = vunpack.c.l.b16 %v6198
        %v6304 = vunpack.c.h.b16 %v6198
        %v6305 = vunpack.c.l.b16 %v6199
        %v6306 = vunpack.c.h.b16 %v6199
        %v6307 = vpack.c.b16 %v6257, %v6255
        %v6308 = vpack.c.b16 %v6258, %v6256
        %v6309 = vpack.c.b16 %v6261, %v6259
        %v6310 = vpack.c.b16 %v6262, %v6260
        %v6311 = vpack.c.b16 %v6265, %v6263
        %v6312 = vpack.c.b16 %v6266, %v6264
        %v6313 = vpack.c.b16 %v6269, %v6267
        %v6314 = vpack.c.b16 %v6270, %v6268
        %v6315 = vpack.c.b16 %v6273, %v6271
        %v6316 = vpack.c.b16 %v6274, %v6272
        %v6317 = vpack.c.b16 %v6277, %v6275
        %v6318 = vpack.c.b16 %v6278, %v6276
        %v6319 = vpack.c.b16 %v6281, %v6279
        %v6320 = vpack.c.b16 %v6282, %v6280
        %v6321 = vpack.c.b16 %v6285, %v6283
        %v6322 = vpack.c.b16 %v6286, %v6284
        %v6323 = vpack.c.b16 %v6289, %v6287
        %v6324 = vpack.c.b16 %v6290, %v6288
        %v6325 = vpack.c.b16 %v6293, %v6291
        %v6326 = vpack.c.b16 %v6294, %v6292
        %v6327 = vpack.c.b16 %v6297, %v6295
        %v6328 = vpack.c.b16 %v6298, %v6296
        %v6329 = vpack.c.b16 %v6301, %v6299
        %v6330 = vpack.c.b16 %v6302, %v6300
        %v6331 = vpack.c.b16 %v6305, %v6303
        %v6332 = vpack.c.b16 %v6306, %v6304
        %v6358 = vsel %vm305, %v6227, 0
        %v6361 = vand.u32 %v6331, %v867
        %v6364 = vand.u32 %v6332, %v867
        %6366 = vmatpush.bf16.msra.mxu0 %v6321
        %6367 = vmatpush.bf16.msra.mxu0 %v6319
        %6368 = vmatpush.bf16.msra.mxu0 %v6317
        %6369 = vmatpush.bf16.msra.mxu0 %v6315
        %6370 = vmatpush.bf16.msra.mxu0 %v6313
        %6371 = vmatpush.bf16.msra.mxu0 %v6311
        %6372 = vmatpush.bf16.msra.mxu0 %v6309
        %6373 = vmatpush.bf16.msra.mxu0 %v6307
        %6374 = vmatmul.bf16.gmra.mxu0 %v6216
        %v6375 = vpop.f32.mrf.mxu0
        %v6376 = vadd.f32 0.0, %v6375
        %v6377 = vpop.f32.mrf.mxu0
        %v6378 = vadd.f32 0.0, %v6377
        %6379 = vdwg.mxu0
        %6380 = vmatpush.bf16.msra.mxu0 0
        %6381 = vmatpush.bf16.msra.mxu0 0
        %6382 = vmatpush.bf16.msra.mxu0 0
        %6383 = vmatpush.bf16.msra.mxu0 %v6361
        %6384 = vmatpush.bf16.msra.mxu0 %v6329
        %6385 = vmatpush.bf16.msra.mxu0 %v6327
        %6386 = vmatpush.bf16.msra.mxu0 %v6325
        %6387 = vmatpush.bf16.msra.mxu0 %v6323
        %6388 = vmatmul.bf16.gmra.mxu0 %v6358
        %v6389 = vpop.f32.mrf.mxu0
        %v6390 = vadd.f32 %v6376, %v6389
        %v6391 = vpop.f32.mrf.mxu0
        %v6392 = vadd.f32 %v6378, %v6391
        %6393 = vdwg.mxu0
        %6394 = vmatpush.bf16.msra.mxu0 %v6322
        %6395 = vmatpush.bf16.msra.mxu0 %v6320
        %6396 = vmatpush.bf16.msra.mxu0 %v6318
        %6397 = vmatpush.bf16.msra.mxu0 %v6316
        %6398 = vmatpush.bf16.msra.mxu0 %v6314
        %6399 = vmatpush.bf16.msra.mxu0 %v6312
        %6400 = vmatpush.bf16.msra.mxu0 %v6310
        %6401 = vmatpush.bf16.msra.mxu0 %v6308
        %6402 = vmatmul.bf16.gmra.mxu0 %v6216
        %v6403 = vpop.f32.mrf.mxu0
        %v6404 = vadd.f32 0.0, %v6403
        %v6405 = vpop.f32.mrf.mxu0
        %v6406 = vadd.f32 0.0, %v6405
        %6407 = vdwg.mxu0
        %6408 = vmatpush.bf16.msra.mxu0 0
        %6409 = vmatpush.bf16.msra.mxu0 0
        %6410 = vmatpush.bf16.msra.mxu0 0
        %6411 = vmatpush.bf16.msra.mxu0 %v6364
        %6412 = vmatpush.bf16.msra.mxu0 %v6330
        %6413 = vmatpush.bf16.msra.mxu0 %v6328
        %6414 = vmatpush.bf16.msra.mxu0 %v6326
        %6415 = vmatpush.bf16.msra.mxu0 %v6324
        %6416 = vmatmul.bf16.gmra.mxu0 %v6358
        %v6417 = vpop.f32.mrf.mxu0
        %v6418 = vadd.f32 %v6404, %v6417
        %v6419 = vpop.f32.mrf.mxu0
        %v6420 = vadd.f32 %v6406, %v6419
        %6421 = vdwg.mxu0
        %v6422 = vadd.f32 %v6169, %v6390
        %v6423 = vadd.f32 %v6170, %v6418
        %v6424 = vadd.f32 %v6171, %v6392
        %v6425 = vadd.f32 %v6172, %v6420
        %s6426 = scalar_lea.vmem [#allocation10], 6656
        %v6427 = vld [vmem:[%s6426] sm:$0xff]
        %v6428 = vld [vmem:[%s6426 + $0x8] sm:$0xff]
        %v6429 = vld [vmem:[%s6426 + $0x10] sm:$0xff]
        %v6430 = vld [vmem:[%s6426 + $0x18] sm:$0xff]
        %v6431 = vld [vmem:[%s6426 + $0x20] sm:$0xff]
        %v6432 = vld [vmem:[%s6426 + $0x28] sm:$0xff]
        %v6433 = vld [vmem:[%s6426 + $0x30] sm:$0xff]
        %v6434 = vld [vmem:[%s6426 + $0x38] sm:$0xff]
        %v6435 = vld [vmem:[%s6426 + $0x40] sm:$0xff]
        %v6436 = vld [vmem:[%s6426 + $0x48] sm:$0xff]
        %v6437 = vld [vmem:[%s6426 + $0x50] sm:$0xff]
        %v6438 = vld [vmem:[%s6426 + $0x58] sm:$0xff]
        %v6439 = vld [vmem:[%s6426 + $0x60] sm:$0xff]
        %v6440 = vld [vmem:[%s6426 + $0x68] sm:$0xff]
        %v6441 = vld [vmem:[%s6426 + $0x70] sm:$0xff]
        %v6442 = vld [vmem:[%s6426 + $0x78] sm:$0xff]
        %v6443 = vld [vmem:[%s6426 + $0x80] sm:$0xff]
        %v6444 = vld [vmem:[%s6426 + $0x88] sm:$0xff]
        %v6445 = vld [vmem:[%s6426 + $0x90] sm:$0xff]
        %v6446 = vld [vmem:[%s6426 + $0x98] sm:$0xff]
        %v6447 = vld [vmem:[%s6426 + $0xa0] sm:$0xff]
        %v6448 = vld [vmem:[%s6426 + $0xa8] sm:$0xff]
        %v6449 = vld [vmem:[%s6426 + $0xb0] sm:$0xff]
        %v6450 = vld [vmem:[%s6426 + $0xb8] sm:$0xff]
        %v6451 = vld [vmem:[%s6426 + $0xc0] sm:$0xff]
        %v6452 = vld [vmem:[%s6426 + $0xc8] sm:$0x11]
        %v6453 = vrot.slane %v5973, 1
        %v6454 = vrot.slane %v6203, 1
        %v6455 = vsel %vm2111, %v6453, %v6454
        %v6456 = vrot.slane %v5974, 1
        %v6457 = vrot.slane %v6204, 1
        %v6458 = vsel %vm2111, %v6456, %v6457
        %v6486 = vunpack.c.l.b16 %v6427
        %v6487 = vunpack.c.h.b16 %v6427
        %v6488 = vunpack.c.l.b16 %v6428
        %v6489 = vunpack.c.h.b16 %v6428
        %v6490 = vunpack.c.l.b16 %v6429
        %v6491 = vunpack.c.h.b16 %v6429
        %v6492 = vunpack.c.l.b16 %v6430
        %v6493 = vunpack.c.h.b16 %v6430
        %v6494 = vunpack.c.l.b16 %v6431
        %v6495 = vunpack.c.h.b16 %v6431
        %v6496 = vunpack.c.l.b16 %v6432
        %v6497 = vunpack.c.h.b16 %v6432
        %v6498 = vunpack.c.l.b16 %v6433
        %v6499 = vunpack.c.h.b16 %v6433
        %v6500 = vunpack.c.l.b16 %v6434
        %v6501 = vunpack.c.h.b16 %v6434
        %v6502 = vunpack.c.l.b16 %v6435
        %v6503 = vunpack.c.h.b16 %v6435
        %v6504 = vunpack.c.l.b16 %v6436
        %v6505 = vunpack.c.h.b16 %v6436
        %v6506 = vunpack.c.l.b16 %v6437
        %v6507 = vunpack.c.h.b16 %v6437
        %v6508 = vunpack.c.l.b16 %v6438
        %v6509 = vunpack.c.h.b16 %v6438
        %v6510 = vunpack.c.l.b16 %v6439
        %v6511 = vunpack.c.h.b16 %v6439
        %v6512 = vunpack.c.l.b16 %v6440
        %v6513 = vunpack.c.h.b16 %v6440
        %v6514 = vunpack.c.l.b16 %v6441
        %v6515 = vunpack.c.h.b16 %v6441
        %v6516 = vunpack.c.l.b16 %v6442
        %v6517 = vunpack.c.h.b16 %v6442
        %v6518 = vunpack.c.l.b16 %v6443
        %v6519 = vunpack.c.h.b16 %v6443
        %v6520 = vunpack.c.l.b16 %v6444
        %v6521 = vunpack.c.h.b16 %v6444
        %v6522 = vunpack.c.l.b16 %v6445
        %v6523 = vunpack.c.h.b16 %v6445
        %v6524 = vunpack.c.l.b16 %v6446
        %v6525 = vunpack.c.h.b16 %v6446
        %v6526 = vunpack.c.l.b16 %v6447
        %v6527 = vunpack.c.h.b16 %v6447
        %v6528 = vunpack.c.l.b16 %v6448
        %v6529 = vunpack.c.h.b16 %v6448
        %v6530 = vunpack.c.l.b16 %v6449
        %v6531 = vunpack.c.h.b16 %v6449
        %v6532 = vunpack.c.l.b16 %v6450
        %v6533 = vunpack.c.h.b16 %v6450
        %v6534 = vunpack.c.l.b16 %v6451
        %v6535 = vunpack.c.h.b16 %v6451
        %v6536 = vunpack.c.l.b16 %v6452
        %v6537 = vunpack.c.h.b16 %v6452
        %v6538 = vpack.c.b16 %v6488, %v6486
        %v6539 = vpack.c.b16 %v6489, %v6487
        %v6540 = vpack.c.b16 %v6492, %v6490
        %v6541 = vpack.c.b16 %v6493, %v6491
        %v6542 = vpack.c.b16 %v6496, %v6494
        %v6543 = vpack.c.b16 %v6497, %v6495
        %v6544 = vpack.c.b16 %v6500, %v6498
        %v6545 = vpack.c.b16 %v6501, %v6499
        %v6546 = vpack.c.b16 %v6504, %v6502
        %v6547 = vpack.c.b16 %v6505, %v6503
        %v6548 = vpack.c.b16 %v6508, %v6506
        %v6549 = vpack.c.b16 %v6509, %v6507
        %v6550 = vpack.c.b16 %v6512, %v6510
        %v6551 = vpack.c.b16 %v6513, %v6511
        %v6552 = vpack.c.b16 %v6516, %v6514
        %v6553 = vpack.c.b16 %v6517, %v6515
        %v6554 = vpack.c.b16 %v6520, %v6518
        %v6555 = vpack.c.b16 %v6521, %v6519
        %v6556 = vpack.c.b16 %v6524, %v6522
        %v6557 = vpack.c.b16 %v6525, %v6523
        %v6558 = vpack.c.b16 %v6528, %v6526
        %v6559 = vpack.c.b16 %v6529, %v6527
        %v6560 = vpack.c.b16 %v6532, %v6530
        %v6561 = vpack.c.b16 %v6533, %v6531
        %v6562 = vpack.c.b16 %v6536, %v6534
        %v6563 = vpack.c.b16 %v6537, %v6535
        %v6589 = vsel %vm305, %v6458, 0
        %v6592 = vand.u32 %v6562, %v867
        %v6595 = vand.u32 %v6563, %v867
        %6597 = vmatpush.bf16.msra.mxu0 %v6552
        %6598 = vmatpush.bf16.msra.mxu0 %v6550
        %6599 = vmatpush.bf16.msra.mxu0 %v6548
        %6600 = vmatpush.bf16.msra.mxu0 %v6546
        %6601 = vmatpush.bf16.msra.mxu0 %v6544
        %6602 = vmatpush.bf16.msra.mxu0 %v6542
        %6603 = vmatpush.bf16.msra.mxu0 %v6540
        %6604 = vmatpush.bf16.msra.mxu0 %v6538
        %6605 = vmatmul.bf16.gmra.mxu0 %v6455
        %v6606 = vpop.f32.mrf.mxu0
        %v6607 = vadd.f32 0.0, %v6606
        %v6608 = vpop.f32.mrf.mxu0
        %v6609 = vadd.f32 0.0, %v6608
        %6610 = vdwg.mxu0
        %6611 = vmatpush.bf16.msra.mxu0 0
        %6612 = vmatpush.bf16.msra.mxu0 0
        %6613 = vmatpush.bf16.msra.mxu0 0
        %6614 = vmatpush.bf16.msra.mxu0 %v6592
        %6615 = vmatpush.bf16.msra.mxu0 %v6560
        %6616 = vmatpush.bf16.msra.mxu0 %v6558
        %6617 = vmatpush.bf16.msra.mxu0 %v6556
        %6618 = vmatpush.bf16.msra.mxu0 %v6554
        %6619 = vmatmul.bf16.gmra.mxu0 %v6589
        %v6620 = vpop.f32.mrf.mxu0
        %v6621 = vadd.f32 %v6607, %v6620
        %v6622 = vpop.f32.mrf.mxu0
        %v6623 = vadd.f32 %v6609, %v6622
        %6624 = vdwg.mxu0
        %6625 = vmatpush.bf16.msra.mxu0 %v6553
        %6626 = vmatpush.bf16.msra.mxu0 %v6551
        %6627 = vmatpush.bf16.msra.mxu0 %v6549
        %6628 = vmatpush.bf16.msra.mxu0 %v6547
        %6629 = vmatpush.bf16.msra.mxu0 %v6545
        %6630 = vmatpush.bf16.msra.mxu0 %v6543
        %6631 = vmatpush.bf16.msra.mxu0 %v6541
        %6632 = vmatpush.bf16.msra.mxu0 %v6539
        %6633 = vmatmul.bf16.gmra.mxu0 %v6455
        %v6634 = vpop.f32.mrf.mxu0
        %v6635 = vadd.f32 0.0, %v6634
        %v6636 = vpop.f32.mrf.mxu0
        %v6637 = vadd.f32 0.0, %v6636
        %6638 = vdwg.mxu0
        %6639 = vmatpush.bf16.msra.mxu0 0
        %6640 = vmatpush.bf16.msra.mxu0 0
        %6641 = vmatpush.bf16.msra.mxu0 0
        %6642 = vmatpush.bf16.msra.mxu0 %v6595
        %6643 = vmatpush.bf16.msra.mxu0 %v6561
        %6644 = vmatpush.bf16.msra.mxu0 %v6559
        %6645 = vmatpush.bf16.msra.mxu0 %v6557
        %6646 = vmatpush.bf16.msra.mxu0 %v6555
        %6647 = vmatmul.bf16.gmra.mxu0 %v6589
        %v6648 = vpop.f32.mrf.mxu0
        %v6649 = vadd.f32 %v6635, %v6648
        %v6650 = vpop.f32.mrf.mxu0
        %v6651 = vadd.f32 %v6637, %v6650
        %6652 = vdwg.mxu0
        %v6653 = vadd.f32 %v6422, %v6621
        %v6654 = vadd.f32 %v6423, %v6649
        %v6655 = vadd.f32 %v6424, %v6623
        %v6656 = vadd.f32 %v6425, %v6651
        %s6657 = scalar_lea.vmem [#allocation10], 7696
        %v6658 = vld [vmem:[%s6657] sm:$0xff]
        %v6659 = vld [vmem:[%s6657 + $0x8] sm:$0xff]
        %v6660 = vld [vmem:[%s6657 + $0x10] sm:$0xff]
        %v6661 = vld [vmem:[%s6657 + $0x18] sm:$0xff]
        %v6662 = vld [vmem:[%s6657 + $0x20] sm:$0xff]
        %v6663 = vld [vmem:[%s6657 + $0x28] sm:$0xff]
        %v6664 = vld [vmem:[%s6657 + $0x30] sm:$0xff]
        %v6665 = vld [vmem:[%s6657 + $0x38] sm:$0xff]
        %v6666 = vld [vmem:[%s6657 + $0x40] sm:$0xff]
        %v6667 = vld [vmem:[%s6657 + $0x48] sm:$0xff]
        %v6668 = vld [vmem:[%s6657 + $0x50] sm:$0xff]
        %v6669 = vld [vmem:[%s6657 + $0x58] sm:$0xff]
        %v6670 = vld [vmem:[%s6657 + $0x60] sm:$0xff]
        %v6671 = vld [vmem:[%s6657 + $0x68] sm:$0xff]
        %v6672 = vld [vmem:[%s6657 + $0x70] sm:$0xff]
        %v6673 = vld [vmem:[%s6657 + $0x78] sm:$0xff]
        %v6674 = vld [vmem:[%s6657 + $0x80] sm:$0xff]
        %v6675 = vld [vmem:[%s6657 + $0x88] sm:$0xff]
        %v6676 = vld [vmem:[%s6657 + $0x90] sm:$0xff]
        %v6677 = vld [vmem:[%s6657 + $0x98] sm:$0xff]
        %v6678 = vld [vmem:[%s6657 + $0xa0] sm:$0xff]
        %v6679 = vld [vmem:[%s6657 + $0xa8] sm:$0xff]
        %v6680 = vld [vmem:[%s6657 + $0xb0] sm:$0xff]
        %v6681 = vld [vmem:[%s6657 + $0xb8] sm:$0xff]
        %v6682 = vld [vmem:[%s6657 + $0xc0] sm:$0xff]
        %v6683 = vld [vmem:[%s6657 + $0xc8] sm:$0x11]
        %v6684 = vrot.slane %v6206, 1
        %v6685 = vrot.slane %v6208, 2
        %v6686 = vor.u32 %v6684, %v6685
        %v6687 = vshrl.u32 %v6203, 16
        %v6689 = vrot.slane %v6687, 1
        %v6690 = vrot.slane %v6213, 2
        %v6691 = vor.u32 %v6689, %v6690
        %v6692 = vsel %vm2343, %v6686, %v6691
        %v6693 = vrot.slane %v6217, 1
        %v6694 = vrot.slane %v6219, 2
        %v6695 = vor.u32 %v6693, %v6694
        %v6696 = vshrl.u32 %v6204, 16
        %v6698 = vrot.slane %v6696, 1
        %v6699 = vrot.slane %v6224, 2
        %v6700 = vor.u32 %v6698, %v6699
        %v6701 = vsel %vm2343, %v6695, %v6700
        %v6729 = vunpack.c.l.b16 %v6658
        %v6730 = vunpack.c.h.b16 %v6658
        %v6731 = vunpack.c.l.b16 %v6659
        %v6732 = vunpack.c.h.b16 %v6659
        %v6733 = vunpack.c.l.b16 %v6660
        %v6734 = vunpack.c.h.b16 %v6660
        %v6735 = vunpack.c.l.b16 %v6661
        %v6736 = vunpack.c.h.b16 %v6661
        %v6737 = vunpack.c.l.b16 %v6662
        %v6738 = vunpack.c.h.b16 %v6662
        %v6739 = vunpack.c.l.b16 %v6663
        %v6740 = vunpack.c.h.b16 %v6663
        %v6741 = vunpack.c.l.b16 %v6664
        %v6742 = vunpack.c.h.b16 %v6664
        %v6743 = vunpack.c.l.b16 %v6665
        %v6744 = vunpack.c.h.b16 %v6665
        %v6745 = vunpack.c.l.b16 %v6666
        %v6746 = vunpack.c.h.b16 %v6666
        %v6747 = vunpack.c.l.b16 %v6667
        %v6748 = vunpack.c.h.b16 %v6667
        %v6749 = vunpack.c.l.b16 %v6668
        %v6750 = vunpack.c.h.b16 %v6668
        %v6751 = vunpack.c.l.b16 %v6669
        %v6752 = vunpack.c.h.b16 %v6669
        %v6753 = vunpack.c.l.b16 %v6670
        %v6754 = vunpack.c.h.b16 %v6670
        %v6755 = vunpack.c.l.b16 %v6671
        %v6756 = vunpack.c.h.b16 %v6671
        %v6757 = vunpack.c.l.b16 %v6672
        %v6758 = vunpack.c.h.b16 %v6672
        %v6759 = vunpack.c.l.b16 %v6673
        %v6760 = vunpack.c.h.b16 %v6673
        %v6761 = vunpack.c.l.b16 %v6674
        %v6762 = vunpack.c.h.b16 %v6674
        %v6763 = vunpack.c.l.b16 %v6675
        %v6764 = vunpack.c.h.b16 %v6675
        %v6765 = vunpack.c.l.b16 %v6676
        %v6766 = vunpack.c.h.b16 %v6676
        %v6767 = vunpack.c.l.b16 %v6677
        %v6768 = vunpack.c.h.b16 %v6677
        %v6769 = vunpack.c.l.b16 %v6678
        %v6770 = vunpack.c.h.b16 %v6678
        %v6771 = vunpack.c.l.b16 %v6679
        %v6772 = vunpack.c.h.b16 %v6679
        %v6773 = vunpack.c.l.b16 %v6680
        %v6774 = vunpack.c.h.b16 %v6680
        %v6775 = vunpack.c.l.b16 %v6681
        %v6776 = vunpack.c.h.b16 %v6681
        %v6777 = vunpack.c.l.b16 %v6682
        %v6778 = vunpack.c.h.b16 %v6682
        %v6779 = vunpack.c.l.b16 %v6683
        %v6780 = vunpack.c.h.b16 %v6683
        %v6781 = vpack.c.b16 %v6731, %v6729
        %v6782 = vpack.c.b16 %v6732, %v6730
        %v6783 = vpack.c.b16 %v6735, %v6733
        %v6784 = vpack.c.b16 %v6736, %v6734
        %v6785 = vpack.c.b16 %v6739, %v6737
        %v6786 = vpack.c.b16 %v6740, %v6738
        %v6787 = vpack.c.b16 %v6743, %v6741
        %v6788 = vpack.c.b16 %v6744, %v6742
        %v6789 = vpack.c.b16 %v6747, %v6745
        %v6790 = vpack.c.b16 %v6748, %v6746
        %v6791 = vpack.c.b16 %v6751, %v6749
        %v6792 = vpack.c.b16 %v6752, %v6750
        %v6793 = vpack.c.b16 %v6755, %v6753
        %v6794 = vpack.c.b16 %v6756, %v6754
        %v6795 = vpack.c.b16 %v6759, %v6757
        %v6796 = vpack.c.b16 %v6760, %v6758
        %v6797 = vpack.c.b16 %v6763, %v6761
        %v6798 = vpack.c.b16 %v6764, %v6762
        %v6799 = vpack.c.b16 %v6767, %v6765
        %v6800 = vpack.c.b16 %v6768, %v6766
        %v6801 = vpack.c.b16 %v6771, %v6769
        %v6802 = vpack.c.b16 %v6772, %v6770
        %v6803 = vpack.c.b16 %v6775, %v6773
        %v6804 = vpack.c.b16 %v6776, %v6774
        %v6805 = vpack.c.b16 %v6779, %v6777
        %v6806 = vpack.c.b16 %v6780, %v6778
        %v6832 = vsel %vm305, %v6701, 0
        %v6835 = vand.u32 %v6805, %v867
        %v6838 = vand.u32 %v6806, %v867
        %6840 = vmatpush.bf16.msra.mxu0 %v6795
        %6841 = vmatpush.bf16.msra.mxu0 %v6793
        %6842 = vmatpush.bf16.msra.mxu0 %v6791
        %6843 = vmatpush.bf16.msra.mxu0 %v6789
        %6844 = vmatpush.bf16.msra.mxu0 %v6787
        %6845 = vmatpush.bf16.msra.mxu0 %v6785
        %6846 = vmatpush.bf16.msra.mxu0 %v6783
        %6847 = vmatpush.bf16.msra.mxu0 %v6781
        %6848 = vmatmul.bf16.gmra.mxu0 %v6692
        %v6849 = vpop.f32.mrf.mxu0
        %v6850 = vadd.f32 0.0, %v6849
        %v6851 = vpop.f32.mrf.mxu0
        %v6852 = vadd.f32 0.0, %v6851
        %6853 = vdwg.mxu0
        %6854 = vmatpush.bf16.msra.mxu0 0
        %6855 = vmatpush.bf16.msra.mxu0 0
        %6856 = vmatpush.bf16.msra.mxu0 0
        %6857 = vmatpush.bf16.msra.mxu0 %v6835
        %6858 = vmatpush.bf16.msra.mxu0 %v6803
        %6859 = vmatpush.bf16.msra.mxu0 %v6801
        %6860 = vmatpush.bf16.msra.mxu0 %v6799
        %6861 = vmatpush.bf16.msra.mxu0 %v6797
        %6862 = vmatmul.bf16.gmra.mxu0 %v6832
        %v6863 = vpop.f32.mrf.mxu0
        %v6864 = vadd.f32 %v6850, %v6863
        %v6865 = vpop.f32.mrf.mxu0
        %v6866 = vadd.f32 %v6852, %v6865
        %6867 = vdwg.mxu0
        %6868 = vmatpush.bf16.msra.mxu0 %v6796
        %6869 = vmatpush.bf16.msra.mxu0 %v6794
        %6870 = vmatpush.bf16.msra.mxu0 %v6792
        %6871 = vmatpush.bf16.msra.mxu0 %v6790
        %6872 = vmatpush.bf16.msra.mxu0 %v6788
        %6873 = vmatpush.bf16.msra.mxu0 %v6786
        %6874 = vmatpush.bf16.msra.mxu0 %v6784
        %6875 = vmatpush.bf16.msra.mxu0 %v6782
        %6876 = vmatmul.bf16.gmra.mxu0 %v6692
        %v6877 = vpop.f32.mrf.mxu0
        %v6878 = vadd.f32 0.0, %v6877
        %v6879 = vpop.f32.mrf.mxu0
        %v6880 = vadd.f32 0.0, %v6879
        %6881 = vdwg.mxu0
        %6882 = vmatpush.bf16.msra.mxu0 0
        %6883 = vmatpush.bf16.msra.mxu0 0
        %6884 = vmatpush.bf16.msra.mxu0 0
        %6885 = vmatpush.bf16.msra.mxu0 %v6838
        %6886 = vmatpush.bf16.msra.mxu0 %v6804
        %6887 = vmatpush.bf16.msra.mxu0 %v6802
        %6888 = vmatpush.bf16.msra.mxu0 %v6800
        %6889 = vmatpush.bf16.msra.mxu0 %v6798
        %6890 = vmatmul.bf16.gmra.mxu0 %v6832
        %v6891 = vpop.f32.mrf.mxu0
        %v6892 = vadd.f32 %v6878, %v6891
        %v6893 = vpop.f32.mrf.mxu0
        %v6894 = vadd.f32 %v6880, %v6893
        %6895 = vdwg.mxu0
        %v6896 = vadd.f32 %v6653, %v6864
        %v6897 = vadd.f32 %v6654, %v6892
        %v6898 = vadd.f32 %v6655, %v6866
        %v6899 = vadd.f32 %v6656, %v6894
        %s6900 = scalar_lea.vmem [#allocation10], 8736
        %v6901 = vld [vmem:[%s6900] sm:$0xff]
        %v6902 = vld [vmem:[%s6900 + $0x8] sm:$0xff]
        %v6903 = vld [vmem:[%s6900 + $0x10] sm:$0xff]
        %v6904 = vld [vmem:[%s6900 + $0x18] sm:$0xff]
        %v6905 = vld [vmem:[%s6900 + $0x20] sm:$0xff]
        %v6906 = vld [vmem:[%s6900 + $0x28] sm:$0xff]
        %v6907 = vld [vmem:[%s6900 + $0x30] sm:$0xff]
        %v6908 = vld [vmem:[%s6900 + $0x38] sm:$0xff]
        %v6909 = vld [vmem:[%s6900 + $0x40] sm:$0xff]
        %v6910 = vld [vmem:[%s6900 + $0x48] sm:$0xff]
        %v6911 = vld [vmem:[%s6900 + $0x50] sm:$0xff]
        %v6912 = vld [vmem:[%s6900 + $0x58] sm:$0xff]
        %v6913 = vld [vmem:[%s6900 + $0x60] sm:$0xff]
        %v6914 = vld [vmem:[%s6900 + $0x68] sm:$0xff]
        %v6915 = vld [vmem:[%s6900 + $0x70] sm:$0xff]
        %v6916 = vld [vmem:[%s6900 + $0x78] sm:$0xff]
        %v6917 = vld [vmem:[%s6900 + $0x80] sm:$0xff]
        %v6918 = vld [vmem:[%s6900 + $0x88] sm:$0xff]
        %v6919 = vld [vmem:[%s6900 + $0x90] sm:$0xff]
        %v6920 = vld [vmem:[%s6900 + $0x98] sm:$0xff]
        %v6921 = vld [vmem:[%s6900 + $0xa0] sm:$0xff]
        %v6922 = vld [vmem:[%s6900 + $0xa8] sm:$0xff]
        %v6923 = vld [vmem:[%s6900 + $0xb0] sm:$0xff]
        %v6924 = vld [vmem:[%s6900 + $0xb8] sm:$0xff]
        %v6925 = vld [vmem:[%s6900 + $0xc0] sm:$0xff]
        %v6926 = vld [vmem:[%s6900 + $0xc8] sm:$0x11]
        %v6927 = vrot.slane %v5973, 2
        %v6928 = vrot.slane %v6203, 2
        %v6929 = vsel %vm930, %v6927, %v6928
        %v6930 = vrot.slane %v5974, 2
        %v6931 = vrot.slane %v6204, 2
        %v6932 = vsel %vm930, %v6930, %v6931
        %v6960 = vunpack.c.l.b16 %v6901
        %v6961 = vunpack.c.h.b16 %v6901
        %v6962 = vunpack.c.l.b16 %v6902
        %v6963 = vunpack.c.h.b16 %v6902
        %v6964 = vunpack.c.l.b16 %v6903
        %v6965 = vunpack.c.h.b16 %v6903
        %v6966 = vunpack.c.l.b16 %v6904
        %v6967 = vunpack.c.h.b16 %v6904
        %v6968 = vunpack.c.l.b16 %v6905
        %v6969 = vunpack.c.h.b16 %v6905
        %v6970 = vunpack.c.l.b16 %v6906
        %v6971 = vunpack.c.h.b16 %v6906
        %v6972 = vunpack.c.l.b16 %v6907
        %v6973 = vunpack.c.h.b16 %v6907
        %v6974 = vunpack.c.l.b16 %v6908
        %v6975 = vunpack.c.h.b16 %v6908
        %v6976 = vunpack.c.l.b16 %v6909
        %v6977 = vunpack.c.h.b16 %v6909
        %v6978 = vunpack.c.l.b16 %v6910
        %v6979 = vunpack.c.h.b16 %v6910
        %v6980 = vunpack.c.l.b16 %v6911
        %v6981 = vunpack.c.h.b16 %v6911
        %v6982 = vunpack.c.l.b16 %v6912
        %v6983 = vunpack.c.h.b16 %v6912
        %v6984 = vunpack.c.l.b16 %v6913
        %v6985 = vunpack.c.h.b16 %v6913
        %v6986 = vunpack.c.l.b16 %v6914
        %v6987 = vunpack.c.h.b16 %v6914
        %v6988 = vunpack.c.l.b16 %v6915
        %v6989 = vunpack.c.h.b16 %v6915
        %v6990 = vunpack.c.l.b16 %v6916
        %v6991 = vunpack.c.h.b16 %v6916
        %v6992 = vunpack.c.l.b16 %v6917
        %v6993 = vunpack.c.h.b16 %v6917
        %v6994 = vunpack.c.l.b16 %v6918
        %v6995 = vunpack.c.h.b16 %v6918
        %v6996 = vunpack.c.l.b16 %v6919
        %v6997 = vunpack.c.h.b16 %v6919
        %v6998 = vunpack.c.l.b16 %v6920
        %v6999 = vunpack.c.h.b16 %v6920
        %v7000 = vunpack.c.l.b16 %v6921
        %v7001 = vunpack.c.h.b16 %v6921
        %v7002 = vunpack.c.l.b16 %v6922
        %v7003 = vunpack.c.h.b16 %v6922
        %v7004 = vunpack.c.l.b16 %v6923
        %v7005 = vunpack.c.h.b16 %v6923
        %v7006 = vunpack.c.l.b16 %v6924
        %v7007 = vunpack.c.h.b16 %v6924
        %v7008 = vunpack.c.l.b16 %v6925
        %v7009 = vunpack.c.h.b16 %v6925
        %v7010 = vunpack.c.l.b16 %v6926
        %v7011 = vunpack.c.h.b16 %v6926
        %v7012 = vpack.c.b16 %v6962, %v6960
        %v7013 = vpack.c.b16 %v6963, %v6961
        %v7014 = vpack.c.b16 %v6966, %v6964
        %v7015 = vpack.c.b16 %v6967, %v6965
        %v7016 = vpack.c.b16 %v6970, %v6968
        %v7017 = vpack.c.b16 %v6971, %v6969
        %v7018 = vpack.c.b16 %v6974, %v6972
        %v7019 = vpack.c.b16 %v6975, %v6973
        %v7020 = vpack.c.b16 %v6978, %v6976
        %v7021 = vpack.c.b16 %v6979, %v6977
        %v7022 = vpack.c.b16 %v6982, %v6980
        %v7023 = vpack.c.b16 %v6983, %v6981
        %v7024 = vpack.c.b16 %v6986, %v6984
        %v7025 = vpack.c.b16 %v6987, %v6985
        %v7026 = vpack.c.b16 %v6990, %v6988
        %v7027 = vpack.c.b16 %v6991, %v6989
        %v7028 = vpack.c.b16 %v6994, %v6992
        %v7029 = vpack.c.b16 %v6995, %v6993
        %v7030 = vpack.c.b16 %v6998, %v6996
        %v7031 = vpack.c.b16 %v6999, %v6997
        %v7032 = vpack.c.b16 %v7002, %v7000
        %v7033 = vpack.c.b16 %v7003, %v7001
        %v7034 = vpack.c.b16 %v7006, %v7004
        %v7035 = vpack.c.b16 %v7007, %v7005
        %v7036 = vpack.c.b16 %v7010, %v7008
        %v7037 = vpack.c.b16 %v7011, %v7009
        %v7063 = vsel %vm305, %v6932, 0
        %v7066 = vand.u32 %v7036, %v867
        %v7069 = vand.u32 %v7037, %v867
        %7071 = vmatpush.bf16.msra.mxu0 %v7026
        %7072 = vmatpush.bf16.msra.mxu0 %v7024
        %7073 = vmatpush.bf16.msra.mxu0 %v7022
        %7074 = vmatpush.bf16.msra.mxu0 %v7020
        %7075 = vmatpush.bf16.msra.mxu0 %v7018
        %7076 = vmatpush.bf16.msra.mxu0 %v7016
        %7077 = vmatpush.bf16.msra.mxu0 %v7014
        %7078 = vmatpush.bf16.msra.mxu0 %v7012
        %7079 = vmatmul.bf16.gmra.mxu0 %v6929
        %v7080 = vpop.f32.mrf.mxu0
        %v7081 = vadd.f32 0.0, %v7080
        %v7082 = vpop.f32.mrf.mxu0
        %v7083 = vadd.f32 0.0, %v7082
        %7084 = vdwg.mxu0
        %7085 = vmatpush.bf16.msra.mxu0 0
        %7086 = vmatpush.bf16.msra.mxu0 0
        %7087 = vmatpush.bf16.msra.mxu0 0
        %7088 = vmatpush.bf16.msra.mxu0 %v7066
        %7089 = vmatpush.bf16.msra.mxu0 %v7034
        %7090 = vmatpush.bf16.msra.mxu0 %v7032
        %7091 = vmatpush.bf16.msra.mxu0 %v7030
        %7092 = vmatpush.bf16.msra.mxu0 %v7028
        %7093 = vmatmul.bf16.gmra.mxu0 %v7063
        %v7094 = vpop.f32.mrf.mxu0
        %v7095 = vadd.f32 %v7081, %v7094
        %v7096 = vpop.f32.mrf.mxu0
        %v7097 = vadd.f32 %v7083, %v7096
        %7098 = vdwg.mxu0
        %7099 = vmatpush.bf16.msra.mxu0 %v7027
        %7100 = vmatpush.bf16.msra.mxu0 %v7025
        %7101 = vmatpush.bf16.msra.mxu0 %v7023
        %7102 = vmatpush.bf16.msra.mxu0 %v7021
        %7103 = vmatpush.bf16.msra.mxu0 %v7019
        %7104 = vmatpush.bf16.msra.mxu0 %v7017
        %7105 = vmatpush.bf16.msra.mxu0 %v7015
        %7106 = vmatpush.bf16.msra.mxu0 %v7013
        %7107 = vmatmul.bf16.gmra.mxu0 %v6929
        %v7108 = vpop.f32.mrf.mxu0
        %v7109 = vadd.f32 0.0, %v7108
        %v7110 = vpop.f32.mrf.mxu0
        %v7111 = vadd.f32 0.0, %v7110
        %7112 = vdwg.mxu0
        %7113 = vmatpush.bf16.msra.mxu0 0
        %7114 = vmatpush.bf16.msra.mxu0 0
        %7115 = vmatpush.bf16.msra.mxu0 0
        %7116 = vmatpush.bf16.msra.mxu0 %v7069
        %7117 = vmatpush.bf16.msra.mxu0 %v7035
        %7118 = vmatpush.bf16.msra.mxu0 %v7033
        %7119 = vmatpush.bf16.msra.mxu0 %v7031
        %7120 = vmatpush.bf16.msra.mxu0 %v7029
        %7121 = vmatmul.bf16.gmra.mxu0 %v7063
        %v7122 = vpop.f32.mrf.mxu0
        %v7123 = vadd.f32 %v7109, %v7122
        %v7124 = vpop.f32.mrf.mxu0
        %v7125 = vadd.f32 %v7111, %v7124
        %7126 = vdwg.mxu0
        %v7127 = vadd.f32 %v6896, %v7095
        %v7128 = vadd.f32 %v6897, %v7123
        %v7129 = vadd.f32 %v6898, %v7097
        %v7130 = vadd.f32 %v6899, %v7125
        %v7131 = vld [vmem:[%s563] sm:$0xff]
        %v7132 = vld [vmem:[%s563 + $0x8] sm:$0xff]
        %v7133 = vld [vmem:[%s563 + $0x10] sm:$0xff]
        %v7134 = vld [vmem:[%s563 + $0x18] sm:$0xff]
        %v7135 = vld [vmem:[%s563 + $0x20] sm:$0xff]
        %v7136 = vld [vmem:[%s563 + $0x28] sm:$0xff]
        %v7137 = vld [vmem:[%s563 + $0x30] sm:$0xf]
        %v7138 = vld [vmem:[%s563 + $0x38] sm:$0xf]
        %v7139 = vpack.c.bf16 %v7132, %v7131
        %v7140 = vpack.c.bf16 %v7134, %v7133
        %v7141 = vpack.c.bf16 %v7136, %v7135
        %v7142 = vpack.c.bf16 %v7138, %v7137
        %s7143 = scalar_lea.vmem [#allocation10], 624
        %v7144 = vld [vmem:[%s7143] sm:$0xff]
        %v7145 = vld [vmem:[%s7143 + $0x8] sm:$0xff]
        %v7146 = vld [vmem:[%s7143 + $0x10] sm:$0xff]
        %v7147 = vld [vmem:[%s7143 + $0x18] sm:$0xff]
        %v7148 = vld [vmem:[%s7143 + $0x20] sm:$0xff]
        %v7149 = vld [vmem:[%s7143 + $0x28] sm:$0xff]
        %v7150 = vld [vmem:[%s7143 + $0x30] sm:$0xff]
        %v7151 = vld [vmem:[%s7143 + $0x38] sm:$0xff]
        %v7152 = vld [vmem:[%s7143 + $0x40] sm:$0xff]
        %v7153 = vld [vmem:[%s7143 + $0x48] sm:$0xff]
        %v7154 = vld [vmem:[%s7143 + $0x50] sm:$0xff]
        %v7155 = vld [vmem:[%s7143 + $0x58] sm:$0xff]
        %v7156 = vld [vmem:[%s7143 + $0x60] sm:$0xff]
        %v7157 = vld [vmem:[%s7143 + $0x68] sm:$0xff]
        %v7158 = vld [vmem:[%s7143 + $0x70] sm:$0xff]
        %v7159 = vld [vmem:[%s7143 + $0x78] sm:$0xff]
        %v7160 = vld [vmem:[%s7143 + $0x80] sm:$0xff]
        %v7161 = vld [vmem:[%s7143 + $0x88] sm:$0xff]
        %v7162 = vld [vmem:[%s7143 + $0x90] sm:$0xff]
        %v7163 = vld [vmem:[%s7143 + $0x98] sm:$0xff]
        %v7164 = vld [vmem:[%s7143 + $0xa0] sm:$0xff]
        %v7165 = vld [vmem:[%s7143 + $0xa8] sm:$0xff]
        %v7166 = vld [vmem:[%s7143 + $0xb0] sm:$0xff]
        %v7167 = vld [vmem:[%s7143 + $0xb8] sm:$0xff]
        %v7168 = vld [vmem:[%s7143 + $0xc0] sm:$0xff]
        %v7169 = vld [vmem:[%s7143 + $0xc8] sm:$0x11]
        %v7173 = vunpack.c.l.b16 %v7139
        %v7174 = vunpack.c.h.b16 %v7139
        %v7175 = vunpack.c.l.b16 %v7140
        %v7176 = vunpack.c.h.b16 %v7140
        %v7177 = vunpack.c.l.b16 %v7141
        %v7178 = vunpack.c.h.b16 %v7141
        %v7179 = vpack.c.b16 %v7175, %v7173
        %v7180 = vpack.c.b16 %v7176, %v7174
        %v7181 = vpack.c.b16 %v7177, %v7177
        %v7182 = vpack.c.b16 %v7178, %v7178
        %v7183 = vrot.slane %v7179, 2
        %v7184 = vrot.slane %v7181, 2
        %v7185 = vsel %vm930, %v7183, %v7184
        %v7186 = vrot.slane %v7180, 2
        %v7187 = vrot.slane %v7182, 2
        %v7188 = vsel %vm930, %v7186, %v7187
        %v7216 = vunpack.c.l.b16 %v7144
        %v7217 = vunpack.c.h.b16 %v7144
        %v7218 = vunpack.c.l.b16 %v7145
        %v7219 = vunpack.c.h.b16 %v7145
        %v7220 = vunpack.c.l.b16 %v7146
        %v7221 = vunpack.c.h.b16 %v7146
        %v7222 = vunpack.c.l.b16 %v7147
        %v7223 = vunpack.c.h.b16 %v7147
        %v7224 = vunpack.c.l.b16 %v7148
        %v7225 = vunpack.c.h.b16 %v7148
        %v7226 = vunpack.c.l.b16 %v7149
        %v7227 = vunpack.c.h.b16 %v7149
        %v7228 = vunpack.c.l.b16 %v7150
        %v7229 = vunpack.c.h.b16 %v7150
        %v7230 = vunpack.c.l.b16 %v7151
        %v7231 = vunpack.c.h.b16 %v7151
        %v7232 = vunpack.c.l.b16 %v7152
        %v7233 = vunpack.c.h.b16 %v7152
        %v7234 = vunpack.c.l.b16 %v7153
        %v7235 = vunpack.c.h.b16 %v7153
        %v7236 = vunpack.c.l.b16 %v7154
        %v7237 = vunpack.c.h.b16 %v7154
        %v7238 = vunpack.c.l.b16 %v7155
        %v7239 = vunpack.c.h.b16 %v7155
        %v7240 = vunpack.c.l.b16 %v7156
        %v7241 = vunpack.c.h.b16 %v7156
        %v7242 = vunpack.c.l.b16 %v7157
        %v7243 = vunpack.c.h.b16 %v7157
        %v7244 = vunpack.c.l.b16 %v7158
        %v7245 = vunpack.c.h.b16 %v7158
        %v7246 = vunpack.c.l.b16 %v7159
        %v7247 = vunpack.c.h.b16 %v7159
        %v7248 = vunpack.c.l.b16 %v7160
        %v7249 = vunpack.c.h.b16 %v7160
        %v7250 = vunpack.c.l.b16 %v7161
        %v7251 = vunpack.c.h.b16 %v7161
        %v7252 = vunpack.c.l.b16 %v7162
        %v7253 = vunpack.c.h.b16 %v7162
        %v7254 = vunpack.c.l.b16 %v7163
        %v7255 = vunpack.c.h.b16 %v7163
        %v7256 = vunpack.c.l.b16 %v7164
        %v7257 = vunpack.c.h.b16 %v7164
        %v7258 = vunpack.c.l.b16 %v7165
        %v7259 = vunpack.c.h.b16 %v7165
        %v7260 = vunpack.c.l.b16 %v7166
        %v7261 = vunpack.c.h.b16 %v7166
        %v7262 = vunpack.c.l.b16 %v7167
        %v7263 = vunpack.c.h.b16 %v7167
        %v7264 = vunpack.c.l.b16 %v7168
        %v7265 = vunpack.c.h.b16 %v7168
        %v7266 = vunpack.c.l.b16 %v7169
        %v7267 = vunpack.c.h.b16 %v7169
        %v7268 = vpack.c.b16 %v7218, %v7216
        %v7269 = vpack.c.b16 %v7219, %v7217
        %v7270 = vpack.c.b16 %v7222, %v7220
        %v7271 = vpack.c.b16 %v7223, %v7221
        %v7272 = vpack.c.b16 %v7226, %v7224
        %v7273 = vpack.c.b16 %v7227, %v7225
        %v7274 = vpack.c.b16 %v7230, %v7228
        %v7275 = vpack.c.b16 %v7231, %v7229
        %v7276 = vpack.c.b16 %v7234, %v7232
        %v7277 = vpack.c.b16 %v7235, %v7233
        %v7278 = vpack.c.b16 %v7238, %v7236
        %v7279 = vpack.c.b16 %v7239, %v7237
        %v7280 = vpack.c.b16 %v7242, %v7240
        %v7281 = vpack.c.b16 %v7243, %v7241
        %v7282 = vpack.c.b16 %v7246, %v7244
        %v7283 = vpack.c.b16 %v7247, %v7245
        %v7284 = vpack.c.b16 %v7250, %v7248
        %v7285 = vpack.c.b16 %v7251, %v7249
        %v7286 = vpack.c.b16 %v7254, %v7252
        %v7287 = vpack.c.b16 %v7255, %v7253
        %v7288 = vpack.c.b16 %v7258, %v7256
        %v7289 = vpack.c.b16 %v7259, %v7257
        %v7290 = vpack.c.b16 %v7262, %v7260
        %v7291 = vpack.c.b16 %v7263, %v7261
        %v7292 = vpack.c.b16 %v7266, %v7264
        %v7293 = vpack.c.b16 %v7267, %v7265
        %v7319 = vsel %vm305, %v7188, 0
        %v7322 = vand.u32 %v7292, %v867
        %v7325 = vand.u32 %v7293, %v867
        %7327 = vmatpush.bf16.msra.mxu0 %v7282
        %7328 = vmatpush.bf16.msra.mxu0 %v7280
        %7329 = vmatpush.bf16.msra.mxu0 %v7278
        %7330 = vmatpush.bf16.msra.mxu0 %v7276
        %7331 = vmatpush.bf16.msra.mxu0 %v7274
        %7332 = vmatpush.bf16.msra.mxu0 %v7272
        %7333 = vmatpush.bf16.msra.mxu0 %v7270
        %7334 = vmatpush.bf16.msra.mxu0 %v7268
        %7335 = vmatmul.bf16.gmra.mxu0 %v7185
        %v7336 = vpop.f32.mrf.mxu0
        %v7337 = vadd.f32 0.0, %v7336
        %v7338 = vpop.f32.mrf.mxu0
        %v7339 = vadd.f32 0.0, %v7338
        %7340 = vdwg.mxu0
        %7341 = vmatpush.bf16.msra.mxu0 0
        %7342 = vmatpush.bf16.msra.mxu0 0
        %7343 = vmatpush.bf16.msra.mxu0 0
        %7344 = vmatpush.bf16.msra.mxu0 %v7322
        %7345 = vmatpush.bf16.msra.mxu0 %v7290
        %7346 = vmatpush.bf16.msra.mxu0 %v7288
        %7347 = vmatpush.bf16.msra.mxu0 %v7286
        %7348 = vmatpush.bf16.msra.mxu0 %v7284
        %7349 = vmatmul.bf16.gmra.mxu0 %v7319
        %v7350 = vpop.f32.mrf.mxu0
        %v7351 = vadd.f32 %v7337, %v7350
        %v7352 = vpop.f32.mrf.mxu0
        %v7353 = vadd.f32 %v7339, %v7352
        %7354 = vdwg.mxu0
        %7355 = vmatpush.bf16.msra.mxu0 %v7283
        %7356 = vmatpush.bf16.msra.mxu0 %v7281
        %7357 = vmatpush.bf16.msra.mxu0 %v7279
        %7358 = vmatpush.bf16.msra.mxu0 %v7277
        %7359 = vmatpush.bf16.msra.mxu0 %v7275
        %7360 = vmatpush.bf16.msra.mxu0 %v7273
        %7361 = vmatpush.bf16.msra.mxu0 %v7271
        %7362 = vmatpush.bf16.msra.mxu0 %v7269
        %7363 = vmatmul.bf16.gmra.mxu0 %v7185
        %v7364 = vpop.f32.mrf.mxu0
        %v7365 = vadd.f32 0.0, %v7364
        %v7366 = vpop.f32.mrf.mxu0
        %v7367 = vadd.f32 0.0, %v7366
        %7368 = vdwg.mxu0
        %7369 = vmatpush.bf16.msra.mxu0 0
        %7370 = vmatpush.bf16.msra.mxu0 0
        %7371 = vmatpush.bf16.msra.mxu0 0
        %7372 = vmatpush.bf16.msra.mxu0 %v7325
        %7373 = vmatpush.bf16.msra.mxu0 %v7291
        %7374 = vmatpush.bf16.msra.mxu0 %v7289
        %7375 = vmatpush.bf16.msra.mxu0 %v7287
        %7376 = vmatpush.bf16.msra.mxu0 %v7285
        %7377 = vmatmul.bf16.gmra.mxu0 %v7319
        %v7378 = vpop.f32.mrf.mxu0
        %v7379 = vadd.f32 %v7365, %v7378
        %v7380 = vpop.f32.mrf.mxu0
        %v7381 = vadd.f32 %v7367, %v7380
        %7382 = vdwg.mxu0
        %v7383 = vadd.f32 %v7127, %v7351
        %v7384 = vadd.f32 %v7128, %v7379
        %v7385 = vadd.f32 %v7129, %v7353
        %v7386 = vadd.f32 %v7130, %v7381
        %s7387 = scalar_lea.vmem [#allocation10], 1664
        %v7388 = vld [vmem:[%s7387] sm:$0xff]
        %v7389 = vld [vmem:[%s7387 + $0x8] sm:$0xff]
        %v7390 = vld [vmem:[%s7387 + $0x10] sm:$0xff]
        %v7391 = vld [vmem:[%s7387 + $0x18] sm:$0xff]
        %v7392 = vld [vmem:[%s7387 + $0x20] sm:$0xff]
        %v7393 = vld [vmem:[%s7387 + $0x28] sm:$0xff]
        %v7394 = vld [vmem:[%s7387 + $0x30] sm:$0xff]
        %v7395 = vld [vmem:[%s7387 + $0x38] sm:$0xff]
        %v7396 = vld [vmem:[%s7387 + $0x40] sm:$0xff]
        %v7397 = vld [vmem:[%s7387 + $0x48] sm:$0xff]
        %v7398 = vld [vmem:[%s7387 + $0x50] sm:$0xff]
        %v7399 = vld [vmem:[%s7387 + $0x58] sm:$0xff]
        %v7400 = vld [vmem:[%s7387 + $0x60] sm:$0xff]
        %v7401 = vld [vmem:[%s7387 + $0x68] sm:$0xff]
        %v7402 = vld [vmem:[%s7387 + $0x70] sm:$0xff]
        %v7403 = vld [vmem:[%s7387 + $0x78] sm:$0xff]
        %v7404 = vld [vmem:[%s7387 + $0x80] sm:$0xff]
        %v7405 = vld [vmem:[%s7387 + $0x88] sm:$0xff]
        %v7406 = vld [vmem:[%s7387 + $0x90] sm:$0xff]
        %v7407 = vld [vmem:[%s7387 + $0x98] sm:$0xff]
        %v7408 = vld [vmem:[%s7387 + $0xa0] sm:$0xff]
        %v7409 = vld [vmem:[%s7387 + $0xa8] sm:$0xff]
        %v7410 = vld [vmem:[%s7387 + $0xb0] sm:$0xff]
        %v7411 = vld [vmem:[%s7387 + $0xb8] sm:$0xff]
        %v7412 = vld [vmem:[%s7387 + $0xc0] sm:$0xff]
        %v7413 = vld [vmem:[%s7387 + $0xc8] sm:$0x11]
        %v7415 = vshrl.u32 %v7179, 16
        %v7417 = vrot.slane %v7415, 2
        %v7418 = vshll.u32 %v7179, 16
        %v7420 = vrot.slane %v7418, 3
        %v7421 = vor.u32 %v7417, %v7420
        %v7423 = vshrl.u32 %v7181, 16
        %v7425 = vrot.slane %v7423, 2
        %v7426 = vshll.u32 %v7181, 16
        %v7428 = vrot.slane %v7426, 3
        %v7429 = vor.u32 %v7425, %v7428
        %v7430 = vsel %vm697, %v7421, %v7429
        %v7432 = vshrl.u32 %v7180, 16
        %v7434 = vrot.slane %v7432, 2
        %v7435 = vshll.u32 %v7180, 16
        %v7437 = vrot.slane %v7435, 3
        %v7438 = vor.u32 %v7434, %v7437
        %v7440 = vshrl.u32 %v7182, 16
        %v7442 = vrot.slane %v7440, 2
        %v7443 = vshll.u32 %v7182, 16
        %v7445 = vrot.slane %v7443, 3
        %v7446 = vor.u32 %v7442, %v7445
        %v7447 = vsel %vm697, %v7438, %v7446
        %v7475 = vunpack.c.l.b16 %v7388
        %v7476 = vunpack.c.h.b16 %v7388
        %v7477 = vunpack.c.l.b16 %v7389
        %v7478 = vunpack.c.h.b16 %v7389
        %v7479 = vunpack.c.l.b16 %v7390
        %v7480 = vunpack.c.h.b16 %v7390
        %v7481 = vunpack.c.l.b16 %v7391
        %v7482 = vunpack.c.h.b16 %v7391
        %v7483 = vunpack.c.l.b16 %v7392
        %v7484 = vunpack.c.h.b16 %v7392
        %v7485 = vunpack.c.l.b16 %v7393
        %v7486 = vunpack.c.h.b16 %v7393
        %v7487 = vunpack.c.l.b16 %v7394
        %v7488 = vunpack.c.h.b16 %v7394
        %v7489 = vunpack.c.l.b16 %v7395
        %v7490 = vunpack.c.h.b16 %v7395
        %v7491 = vunpack.c.l.b16 %v7396
        %v7492 = vunpack.c.h.b16 %v7396
        %v7493 = vunpack.c.l.b16 %v7397
        %v7494 = vunpack.c.h.b16 %v7397
        %v7495 = vunpack.c.l.b16 %v7398
        %v7496 = vunpack.c.h.b16 %v7398
        %v7497 = vunpack.c.l.b16 %v7399
        %v7498 = vunpack.c.h.b16 %v7399
        %v7499 = vunpack.c.l.b16 %v7400
        %v7500 = vunpack.c.h.b16 %v7400
        %v7501 = vunpack.c.l.b16 %v7401
        %v7502 = vunpack.c.h.b16 %v7401
        %v7503 = vunpack.c.l.b16 %v7402
        %v7504 = vunpack.c.h.b16 %v7402
        %v7505 = vunpack.c.l.b16 %v7403
        %v7506 = vunpack.c.h.b16 %v7403
        %v7507 = vunpack.c.l.b16 %v7404
        %v7508 = vunpack.c.h.b16 %v7404
        %v7509 = vunpack.c.l.b16 %v7405
        %v7510 = vunpack.c.h.b16 %v7405
        %v7511 = vunpack.c.l.b16 %v7406
        %v7512 = vunpack.c.h.b16 %v7406
        %v7513 = vunpack.c.l.b16 %v7407
        %v7514 = vunpack.c.h.b16 %v7407
        %v7515 = vunpack.c.l.b16 %v7408
        %v7516 = vunpack.c.h.b16 %v7408
        %v7517 = vunpack.c.l.b16 %v7409
        %v7518 = vunpack.c.h.b16 %v7409
        %v7519 = vunpack.c.l.b16 %v7410
        %v7520 = vunpack.c.h.b16 %v7410
        %v7521 = vunpack.c.l.b16 %v7411
        %v7522 = vunpack.c.h.b16 %v7411
        %v7523 = vunpack.c.l.b16 %v7412
        %v7524 = vunpack.c.h.b16 %v7412
        %v7525 = vunpack.c.l.b16 %v7413
        %v7526 = vunpack.c.h.b16 %v7413
        %v7527 = vpack.c.b16 %v7477, %v7475
        %v7528 = vpack.c.b16 %v7478, %v7476
        %v7529 = vpack.c.b16 %v7481, %v7479
        %v7530 = vpack.c.b16 %v7482, %v7480
        %v7531 = vpack.c.b16 %v7485, %v7483
        %v7532 = vpack.c.b16 %v7486, %v7484
        %v7533 = vpack.c.b16 %v7489, %v7487
        %v7534 = vpack.c.b16 %v7490, %v7488
        %v7535 = vpack.c.b16 %v7493, %v7491
        %v7536 = vpack.c.b16 %v7494, %v7492
        %v7537 = vpack.c.b16 %v7497, %v7495
        %v7538 = vpack.c.b16 %v7498, %v7496
        %v7539 = vpack.c.b16 %v7501, %v7499
        %v7540 = vpack.c.b16 %v7502, %v7500
        %v7541 = vpack.c.b16 %v7505, %v7503
        %v7542 = vpack.c.b16 %v7506, %v7504
        %v7543 = vpack.c.b16 %v7509, %v7507
        %v7544 = vpack.c.b16 %v7510, %v7508
        %v7545 = vpack.c.b16 %v7513, %v7511
        %v7546 = vpack.c.b16 %v7514, %v7512
        %v7547 = vpack.c.b16 %v7517, %v7515
        %v7548 = vpack.c.b16 %v7518, %v7516
        %v7549 = vpack.c.b16 %v7521, %v7519
        %v7550 = vpack.c.b16 %v7522, %v7520
        %v7551 = vpack.c.b16 %v7525, %v7523
        %v7552 = vpack.c.b16 %v7526, %v7524
        %v7578 = vsel %vm305, %v7447, 0
        %v7581 = vand.u32 %v7551, %v867
        %v7584 = vand.u32 %v7552, %v867
        %7586 = vmatpush.bf16.msra.mxu0 %v7541
        %7587 = vmatpush.bf16.msra.mxu0 %v7539
        %7588 = vmatpush.bf16.msra.mxu0 %v7537
        %7589 = vmatpush.bf16.msra.mxu0 %v7535
        %7590 = vmatpush.bf16.msra.mxu0 %v7533
        %7591 = vmatpush.bf16.msra.mxu0 %v7531
        %7592 = vmatpush.bf16.msra.mxu0 %v7529
        %7593 = vmatpush.bf16.msra.mxu0 %v7527
        %7594 = vmatmul.bf16.gmra.mxu0 %v7430
        %v7595 = vpop.f32.mrf.mxu0
        %v7596 = vadd.f32 0.0, %v7595
        %v7597 = vpop.f32.mrf.mxu0
        %v7598 = vadd.f32 0.0, %v7597
        %7599 = vdwg.mxu0
        %7600 = vmatpush.bf16.msra.mxu0 0
        %7601 = vmatpush.bf16.msra.mxu0 0
        %7602 = vmatpush.bf16.msra.mxu0 0
        %7603 = vmatpush.bf16.msra.mxu0 %v7581
        %7604 = vmatpush.bf16.msra.mxu0 %v7549
        %7605 = vmatpush.bf16.msra.mxu0 %v7547
        %7606 = vmatpush.bf16.msra.mxu0 %v7545
        %7607 = vmatpush.bf16.msra.mxu0 %v7543
        %7608 = vmatmul.bf16.gmra.mxu0 %v7578
        %v7609 = vpop.f32.mrf.mxu0
        %v7610 = vadd.f32 %v7596, %v7609
        %v7611 = vpop.f32.mrf.mxu0
        %v7612 = vadd.f32 %v7598, %v7611
        %7613 = vdwg.mxu0
        %7614 = vmatpush.bf16.msra.mxu0 %v7542
        %7615 = vmatpush.bf16.msra.mxu0 %v7540
        %7616 = vmatpush.bf16.msra.mxu0 %v7538
        %7617 = vmatpush.bf16.msra.mxu0 %v7536
        %7618 = vmatpush.bf16.msra.mxu0 %v7534
        %7619 = vmatpush.bf16.msra.mxu0 %v7532
        %7620 = vmatpush.bf16.msra.mxu0 %v7530
        %7621 = vmatpush.bf16.msra.mxu0 %v7528
        %7622 = vmatmul.bf16.gmra.mxu0 %v7430
        %v7623 = vpop.f32.mrf.mxu0
        %v7624 = vadd.f32 0.0, %v7623
        %v7625 = vpop.f32.mrf.mxu0
        %v7626 = vadd.f32 0.0, %v7625
        %7627 = vdwg.mxu0
        %7628 = vmatpush.bf16.msra.mxu0 0
        %7629 = vmatpush.bf16.msra.mxu0 0
        %7630 = vmatpush.bf16.msra.mxu0 0
        %7631 = vmatpush.bf16.msra.mxu0 %v7584
        %7632 = vmatpush.bf16.msra.mxu0 %v7550
        %7633 = vmatpush.bf16.msra.mxu0 %v7548
        %7634 = vmatpush.bf16.msra.mxu0 %v7546
        %7635 = vmatpush.bf16.msra.mxu0 %v7544
        %7636 = vmatmul.bf16.gmra.mxu0 %v7578
        %v7637 = vpop.f32.mrf.mxu0
        %v7638 = vadd.f32 %v7624, %v7637
        %v7639 = vpop.f32.mrf.mxu0
        %v7640 = vadd.f32 %v7626, %v7639
        %7641 = vdwg.mxu0
        %v7642 = vadd.f32 %v7383, %v7610
        %v7643 = vadd.f32 %v7384, %v7638
        %v7644 = vadd.f32 %v7385, %v7612
        %v7645 = vadd.f32 %v7386, %v7640
        %s7646 = scalar_lea.vmem [#allocation10], 2704
        %v7647 = vld [vmem:[%s7646] sm:$0xff]
        %v7648 = vld [vmem:[%s7646 + $0x8] sm:$0xff]
        %v7649 = vld [vmem:[%s7646 + $0x10] sm:$0xff]
        %v7650 = vld [vmem:[%s7646 + $0x18] sm:$0xff]
        %v7651 = vld [vmem:[%s7646 + $0x20] sm:$0xff]
        %v7652 = vld [vmem:[%s7646 + $0x28] sm:$0xff]
        %v7653 = vld [vmem:[%s7646 + $0x30] sm:$0xff]
        %v7654 = vld [vmem:[%s7646 + $0x38] sm:$0xff]
        %v7655 = vld [vmem:[%s7646 + $0x40] sm:$0xff]
        %v7656 = vld [vmem:[%s7646 + $0x48] sm:$0xff]
        %v7657 = vld [vmem:[%s7646 + $0x50] sm:$0xff]
        %v7658 = vld [vmem:[%s7646 + $0x58] sm:$0xff]
        %v7659 = vld [vmem:[%s7646 + $0x60] sm:$0xff]
        %v7660 = vld [vmem:[%s7646 + $0x68] sm:$0xff]
        %v7661 = vld [vmem:[%s7646 + $0x70] sm:$0xff]
        %v7662 = vld [vmem:[%s7646 + $0x78] sm:$0xff]
        %v7663 = vld [vmem:[%s7646 + $0x80] sm:$0xff]
        %v7664 = vld [vmem:[%s7646 + $0x88] sm:$0xff]
        %v7665 = vld [vmem:[%s7646 + $0x90] sm:$0xff]
        %v7666 = vld [vmem:[%s7646 + $0x98] sm:$0xff]
        %v7667 = vld [vmem:[%s7646 + $0xa0] sm:$0xff]
        %v7668 = vld [vmem:[%s7646 + $0xa8] sm:$0xff]
        %v7669 = vld [vmem:[%s7646 + $0xb0] sm:$0xff]
        %v7670 = vld [vmem:[%s7646 + $0xb8] sm:$0xff]
        %v7671 = vld [vmem:[%s7646 + $0xc0] sm:$0xff]
        %v7672 = vld [vmem:[%s7646 + $0xc8] sm:$0x11]
        %v7673 = vrot.slane %v7179, 3
        %v7674 = vrot.slane %v7181, 3
        %v7675 = vsel %vm1158, %v7673, %v7674
        %v7676 = vrot.slane %v7180, 3
        %v7677 = vrot.slane %v7182, 3
        %v7678 = vsel %vm1158, %v7676, %v7677
        %v7706 = vunpack.c.l.b16 %v7647
        %v7707 = vunpack.c.h.b16 %v7647
        %v7708 = vunpack.c.l.b16 %v7648
        %v7709 = vunpack.c.h.b16 %v7648
        %v7710 = vunpack.c.l.b16 %v7649
        %v7711 = vunpack.c.h.b16 %v7649
        %v7712 = vunpack.c.l.b16 %v7650
        %v7713 = vunpack.c.h.b16 %v7650
        %v7714 = vunpack.c.l.b16 %v7651
        %v7715 = vunpack.c.h.b16 %v7651
        %v7716 = vunpack.c.l.b16 %v7652
        %v7717 = vunpack.c.h.b16 %v7652
        %v7718 = vunpack.c.l.b16 %v7653
        %v7719 = vunpack.c.h.b16 %v7653
        %v7720 = vunpack.c.l.b16 %v7654
        %v7721 = vunpack.c.h.b16 %v7654
        %v7722 = vunpack.c.l.b16 %v7655
        %v7723 = vunpack.c.h.b16 %v7655
        %v7724 = vunpack.c.l.b16 %v7656
        %v7725 = vunpack.c.h.b16 %v7656
        %v7726 = vunpack.c.l.b16 %v7657
        %v7727 = vunpack.c.h.b16 %v7657
        %v7728 = vunpack.c.l.b16 %v7658
        %v7729 = vunpack.c.h.b16 %v7658
        %v7730 = vunpack.c.l.b16 %v7659
        %v7731 = vunpack.c.h.b16 %v7659
        %v7732 = vunpack.c.l.b16 %v7660
        %v7733 = vunpack.c.h.b16 %v7660
        %v7734 = vunpack.c.l.b16 %v7661
        %v7735 = vunpack.c.h.b16 %v7661
        %v7736 = vunpack.c.l.b16 %v7662
        %v7737 = vunpack.c.h.b16 %v7662
        %v7738 = vunpack.c.l.b16 %v7663
        %v7739 = vunpack.c.h.b16 %v7663
        %v7740 = vunpack.c.l.b16 %v7664
        %v7741 = vunpack.c.h.b16 %v7664
        %v7742 = vunpack.c.l.b16 %v7665
        %v7743 = vunpack.c.h.b16 %v7665
        %v7744 = vunpack.c.l.b16 %v7666
        %v7745 = vunpack.c.h.b16 %v7666
        %v7746 = vunpack.c.l.b16 %v7667
        %v7747 = vunpack.c.h.b16 %v7667
        %v7748 = vunpack.c.l.b16 %v7668
        %v7749 = vunpack.c.h.b16 %v7668
        %v7750 = vunpack.c.l.b16 %v7669
        %v7751 = vunpack.c.h.b16 %v7669
        %v7752 = vunpack.c.l.b16 %v7670
        %v7753 = vunpack.c.h.b16 %v7670
        %v7754 = vunpack.c.l.b16 %v7671
        %v7755 = vunpack.c.h.b16 %v7671
        %v7756 = vunpack.c.l.b16 %v7672
        %v7757 = vunpack.c.h.b16 %v7672
        %v7758 = vpack.c.b16 %v7708, %v7706
        %v7759 = vpack.c.b16 %v7709, %v7707
        %v7760 = vpack.c.b16 %v7712, %v7710
        %v7761 = vpack.c.b16 %v7713, %v7711
        %v7762 = vpack.c.b16 %v7716, %v7714
        %v7763 = vpack.c.b16 %v7717, %v7715
        %v7764 = vpack.c.b16 %v7720, %v7718
        %v7765 = vpack.c.b16 %v7721, %v7719
        %v7766 = vpack.c.b16 %v7724, %v7722
        %v7767 = vpack.c.b16 %v7725, %v7723
        %v7768 = vpack.c.b16 %v7728, %v7726
        %v7769 = vpack.c.b16 %v7729, %v7727
        %v7770 = vpack.c.b16 %v7732, %v7730
        %v7771 = vpack.c.b16 %v7733, %v7731
        %v7772 = vpack.c.b16 %v7736, %v7734
        %v7773 = vpack.c.b16 %v7737, %v7735
        %v7774 = vpack.c.b16 %v7740, %v7738
        %v7775 = vpack.c.b16 %v7741, %v7739
        %v7776 = vpack.c.b16 %v7744, %v7742
        %v7777 = vpack.c.b16 %v7745, %v7743
        %v7778 = vpack.c.b16 %v7748, %v7746
        %v7779 = vpack.c.b16 %v7749, %v7747
        %v7780 = vpack.c.b16 %v7752, %v7750
        %v7781 = vpack.c.b16 %v7753, %v7751
        %v7782 = vpack.c.b16 %v7756, %v7754
        %v7783 = vpack.c.b16 %v7757, %v7755
        %v7809 = vsel %vm305, %v7678, 0
        %v7812 = vand.u32 %v7782, %v867
        %v7815 = vand.u32 %v7783, %v867
        %7817 = vmatpush.bf16.msra.mxu0 %v7772
        %7818 = vmatpush.bf16.msra.mxu0 %v7770
        %7819 = vmatpush.bf16.msra.mxu0 %v7768
        %7820 = vmatpush.bf16.msra.mxu0 %v7766
        %7821 = vmatpush.bf16.msra.mxu0 %v7764
        %7822 = vmatpush.bf16.msra.mxu0 %v7762
        %7823 = vmatpush.bf16.msra.mxu0 %v7760
        %7824 = vmatpush.bf16.msra.mxu0 %v7758
        %7825 = vmatmul.bf16.gmra.mxu0 %v7675
        %v7826 = vpop.f32.mrf.mxu0
        %v7827 = vadd.f32 0.0, %v7826
        %v7828 = vpop.f32.mrf.mxu0
        %v7829 = vadd.f32 0.0, %v7828
        %7830 = vdwg.mxu0
        %7831 = vmatpush.bf16.msra.mxu0 0
        %7832 = vmatpush.bf16.msra.mxu0 0
        %7833 = vmatpush.bf16.msra.mxu0 0
        %7834 = vmatpush.bf16.msra.mxu0 %v7812
        %7835 = vmatpush.bf16.msra.mxu0 %v7780
        %7836 = vmatpush.bf16.msra.mxu0 %v7778
        %7837 = vmatpush.bf16.msra.mxu0 %v7776
        %7838 = vmatpush.bf16.msra.mxu0 %v7774
        %7839 = vmatmul.bf16.gmra.mxu0 %v7809
        %v7840 = vpop.f32.mrf.mxu0
        %v7841 = vadd.f32 %v7827, %v7840
        %v7842 = vpop.f32.mrf.mxu0
        %v7843 = vadd.f32 %v7829, %v7842
        %7844 = vdwg.mxu0
        %7845 = vmatpush.bf16.msra.mxu0 %v7773
        %7846 = vmatpush.bf16.msra.mxu0 %v7771
        %7847 = vmatpush.bf16.msra.mxu0 %v7769
        %7848 = vmatpush.bf16.msra.mxu0 %v7767
        %7849 = vmatpush.bf16.msra.mxu0 %v7765
        %7850 = vmatpush.bf16.msra.mxu0 %v7763
        %7851 = vmatpush.bf16.msra.mxu0 %v7761
        %7852 = vmatpush.bf16.msra.mxu0 %v7759
        %7853 = vmatmul.bf16.gmra.mxu0 %v7675
        %v7854 = vpop.f32.mrf.mxu0
        %v7855 = vadd.f32 0.0, %v7854
        %v7856 = vpop.f32.mrf.mxu0
        %v7857 = vadd.f32 0.0, %v7856
        %7858 = vdwg.mxu0
        %7859 = vmatpush.bf16.msra.mxu0 0
        %7860 = vmatpush.bf16.msra.mxu0 0
        %7861 = vmatpush.bf16.msra.mxu0 0
        %7862 = vmatpush.bf16.msra.mxu0 %v7815
        %7863 = vmatpush.bf16.msra.mxu0 %v7781
        %7864 = vmatpush.bf16.msra.mxu0 %v7779
        %7865 = vmatpush.bf16.msra.mxu0 %v7777
        %7866 = vmatpush.bf16.msra.mxu0 %v7775
        %7867 = vmatmul.bf16.gmra.mxu0 %v7809
        %v7868 = vpop.f32.mrf.mxu0
        %v7869 = vadd.f32 %v7855, %v7868
        %v7870 = vpop.f32.mrf.mxu0
        %v7871 = vadd.f32 %v7857, %v7870
        %7872 = vdwg.mxu0
        %v7873 = vadd.f32 %v7642, %v7841
        %v7874 = vadd.f32 %v7643, %v7869
        %v7875 = vadd.f32 %v7644, %v7843
        %v7876 = vadd.f32 %v7645, %v7871
        %s7877 = scalar_lea.vmem [#allocation10], 3744
        %v7878 = vld [vmem:[%s7877] sm:$0xff]
        %v7879 = vld [vmem:[%s7877 + $0x8] sm:$0xff]
        %v7880 = vld [vmem:[%s7877 + $0x10] sm:$0xff]
        %v7881 = vld [vmem:[%s7877 + $0x18] sm:$0xff]
        %v7882 = vld [vmem:[%s7877 + $0x20] sm:$0xff]
        %v7883 = vld [vmem:[%s7877 + $0x28] sm:$0xff]
        %v7884 = vld [vmem:[%s7877 + $0x30] sm:$0xff]
        %v7885 = vld [vmem:[%s7877 + $0x38] sm:$0xff]
        %v7886 = vld [vmem:[%s7877 + $0x40] sm:$0xff]
        %v7887 = vld [vmem:[%s7877 + $0x48] sm:$0xff]
        %v7888 = vld [vmem:[%s7877 + $0x50] sm:$0xff]
        %v7889 = vld [vmem:[%s7877 + $0x58] sm:$0xff]
        %v7890 = vld [vmem:[%s7877 + $0x60] sm:$0xff]
        %v7891 = vld [vmem:[%s7877 + $0x68] sm:$0xff]
        %v7892 = vld [vmem:[%s7877 + $0x70] sm:$0xff]
        %v7893 = vld [vmem:[%s7877 + $0x78] sm:$0xff]
        %v7894 = vld [vmem:[%s7877 + $0x80] sm:$0xff]
        %v7895 = vld [vmem:[%s7877 + $0x88] sm:$0xff]
        %v7896 = vld [vmem:[%s7877 + $0x90] sm:$0xff]
        %v7897 = vld [vmem:[%s7877 + $0x98] sm:$0xff]
        %v7898 = vld [vmem:[%s7877 + $0xa0] sm:$0xff]
        %v7899 = vld [vmem:[%s7877 + $0xa8] sm:$0xff]
        %v7900 = vld [vmem:[%s7877 + $0xb0] sm:$0xff]
        %v7901 = vld [vmem:[%s7877 + $0xb8] sm:$0xff]
        %v7902 = vld [vmem:[%s7877 + $0xc0] sm:$0xff]
        %v7903 = vld [vmem:[%s7877 + $0xc8] sm:$0x11]
        %v7904 = vrot.slane %v7415, 3
        %v7905 = vrot.slane %v7418, 4
        %v7906 = vor.u32 %v7904, %v7905
        %v7907 = vrot.slane %v7423, 3
        %v7908 = vrot.slane %v7426, 4
        %v7909 = vor.u32 %v7907, %v7908
        %v7910 = vsel %vm1390, %v7906, %v7909
        %v7911 = vrot.slane %v7432, 3
        %v7912 = vrot.slane %v7435, 4
        %v7913 = vor.u32 %v7911, %v7912
        %v7914 = vrot.slane %v7440, 3
        %v7915 = vrot.slane %v7443, 4
        %v7916 = vor.u32 %v7914, %v7915
        %v7917 = vsel %vm1390, %v7913, %v7916
        %v7945 = vunpack.c.l.b16 %v7878
        %v7946 = vunpack.c.h.b16 %v7878
        %v7947 = vunpack.c.l.b16 %v7879
        %v7948 = vunpack.c.h.b16 %v7879
        %v7949 = vunpack.c.l.b16 %v7880
        %v7950 = vunpack.c.h.b16 %v7880
        %v7951 = vunpack.c.l.b16 %v7881
        %v7952 = vunpack.c.h.b16 %v7881
        %v7953 = vunpack.c.l.b16 %v7882
        %v7954 = vunpack.c.h.b16 %v7882
        %v7955 = vunpack.c.l.b16 %v7883
        %v7956 = vunpack.c.h.b16 %v7883
        %v7957 = vunpack.c.l.b16 %v7884
        %v7958 = vunpack.c.h.b16 %v7884
        %v7959 = vunpack.c.l.b16 %v7885
        %v7960 = vunpack.c.h.b16 %v7885
        %v7961 = vunpack.c.l.b16 %v7886
        %v7962 = vunpack.c.h.b16 %v7886
        %v7963 = vunpack.c.l.b16 %v7887
        %v7964 = vunpack.c.h.b16 %v7887
        %v7965 = vunpack.c.l.b16 %v7888
        %v7966 = vunpack.c.h.b16 %v7888
        %v7967 = vunpack.c.l.b16 %v7889
        %v7968 = vunpack.c.h.b16 %v7889
        %v7969 = vunpack.c.l.b16 %v7890
        %v7970 = vunpack.c.h.b16 %v7890
        %v7971 = vunpack.c.l.b16 %v7891
        %v7972 = vunpack.c.h.b16 %v7891
        %v7973 = vunpack.c.l.b16 %v7892
        %v7974 = vunpack.c.h.b16 %v7892
        %v7975 = vunpack.c.l.b16 %v7893
        %v7976 = vunpack.c.h.b16 %v7893
        %v7977 = vunpack.c.l.b16 %v7894
        %v7978 = vunpack.c.h.b16 %v7894
        %v7979 = vunpack.c.l.b16 %v7895
        %v7980 = vunpack.c.h.b16 %v7895
        %v7981 = vunpack.c.l.b16 %v7896
        %v7982 = vunpack.c.h.b16 %v7896
        %v7983 = vunpack.c.l.b16 %v7897
        %v7984 = vunpack.c.h.b16 %v7897
        %v7985 = vunpack.c.l.b16 %v7898
        %v7986 = vunpack.c.h.b16 %v7898
        %v7987 = vunpack.c.l.b16 %v7899
        %v7988 = vunpack.c.h.b16 %v7899
        %v7989 = vunpack.c.l.b16 %v7900
        %v7990 = vunpack.c.h.b16 %v7900
        %v7991 = vunpack.c.l.b16 %v7901
        %v7992 = vunpack.c.h.b16 %v7901
        %v7993 = vunpack.c.l.b16 %v7902
        %v7994 = vunpack.c.h.b16 %v7902
        %v7995 = vunpack.c.l.b16 %v7903
        %v7996 = vunpack.c.h.b16 %v7903
        %v7997 = vpack.c.b16 %v7947, %v7945
        %v7998 = vpack.c.b16 %v7948, %v7946
        %v7999 = vpack.c.b16 %v7951, %v7949
        %v8000 = vpack.c.b16 %v7952, %v7950
        %v8001 = vpack.c.b16 %v7955, %v7953
        %v8002 = vpack.c.b16 %v7956, %v7954
        %v8003 = vpack.c.b16 %v7959, %v7957
        %v8004 = vpack.c.b16 %v7960, %v7958
        %v8005 = vpack.c.b16 %v7963, %v7961
        %v8006 = vpack.c.b16 %v7964, %v7962
        %v8007 = vpack.c.b16 %v7967, %v7965
        %v8008 = vpack.c.b16 %v7968, %v7966
        %v8009 = vpack.c.b16 %v7971, %v7969
        %v8010 = vpack.c.b16 %v7972, %v7970
        %v8011 = vpack.c.b16 %v7975, %v7973
        %v8012 = vpack.c.b16 %v7976, %v7974
        %v8013 = vpack.c.b16 %v7979, %v7977
        %v8014 = vpack.c.b16 %v7980, %v7978
        %v8015 = vpack.c.b16 %v7983, %v7981
        %v8016 = vpack.c.b16 %v7984, %v7982
        %v8017 = vpack.c.b16 %v7987, %v7985
        %v8018 = vpack.c.b16 %v7988, %v7986
        %v8019 = vpack.c.b16 %v7991, %v7989
        %v8020 = vpack.c.b16 %v7992, %v7990
        %v8021 = vpack.c.b16 %v7995, %v7993
        %v8022 = vpack.c.b16 %v7996, %v7994
        %v8048 = vsel %vm305, %v7917, 0
        %v8051 = vand.u32 %v8021, %v867
        %v8054 = vand.u32 %v8022, %v867
        %8056 = vmatpush.bf16.msra.mxu0 %v8011
        %8057 = vmatpush.bf16.msra.mxu0 %v8009
        %8058 = vmatpush.bf16.msra.mxu0 %v8007
        %8059 = vmatpush.bf16.msra.mxu0 %v8005
        %8060 = vmatpush.bf16.msra.mxu0 %v8003
        %8061 = vmatpush.bf16.msra.mxu0 %v8001
        %8062 = vmatpush.bf16.msra.mxu0 %v7999
        %8063 = vmatpush.bf16.msra.mxu0 %v7997
        %8064 = vmatmul.bf16.gmra.mxu0 %v7910
        %v8065 = vpop.f32.mrf.mxu0
        %v8066 = vadd.f32 0.0, %v8065
        %v8067 = vpop.f32.mrf.mxu0
        %v8068 = vadd.f32 0.0, %v8067
        %8069 = vdwg.mxu0
        %8070 = vmatpush.bf16.msra.mxu0 0
        %8071 = vmatpush.bf16.msra.mxu0 0
        %8072 = vmatpush.bf16.msra.mxu0 0
        %8073 = vmatpush.bf16.msra.mxu0 %v8051
        %8074 = vmatpush.bf16.msra.mxu0 %v8019
        %8075 = vmatpush.bf16.msra.mxu0 %v8017
        %8076 = vmatpush.bf16.msra.mxu0 %v8015
        %8077 = vmatpush.bf16.msra.mxu0 %v8013
        %8078 = vmatmul.bf16.gmra.mxu0 %v8048
        %v8079 = vpop.f32.mrf.mxu0
        %v8080 = vadd.f32 %v8066, %v8079
        %v8081 = vpop.f32.mrf.mxu0
        %v8082 = vadd.f32 %v8068, %v8081
        %8083 = vdwg.mxu0
        %8084 = vmatpush.bf16.msra.mxu0 %v8012
        %8085 = vmatpush.bf16.msra.mxu0 %v8010
        %8086 = vmatpush.bf16.msra.mxu0 %v8008
        %8087 = vmatpush.bf16.msra.mxu0 %v8006
        %8088 = vmatpush.bf16.msra.mxu0 %v8004
        %8089 = vmatpush.bf16.msra.mxu0 %v8002
        %8090 = vmatpush.bf16.msra.mxu0 %v8000
        %8091 = vmatpush.bf16.msra.mxu0 %v7998
        %8092 = vmatmul.bf16.gmra.mxu0 %v7910
        %v8093 = vpop.f32.mrf.mxu0
        %v8094 = vadd.f32 0.0, %v8093
        %v8095 = vpop.f32.mrf.mxu0
        %v8096 = vadd.f32 0.0, %v8095
        %8097 = vdwg.mxu0
        %8098 = vmatpush.bf16.msra.mxu0 0
        %8099 = vmatpush.bf16.msra.mxu0 0
        %8100 = vmatpush.bf16.msra.mxu0 0
        %8101 = vmatpush.bf16.msra.mxu0 %v8054
        %8102 = vmatpush.bf16.msra.mxu0 %v8020
        %8103 = vmatpush.bf16.msra.mxu0 %v8018
        %8104 = vmatpush.bf16.msra.mxu0 %v8016
        %8105 = vmatpush.bf16.msra.mxu0 %v8014
        %8106 = vmatmul.bf16.gmra.mxu0 %v8048
        %v8107 = vpop.f32.mrf.mxu0
        %v8108 = vadd.f32 %v8094, %v8107
        %v8109 = vpop.f32.mrf.mxu0
        %v8110 = vadd.f32 %v8096, %v8109
        %8111 = vdwg.mxu0
        %v8112 = vadd.f32 %v7873, %v8080
        %v8113 = vadd.f32 %v7874, %v8108
        %v8114 = vadd.f32 %v7875, %v8082
        %v8115 = vadd.f32 %v7876, %v8110
        %s8116 = scalar_lea.vmem [#allocation10], 4784
        %v8117 = vld [vmem:[%s8116] sm:$0xff]
        %v8118 = vld [vmem:[%s8116 + $0x8] sm:$0xff]
        %v8119 = vld [vmem:[%s8116 + $0x10] sm:$0xff]
        %v8120 = vld [vmem:[%s8116 + $0x18] sm:$0xff]
        %v8121 = vld [vmem:[%s8116 + $0x20] sm:$0xff]
        %v8122 = vld [vmem:[%s8116 + $0x28] sm:$0xff]
        %v8123 = vld [vmem:[%s8116 + $0x30] sm:$0xff]
        %v8124 = vld [vmem:[%s8116 + $0x38] sm:$0xff]
        %v8125 = vld [vmem:[%s8116 + $0x40] sm:$0xff]
        %v8126 = vld [vmem:[%s8116 + $0x48] sm:$0xff]
        %v8127 = vld [vmem:[%s8116 + $0x50] sm:$0xff]
        %v8128 = vld [vmem:[%s8116 + $0x58] sm:$0xff]
        %v8129 = vld [vmem:[%s8116 + $0x60] sm:$0xff]
        %v8130 = vld [vmem:[%s8116 + $0x68] sm:$0xff]
        %v8131 = vld [vmem:[%s8116 + $0x70] sm:$0xff]
        %v8132 = vld [vmem:[%s8116 + $0x78] sm:$0xff]
        %v8133 = vld [vmem:[%s8116 + $0x80] sm:$0xff]
        %v8134 = vld [vmem:[%s8116 + $0x88] sm:$0xff]
        %v8135 = vld [vmem:[%s8116 + $0x90] sm:$0xff]
        %v8136 = vld [vmem:[%s8116 + $0x98] sm:$0xff]
        %v8137 = vld [vmem:[%s8116 + $0xa0] sm:$0xff]
        %v8138 = vld [vmem:[%s8116 + $0xa8] sm:$0xff]
        %v8139 = vld [vmem:[%s8116 + $0xb0] sm:$0xff]
        %v8140 = vld [vmem:[%s8116 + $0xb8] sm:$0xff]
        %v8141 = vld [vmem:[%s8116 + $0xc0] sm:$0xff]
        %v8142 = vld [vmem:[%s8116 + $0xc8] sm:$0x11]
        %v8143 = vpack.c.b16 %v7177, %v7175
        %v8144 = vpack.c.b16 %v7178, %v7176
        %v8172 = vunpack.c.l.b16 %v8117
        %v8173 = vunpack.c.h.b16 %v8117
        %v8174 = vunpack.c.l.b16 %v8118
        %v8175 = vunpack.c.h.b16 %v8118
        %v8176 = vunpack.c.l.b16 %v8119
        %v8177 = vunpack.c.h.b16 %v8119
        %v8178 = vunpack.c.l.b16 %v8120
        %v8179 = vunpack.c.h.b16 %v8120
        %v8180 = vunpack.c.l.b16 %v8121
        %v8181 = vunpack.c.h.b16 %v8121
        %v8182 = vunpack.c.l.b16 %v8122
        %v8183 = vunpack.c.h.b16 %v8122
        %v8184 = vunpack.c.l.b16 %v8123
        %v8185 = vunpack.c.h.b16 %v8123
        %v8186 = vunpack.c.l.b16 %v8124
        %v8187 = vunpack.c.h.b16 %v8124
        %v8188 = vunpack.c.l.b16 %v8125
        %v8189 = vunpack.c.h.b16 %v8125
        %v8190 = vunpack.c.l.b16 %v8126
        %v8191 = vunpack.c.h.b16 %v8126
        %v8192 = vunpack.c.l.b16 %v8127
        %v8193 = vunpack.c.h.b16 %v8127
        %v8194 = vunpack.c.l.b16 %v8128
        %v8195 = vunpack.c.h.b16 %v8128
        %v8196 = vunpack.c.l.b16 %v8129
        %v8197 = vunpack.c.h.b16 %v8129
        %v8198 = vunpack.c.l.b16 %v8130
        %v8199 = vunpack.c.h.b16 %v8130
        %v8200 = vunpack.c.l.b16 %v8131
        %v8201 = vunpack.c.h.b16 %v8131
        %v8202 = vunpack.c.l.b16 %v8132
        %v8203 = vunpack.c.h.b16 %v8132
        %v8204 = vunpack.c.l.b16 %v8133
        %v8205 = vunpack.c.h.b16 %v8133
        %v8206 = vunpack.c.l.b16 %v8134
        %v8207 = vunpack.c.h.b16 %v8134
        %v8208 = vunpack.c.l.b16 %v8135
        %v8209 = vunpack.c.h.b16 %v8135
        %v8210 = vunpack.c.l.b16 %v8136
        %v8211 = vunpack.c.h.b16 %v8136
        %v8212 = vunpack.c.l.b16 %v8137
        %v8213 = vunpack.c.h.b16 %v8137
        %v8214 = vunpack.c.l.b16 %v8138
        %v8215 = vunpack.c.h.b16 %v8138
        %v8216 = vunpack.c.l.b16 %v8139
        %v8217 = vunpack.c.h.b16 %v8139
        %v8218 = vunpack.c.l.b16 %v8140
        %v8219 = vunpack.c.h.b16 %v8140
        %v8220 = vunpack.c.l.b16 %v8141
        %v8221 = vunpack.c.h.b16 %v8141
        %v8222 = vunpack.c.l.b16 %v8142
        %v8223 = vunpack.c.h.b16 %v8142
        %v8224 = vpack.c.b16 %v8174, %v8172
        %v8225 = vpack.c.b16 %v8175, %v8173
        %v8226 = vpack.c.b16 %v8178, %v8176
        %v8227 = vpack.c.b16 %v8179, %v8177
        %v8228 = vpack.c.b16 %v8182, %v8180
        %v8229 = vpack.c.b16 %v8183, %v8181
        %v8230 = vpack.c.b16 %v8186, %v8184
        %v8231 = vpack.c.b16 %v8187, %v8185
        %v8232 = vpack.c.b16 %v8190, %v8188
        %v8233 = vpack.c.b16 %v8191, %v8189
        %v8234 = vpack.c.b16 %v8194, %v8192
        %v8235 = vpack.c.b16 %v8195, %v8193
        %v8236 = vpack.c.b16 %v8198, %v8196
        %v8237 = vpack.c.b16 %v8199, %v8197
        %v8238 = vpack.c.b16 %v8202, %v8200
        %v8239 = vpack.c.b16 %v8203, %v8201
        %v8240 = vpack.c.b16 %v8206, %v8204
        %v8241 = vpack.c.b16 %v8207, %v8205
        %v8242 = vpack.c.b16 %v8210, %v8208
        %v8243 = vpack.c.b16 %v8211, %v8209
        %v8244 = vpack.c.b16 %v8214, %v8212
        %v8245 = vpack.c.b16 %v8215, %v8213
        %v8246 = vpack.c.b16 %v8218, %v8216
        %v8247 = vpack.c.b16 %v8219, %v8217
        %v8248 = vpack.c.b16 %v8222, %v8220
        %v8249 = vpack.c.b16 %v8223, %v8221
        %v8275 = vsel %vm305, %v8144, 0
        %v8278 = vand.u32 %v8248, %v867
        %v8281 = vand.u32 %v8249, %v867
        %8283 = vmatpush.bf16.msra.mxu0 %v8238
        %8284 = vmatpush.bf16.msra.mxu0 %v8236
        %8285 = vmatpush.bf16.msra.mxu0 %v8234
        %8286 = vmatpush.bf16.msra.mxu0 %v8232
        %8287 = vmatpush.bf16.msra.mxu0 %v8230
        %8288 = vmatpush.bf16.msra.mxu0 %v8228
        %8289 = vmatpush.bf16.msra.mxu0 %v8226
        %8290 = vmatpush.bf16.msra.mxu0 %v8224
        %8291 = vmatmul.bf16.gmra.mxu0 %v8143
        %v8292 = vpop.f32.mrf.mxu0
        %v8293 = vadd.f32 0.0, %v8292
        %v8294 = vpop.f32.mrf.mxu0
        %v8295 = vadd.f32 0.0, %v8294
        %8296 = vdwg.mxu0
        %8297 = vmatpush.bf16.msra.mxu0 0
        %8298 = vmatpush.bf16.msra.mxu0 0
        %8299 = vmatpush.bf16.msra.mxu0 0
        %8300 = vmatpush.bf16.msra.mxu0 %v8278
        %8301 = vmatpush.bf16.msra.mxu0 %v8246
        %8302 = vmatpush.bf16.msra.mxu0 %v8244
        %8303 = vmatpush.bf16.msra.mxu0 %v8242
        %8304 = vmatpush.bf16.msra.mxu0 %v8240
        %8305 = vmatmul.bf16.gmra.mxu0 %v8275
        %v8306 = vpop.f32.mrf.mxu0
        %v8307 = vadd.f32 %v8293, %v8306
        %v8308 = vpop.f32.mrf.mxu0
        %v8309 = vadd.f32 %v8295, %v8308
        %8310 = vdwg.mxu0
        %8311 = vmatpush.bf16.msra.mxu0 %v8239
        %8312 = vmatpush.bf16.msra.mxu0 %v8237
        %8313 = vmatpush.bf16.msra.mxu0 %v8235
        %8314 = vmatpush.bf16.msra.mxu0 %v8233
        %8315 = vmatpush.bf16.msra.mxu0 %v8231
        %8316 = vmatpush.bf16.msra.mxu0 %v8229
        %8317 = vmatpush.bf16.msra.mxu0 %v8227
        %8318 = vmatpush.bf16.msra.mxu0 %v8225
        %8319 = vmatmul.bf16.gmra.mxu0 %v8143
        %v8320 = vpop.f32.mrf.mxu0
        %v8321 = vadd.f32 0.0, %v8320
        %v8322 = vpop.f32.mrf.mxu0
        %v8323 = vadd.f32 0.0, %v8322
        %8324 = vdwg.mxu0
        %8325 = vmatpush.bf16.msra.mxu0 0
        %8326 = vmatpush.bf16.msra.mxu0 0
        %8327 = vmatpush.bf16.msra.mxu0 0
        %8328 = vmatpush.bf16.msra.mxu0 %v8281
        %8329 = vmatpush.bf16.msra.mxu0 %v8247
        %8330 = vmatpush.bf16.msra.mxu0 %v8245
        %8331 = vmatpush.bf16.msra.mxu0 %v8243
        %8332 = vmatpush.bf16.msra.mxu0 %v8241
        %8333 = vmatmul.bf16.gmra.mxu0 %v8275
        %v8334 = vpop.f32.mrf.mxu0
        %v8335 = vadd.f32 %v8321, %v8334
        %v8336 = vpop.f32.mrf.mxu0
        %v8337 = vadd.f32 %v8323, %v8336
        %8338 = vdwg.mxu0
        %v8339 = vadd.f32 %v8112, %v8307
        %v8340 = vadd.f32 %v8113, %v8335
        %v8341 = vadd.f32 %v8114, %v8309
        %v8342 = vadd.f32 %v8115, %v8337
        %s8343 = scalar_lea.vmem [#allocation10], 5824
        %v8344 = vld [vmem:[%s8343] sm:$0xff]
        %v8345 = vld [vmem:[%s8343 + $0x8] sm:$0xff]
        %v8346 = vld [vmem:[%s8343 + $0x10] sm:$0xff]
        %v8347 = vld [vmem:[%s8343 + $0x18] sm:$0xff]
        %v8348 = vld [vmem:[%s8343 + $0x20] sm:$0xff]
        %v8349 = vld [vmem:[%s8343 + $0x28] sm:$0xff]
        %v8350 = vld [vmem:[%s8343 + $0x30] sm:$0xff]
        %v8351 = vld [vmem:[%s8343 + $0x38] sm:$0xff]
        %v8352 = vld [vmem:[%s8343 + $0x40] sm:$0xff]
        %v8353 = vld [vmem:[%s8343 + $0x48] sm:$0xff]
        %v8354 = vld [vmem:[%s8343 + $0x50] sm:$0xff]
        %v8355 = vld [vmem:[%s8343 + $0x58] sm:$0xff]
        %v8356 = vld [vmem:[%s8343 + $0x60] sm:$0xff]
        %v8357 = vld [vmem:[%s8343 + $0x68] sm:$0xff]
        %v8358 = vld [vmem:[%s8343 + $0x70] sm:$0xff]
        %v8359 = vld [vmem:[%s8343 + $0x78] sm:$0xff]
        %v8360 = vld [vmem:[%s8343 + $0x80] sm:$0xff]
        %v8361 = vld [vmem:[%s8343 + $0x88] sm:$0xff]
        %v8362 = vld [vmem:[%s8343 + $0x90] sm:$0xff]
        %v8363 = vld [vmem:[%s8343 + $0x98] sm:$0xff]
        %v8364 = vld [vmem:[%s8343 + $0xa0] sm:$0xff]
        %v8365 = vld [vmem:[%s8343 + $0xa8] sm:$0xff]
        %v8366 = vld [vmem:[%s8343 + $0xb0] sm:$0xff]
        %v8367 = vld [vmem:[%s8343 + $0xb8] sm:$0xff]
        %v8368 = vld [vmem:[%s8343 + $0xc0] sm:$0xff]
        %v8369 = vld [vmem:[%s8343 + $0xc8] sm:$0x11]
        %v8371 = vunpack.c.l.b16 %v7142
        %v8372 = vunpack.c.h.b16 %v7142
        %v8373 = vpack.c.b16 %v8371, %v8371
        %v8374 = vpack.c.b16 %v8372, %v8372
        %v8376 = vshrl.u32 %v8143, 16
        %v8378 = vshll.u32 %v8143, 16
        %v8380 = vrot.slane %v8378, 1
        %v8381 = vor.u32 %v8376, %v8380
        %v8383 = vshll.u32 %v8373, 16
        %v8385 = vrot.slane %v8383, 1
        %v8386 = vsel %vm1862, %v8381, %v8385
        %v8387 = vshrl.u32 %v8144, 16
        %v8389 = vshll.u32 %v8144, 16
        %v8391 = vrot.slane %v8389, 1
        %v8392 = vor.u32 %v8387, %v8391
        %v8394 = vshll.u32 %v8374, 16
        %v8396 = vrot.slane %v8394, 1
        %v8397 = vsel %vm1862, %v8392, %v8396
        %v8425 = vunpack.c.l.b16 %v8344
        %v8426 = vunpack.c.h.b16 %v8344
        %v8427 = vunpack.c.l.b16 %v8345
        %v8428 = vunpack.c.h.b16 %v8345
        %v8429 = vunpack.c.l.b16 %v8346
        %v8430 = vunpack.c.h.b16 %v8346
        %v8431 = vunpack.c.l.b16 %v8347
        %v8432 = vunpack.c.h.b16 %v8347
        %v8433 = vunpack.c.l.b16 %v8348
        %v8434 = vunpack.c.h.b16 %v8348
        %v8435 = vunpack.c.l.b16 %v8349
        %v8436 = vunpack.c.h.b16 %v8349
        %v8437 = vunpack.c.l.b16 %v8350
        %v8438 = vunpack.c.h.b16 %v8350
        %v8439 = vunpack.c.l.b16 %v8351
        %v8440 = vunpack.c.h.b16 %v8351
        %v8441 = vunpack.c.l.b16 %v8352
        %v8442 = vunpack.c.h.b16 %v8352
        %v8443 = vunpack.c.l.b16 %v8353
        %v8444 = vunpack.c.h.b16 %v8353
        %v8445 = vunpack.c.l.b16 %v8354
        %v8446 = vunpack.c.h.b16 %v8354
        %v8447 = vunpack.c.l.b16 %v8355
        %v8448 = vunpack.c.h.b16 %v8355
        %v8449 = vunpack.c.l.b16 %v8356
        %v8450 = vunpack.c.h.b16 %v8356
        %v8451 = vunpack.c.l.b16 %v8357
        %v8452 = vunpack.c.h.b16 %v8357
        %v8453 = vunpack.c.l.b16 %v8358
        %v8454 = vunpack.c.h.b16 %v8358
        %v8455 = vunpack.c.l.b16 %v8359
        %v8456 = vunpack.c.h.b16 %v8359
        %v8457 = vunpack.c.l.b16 %v8360
        %v8458 = vunpack.c.h.b16 %v8360
        %v8459 = vunpack.c.l.b16 %v8361
        %v8460 = vunpack.c.h.b16 %v8361
        %v8461 = vunpack.c.l.b16 %v8362
        %v8462 = vunpack.c.h.b16 %v8362
        %v8463 = vunpack.c.l.b16 %v8363
        %v8464 = vunpack.c.h.b16 %v8363
        %v8465 = vunpack.c.l.b16 %v8364
        %v8466 = vunpack.c.h.b16 %v8364
        %v8467 = vunpack.c.l.b16 %v8365
        %v8468 = vunpack.c.h.b16 %v8365
        %v8469 = vunpack.c.l.b16 %v8366
        %v8470 = vunpack.c.h.b16 %v8366
        %v8471 = vunpack.c.l.b16 %v8367
        %v8472 = vunpack.c.h.b16 %v8367
        %v8473 = vunpack.c.l.b16 %v8368
        %v8474 = vunpack.c.h.b16 %v8368
        %v8475 = vunpack.c.l.b16 %v8369
        %v8476 = vunpack.c.h.b16 %v8369
        %v8477 = vpack.c.b16 %v8427, %v8425
        %v8478 = vpack.c.b16 %v8428, %v8426
        %v8479 = vpack.c.b16 %v8431, %v8429
        %v8480 = vpack.c.b16 %v8432, %v8430
        %v8481 = vpack.c.b16 %v8435, %v8433
        %v8482 = vpack.c.b16 %v8436, %v8434
        %v8483 = vpack.c.b16 %v8439, %v8437
        %v8484 = vpack.c.b16 %v8440, %v8438
        %v8485 = vpack.c.b16 %v8443, %v8441
        %v8486 = vpack.c.b16 %v8444, %v8442
        %v8487 = vpack.c.b16 %v8447, %v8445
        %v8488 = vpack.c.b16 %v8448, %v8446
        %v8489 = vpack.c.b16 %v8451, %v8449
        %v8490 = vpack.c.b16 %v8452, %v8450
        %v8491 = vpack.c.b16 %v8455, %v8453
        %v8492 = vpack.c.b16 %v8456, %v8454
        %v8493 = vpack.c.b16 %v8459, %v8457
        %v8494 = vpack.c.b16 %v8460, %v8458
        %v8495 = vpack.c.b16 %v8463, %v8461
        %v8496 = vpack.c.b16 %v8464, %v8462
        %v8497 = vpack.c.b16 %v8467, %v8465
        %v8498 = vpack.c.b16 %v8468, %v8466
        %v8499 = vpack.c.b16 %v8471, %v8469
        %v8500 = vpack.c.b16 %v8472, %v8470
        %v8501 = vpack.c.b16 %v8475, %v8473
        %v8502 = vpack.c.b16 %v8476, %v8474
        %v8528 = vsel %vm305, %v8397, 0
        %v8531 = vand.u32 %v8501, %v867
        %v8534 = vand.u32 %v8502, %v867
        %8536 = vmatpush.bf16.msra.mxu0 %v8491
        %8537 = vmatpush.bf16.msra.mxu0 %v8489
        %8538 = vmatpush.bf16.msra.mxu0 %v8487
        %8539 = vmatpush.bf16.msra.mxu0 %v8485
        %8540 = vmatpush.bf16.msra.mxu0 %v8483
        %8541 = vmatpush.bf16.msra.mxu0 %v8481
        %8542 = vmatpush.bf16.msra.mxu0 %v8479
        %8543 = vmatpush.bf16.msra.mxu0 %v8477
        %8544 = vmatmul.bf16.gmra.mxu0 %v8386
        %v8545 = vpop.f32.mrf.mxu0
        %v8546 = vadd.f32 0.0, %v8545
        %v8547 = vpop.f32.mrf.mxu0
        %v8548 = vadd.f32 0.0, %v8547
        %8549 = vdwg.mxu0
        %8550 = vmatpush.bf16.msra.mxu0 0
        %8551 = vmatpush.bf16.msra.mxu0 0
        %8552 = vmatpush.bf16.msra.mxu0 0
        %8553 = vmatpush.bf16.msra.mxu0 %v8531
        %8554 = vmatpush.bf16.msra.mxu0 %v8499
        %8555 = vmatpush.bf16.msra.mxu0 %v8497
        %8556 = vmatpush.bf16.msra.mxu0 %v8495
        %8557 = vmatpush.bf16.msra.mxu0 %v8493
        %8558 = vmatmul.bf16.gmra.mxu0 %v8528
        %v8559 = vpop.f32.mrf.mxu0
        %v8560 = vadd.f32 %v8546, %v8559
        %v8561 = vpop.f32.mrf.mxu0
        %v8562 = vadd.f32 %v8548, %v8561
        %8563 = vdwg.mxu0
        %8564 = vmatpush.bf16.msra.mxu0 %v8492
        %8565 = vmatpush.bf16.msra.mxu0 %v8490
        %8566 = vmatpush.bf16.msra.mxu0 %v8488
        %8567 = vmatpush.bf16.msra.mxu0 %v8486
        %8568 = vmatpush.bf16.msra.mxu0 %v8484
        %8569 = vmatpush.bf16.msra.mxu0 %v8482
        %8570 = vmatpush.bf16.msra.mxu0 %v8480
        %8571 = vmatpush.bf16.msra.mxu0 %v8478
        %8572 = vmatmul.bf16.gmra.mxu0 %v8386
        %v8573 = vpop.f32.mrf.mxu0
        %v8574 = vadd.f32 0.0, %v8573
        %v8575 = vpop.f32.mrf.mxu0
        %v8576 = vadd.f32 0.0, %v8575
        %8577 = vdwg.mxu0
        %8578 = vmatpush.bf16.msra.mxu0 0
        %8579 = vmatpush.bf16.msra.mxu0 0
        %8580 = vmatpush.bf16.msra.mxu0 0
        %8581 = vmatpush.bf16.msra.mxu0 %v8534
        %8582 = vmatpush.bf16.msra.mxu0 %v8500
        %8583 = vmatpush.bf16.msra.mxu0 %v8498
        %8584 = vmatpush.bf16.msra.mxu0 %v8496
        %8585 = vmatpush.bf16.msra.mxu0 %v8494
        %8586 = vmatmul.bf16.gmra.mxu0 %v8528
        %v8587 = vpop.f32.mrf.mxu0
        %v8588 = vadd.f32 %v8574, %v8587
        %v8589 = vpop.f32.mrf.mxu0
        %v8590 = vadd.f32 %v8576, %v8589
        %8591 = vdwg.mxu0
        %v8592 = vadd.f32 %v8339, %v8560
        %v8593 = vadd.f32 %v8340, %v8588
        %v8594 = vadd.f32 %v8341, %v8562
        %v8595 = vadd.f32 %v8342, %v8590
        %s8596 = scalar_lea.vmem [#allocation10], 6864
        %v8597 = vld [vmem:[%s8596] sm:$0xff]
        %v8598 = vld [vmem:[%s8596 + $0x8] sm:$0xff]
        %v8599 = vld [vmem:[%s8596 + $0x10] sm:$0xff]
        %v8600 = vld [vmem:[%s8596 + $0x18] sm:$0xff]
        %v8601 = vld [vmem:[%s8596 + $0x20] sm:$0xff]
        %v8602 = vld [vmem:[%s8596 + $0x28] sm:$0xff]
        %v8603 = vld [vmem:[%s8596 + $0x30] sm:$0xff]
        %v8604 = vld [vmem:[%s8596 + $0x38] sm:$0xff]
        %v8605 = vld [vmem:[%s8596 + $0x40] sm:$0xff]
        %v8606 = vld [vmem:[%s8596 + $0x48] sm:$0xff]
        %v8607 = vld [vmem:[%s8596 + $0x50] sm:$0xff]
        %v8608 = vld [vmem:[%s8596 + $0x58] sm:$0xff]
        %v8609 = vld [vmem:[%s8596 + $0x60] sm:$0xff]
        %v8610 = vld [vmem:[%s8596 + $0x68] sm:$0xff]
        %v8611 = vld [vmem:[%s8596 + $0x70] sm:$0xff]
        %v8612 = vld [vmem:[%s8596 + $0x78] sm:$0xff]
        %v8613 = vld [vmem:[%s8596 + $0x80] sm:$0xff]
        %v8614 = vld [vmem:[%s8596 + $0x88] sm:$0xff]
        %v8615 = vld [vmem:[%s8596 + $0x90] sm:$0xff]
        %v8616 = vld [vmem:[%s8596 + $0x98] sm:$0xff]
        %v8617 = vld [vmem:[%s8596 + $0xa0] sm:$0xff]
        %v8618 = vld [vmem:[%s8596 + $0xa8] sm:$0xff]
        %v8619 = vld [vmem:[%s8596 + $0xb0] sm:$0xff]
        %v8620 = vld [vmem:[%s8596 + $0xb8] sm:$0xff]
        %v8621 = vld [vmem:[%s8596 + $0xc0] sm:$0xff]
        %v8622 = vld [vmem:[%s8596 + $0xc8] sm:$0x11]
        %v8623 = vrot.slane %v8143, 1
        %v8624 = vrot.slane %v8373, 1
        %v8625 = vsel %vm2111, %v8623, %v8624
        %v8626 = vrot.slane %v8144, 1
        %v8627 = vrot.slane %v8374, 1
        %v8628 = vsel %vm2111, %v8626, %v8627
        %v8656 = vunpack.c.l.b16 %v8597
        %v8657 = vunpack.c.h.b16 %v8597
        %v8658 = vunpack.c.l.b16 %v8598
        %v8659 = vunpack.c.h.b16 %v8598
        %v8660 = vunpack.c.l.b16 %v8599
        %v8661 = vunpack.c.h.b16 %v8599
        %v8662 = vunpack.c.l.b16 %v8600
        %v8663 = vunpack.c.h.b16 %v8600
        %v8664 = vunpack.c.l.b16 %v8601
        %v8665 = vunpack.c.h.b16 %v8601
        %v8666 = vunpack.c.l.b16 %v8602
        %v8667 = vunpack.c.h.b16 %v8602
        %v8668 = vunpack.c.l.b16 %v8603
        %v8669 = vunpack.c.h.b16 %v8603
        %v8670 = vunpack.c.l.b16 %v8604
        %v8671 = vunpack.c.h.b16 %v8604
        %v8672 = vunpack.c.l.b16 %v8605
        %v8673 = vunpack.c.h.b16 %v8605
        %v8674 = vunpack.c.l.b16 %v8606
        %v8675 = vunpack.c.h.b16 %v8606
        %v8676 = vunpack.c.l.b16 %v8607
        %v8677 = vunpack.c.h.b16 %v8607
        %v8678 = vunpack.c.l.b16 %v8608
        %v8679 = vunpack.c.h.b16 %v8608
        %v8680 = vunpack.c.l.b16 %v8609
        %v8681 = vunpack.c.h.b16 %v8609
        %v8682 = vunpack.c.l.b16 %v8610
        %v8683 = vunpack.c.h.b16 %v8610
        %v8684 = vunpack.c.l.b16 %v8611
        %v8685 = vunpack.c.h.b16 %v8611
        %v8686 = vunpack.c.l.b16 %v8612
        %v8687 = vunpack.c.h.b16 %v8612
        %v8688 = vunpack.c.l.b16 %v8613
        %v8689 = vunpack.c.h.b16 %v8613
        %v8690 = vunpack.c.l.b16 %v8614
        %v8691 = vunpack.c.h.b16 %v8614
        %v8692 = vunpack.c.l.b16 %v8615
        %v8693 = vunpack.c.h.b16 %v8615
        %v8694 = vunpack.c.l.b16 %v8616
        %v8695 = vunpack.c.h.b16 %v8616
        %v8696 = vunpack.c.l.b16 %v8617
        %v8697 = vunpack.c.h.b16 %v8617
        %v8698 = vunpack.c.l.b16 %v8618
        %v8699 = vunpack.c.h.b16 %v8618
        %v8700 = vunpack.c.l.b16 %v8619
        %v8701 = vunpack.c.h.b16 %v8619
        %v8702 = vunpack.c.l.b16 %v8620
        %v8703 = vunpack.c.h.b16 %v8620
        %v8704 = vunpack.c.l.b16 %v8621
        %v8705 = vunpack.c.h.b16 %v8621
        %v8706 = vunpack.c.l.b16 %v8622
        %v8707 = vunpack.c.h.b16 %v8622
        %v8708 = vpack.c.b16 %v8658, %v8656
        %v8709 = vpack.c.b16 %v8659, %v8657
        %v8710 = vpack.c.b16 %v8662, %v8660
        %v8711 = vpack.c.b16 %v8663, %v8661
        %v8712 = vpack.c.b16 %v8666, %v8664
        %v8713 = vpack.c.b16 %v8667, %v8665
        %v8714 = vpack.c.b16 %v8670, %v8668
        %v8715 = vpack.c.b16 %v8671, %v8669
        %v8716 = vpack.c.b16 %v8674, %v8672
        %v8717 = vpack.c.b16 %v8675, %v8673
        %v8718 = vpack.c.b16 %v8678, %v8676
        %v8719 = vpack.c.b16 %v8679, %v8677
        %v8720 = vpack.c.b16 %v8682, %v8680
        %v8721 = vpack.c.b16 %v8683, %v8681
        %v8722 = vpack.c.b16 %v8686, %v8684
        %v8723 = vpack.c.b16 %v8687, %v8685
        %v8724 = vpack.c.b16 %v8690, %v8688
        %v8725 = vpack.c.b16 %v8691, %v8689
        %v8726 = vpack.c.b16 %v8694, %v8692
        %v8727 = vpack.c.b16 %v8695, %v8693
        %v8728 = vpack.c.b16 %v8698, %v8696
        %v8729 = vpack.c.b16 %v8699, %v8697
        %v8730 = vpack.c.b16 %v8702, %v8700
        %v8731 = vpack.c.b16 %v8703, %v8701
        %v8732 = vpack.c.b16 %v8706, %v8704
        %v8733 = vpack.c.b16 %v8707, %v8705
        %v8759 = vsel %vm305, %v8628, 0
        %v8762 = vand.u32 %v8732, %v867
        %v8765 = vand.u32 %v8733, %v867
        %8767 = vmatpush.bf16.msra.mxu0 %v8722
        %8768 = vmatpush.bf16.msra.mxu0 %v8720
        %8769 = vmatpush.bf16.msra.mxu0 %v8718
        %8770 = vmatpush.bf16.msra.mxu0 %v8716
        %8771 = vmatpush.bf16.msra.mxu0 %v8714
        %8772 = vmatpush.bf16.msra.mxu0 %v8712
        %8773 = vmatpush.bf16.msra.mxu0 %v8710
        %8774 = vmatpush.bf16.msra.mxu0 %v8708
        %8775 = vmatmul.bf16.gmra.mxu0 %v8625
        %v8776 = vpop.f32.mrf.mxu0
        %v8777 = vadd.f32 0.0, %v8776
        %v8778 = vpop.f32.mrf.mxu0
        %v8779 = vadd.f32 0.0, %v8778
        %8780 = vdwg.mxu0
        %8781 = vmatpush.bf16.msra.mxu0 0
        %8782 = vmatpush.bf16.msra.mxu0 0
        %8783 = vmatpush.bf16.msra.mxu0 0
        %8784 = vmatpush.bf16.msra.mxu0 %v8762
        %8785 = vmatpush.bf16.msra.mxu0 %v8730
        %8786 = vmatpush.bf16.msra.mxu0 %v8728
        %8787 = vmatpush.bf16.msra.mxu0 %v8726
        %8788 = vmatpush.bf16.msra.mxu0 %v8724
        %8789 = vmatmul.bf16.gmra.mxu0 %v8759
        %v8790 = vpop.f32.mrf.mxu0
        %v8791 = vadd.f32 %v8777, %v8790
        %v8792 = vpop.f32.mrf.mxu0
        %v8793 = vadd.f32 %v8779, %v8792
        %8794 = vdwg.mxu0
        %8795 = vmatpush.bf16.msra.mxu0 %v8723
        %8796 = vmatpush.bf16.msra.mxu0 %v8721
        %8797 = vmatpush.bf16.msra.mxu0 %v8719
        %8798 = vmatpush.bf16.msra.mxu0 %v8717
        %8799 = vmatpush.bf16.msra.mxu0 %v8715
        %8800 = vmatpush.bf16.msra.mxu0 %v8713
        %8801 = vmatpush.bf16.msra.mxu0 %v8711
        %8802 = vmatpush.bf16.msra.mxu0 %v8709
        %8803 = vmatmul.bf16.gmra.mxu0 %v8625
        %v8804 = vpop.f32.mrf.mxu0
        %v8805 = vadd.f32 0.0, %v8804
        %v8806 = vpop.f32.mrf.mxu0
        %v8807 = vadd.f32 0.0, %v8806
        %8808 = vdwg.mxu0
        %8809 = vmatpush.bf16.msra.mxu0 0
        %8810 = vmatpush.bf16.msra.mxu0 0
        %8811 = vmatpush.bf16.msra.mxu0 0
        %8812 = vmatpush.bf16.msra.mxu0 %v8765
        %8813 = vmatpush.bf16.msra.mxu0 %v8731
        %8814 = vmatpush.bf16.msra.mxu0 %v8729
        %8815 = vmatpush.bf16.msra.mxu0 %v8727
        %8816 = vmatpush.bf16.msra.mxu0 %v8725
        %8817 = vmatmul.bf16.gmra.mxu0 %v8759
        %v8818 = vpop.f32.mrf.mxu0
        %v8819 = vadd.f32 %v8805, %v8818
        %v8820 = vpop.f32.mrf.mxu0
        %v8821 = vadd.f32 %v8807, %v8820
        %8822 = vdwg.mxu0
        %v8823 = vadd.f32 %v8592, %v8791
        %v8824 = vadd.f32 %v8593, %v8819
        %v8825 = vadd.f32 %v8594, %v8793
        %v8826 = vadd.f32 %v8595, %v8821
        %s8827 = scalar_lea.vmem [#allocation10], 7904
        %v8828 = vld [vmem:[%s8827] sm:$0xff]
        %v8829 = vld [vmem:[%s8827 + $0x8] sm:$0xff]
        %v8830 = vld [vmem:[%s8827 + $0x10] sm:$0xff]
        %v8831 = vld [vmem:[%s8827 + $0x18] sm:$0xff]
        %v8832 = vld [vmem:[%s8827 + $0x20] sm:$0xff]
        %v8833 = vld [vmem:[%s8827 + $0x28] sm:$0xff]
        %v8834 = vld [vmem:[%s8827 + $0x30] sm:$0xff]
        %v8835 = vld [vmem:[%s8827 + $0x38] sm:$0xff]
        %v8836 = vld [vmem:[%s8827 + $0x40] sm:$0xff]
        %v8837 = vld [vmem:[%s8827 + $0x48] sm:$0xff]
        %v8838 = vld [vmem:[%s8827 + $0x50] sm:$0xff]
        %v8839 = vld [vmem:[%s8827 + $0x58] sm:$0xff]
        %v8840 = vld [vmem:[%s8827 + $0x60] sm:$0xff]
        %v8841 = vld [vmem:[%s8827 + $0x68] sm:$0xff]
        %v8842 = vld [vmem:[%s8827 + $0x70] sm:$0xff]
        %v8843 = vld [vmem:[%s8827 + $0x78] sm:$0xff]
        %v8844 = vld [vmem:[%s8827 + $0x80] sm:$0xff]
        %v8845 = vld [vmem:[%s8827 + $0x88] sm:$0xff]
        %v8846 = vld [vmem:[%s8827 + $0x90] sm:$0xff]
        %v8847 = vld [vmem:[%s8827 + $0x98] sm:$0xff]
        %v8848 = vld [vmem:[%s8827 + $0xa0] sm:$0xff]
        %v8849 = vld [vmem:[%s8827 + $0xa8] sm:$0xff]
        %v8850 = vld [vmem:[%s8827 + $0xb0] sm:$0xff]
        %v8851 = vld [vmem:[%s8827 + $0xb8] sm:$0xff]
        %v8852 = vld [vmem:[%s8827 + $0xc0] sm:$0xff]
        %v8853 = vld [vmem:[%s8827 + $0xc8] sm:$0x11]
        %v8854 = vrot.slane %v8376, 1
        %v8855 = vrot.slane %v8378, 2
        %v8856 = vor.u32 %v8854, %v8855
        %v8857 = vshrl.u32 %v8373, 16
        %v8859 = vrot.slane %v8857, 1
        %v8860 = vrot.slane %v8383, 2
        %v8861 = vor.u32 %v8859, %v8860
        %v8862 = vsel %vm2343, %v8856, %v8861
        %v8863 = vrot.slane %v8387, 1
        %v8864 = vrot.slane %v8389, 2
        %v8865 = vor.u32 %v8863, %v8864
        %v8866 = vshrl.u32 %v8374, 16
        %v8868 = vrot.slane %v8866, 1
        %v8869 = vrot.slane %v8394, 2
        %v8870 = vor.u32 %v8868, %v8869
        %v8871 = vsel %vm2343, %v8865, %v8870
        %v8899 = vunpack.c.l.b16 %v8828
        %v8900 = vunpack.c.h.b16 %v8828
        %v8901 = vunpack.c.l.b16 %v8829
        %v8902 = vunpack.c.h.b16 %v8829
        %v8903 = vunpack.c.l.b16 %v8830
        %v8904 = vunpack.c.h.b16 %v8830
        %v8905 = vunpack.c.l.b16 %v8831
        %v8906 = vunpack.c.h.b16 %v8831
        %v8907 = vunpack.c.l.b16 %v8832
        %v8908 = vunpack.c.h.b16 %v8832
        %v8909 = vunpack.c.l.b16 %v8833
        %v8910 = vunpack.c.h.b16 %v8833
        %v8911 = vunpack.c.l.b16 %v8834
        %v8912 = vunpack.c.h.b16 %v8834
        %v8913 = vunpack.c.l.b16 %v8835
        %v8914 = vunpack.c.h.b16 %v8835
        %v8915 = vunpack.c.l.b16 %v8836
        %v8916 = vunpack.c.h.b16 %v8836
        %v8917 = vunpack.c.l.b16 %v8837
        %v8918 = vunpack.c.h.b16 %v8837
        %v8919 = vunpack.c.l.b16 %v8838
        %v8920 = vunpack.c.h.b16 %v8838
        %v8921 = vunpack.c.l.b16 %v8839
        %v8922 = vunpack.c.h.b16 %v8839
        %v8923 = vunpack.c.l.b16 %v8840
        %v8924 = vunpack.c.h.b16 %v8840
        %v8925 = vunpack.c.l.b16 %v8841
        %v8926 = vunpack.c.h.b16 %v8841
        %v8927 = vunpack.c.l.b16 %v8842
        %v8928 = vunpack.c.h.b16 %v8842
        %v8929 = vunpack.c.l.b16 %v8843
        %v8930 = vunpack.c.h.b16 %v8843
        %v8931 = vunpack.c.l.b16 %v8844
        %v8932 = vunpack.c.h.b16 %v8844
        %v8933 = vunpack.c.l.b16 %v8845
        %v8934 = vunpack.c.h.b16 %v8845
        %v8935 = vunpack.c.l.b16 %v8846
        %v8936 = vunpack.c.h.b16 %v8846
        %v8937 = vunpack.c.l.b16 %v8847
        %v8938 = vunpack.c.h.b16 %v8847
        %v8939 = vunpack.c.l.b16 %v8848
        %v8940 = vunpack.c.h.b16 %v8848
        %v8941 = vunpack.c.l.b16 %v8849
        %v8942 = vunpack.c.h.b16 %v8849
        %v8943 = vunpack.c.l.b16 %v8850
        %v8944 = vunpack.c.h.b16 %v8850
        %v8945 = vunpack.c.l.b16 %v8851
        %v8946 = vunpack.c.h.b16 %v8851
        %v8947 = vunpack.c.l.b16 %v8852
        %v8948 = vunpack.c.h.b16 %v8852
        %v8949 = vunpack.c.l.b16 %v8853
        %v8950 = vunpack.c.h.b16 %v8853
        %v8951 = vpack.c.b16 %v8901, %v8899
        %v8952 = vpack.c.b16 %v8902, %v8900
        %v8953 = vpack.c.b16 %v8905, %v8903
        %v8954 = vpack.c.b16 %v8906, %v8904
        %v8955 = vpack.c.b16 %v8909, %v8907
        %v8956 = vpack.c.b16 %v8910, %v8908
        %v8957 = vpack.c.b16 %v8913, %v8911
        %v8958 = vpack.c.b16 %v8914, %v8912
        %v8959 = vpack.c.b16 %v8917, %v8915
        %v8960 = vpack.c.b16 %v8918, %v8916
        %v8961 = vpack.c.b16 %v8921, %v8919
        %v8962 = vpack.c.b16 %v8922, %v8920
        %v8963 = vpack.c.b16 %v8925, %v8923
        %v8964 = vpack.c.b16 %v8926, %v8924
        %v8965 = vpack.c.b16 %v8929, %v8927
        %v8966 = vpack.c.b16 %v8930, %v8928
        %v8967 = vpack.c.b16 %v8933, %v8931
        %v8968 = vpack.c.b16 %v8934, %v8932
        %v8969 = vpack.c.b16 %v8937, %v8935
        %v8970 = vpack.c.b16 %v8938, %v8936
        %v8971 = vpack.c.b16 %v8941, %v8939
        %v8972 = vpack.c.b16 %v8942, %v8940
        %v8973 = vpack.c.b16 %v8945, %v8943
        %v8974 = vpack.c.b16 %v8946, %v8944
        %v8975 = vpack.c.b16 %v8949, %v8947
        %v8976 = vpack.c.b16 %v8950, %v8948
        %v9002 = vsel %vm305, %v8871, 0
        %v9005 = vand.u32 %v8975, %v867
        %v9008 = vand.u32 %v8976, %v867
        %9010 = vmatpush.bf16.msra.mxu0 %v8965
        %9011 = vmatpush.bf16.msra.mxu0 %v8963
        %9012 = vmatpush.bf16.msra.mxu0 %v8961
        %9013 = vmatpush.bf16.msra.mxu0 %v8959
        %9014 = vmatpush.bf16.msra.mxu0 %v8957
        %9015 = vmatpush.bf16.msra.mxu0 %v8955
        %9016 = vmatpush.bf16.msra.mxu0 %v8953
        %9017 = vmatpush.bf16.msra.mxu0 %v8951
        %9018 = vmatmul.bf16.gmra.mxu0 %v8862
        %v9019 = vpop.f32.mrf.mxu0
        %v9020 = vadd.f32 0.0, %v9019
        %v9021 = vpop.f32.mrf.mxu0
        %v9022 = vadd.f32 0.0, %v9021
        %9023 = vdwg.mxu0
        %9024 = vmatpush.bf16.msra.mxu0 0
        %9025 = vmatpush.bf16.msra.mxu0 0
        %9026 = vmatpush.bf16.msra.mxu0 0
        %9027 = vmatpush.bf16.msra.mxu0 %v9005
        %9028 = vmatpush.bf16.msra.mxu0 %v8973
        %9029 = vmatpush.bf16.msra.mxu0 %v8971
        %9030 = vmatpush.bf16.msra.mxu0 %v8969
        %9031 = vmatpush.bf16.msra.mxu0 %v8967
        %9032 = vmatmul.bf16.gmra.mxu0 %v9002
        %v9033 = vpop.f32.mrf.mxu0
        %v9034 = vadd.f32 %v9020, %v9033
        %v9035 = vpop.f32.mrf.mxu0
        %v9036 = vadd.f32 %v9022, %v9035
        %9037 = vdwg.mxu0
        %9038 = vmatpush.bf16.msra.mxu0 %v8966
        %9039 = vmatpush.bf16.msra.mxu0 %v8964
        %9040 = vmatpush.bf16.msra.mxu0 %v8962
        %9041 = vmatpush.bf16.msra.mxu0 %v8960
        %9042 = vmatpush.bf16.msra.mxu0 %v8958
        %9043 = vmatpush.bf16.msra.mxu0 %v8956
        %9044 = vmatpush.bf16.msra.mxu0 %v8954
        %9045 = vmatpush.bf16.msra.mxu0 %v8952
        %9046 = vmatmul.bf16.gmra.mxu0 %v8862
        %v9047 = vpop.f32.mrf.mxu0
        %v9048 = vadd.f32 0.0, %v9047
        %v9049 = vpop.f32.mrf.mxu0
        %v9050 = vadd.f32 0.0, %v9049
        %9051 = vdwg.mxu0
        %9052 = vmatpush.bf16.msra.mxu0 0
        %9053 = vmatpush.bf16.msra.mxu0 0
        %9054 = vmatpush.bf16.msra.mxu0 0
        %9055 = vmatpush.bf16.msra.mxu0 %v9008
        %9056 = vmatpush.bf16.msra.mxu0 %v8974
        %9057 = vmatpush.bf16.msra.mxu0 %v8972
        %9058 = vmatpush.bf16.msra.mxu0 %v8970
        %9059 = vmatpush.bf16.msra.mxu0 %v8968
        %9060 = vmatmul.bf16.gmra.mxu0 %v9002
        %v9061 = vpop.f32.mrf.mxu0
        %v9062 = vadd.f32 %v9048, %v9061
        %v9063 = vpop.f32.mrf.mxu0
        %v9064 = vadd.f32 %v9050, %v9063
        %9065 = vdwg.mxu0
        %v9066 = vadd.f32 %v8823, %v9034
        %v9067 = vadd.f32 %v8824, %v9062
        %v9068 = vadd.f32 %v8825, %v9036
        %v9069 = vadd.f32 %v8826, %v9064
        %s9070 = scalar_lea.vmem [#allocation10], 8944
        %v9071 = vld [vmem:[%s9070] sm:$0xff]
        %v9072 = vld [vmem:[%s9070 + $0x8] sm:$0xff]
        %v9073 = vld [vmem:[%s9070 + $0x10] sm:$0xff]
        %v9074 = vld [vmem:[%s9070 + $0x18] sm:$0xff]
        %v9075 = vld [vmem:[%s9070 + $0x20] sm:$0xff]
        %v9076 = vld [vmem:[%s9070 + $0x28] sm:$0xff]
        %v9077 = vld [vmem:[%s9070 + $0x30] sm:$0xff]
        %v9078 = vld [vmem:[%s9070 + $0x38] sm:$0xff]
        %v9079 = vld [vmem:[%s9070 + $0x40] sm:$0xff]
        %v9080 = vld [vmem:[%s9070 + $0x48] sm:$0xff]
        %v9081 = vld [vmem:[%s9070 + $0x50] sm:$0xff]
        %v9082 = vld [vmem:[%s9070 + $0x58] sm:$0xff]
        %v9083 = vld [vmem:[%s9070 + $0x60] sm:$0xff]
        %v9084 = vld [vmem:[%s9070 + $0x68] sm:$0xff]
        %v9085 = vld [vmem:[%s9070 + $0x70] sm:$0xff]
        %v9086 = vld [vmem:[%s9070 + $0x78] sm:$0xff]
        %v9087 = vld [vmem:[%s9070 + $0x80] sm:$0xff]
        %v9088 = vld [vmem:[%s9070 + $0x88] sm:$0xff]
        %v9089 = vld [vmem:[%s9070 + $0x90] sm:$0xff]
        %v9090 = vld [vmem:[%s9070 + $0x98] sm:$0xff]
        %v9091 = vld [vmem:[%s9070 + $0xa0] sm:$0xff]
        %v9092 = vld [vmem:[%s9070 + $0xa8] sm:$0xff]
        %v9093 = vld [vmem:[%s9070 + $0xb0] sm:$0xff]
        %v9094 = vld [vmem:[%s9070 + $0xb8] sm:$0xff]
        %v9095 = vld [vmem:[%s9070 + $0xc0] sm:$0xff]
        %v9096 = vld [vmem:[%s9070 + $0xc8] sm:$0x11]
        %v9097 = vrot.slane %v8143, 2
        %v9098 = vrot.slane %v8373, 2
        %v9099 = vsel %vm930, %v9097, %v9098
        %v9100 = vrot.slane %v8144, 2
        %v9101 = vrot.slane %v8374, 2
        %v9102 = vsel %vm930, %v9100, %v9101
        %v9130 = vunpack.c.l.b16 %v9071
        %v9131 = vunpack.c.h.b16 %v9071
        %v9132 = vunpack.c.l.b16 %v9072
        %v9133 = vunpack.c.h.b16 %v9072
        %v9134 = vunpack.c.l.b16 %v9073
        %v9135 = vunpack.c.h.b16 %v9073
        %v9136 = vunpack.c.l.b16 %v9074
        %v9137 = vunpack.c.h.b16 %v9074
        %v9138 = vunpack.c.l.b16 %v9075
        %v9139 = vunpack.c.h.b16 %v9075
        %v9140 = vunpack.c.l.b16 %v9076
        %v9141 = vunpack.c.h.b16 %v9076
        %v9142 = vunpack.c.l.b16 %v9077
        %v9143 = vunpack.c.h.b16 %v9077
        %v9144 = vunpack.c.l.b16 %v9078
        %v9145 = vunpack.c.h.b16 %v9078
        %v9146 = vunpack.c.l.b16 %v9079
        %v9147 = vunpack.c.h.b16 %v9079
        %v9148 = vunpack.c.l.b16 %v9080
        %v9149 = vunpack.c.h.b16 %v9080
        %v9150 = vunpack.c.l.b16 %v9081
        %v9151 = vunpack.c.h.b16 %v9081
        %v9152 = vunpack.c.l.b16 %v9082
        %v9153 = vunpack.c.h.b16 %v9082
        %v9154 = vunpack.c.l.b16 %v9083
        %v9155 = vunpack.c.h.b16 %v9083
        %v9156 = vunpack.c.l.b16 %v9084
        %v9157 = vunpack.c.h.b16 %v9084
        %v9158 = vunpack.c.l.b16 %v9085
        %v9159 = vunpack.c.h.b16 %v9085
        %v9160 = vunpack.c.l.b16 %v9086
        %v9161 = vunpack.c.h.b16 %v9086
        %v9162 = vunpack.c.l.b16 %v9087
        %v9163 = vunpack.c.h.b16 %v9087
        %v9164 = vunpack.c.l.b16 %v9088
        %v9165 = vunpack.c.h.b16 %v9088
        %v9166 = vunpack.c.l.b16 %v9089
        %v9167 = vunpack.c.h.b16 %v9089
        %v9168 = vunpack.c.l.b16 %v9090
        %v9169 = vunpack.c.h.b16 %v9090
        %v9170 = vunpack.c.l.b16 %v9091
        %v9171 = vunpack.c.h.b16 %v9091
        %v9172 = vunpack.c.l.b16 %v9092
        %v9173 = vunpack.c.h.b16 %v9092
        %v9174 = vunpack.c.l.b16 %v9093
        %v9175 = vunpack.c.h.b16 %v9093
        %v9176 = vunpack.c.l.b16 %v9094
        %v9177 = vunpack.c.h.b16 %v9094
        %v9178 = vunpack.c.l.b16 %v9095
        %v9179 = vunpack.c.h.b16 %v9095
        %v9180 = vunpack.c.l.b16 %v9096
        %v9181 = vunpack.c.h.b16 %v9096
        %v9182 = vpack.c.b16 %v9132, %v9130
        %v9183 = vpack.c.b16 %v9133, %v9131
        %v9184 = vpack.c.b16 %v9136, %v9134
        %v9185 = vpack.c.b16 %v9137, %v9135
        %v9186 = vpack.c.b16 %v9140, %v9138
        %v9187 = vpack.c.b16 %v9141, %v9139
        %v9188 = vpack.c.b16 %v9144, %v9142
        %v9189 = vpack.c.b16 %v9145, %v9143
        %v9190 = vpack.c.b16 %v9148, %v9146
        %v9191 = vpack.c.b16 %v9149, %v9147
        %v9192 = vpack.c.b16 %v9152, %v9150
        %v9193 = vpack.c.b16 %v9153, %v9151
        %v9194 = vpack.c.b16 %v9156, %v9154
        %v9195 = vpack.c.b16 %v9157, %v9155
        %v9196 = vpack.c.b16 %v9160, %v9158
        %v9197 = vpack.c.b16 %v9161, %v9159
        %v9198 = vpack.c.b16 %v9164, %v9162
        %v9199 = vpack.c.b16 %v9165, %v9163
        %v9200 = vpack.c.b16 %v9168, %v9166
        %v9201 = vpack.c.b16 %v9169, %v9167
        %v9202 = vpack.c.b16 %v9172, %v9170
        %v9203 = vpack.c.b16 %v9173, %v9171
        %v9204 = vpack.c.b16 %v9176, %v9174
        %v9205 = vpack.c.b16 %v9177, %v9175
        %v9206 = vpack.c.b16 %v9180, %v9178
        %v9207 = vpack.c.b16 %v9181, %v9179
        %v9233 = vsel %vm305, %v9102, 0
        %v9236 = vand.u32 %v9206, %v867
        %v9239 = vand.u32 %v9207, %v867
        %9241 = vmatpush.bf16.msra.mxu0 %v9196
        %9242 = vmatpush.bf16.msra.mxu0 %v9194
        %9243 = vmatpush.bf16.msra.mxu0 %v9192
        %9244 = vmatpush.bf16.msra.mxu0 %v9190
        %9245 = vmatpush.bf16.msra.mxu0 %v9188
        %9246 = vmatpush.bf16.msra.mxu0 %v9186
        %9247 = vmatpush.bf16.msra.mxu0 %v9184
        %9248 = vmatpush.bf16.msra.mxu0 %v9182
        %9249 = vmatmul.bf16.gmra.mxu0 %v9099
        %v9250 = vpop.f32.mrf.mxu0
        %v9251 = vadd.f32 0.0, %v9250
        %v9252 = vpop.f32.mrf.mxu0
        %v9253 = vadd.f32 0.0, %v9252
        %9254 = vdwg.mxu0
        %9255 = vmatpush.bf16.msra.mxu0 0
        %9256 = vmatpush.bf16.msra.mxu0 0
        %9257 = vmatpush.bf16.msra.mxu0 0
        %9258 = vmatpush.bf16.msra.mxu0 %v9236
        %9259 = vmatpush.bf16.msra.mxu0 %v9204
        %9260 = vmatpush.bf16.msra.mxu0 %v9202
        %9261 = vmatpush.bf16.msra.mxu0 %v9200
        %9262 = vmatpush.bf16.msra.mxu0 %v9198
        %9263 = vmatmul.bf16.gmra.mxu0 %v9233
        %v9264 = vpop.f32.mrf.mxu0
        %v9265 = vadd.f32 %v9251, %v9264
        %v9266 = vpop.f32.mrf.mxu0
        %v9267 = vadd.f32 %v9253, %v9266
        %9268 = vdwg.mxu0
        %9269 = vmatpush.bf16.msra.mxu0 %v9197
        %9270 = vmatpush.bf16.msra.mxu0 %v9195
        %9271 = vmatpush.bf16.msra.mxu0 %v9193
        %9272 = vmatpush.bf16.msra.mxu0 %v9191
        %9273 = vmatpush.bf16.msra.mxu0 %v9189
        %9274 = vmatpush.bf16.msra.mxu0 %v9187
        %9275 = vmatpush.bf16.msra.mxu0 %v9185
        %9276 = vmatpush.bf16.msra.mxu0 %v9183
        %9277 = vmatmul.bf16.gmra.mxu0 %v9099
        %v9278 = vpop.f32.mrf.mxu0
        %v9279 = vadd.f32 0.0, %v9278
        %v9280 = vpop.f32.mrf.mxu0
        %v9281 = vadd.f32 0.0, %v9280
        %9282 = vdwg.mxu0
        %9283 = vmatpush.bf16.msra.mxu0 0
        %9284 = vmatpush.bf16.msra.mxu0 0
        %9285 = vmatpush.bf16.msra.mxu0 0
        %9286 = vmatpush.bf16.msra.mxu0 %v9239
        %9287 = vmatpush.bf16.msra.mxu0 %v9205
        %9288 = vmatpush.bf16.msra.mxu0 %v9203
        %9289 = vmatpush.bf16.msra.mxu0 %v9201
        %9290 = vmatpush.bf16.msra.mxu0 %v9199
        %9291 = vmatmul.bf16.gmra.mxu0 %v9233
        %v9292 = vpop.f32.mrf.mxu0
        %v9293 = vadd.f32 %v9279, %v9292
        %v9294 = vpop.f32.mrf.mxu0
        %v9295 = vadd.f32 %v9281, %v9294
        %9296 = vdwg.mxu0
        %v9297 = vadd.f32 %v9066, %v9265
        %v9298 = vadd.f32 %v9067, %v9293
        %v9299 = vadd.f32 %v9068, %v9267
        %v9300 = vadd.f32 %v9069, %v9295
        %v9301 = vld [vmem:[%s614] sm:$0xff]
        %v9302 = vld [vmem:[%s614 + $0x8] sm:$0xff]
        %v9303 = vld [vmem:[%s614 + $0x10] sm:$0xff]
        %v9304 = vld [vmem:[%s614 + $0x18] sm:$0xff]
        %v9305 = vld [vmem:[%s614 + $0x20] sm:$0xff]
        %v9306 = vld [vmem:[%s614 + $0x28] sm:$0xff]
        %v9307 = vld [vmem:[%s614 + $0x30] sm:$0xf]
        %v9308 = vld [vmem:[%s614 + $0x38] sm:$0xf]
        %v9309 = vpack.c.bf16 %v9302, %v9301
        %v9310 = vpack.c.bf16 %v9304, %v9303
        %v9311 = vpack.c.bf16 %v9306, %v9305
        %v9312 = vpack.c.bf16 %v9308, %v9307
        %s9313 = scalar_lea.vmem [#allocation10], 832
        %v9314 = vld [vmem:[%s9313] sm:$0xff]
        %v9315 = vld [vmem:[%s9313 + $0x8] sm:$0xff]
        %v9316 = vld [vmem:[%s9313 + $0x10] sm:$0xff]
        %v9317 = vld [vmem:[%s9313 + $0x18] sm:$0xff]
        %v9318 = vld [vmem:[%s9313 + $0x20] sm:$0xff]
        %v9319 = vld [vmem:[%s9313 + $0x28] sm:$0xff]
        %v9320 = vld [vmem:[%s9313 + $0x30] sm:$0xff]
        %v9321 = vld [vmem:[%s9313 + $0x38] sm:$0xff]
        %v9322 = vld [vmem:[%s9313 + $0x40] sm:$0xff]
        %v9323 = vld [vmem:[%s9313 + $0x48] sm:$0xff]
        %v9324 = vld [vmem:[%s9313 + $0x50] sm:$0xff]
        %v9325 = vld [vmem:[%s9313 + $0x58] sm:$0xff]
        %v9326 = vld [vmem:[%s9313 + $0x60] sm:$0xff]
        %v9327 = vld [vmem:[%s9313 + $0x68] sm:$0xff]
        %v9328 = vld [vmem:[%s9313 + $0x70] sm:$0xff]
        %v9329 = vld [vmem:[%s9313 + $0x78] sm:$0xff]
        %v9330 = vld [vmem:[%s9313 + $0x80] sm:$0xff]
        %v9331 = vld [vmem:[%s9313 + $0x88] sm:$0xff]
        %v9332 = vld [vmem:[%s9313 + $0x90] sm:$0xff]
        %v9333 = vld [vmem:[%s9313 + $0x98] sm:$0xff]
        %v9334 = vld [vmem:[%s9313 + $0xa0] sm:$0xff]
        %v9335 = vld [vmem:[%s9313 + $0xa8] sm:$0xff]
        %v9336 = vld [vmem:[%s9313 + $0xb0] sm:$0xff]
        %v9337 = vld [vmem:[%s9313 + $0xb8] sm:$0xff]
        %v9338 = vld [vmem:[%s9313 + $0xc0] sm:$0xff]
        %v9339 = vld [vmem:[%s9313 + $0xc8] sm:$0x11]
        %v9343 = vunpack.c.l.b16 %v9309
        %v9344 = vunpack.c.h.b16 %v9309
        %v9345 = vunpack.c.l.b16 %v9310
        %v9346 = vunpack.c.h.b16 %v9310
        %v9347 = vunpack.c.l.b16 %v9311
        %v9348 = vunpack.c.h.b16 %v9311
        %v9349 = vpack.c.b16 %v9345, %v9343
        %v9350 = vpack.c.b16 %v9346, %v9344
        %v9351 = vpack.c.b16 %v9347, %v9347
        %v9352 = vpack.c.b16 %v9348, %v9348
        %v9353 = vrot.slane %v9349, 2
        %v9354 = vrot.slane %v9351, 2
        %v9355 = vsel %vm930, %v9353, %v9354
        %v9356 = vrot.slane %v9350, 2
        %v9357 = vrot.slane %v9352, 2
        %v9358 = vsel %vm930, %v9356, %v9357
        %v9386 = vunpack.c.l.b16 %v9314
        %v9387 = vunpack.c.h.b16 %v9314
        %v9388 = vunpack.c.l.b16 %v9315
        %v9389 = vunpack.c.h.b16 %v9315
        %v9390 = vunpack.c.l.b16 %v9316
        %v9391 = vunpack.c.h.b16 %v9316
        %v9392 = vunpack.c.l.b16 %v9317
        %v9393 = vunpack.c.h.b16 %v9317
        %v9394 = vunpack.c.l.b16 %v9318
        %v9395 = vunpack.c.h.b16 %v9318
        %v9396 = vunpack.c.l.b16 %v9319
        %v9397 = vunpack.c.h.b16 %v9319
        %v9398 = vunpack.c.l.b16 %v9320
        %v9399 = vunpack.c.h.b16 %v9320
        %v9400 = vunpack.c.l.b16 %v9321
        %v9401 = vunpack.c.h.b16 %v9321
        %v9402 = vunpack.c.l.b16 %v9322
        %v9403 = vunpack.c.h.b16 %v9322
        %v9404 = vunpack.c.l.b16 %v9323
        %v9405 = vunpack.c.h.b16 %v9323
        %v9406 = vunpack.c.l.b16 %v9324
        %v9407 = vunpack.c.h.b16 %v9324
        %v9408 = vunpack.c.l.b16 %v9325
        %v9409 = vunpack.c.h.b16 %v9325
        %v9410 = vunpack.c.l.b16 %v9326
        %v9411 = vunpack.c.h.b16 %v9326
        %v9412 = vunpack.c.l.b16 %v9327
        %v9413 = vunpack.c.h.b16 %v9327
        %v9414 = vunpack.c.l.b16 %v9328
        %v9415 = vunpack.c.h.b16 %v9328
        %v9416 = vunpack.c.l.b16 %v9329
        %v9417 = vunpack.c.h.b16 %v9329
        %v9418 = vunpack.c.l.b16 %v9330
        %v9419 = vunpack.c.h.b16 %v9330
        %v9420 = vunpack.c.l.b16 %v9331
        %v9421 = vunpack.c.h.b16 %v9331
        %v9422 = vunpack.c.l.b16 %v9332
        %v9423 = vunpack.c.h.b16 %v9332
        %v9424 = vunpack.c.l.b16 %v9333
        %v9425 = vunpack.c.h.b16 %v9333
        %v9426 = vunpack.c.l.b16 %v9334
        %v9427 = vunpack.c.h.b16 %v9334
        %v9428 = vunpack.c.l.b16 %v9335
        %v9429 = vunpack.c.h.b16 %v9335
        %v9430 = vunpack.c.l.b16 %v9336
        %v9431 = vunpack.c.h.b16 %v9336
        %v9432 = vunpack.c.l.b16 %v9337
        %v9433 = vunpack.c.h.b16 %v9337
        %v9434 = vunpack.c.l.b16 %v9338
        %v9435 = vunpack.c.h.b16 %v9338
        %v9436 = vunpack.c.l.b16 %v9339
        %v9437 = vunpack.c.h.b16 %v9339
        %v9438 = vpack.c.b16 %v9388, %v9386
        %v9439 = vpack.c.b16 %v9389, %v9387
        %v9440 = vpack.c.b16 %v9392, %v9390
        %v9441 = vpack.c.b16 %v9393, %v9391
        %v9442 = vpack.c.b16 %v9396, %v9394
        %v9443 = vpack.c.b16 %v9397, %v9395
        %v9444 = vpack.c.b16 %v9400, %v9398
        %v9445 = vpack.c.b16 %v9401, %v9399
        %v9446 = vpack.c.b16 %v9404, %v9402
        %v9447 = vpack.c.b16 %v9405, %v9403
        %v9448 = vpack.c.b16 %v9408, %v9406
        %v9449 = vpack.c.b16 %v9409, %v9407
        %v9450 = vpack.c.b16 %v9412, %v9410
        %v9451 = vpack.c.b16 %v9413, %v9411
        %v9452 = vpack.c.b16 %v9416, %v9414
        %v9453 = vpack.c.b16 %v9417, %v9415
        %v9454 = vpack.c.b16 %v9420, %v9418
        %v9455 = vpack.c.b16 %v9421, %v9419
        %v9456 = vpack.c.b16 %v9424, %v9422
        %v9457 = vpack.c.b16 %v9425, %v9423
        %v9458 = vpack.c.b16 %v9428, %v9426
        %v9459 = vpack.c.b16 %v9429, %v9427
        %v9460 = vpack.c.b16 %v9432, %v9430
        %v9461 = vpack.c.b16 %v9433, %v9431
        %v9462 = vpack.c.b16 %v9436, %v9434
        %v9463 = vpack.c.b16 %v9437, %v9435
        %v9489 = vsel %vm305, %v9358, 0
        %v9492 = vand.u32 %v9462, %v867
        %v9495 = vand.u32 %v9463, %v867
        %9497 = vmatpush.bf16.msra.mxu0 %v9452
        %9498 = vmatpush.bf16.msra.mxu0 %v9450
        %9499 = vmatpush.bf16.msra.mxu0 %v9448
        %9500 = vmatpush.bf16.msra.mxu0 %v9446
        %9501 = vmatpush.bf16.msra.mxu0 %v9444
        %9502 = vmatpush.bf16.msra.mxu0 %v9442
        %9503 = vmatpush.bf16.msra.mxu0 %v9440
        %9504 = vmatpush.bf16.msra.mxu0 %v9438
        %9505 = vmatmul.bf16.gmra.mxu0 %v9355
        %v9506 = vpop.f32.mrf.mxu0
        %v9507 = vadd.f32 0.0, %v9506
        %v9508 = vpop.f32.mrf.mxu0
        %v9509 = vadd.f32 0.0, %v9508
        %9510 = vdwg.mxu0
        %9511 = vmatpush.bf16.msra.mxu0 0
        %9512 = vmatpush.bf16.msra.mxu0 0
        %9513 = vmatpush.bf16.msra.mxu0 0
        %9514 = vmatpush.bf16.msra.mxu0 %v9492
        %9515 = vmatpush.bf16.msra.mxu0 %v9460
        %9516 = vmatpush.bf16.msra.mxu0 %v9458
        %9517 = vmatpush.bf16.msra.mxu0 %v9456
        %9518 = vmatpush.bf16.msra.mxu0 %v9454
        %9519 = vmatmul.bf16.gmra.mxu0 %v9489
        %v9520 = vpop.f32.mrf.mxu0
        %v9521 = vadd.f32 %v9507, %v9520
        %v9522 = vpop.f32.mrf.mxu0
        %v9523 = vadd.f32 %v9509, %v9522
        %9524 = vdwg.mxu0
        %9525 = vmatpush.bf16.msra.mxu0 %v9453
        %9526 = vmatpush.bf16.msra.mxu0 %v9451
        %9527 = vmatpush.bf16.msra.mxu0 %v9449
        %9528 = vmatpush.bf16.msra.mxu0 %v9447
        %9529 = vmatpush.bf16.msra.mxu0 %v9445
        %9530 = vmatpush.bf16.msra.mxu0 %v9443
        %9531 = vmatpush.bf16.msra.mxu0 %v9441
        %9532 = vmatpush.bf16.msra.mxu0 %v9439
        %9533 = vmatmul.bf16.gmra.mxu0 %v9355
        %v9534 = vpop.f32.mrf.mxu0
        %v9535 = vadd.f32 0.0, %v9534
        %v9536 = vpop.f32.mrf.mxu0
        %v9537 = vadd.f32 0.0, %v9536
        %9538 = vdwg.mxu0
        %9539 = vmatpush.bf16.msra.mxu0 0
        %9540 = vmatpush.bf16.msra.mxu0 0
        %9541 = vmatpush.bf16.msra.mxu0 0
        %9542 = vmatpush.bf16.msra.mxu0 %v9495
        %9543 = vmatpush.bf16.msra.mxu0 %v9461
        %9544 = vmatpush.bf16.msra.mxu0 %v9459
        %9545 = vmatpush.bf16.msra.mxu0 %v9457
        %9546 = vmatpush.bf16.msra.mxu0 %v9455
        %9547 = vmatmul.bf16.gmra.mxu0 %v9489
        %v9548 = vpop.f32.mrf.mxu0
        %v9549 = vadd.f32 %v9535, %v9548
        %v9550 = vpop.f32.mrf.mxu0
        %v9551 = vadd.f32 %v9537, %v9550
        %9552 = vdwg.mxu0
        %v9553 = vadd.f32 %v9297, %v9521
        %v9554 = vadd.f32 %v9298, %v9549
        %v9555 = vadd.f32 %v9299, %v9523
        %v9556 = vadd.f32 %v9300, %v9551
        %s9557 = scalar_lea.vmem [#allocation10], 1872
        %v9558 = vld [vmem:[%s9557] sm:$0xff]
        %v9559 = vld [vmem:[%s9557 + $0x8] sm:$0xff]
        %v9560 = vld [vmem:[%s9557 + $0x10] sm:$0xff]
        %v9561 = vld [vmem:[%s9557 + $0x18] sm:$0xff]
        %v9562 = vld [vmem:[%s9557 + $0x20] sm:$0xff]
        %v9563 = vld [vmem:[%s9557 + $0x28] sm:$0xff]
        %v9564 = vld [vmem:[%s9557 + $0x30] sm:$0xff]
        %v9565 = vld [vmem:[%s9557 + $0x38] sm:$0xff]
        %v9566 = vld [vmem:[%s9557 + $0x40] sm:$0xff]
        %v9567 = vld [vmem:[%s9557 + $0x48] sm:$0xff]
        %v9568 = vld [vmem:[%s9557 + $0x50] sm:$0xff]
        %v9569 = vld [vmem:[%s9557 + $0x58] sm:$0xff]
        %v9570 = vld [vmem:[%s9557 + $0x60] sm:$0xff]
        %v9571 = vld [vmem:[%s9557 + $0x68] sm:$0xff]
        %v9572 = vld [vmem:[%s9557 + $0x70] sm:$0xff]
        %v9573 = vld [vmem:[%s9557 + $0x78] sm:$0xff]
        %v9574 = vld [vmem:[%s9557 + $0x80] sm:$0xff]
        %v9575 = vld [vmem:[%s9557 + $0x88] sm:$0xff]
        %v9576 = vld [vmem:[%s9557 + $0x90] sm:$0xff]
        %v9577 = vld [vmem:[%s9557 + $0x98] sm:$0xff]
        %v9578 = vld [vmem:[%s9557 + $0xa0] sm:$0xff]
        %v9579 = vld [vmem:[%s9557 + $0xa8] sm:$0xff]
        %v9580 = vld [vmem:[%s9557 + $0xb0] sm:$0xff]
        %v9581 = vld [vmem:[%s9557 + $0xb8] sm:$0xff]
        %v9582 = vld [vmem:[%s9557 + $0xc0] sm:$0xff]
        %v9583 = vld [vmem:[%s9557 + $0xc8] sm:$0x11]
        %v9585 = vshrl.u32 %v9349, 16
        %v9587 = vrot.slane %v9585, 2
        %v9588 = vshll.u32 %v9349, 16
        %v9590 = vrot.slane %v9588, 3
        %v9591 = vor.u32 %v9587, %v9590
        %v9593 = vshrl.u32 %v9351, 16
        %v9595 = vrot.slane %v9593, 2
        %v9596 = vshll.u32 %v9351, 16
        %v9598 = vrot.slane %v9596, 3
        %v9599 = vor.u32 %v9595, %v9598
        %v9600 = vsel %vm697, %v9591, %v9599
        %v9602 = vshrl.u32 %v9350, 16
        %v9604 = vrot.slane %v9602, 2
        %v9605 = vshll.u32 %v9350, 16
        %v9607 = vrot.slane %v9605, 3
        %v9608 = vor.u32 %v9604, %v9607
        %v9610 = vshrl.u32 %v9352, 16
        %v9612 = vrot.slane %v9610, 2
        %v9613 = vshll.u32 %v9352, 16
        %v9615 = vrot.slane %v9613, 3
        %v9616 = vor.u32 %v9612, %v9615
        %v9617 = vsel %vm697, %v9608, %v9616
        %v9645 = vunpack.c.l.b16 %v9558
        %v9646 = vunpack.c.h.b16 %v9558
        %v9647 = vunpack.c.l.b16 %v9559
        %v9648 = vunpack.c.h.b16 %v9559
        %v9649 = vunpack.c.l.b16 %v9560
        %v9650 = vunpack.c.h.b16 %v9560
        %v9651 = vunpack.c.l.b16 %v9561
        %v9652 = vunpack.c.h.b16 %v9561
        %v9653 = vunpack.c.l.b16 %v9562
        %v9654 = vunpack.c.h.b16 %v9562
        %v9655 = vunpack.c.l.b16 %v9563
        %v9656 = vunpack.c.h.b16 %v9563
        %v9657 = vunpack.c.l.b16 %v9564
        %v9658 = vunpack.c.h.b16 %v9564
        %v9659 = vunpack.c.l.b16 %v9565
        %v9660 = vunpack.c.h.b16 %v9565
        %v9661 = vunpack.c.l.b16 %v9566
        %v9662 = vunpack.c.h.b16 %v9566
        %v9663 = vunpack.c.l.b16 %v9567
        %v9664 = vunpack.c.h.b16 %v9567
        %v9665 = vunpack.c.l.b16 %v9568
        %v9666 = vunpack.c.h.b16 %v9568
        %v9667 = vunpack.c.l.b16 %v9569
        %v9668 = vunpack.c.h.b16 %v9569
        %v9669 = vunpack.c.l.b16 %v9570
        %v9670 = vunpack.c.h.b16 %v9570
        %v9671 = vunpack.c.l.b16 %v9571
        %v9672 = vunpack.c.h.b16 %v9571
        %v9673 = vunpack.c.l.b16 %v9572
        %v9674 = vunpack.c.h.b16 %v9572
        %v9675 = vunpack.c.l.b16 %v9573
        %v9676 = vunpack.c.h.b16 %v9573
        %v9677 = vunpack.c.l.b16 %v9574
        %v9678 = vunpack.c.h.b16 %v9574
        %v9679 = vunpack.c.l.b16 %v9575
        %v9680 = vunpack.c.h.b16 %v9575
        %v9681 = vunpack.c.l.b16 %v9576
        %v9682 = vunpack.c.h.b16 %v9576
        %v9683 = vunpack.c.l.b16 %v9577
        %v9684 = vunpack.c.h.b16 %v9577
        %v9685 = vunpack.c.l.b16 %v9578
        %v9686 = vunpack.c.h.b16 %v9578
        %v9687 = vunpack.c.l.b16 %v9579
        %v9688 = vunpack.c.h.b16 %v9579
        %v9689 = vunpack.c.l.b16 %v9580
        %v9690 = vunpack.c.h.b16 %v9580
        %v9691 = vunpack.c.l.b16 %v9581
        %v9692 = vunpack.c.h.b16 %v9581
        %v9693 = vunpack.c.l.b16 %v9582
        %v9694 = vunpack.c.h.b16 %v9582
        %v9695 = vunpack.c.l.b16 %v9583
        %v9696 = vunpack.c.h.b16 %v9583
        %v9697 = vpack.c.b16 %v9647, %v9645
        %v9698 = vpack.c.b16 %v9648, %v9646
        %v9699 = vpack.c.b16 %v9651, %v9649
        %v9700 = vpack.c.b16 %v9652, %v9650
        %v9701 = vpack.c.b16 %v9655, %v9653
        %v9702 = vpack.c.b16 %v9656, %v9654
        %v9703 = vpack.c.b16 %v9659, %v9657
        %v9704 = vpack.c.b16 %v9660, %v9658
        %v9705 = vpack.c.b16 %v9663, %v9661
        %v9706 = vpack.c.b16 %v9664, %v9662
        %v9707 = vpack.c.b16 %v9667, %v9665
        %v9708 = vpack.c.b16 %v9668, %v9666
        %v9709 = vpack.c.b16 %v9671, %v9669
        %v9710 = vpack.c.b16 %v9672, %v9670
        %v9711 = vpack.c.b16 %v9675, %v9673
        %v9712 = vpack.c.b16 %v9676, %v9674
        %v9713 = vpack.c.b16 %v9679, %v9677
        %v9714 = vpack.c.b16 %v9680, %v9678
        %v9715 = vpack.c.b16 %v9683, %v9681
        %v9716 = vpack.c.b16 %v9684, %v9682
        %v9717 = vpack.c.b16 %v9687, %v9685
        %v9718 = vpack.c.b16 %v9688, %v9686
        %v9719 = vpack.c.b16 %v9691, %v9689
        %v9720 = vpack.c.b16 %v9692, %v9690
        %v9721 = vpack.c.b16 %v9695, %v9693
        %v9722 = vpack.c.b16 %v9696, %v9694
        %v9748 = vsel %vm305, %v9617, 0
        %v9751 = vand.u32 %v9721, %v867
        %v9754 = vand.u32 %v9722, %v867
        %9756 = vmatpush.bf16.msra.mxu0 %v9711
        %9757 = vmatpush.bf16.msra.mxu0 %v9709
        %9758 = vmatpush.bf16.msra.mxu0 %v9707
        %9759 = vmatpush.bf16.msra.mxu0 %v9705
        %9760 = vmatpush.bf16.msra.mxu0 %v9703
        %9761 = vmatpush.bf16.msra.mxu0 %v9701
        %9762 = vmatpush.bf16.msra.mxu0 %v9699
        %9763 = vmatpush.bf16.msra.mxu0 %v9697
        %9764 = vmatmul.bf16.gmra.mxu0 %v9600
        %v9765 = vpop.f32.mrf.mxu0
        %v9766 = vadd.f32 0.0, %v9765
        %v9767 = vpop.f32.mrf.mxu0
        %v9768 = vadd.f32 0.0, %v9767
        %9769 = vdwg.mxu0
        %9770 = vmatpush.bf16.msra.mxu0 0
        %9771 = vmatpush.bf16.msra.mxu0 0
        %9772 = vmatpush.bf16.msra.mxu0 0
        %9773 = vmatpush.bf16.msra.mxu0 %v9751
        %9774 = vmatpush.bf16.msra.mxu0 %v9719
        %9775 = vmatpush.bf16.msra.mxu0 %v9717
        %9776 = vmatpush.bf16.msra.mxu0 %v9715
        %9777 = vmatpush.bf16.msra.mxu0 %v9713
        %9778 = vmatmul.bf16.gmra.mxu0 %v9748
        %v9779 = vpop.f32.mrf.mxu0
        %v9780 = vadd.f32 %v9766, %v9779
        %v9781 = vpop.f32.mrf.mxu0
        %v9782 = vadd.f32 %v9768, %v9781
        %9783 = vdwg.mxu0
        %9784 = vmatpush.bf16.msra.mxu0 %v9712
        %9785 = vmatpush.bf16.msra.mxu0 %v9710
        %9786 = vmatpush.bf16.msra.mxu0 %v9708
        %9787 = vmatpush.bf16.msra.mxu0 %v9706
        %9788 = vmatpush.bf16.msra.mxu0 %v9704
        %9789 = vmatpush.bf16.msra.mxu0 %v9702
        %9790 = vmatpush.bf16.msra.mxu0 %v9700
        %9791 = vmatpush.bf16.msra.mxu0 %v9698
        %9792 = vmatmul.bf16.gmra.mxu0 %v9600
        %v9793 = vpop.f32.mrf.mxu0
        %v9794 = vadd.f32 0.0, %v9793
        %v9795 = vpop.f32.mrf.mxu0
        %v9796 = vadd.f32 0.0, %v9795
        %9797 = vdwg.mxu0
        %9798 = vmatpush.bf16.msra.mxu0 0
        %9799 = vmatpush.bf16.msra.mxu0 0
        %9800 = vmatpush.bf16.msra.mxu0 0
        %9801 = vmatpush.bf16.msra.mxu0 %v9754
        %9802 = vmatpush.bf16.msra.mxu0 %v9720
        %9803 = vmatpush.bf16.msra.mxu0 %v9718
        %9804 = vmatpush.bf16.msra.mxu0 %v9716
        %9805 = vmatpush.bf16.msra.mxu0 %v9714
        %9806 = vmatmul.bf16.gmra.mxu0 %v9748
        %v9807 = vpop.f32.mrf.mxu0
        %v9808 = vadd.f32 %v9794, %v9807
        %v9809 = vpop.f32.mrf.mxu0
        %v9810 = vadd.f32 %v9796, %v9809
        %9811 = vdwg.mxu0
        %v9812 = vadd.f32 %v9553, %v9780
        %v9813 = vadd.f32 %v9554, %v9808
        %v9814 = vadd.f32 %v9555, %v9782
        %v9815 = vadd.f32 %v9556, %v9810
        %s9816 = scalar_lea.vmem [#allocation10], 2912
        %v9817 = vld [vmem:[%s9816] sm:$0xff]
        %v9818 = vld [vmem:[%s9816 + $0x8] sm:$0xff]
        %v9819 = vld [vmem:[%s9816 + $0x10] sm:$0xff]
        %v9820 = vld [vmem:[%s9816 + $0x18] sm:$0xff]
        %v9821 = vld [vmem:[%s9816 + $0x20] sm:$0xff]
        %v9822 = vld [vmem:[%s9816 + $0x28] sm:$0xff]
        %v9823 = vld [vmem:[%s9816 + $0x30] sm:$0xff]
        %v9824 = vld [vmem:[%s9816 + $0x38] sm:$0xff]
        %v9825 = vld [vmem:[%s9816 + $0x40] sm:$0xff]
        %v9826 = vld [vmem:[%s9816 + $0x48] sm:$0xff]
        %v9827 = vld [vmem:[%s9816 + $0x50] sm:$0xff]
        %v9828 = vld [vmem:[%s9816 + $0x58] sm:$0xff]
        %v9829 = vld [vmem:[%s9816 + $0x60] sm:$0xff]
        %v9830 = vld [vmem:[%s9816 + $0x68] sm:$0xff]
        %v9831 = vld [vmem:[%s9816 + $0x70] sm:$0xff]
        %v9832 = vld [vmem:[%s9816 + $0x78] sm:$0xff]
        %v9833 = vld [vmem:[%s9816 + $0x80] sm:$0xff]
        %v9834 = vld [vmem:[%s9816 + $0x88] sm:$0xff]
        %v9835 = vld [vmem:[%s9816 + $0x90] sm:$0xff]
        %v9836 = vld [vmem:[%s9816 + $0x98] sm:$0xff]
        %v9837 = vld [vmem:[%s9816 + $0xa0] sm:$0xff]
        %v9838 = vld [vmem:[%s9816 + $0xa8] sm:$0xff]
        %v9839 = vld [vmem:[%s9816 + $0xb0] sm:$0xff]
        %v9840 = vld [vmem:[%s9816 + $0xb8] sm:$0xff]
        %v9841 = vld [vmem:[%s9816 + $0xc0] sm:$0xff]
        %v9842 = vld [vmem:[%s9816 + $0xc8] sm:$0x11]
        %v9843 = vrot.slane %v9349, 3
        %v9844 = vrot.slane %v9351, 3
        %v9845 = vsel %vm1158, %v9843, %v9844
        %v9846 = vrot.slane %v9350, 3
        %v9847 = vrot.slane %v9352, 3
        %v9848 = vsel %vm1158, %v9846, %v9847
        %v9876 = vunpack.c.l.b16 %v9817
        %v9877 = vunpack.c.h.b16 %v9817
        %v9878 = vunpack.c.l.b16 %v9818
        %v9879 = vunpack.c.h.b16 %v9818
        %v9880 = vunpack.c.l.b16 %v9819
        %v9881 = vunpack.c.h.b16 %v9819
        %v9882 = vunpack.c.l.b16 %v9820
        %v9883 = vunpack.c.h.b16 %v9820
        %v9884 = vunpack.c.l.b16 %v9821
        %v9885 = vunpack.c.h.b16 %v9821
        %v9886 = vunpack.c.l.b16 %v9822
        %v9887 = vunpack.c.h.b16 %v9822
        %v9888 = vunpack.c.l.b16 %v9823
        %v9889 = vunpack.c.h.b16 %v9823
        %v9890 = vunpack.c.l.b16 %v9824
        %v9891 = vunpack.c.h.b16 %v9824
        %v9892 = vunpack.c.l.b16 %v9825
        %v9893 = vunpack.c.h.b16 %v9825
        %v9894 = vunpack.c.l.b16 %v9826
        %v9895 = vunpack.c.h.b16 %v9826
        %v9896 = vunpack.c.l.b16 %v9827
        %v9897 = vunpack.c.h.b16 %v9827
        %v9898 = vunpack.c.l.b16 %v9828
        %v9899 = vunpack.c.h.b16 %v9828
        %v9900 = vunpack.c.l.b16 %v9829
        %v9901 = vunpack.c.h.b16 %v9829
        %v9902 = vunpack.c.l.b16 %v9830
        %v9903 = vunpack.c.h.b16 %v9830
        %v9904 = vunpack.c.l.b16 %v9831
        %v9905 = vunpack.c.h.b16 %v9831
        %v9906 = vunpack.c.l.b16 %v9832
        %v9907 = vunpack.c.h.b16 %v9832
        %v9908 = vunpack.c.l.b16 %v9833
        %v9909 = vunpack.c.h.b16 %v9833
        %v9910 = vunpack.c.l.b16 %v9834
        %v9911 = vunpack.c.h.b16 %v9834
        %v9912 = vunpack.c.l.b16 %v9835
        %v9913 = vunpack.c.h.b16 %v9835
        %v9914 = vunpack.c.l.b16 %v9836
        %v9915 = vunpack.c.h.b16 %v9836
        %v9916 = vunpack.c.l.b16 %v9837
        %v9917 = vunpack.c.h.b16 %v9837
        %v9918 = vunpack.c.l.b16 %v9838
        %v9919 = vunpack.c.h.b16 %v9838
        %v9920 = vunpack.c.l.b16 %v9839
        %v9921 = vunpack.c.h.b16 %v9839
        %v9922 = vunpack.c.l.b16 %v9840
        %v9923 = vunpack.c.h.b16 %v9840
        %v9924 = vunpack.c.l.b16 %v9841
        %v9925 = vunpack.c.h.b16 %v9841
        %v9926 = vunpack.c.l.b16 %v9842
        %v9927 = vunpack.c.h.b16 %v9842
        %v9928 = vpack.c.b16 %v9878, %v9876
        %v9929 = vpack.c.b16 %v9879, %v9877
        %v9930 = vpack.c.b16 %v9882, %v9880
        %v9931 = vpack.c.b16 %v9883, %v9881
        %v9932 = vpack.c.b16 %v9886, %v9884
        %v9933 = vpack.c.b16 %v9887, %v9885
        %v9934 = vpack.c.b16 %v9890, %v9888
        %v9935 = vpack.c.b16 %v9891, %v9889
        %v9936 = vpack.c.b16 %v9894, %v9892
        %v9937 = vpack.c.b16 %v9895, %v9893
        %v9938 = vpack.c.b16 %v9898, %v9896
        %v9939 = vpack.c.b16 %v9899, %v9897
        %v9940 = vpack.c.b16 %v9902, %v9900
        %v9941 = vpack.c.b16 %v9903, %v9901
        %v9942 = vpack.c.b16 %v9906, %v9904
        %v9943 = vpack.c.b16 %v9907, %v9905
        %v9944 = vpack.c.b16 %v9910, %v9908
        %v9945 = vpack.c.b16 %v9911, %v9909
        %v9946 = vpack.c.b16 %v9914, %v9912
        %v9947 = vpack.c.b16 %v9915, %v9913
        %v9948 = vpack.c.b16 %v9918, %v9916
        %v9949 = vpack.c.b16 %v9919, %v9917
        %v9950 = vpack.c.b16 %v9922, %v9920
        %v9951 = vpack.c.b16 %v9923, %v9921
        %v9952 = vpack.c.b16 %v9926, %v9924
        %v9953 = vpack.c.b16 %v9927, %v9925
        %v9979 = vsel %vm305, %v9848, 0
        %v9982 = vand.u32 %v9952, %v867
        %v9985 = vand.u32 %v9953, %v867
        %9987 = vmatpush.bf16.msra.mxu0 %v9942
        %9988 = vmatpush.bf16.msra.mxu0 %v9940
        %9989 = vmatpush.bf16.msra.mxu0 %v9938
        %9990 = vmatpush.bf16.msra.mxu0 %v9936
        %9991 = vmatpush.bf16.msra.mxu0 %v9934
        %9992 = vmatpush.bf16.msra.mxu0 %v9932
        %9993 = vmatpush.bf16.msra.mxu0 %v9930
        %9994 = vmatpush.bf16.msra.mxu0 %v9928
        %9995 = vmatmul.bf16.gmra.mxu0 %v9845
        %v9996 = vpop.f32.mrf.mxu0
        %v9997 = vadd.f32 0.0, %v9996
        %v9998 = vpop.f32.mrf.mxu0
        %v9999 = vadd.f32 0.0, %v9998
        %10000 = vdwg.mxu0
        %10001 = vmatpush.bf16.msra.mxu0 0
        %10002 = vmatpush.bf16.msra.mxu0 0
        %10003 = vmatpush.bf16.msra.mxu0 0
        %10004 = vmatpush.bf16.msra.mxu0 %v9982
        %10005 = vmatpush.bf16.msra.mxu0 %v9950
        %10006 = vmatpush.bf16.msra.mxu0 %v9948
        %10007 = vmatpush.bf16.msra.mxu0 %v9946
        %10008 = vmatpush.bf16.msra.mxu0 %v9944
        %10009 = vmatmul.bf16.gmra.mxu0 %v9979
        %v10010 = vpop.f32.mrf.mxu0
        %v10011 = vadd.f32 %v9997, %v10010
        %v10012 = vpop.f32.mrf.mxu0
        %v10013 = vadd.f32 %v9999, %v10012
        %10014 = vdwg.mxu0
        %10015 = vmatpush.bf16.msra.mxu0 %v9943
        %10016 = vmatpush.bf16.msra.mxu0 %v9941
        %10017 = vmatpush.bf16.msra.mxu0 %v9939
        %10018 = vmatpush.bf16.msra.mxu0 %v9937
        %10019 = vmatpush.bf16.msra.mxu0 %v9935
        %10020 = vmatpush.bf16.msra.mxu0 %v9933
        %10021 = vmatpush.bf16.msra.mxu0 %v9931
        %10022 = vmatpush.bf16.msra.mxu0 %v9929
        %10023 = vmatmul.bf16.gmra.mxu0 %v9845
        %v10024 = vpop.f32.mrf.mxu0
        %v10025 = vadd.f32 0.0, %v10024
        %v10026 = vpop.f32.mrf.mxu0
        %v10027 = vadd.f32 0.0, %v10026
        %10028 = vdwg.mxu0
        %10029 = vmatpush.bf16.msra.mxu0 0
        %10030 = vmatpush.bf16.msra.mxu0 0
        %10031 = vmatpush.bf16.msra.mxu0 0
        %10032 = vmatpush.bf16.msra.mxu0 %v9985
        %10033 = vmatpush.bf16.msra.mxu0 %v9951
        %10034 = vmatpush.bf16.msra.mxu0 %v9949
        %10035 = vmatpush.bf16.msra.mxu0 %v9947
        %10036 = vmatpush.bf16.msra.mxu0 %v9945
        %10037 = vmatmul.bf16.gmra.mxu0 %v9979
        %v10038 = vpop.f32.mrf.mxu0
        %v10039 = vadd.f32 %v10025, %v10038
        %v10040 = vpop.f32.mrf.mxu0
        %v10041 = vadd.f32 %v10027, %v10040
        %10042 = vdwg.mxu0
        %v10043 = vadd.f32 %v9812, %v10011
        %v10044 = vadd.f32 %v9813, %v10039
        %v10045 = vadd.f32 %v9814, %v10013
        %v10046 = vadd.f32 %v9815, %v10041
        %s10047 = scalar_lea.vmem [#allocation10], 3952
        %v10048 = vld [vmem:[%s10047] sm:$0xff]
        %v10049 = vld [vmem:[%s10047 + $0x8] sm:$0xff]
        %v10050 = vld [vmem:[%s10047 + $0x10] sm:$0xff]
        %v10051 = vld [vmem:[%s10047 + $0x18] sm:$0xff]
        %v10052 = vld [vmem:[%s10047 + $0x20] sm:$0xff]
        %v10053 = vld [vmem:[%s10047 + $0x28] sm:$0xff]
        %v10054 = vld [vmem:[%s10047 + $0x30] sm:$0xff]
        %v10055 = vld [vmem:[%s10047 + $0x38] sm:$0xff]
        %v10056 = vld [vmem:[%s10047 + $0x40] sm:$0xff]
        %v10057 = vld [vmem:[%s10047 + $0x48] sm:$0xff]
        %v10058 = vld [vmem:[%s10047 + $0x50] sm:$0xff]
        %v10059 = vld [vmem:[%s10047 + $0x58] sm:$0xff]
        %v10060 = vld [vmem:[%s10047 + $0x60] sm:$0xff]
        %v10061 = vld [vmem:[%s10047 + $0x68] sm:$0xff]
        %v10062 = vld [vmem:[%s10047 + $0x70] sm:$0xff]
        %v10063 = vld [vmem:[%s10047 + $0x78] sm:$0xff]
        %v10064 = vld [vmem:[%s10047 + $0x80] sm:$0xff]
        %v10065 = vld [vmem:[%s10047 + $0x88] sm:$0xff]
        %v10066 = vld [vmem:[%s10047 + $0x90] sm:$0xff]
        %v10067 = vld [vmem:[%s10047 + $0x98] sm:$0xff]
        %v10068 = vld [vmem:[%s10047 + $0xa0] sm:$0xff]
        %v10069 = vld [vmem:[%s10047 + $0xa8] sm:$0xff]
        %v10070 = vld [vmem:[%s10047 + $0xb0] sm:$0xff]
        %v10071 = vld [vmem:[%s10047 + $0xb8] sm:$0xff]
        %v10072 = vld [vmem:[%s10047 + $0xc0] sm:$0xff]
        %v10073 = vld [vmem:[%s10047 + $0xc8] sm:$0x11]
        %v10074 = vrot.slane %v9585, 3
        %v10075 = vrot.slane %v9588, 4
        %v10076 = vor.u32 %v10074, %v10075
        %v10077 = vrot.slane %v9593, 3
        %v10078 = vrot.slane %v9596, 4
        %v10079 = vor.u32 %v10077, %v10078
        %v10080 = vsel %vm1390, %v10076, %v10079
        %v10081 = vrot.slane %v9602, 3
        %v10082 = vrot.slane %v9605, 4
        %v10083 = vor.u32 %v10081, %v10082
        %v10084 = vrot.slane %v9610, 3
        %v10085 = vrot.slane %v9613, 4
        %v10086 = vor.u32 %v10084, %v10085
        %v10087 = vsel %vm1390, %v10083, %v10086
        %v10115 = vunpack.c.l.b16 %v10048
        %v10116 = vunpack.c.h.b16 %v10048
        %v10117 = vunpack.c.l.b16 %v10049
        %v10118 = vunpack.c.h.b16 %v10049
        %v10119 = vunpack.c.l.b16 %v10050
        %v10120 = vunpack.c.h.b16 %v10050
        %v10121 = vunpack.c.l.b16 %v10051
        %v10122 = vunpack.c.h.b16 %v10051
        %v10123 = vunpack.c.l.b16 %v10052
        %v10124 = vunpack.c.h.b16 %v10052
        %v10125 = vunpack.c.l.b16 %v10053
        %v10126 = vunpack.c.h.b16 %v10053
        %v10127 = vunpack.c.l.b16 %v10054
        %v10128 = vunpack.c.h.b16 %v10054
        %v10129 = vunpack.c.l.b16 %v10055
        %v10130 = vunpack.c.h.b16 %v10055
        %v10131 = vunpack.c.l.b16 %v10056
        %v10132 = vunpack.c.h.b16 %v10056
        %v10133 = vunpack.c.l.b16 %v10057
        %v10134 = vunpack.c.h.b16 %v10057
        %v10135 = vunpack.c.l.b16 %v10058
        %v10136 = vunpack.c.h.b16 %v10058
        %v10137 = vunpack.c.l.b16 %v10059
        %v10138 = vunpack.c.h.b16 %v10059
        %v10139 = vunpack.c.l.b16 %v10060
        %v10140 = vunpack.c.h.b16 %v10060
        %v10141 = vunpack.c.l.b16 %v10061
        %v10142 = vunpack.c.h.b16 %v10061
        %v10143 = vunpack.c.l.b16 %v10062
        %v10144 = vunpack.c.h.b16 %v10062
        %v10145 = vunpack.c.l.b16 %v10063
        %v10146 = vunpack.c.h.b16 %v10063
        %v10147 = vunpack.c.l.b16 %v10064
        %v10148 = vunpack.c.h.b16 %v10064
        %v10149 = vunpack.c.l.b16 %v10065
        %v10150 = vunpack.c.h.b16 %v10065
        %v10151 = vunpack.c.l.b16 %v10066
        %v10152 = vunpack.c.h.b16 %v10066
        %v10153 = vunpack.c.l.b16 %v10067
        %v10154 = vunpack.c.h.b16 %v10067
        %v10155 = vunpack.c.l.b16 %v10068
        %v10156 = vunpack.c.h.b16 %v10068
        %v10157 = vunpack.c.l.b16 %v10069
        %v10158 = vunpack.c.h.b16 %v10069
        %v10159 = vunpack.c.l.b16 %v10070
        %v10160 = vunpack.c.h.b16 %v10070
        %v10161 = vunpack.c.l.b16 %v10071
        %v10162 = vunpack.c.h.b16 %v10071
        %v10163 = vunpack.c.l.b16 %v10072
        %v10164 = vunpack.c.h.b16 %v10072
        %v10165 = vunpack.c.l.b16 %v10073
        %v10166 = vunpack.c.h.b16 %v10073
        %v10167 = vpack.c.b16 %v10117, %v10115
        %v10168 = vpack.c.b16 %v10118, %v10116
        %v10169 = vpack.c.b16 %v10121, %v10119
        %v10170 = vpack.c.b16 %v10122, %v10120
        %v10171 = vpack.c.b16 %v10125, %v10123
        %v10172 = vpack.c.b16 %v10126, %v10124
        %v10173 = vpack.c.b16 %v10129, %v10127
        %v10174 = vpack.c.b16 %v10130, %v10128
        %v10175 = vpack.c.b16 %v10133, %v10131
        %v10176 = vpack.c.b16 %v10134, %v10132
        %v10177 = vpack.c.b16 %v10137, %v10135
        %v10178 = vpack.c.b16 %v10138, %v10136
        %v10179 = vpack.c.b16 %v10141, %v10139
        %v10180 = vpack.c.b16 %v10142, %v10140
        %v10181 = vpack.c.b16 %v10145, %v10143
        %v10182 = vpack.c.b16 %v10146, %v10144
        %v10183 = vpack.c.b16 %v10149, %v10147
        %v10184 = vpack.c.b16 %v10150, %v10148
        %v10185 = vpack.c.b16 %v10153, %v10151
        %v10186 = vpack.c.b16 %v10154, %v10152
        %v10187 = vpack.c.b16 %v10157, %v10155
        %v10188 = vpack.c.b16 %v10158, %v10156
        %v10189 = vpack.c.b16 %v10161, %v10159
        %v10190 = vpack.c.b16 %v10162, %v10160
        %v10191 = vpack.c.b16 %v10165, %v10163
        %v10192 = vpack.c.b16 %v10166, %v10164
        %v10218 = vsel %vm305, %v10087, 0
        %v10221 = vand.u32 %v10191, %v867
        %v10224 = vand.u32 %v10192, %v867
        %10226 = vmatpush.bf16.msra.mxu0 %v10181
        %10227 = vmatpush.bf16.msra.mxu0 %v10179
        %10228 = vmatpush.bf16.msra.mxu0 %v10177
        %10229 = vmatpush.bf16.msra.mxu0 %v10175
        %10230 = vmatpush.bf16.msra.mxu0 %v10173
        %10231 = vmatpush.bf16.msra.mxu0 %v10171
        %10232 = vmatpush.bf16.msra.mxu0 %v10169
        %10233 = vmatpush.bf16.msra.mxu0 %v10167
        %10234 = vmatmul.bf16.gmra.mxu0 %v10080
        %v10235 = vpop.f32.mrf.mxu0
        %v10236 = vadd.f32 0.0, %v10235
        %v10237 = vpop.f32.mrf.mxu0
        %v10238 = vadd.f32 0.0, %v10237
        %10239 = vdwg.mxu0
        %10240 = vmatpush.bf16.msra.mxu0 0
        %10241 = vmatpush.bf16.msra.mxu0 0
        %10242 = vmatpush.bf16.msra.mxu0 0
        %10243 = vmatpush.bf16.msra.mxu0 %v10221
        %10244 = vmatpush.bf16.msra.mxu0 %v10189
        %10245 = vmatpush.bf16.msra.mxu0 %v10187
        %10246 = vmatpush.bf16.msra.mxu0 %v10185
        %10247 = vmatpush.bf16.msra.mxu0 %v10183
        %10248 = vmatmul.bf16.gmra.mxu0 %v10218
        %v10249 = vpop.f32.mrf.mxu0
        %v10250 = vadd.f32 %v10236, %v10249
        %v10251 = vpop.f32.mrf.mxu0
        %v10252 = vadd.f32 %v10238, %v10251
        %10253 = vdwg.mxu0
        %10254 = vmatpush.bf16.msra.mxu0 %v10182
        %10255 = vmatpush.bf16.msra.mxu0 %v10180
        %10256 = vmatpush.bf16.msra.mxu0 %v10178
        %10257 = vmatpush.bf16.msra.mxu0 %v10176
        %10258 = vmatpush.bf16.msra.mxu0 %v10174
        %10259 = vmatpush.bf16.msra.mxu0 %v10172
        %10260 = vmatpush.bf16.msra.mxu0 %v10170
        %10261 = vmatpush.bf16.msra.mxu0 %v10168
        %10262 = vmatmul.bf16.gmra.mxu0 %v10080
        %v10263 = vpop.f32.mrf.mxu0
        %v10264 = vadd.f32 0.0, %v10263
        %v10265 = vpop.f32.mrf.mxu0
        %v10266 = vadd.f32 0.0, %v10265
        %10267 = vdwg.mxu0
        %10268 = vmatpush.bf16.msra.mxu0 0
        %10269 = vmatpush.bf16.msra.mxu0 0
        %10270 = vmatpush.bf16.msra.mxu0 0
        %10271 = vmatpush.bf16.msra.mxu0 %v10224
        %10272 = vmatpush.bf16.msra.mxu0 %v10190
        %10273 = vmatpush.bf16.msra.mxu0 %v10188
        %10274 = vmatpush.bf16.msra.mxu0 %v10186
        %10275 = vmatpush.bf16.msra.mxu0 %v10184
        %10276 = vmatmul.bf16.gmra.mxu0 %v10218
        %v10277 = vpop.f32.mrf.mxu0
        %v10278 = vadd.f32 %v10264, %v10277
        %v10279 = vpop.f32.mrf.mxu0
        %v10280 = vadd.f32 %v10266, %v10279
        %10281 = vdwg.mxu0
        %v10282 = vadd.f32 %v10043, %v10250
        %v10283 = vadd.f32 %v10044, %v10278
        %v10284 = vadd.f32 %v10045, %v10252
        %v10285 = vadd.f32 %v10046, %v10280
        %s10286 = scalar_lea.vmem [#allocation10], 4992
        %v10287 = vld [vmem:[%s10286] sm:$0xff]
        %v10288 = vld [vmem:[%s10286 + $0x8] sm:$0xff]
        %v10289 = vld [vmem:[%s10286 + $0x10] sm:$0xff]
        %v10290 = vld [vmem:[%s10286 + $0x18] sm:$0xff]
        %v10291 = vld [vmem:[%s10286 + $0x20] sm:$0xff]
        %v10292 = vld [vmem:[%s10286 + $0x28] sm:$0xff]
        %v10293 = vld [vmem:[%s10286 + $0x30] sm:$0xff]
        %v10294 = vld [vmem:[%s10286 + $0x38] sm:$0xff]
        %v10295 = vld [vmem:[%s10286 + $0x40] sm:$0xff]
        %v10296 = vld [vmem:[%s10286 + $0x48] sm:$0xff]
        %v10297 = vld [vmem:[%s10286 + $0x50] sm:$0xff]
        %v10298 = vld [vmem:[%s10286 + $0x58] sm:$0xff]
        %v10299 = vld [vmem:[%s10286 + $0x60] sm:$0xff]
        %v10300 = vld [vmem:[%s10286 + $0x68] sm:$0xff]
        %v10301 = vld [vmem:[%s10286 + $0x70] sm:$0xff]
        %v10302 = vld [vmem:[%s10286 + $0x78] sm:$0xff]
        %v10303 = vld [vmem:[%s10286 + $0x80] sm:$0xff]
        %v10304 = vld [vmem:[%s10286 + $0x88] sm:$0xff]
        %v10305 = vld [vmem:[%s10286 + $0x90] sm:$0xff]
        %v10306 = vld [vmem:[%s10286 + $0x98] sm:$0xff]
        %v10307 = vld [vmem:[%s10286 + $0xa0] sm:$0xff]
        %v10308 = vld [vmem:[%s10286 + $0xa8] sm:$0xff]
        %v10309 = vld [vmem:[%s10286 + $0xb0] sm:$0xff]
        %v10310 = vld [vmem:[%s10286 + $0xb8] sm:$0xff]
        %v10311 = vld [vmem:[%s10286 + $0xc0] sm:$0xff]
        %v10312 = vld [vmem:[%s10286 + $0xc8] sm:$0x11]
        %v10313 = vpack.c.b16 %v9347, %v9345
        %v10314 = vpack.c.b16 %v9348, %v9346
        %v10342 = vunpack.c.l.b16 %v10287
        %v10343 = vunpack.c.h.b16 %v10287
        %v10344 = vunpack.c.l.b16 %v10288
        %v10345 = vunpack.c.h.b16 %v10288
        %v10346 = vunpack.c.l.b16 %v10289
        %v10347 = vunpack.c.h.b16 %v10289
        %v10348 = vunpack.c.l.b16 %v10290
        %v10349 = vunpack.c.h.b16 %v10290
        %v10350 = vunpack.c.l.b16 %v10291
        %v10351 = vunpack.c.h.b16 %v10291
        %v10352 = vunpack.c.l.b16 %v10292
        %v10353 = vunpack.c.h.b16 %v10292
        %v10354 = vunpack.c.l.b16 %v10293
        %v10355 = vunpack.c.h.b16 %v10293
        %v10356 = vunpack.c.l.b16 %v10294
        %v10357 = vunpack.c.h.b16 %v10294
        %v10358 = vunpack.c.l.b16 %v10295
        %v10359 = vunpack.c.h.b16 %v10295
        %v10360 = vunpack.c.l.b16 %v10296
        %v10361 = vunpack.c.h.b16 %v10296
        %v10362 = vunpack.c.l.b16 %v10297
        %v10363 = vunpack.c.h.b16 %v10297
        %v10364 = vunpack.c.l.b16 %v10298
        %v10365 = vunpack.c.h.b16 %v10298
        %v10366 = vunpack.c.l.b16 %v10299
        %v10367 = vunpack.c.h.b16 %v10299
        %v10368 = vunpack.c.l.b16 %v10300
        %v10369 = vunpack.c.h.b16 %v10300
        %v10370 = vunpack.c.l.b16 %v10301
        %v10371 = vunpack.c.h.b16 %v10301
        %v10372 = vunpack.c.l.b16 %v10302
        %v10373 = vunpack.c.h.b16 %v10302
        %v10374 = vunpack.c.l.b16 %v10303
        %v10375 = vunpack.c.h.b16 %v10303
        %v10376 = vunpack.c.l.b16 %v10304
        %v10377 = vunpack.c.h.b16 %v10304
        %v10378 = vunpack.c.l.b16 %v10305
        %v10379 = vunpack.c.h.b16 %v10305
        %v10380 = vunpack.c.l.b16 %v10306
        %v10381 = vunpack.c.h.b16 %v10306
        %v10382 = vunpack.c.l.b16 %v10307
        %v10383 = vunpack.c.h.b16 %v10307
        %v10384 = vunpack.c.l.b16 %v10308
        %v10385 = vunpack.c.h.b16 %v10308
        %v10386 = vunpack.c.l.b16 %v10309
        %v10387 = vunpack.c.h.b16 %v10309
        %v10388 = vunpack.c.l.b16 %v10310
        %v10389 = vunpack.c.h.b16 %v10310
        %v10390 = vunpack.c.l.b16 %v10311
        %v10391 = vunpack.c.h.b16 %v10311
        %v10392 = vunpack.c.l.b16 %v10312
        %v10393 = vunpack.c.h.b16 %v10312
        %v10394 = vpack.c.b16 %v10344, %v10342
        %v10395 = vpack.c.b16 %v10345, %v10343
        %v10396 = vpack.c.b16 %v10348, %v10346
        %v10397 = vpack.c.b16 %v10349, %v10347
        %v10398 = vpack.c.b16 %v10352, %v10350
        %v10399 = vpack.c.b16 %v10353, %v10351
        %v10400 = vpack.c.b16 %v10356, %v10354
        %v10401 = vpack.c.b16 %v10357, %v10355
        %v10402 = vpack.c.b16 %v10360, %v10358
        %v10403 = vpack.c.b16 %v10361, %v10359
        %v10404 = vpack.c.b16 %v10364, %v10362
        %v10405 = vpack.c.b16 %v10365, %v10363
        %v10406 = vpack.c.b16 %v10368, %v10366
        %v10407 = vpack.c.b16 %v10369, %v10367
        %v10408 = vpack.c.b16 %v10372, %v10370
        %v10409 = vpack.c.b16 %v10373, %v10371
        %v10410 = vpack.c.b16 %v10376, %v10374
        %v10411 = vpack.c.b16 %v10377, %v10375
        %v10412 = vpack.c.b16 %v10380, %v10378
        %v10413 = vpack.c.b16 %v10381, %v10379
        %v10414 = vpack.c.b16 %v10384, %v10382
        %v10415 = vpack.c.b16 %v10385, %v10383
        %v10416 = vpack.c.b16 %v10388, %v10386
        %v10417 = vpack.c.b16 %v10389, %v10387
        %v10418 = vpack.c.b16 %v10392, %v10390
        %v10419 = vpack.c.b16 %v10393, %v10391
        %v10445 = vsel %vm305, %v10314, 0
        %v10448 = vand.u32 %v10418, %v867
        %v10451 = vand.u32 %v10419, %v867
        %10453 = vmatpush.bf16.msra.mxu0 %v10408
        %10454 = vmatpush.bf16.msra.mxu0 %v10406
        %10455 = vmatpush.bf16.msra.mxu0 %v10404
        %10456 = vmatpush.bf16.msra.mxu0 %v10402
        %10457 = vmatpush.bf16.msra.mxu0 %v10400
        %10458 = vmatpush.bf16.msra.mxu0 %v10398
        %10459 = vmatpush.bf16.msra.mxu0 %v10396
        %10460 = vmatpush.bf16.msra.mxu0 %v10394
        %10461 = vmatmul.bf16.gmra.mxu0 %v10313
        %v10462 = vpop.f32.mrf.mxu0
        %v10463 = vadd.f32 0.0, %v10462
        %v10464 = vpop.f32.mrf.mxu0
        %v10465 = vadd.f32 0.0, %v10464
        %10466 = vdwg.mxu0
        %10467 = vmatpush.bf16.msra.mxu0 0
        %10468 = vmatpush.bf16.msra.mxu0 0
        %10469 = vmatpush.bf16.msra.mxu0 0
        %10470 = vmatpush.bf16.msra.mxu0 %v10448
        %10471 = vmatpush.bf16.msra.mxu0 %v10416
        %10472 = vmatpush.bf16.msra.mxu0 %v10414
        %10473 = vmatpush.bf16.msra.mxu0 %v10412
        %10474 = vmatpush.bf16.msra.mxu0 %v10410
        %10475 = vmatmul.bf16.gmra.mxu0 %v10445
        %v10476 = vpop.f32.mrf.mxu0
        %v10477 = vadd.f32 %v10463, %v10476
        %v10478 = vpop.f32.mrf.mxu0
        %v10479 = vadd.f32 %v10465, %v10478
        %10480 = vdwg.mxu0
        %10481 = vmatpush.bf16.msra.mxu0 %v10409
        %10482 = vmatpush.bf16.msra.mxu0 %v10407
        %10483 = vmatpush.bf16.msra.mxu0 %v10405
        %10484 = vmatpush.bf16.msra.mxu0 %v10403
        %10485 = vmatpush.bf16.msra.mxu0 %v10401
        %10486 = vmatpush.bf16.msra.mxu0 %v10399
        %10487 = vmatpush.bf16.msra.mxu0 %v10397
        %10488 = vmatpush.bf16.msra.mxu0 %v10395
        %10489 = vmatmul.bf16.gmra.mxu0 %v10313
        %v10490 = vpop.f32.mrf.mxu0
        %v10491 = vadd.f32 0.0, %v10490
        %v10492 = vpop.f32.mrf.mxu0
        %v10493 = vadd.f32 0.0, %v10492
        %10494 = vdwg.mxu0
        %10495 = vmatpush.bf16.msra.mxu0 0
        %10496 = vmatpush.bf16.msra.mxu0 0
        %10497 = vmatpush.bf16.msra.mxu0 0
        %10498 = vmatpush.bf16.msra.mxu0 %v10451
        %10499 = vmatpush.bf16.msra.mxu0 %v10417
        %10500 = vmatpush.bf16.msra.mxu0 %v10415
        %10501 = vmatpush.bf16.msra.mxu0 %v10413
        %10502 = vmatpush.bf16.msra.mxu0 %v10411
        %10503 = vmatmul.bf16.gmra.mxu0 %v10445
        %v10504 = vpop.f32.mrf.mxu0
        %v10505 = vadd.f32 %v10491, %v10504
        %v10506 = vpop.f32.mrf.mxu0
        %v10507 = vadd.f32 %v10493, %v10506
        %10508 = vdwg.mxu0
        %v10509 = vadd.f32 %v10282, %v10477
        %v10510 = vadd.f32 %v10283, %v10505
        %v10511 = vadd.f32 %v10284, %v10479
        %v10512 = vadd.f32 %v10285, %v10507
        %s10513 = scalar_lea.vmem [#allocation10], 6032
        %v10514 = vld [vmem:[%s10513] sm:$0xff]
        %v10515 = vld [vmem:[%s10513 + $0x8] sm:$0xff]
        %v10516 = vld [vmem:[%s10513 + $0x10] sm:$0xff]
        %v10517 = vld [vmem:[%s10513 + $0x18] sm:$0xff]
        %v10518 = vld [vmem:[%s10513 + $0x20] sm:$0xff]
        %v10519 = vld [vmem:[%s10513 + $0x28] sm:$0xff]
        %v10520 = vld [vmem:[%s10513 + $0x30] sm:$0xff]
        %v10521 = vld [vmem:[%s10513 + $0x38] sm:$0xff]
        %v10522 = vld [vmem:[%s10513 + $0x40] sm:$0xff]
        %v10523 = vld [vmem:[%s10513 + $0x48] sm:$0xff]
        %v10524 = vld [vmem:[%s10513 + $0x50] sm:$0xff]
        %v10525 = vld [vmem:[%s10513 + $0x58] sm:$0xff]
        %v10526 = vld [vmem:[%s10513 + $0x60] sm:$0xff]
        %v10527 = vld [vmem:[%s10513 + $0x68] sm:$0xff]
        %v10528 = vld [vmem:[%s10513 + $0x70] sm:$0xff]
        %v10529 = vld [vmem:[%s10513 + $0x78] sm:$0xff]
        %v10530 = vld [vmem:[%s10513 + $0x80] sm:$0xff]
        %v10531 = vld [vmem:[%s10513 + $0x88] sm:$0xff]
        %v10532 = vld [vmem:[%s10513 + $0x90] sm:$0xff]
        %v10533 = vld [vmem:[%s10513 + $0x98] sm:$0xff]
        %v10534 = vld [vmem:[%s10513 + $0xa0] sm:$0xff]
        %v10535 = vld [vmem:[%s10513 + $0xa8] sm:$0xff]
        %v10536 = vld [vmem:[%s10513 + $0xb0] sm:$0xff]
        %v10537 = vld [vmem:[%s10513 + $0xb8] sm:$0xff]
        %v10538 = vld [vmem:[%s10513 + $0xc0] sm:$0xff]
        %v10539 = vld [vmem:[%s10513 + $0xc8] sm:$0x11]
        %v10541 = vunpack.c.l.b16 %v9312
        %v10542 = vunpack.c.h.b16 %v9312
        %v10543 = vpack.c.b16 %v10541, %v10541
        %v10544 = vpack.c.b16 %v10542, %v10542
        %v10546 = vshrl.u32 %v10313, 16
        %v10548 = vshll.u32 %v10313, 16
        %v10550 = vrot.slane %v10548, 1
        %v10551 = vor.u32 %v10546, %v10550
        %v10553 = vshll.u32 %v10543, 16
        %v10555 = vrot.slane %v10553, 1
        %v10556 = vsel %vm1862, %v10551, %v10555
        %v10557 = vshrl.u32 %v10314, 16
        %v10559 = vshll.u32 %v10314, 16
        %v10561 = vrot.slane %v10559, 1
        %v10562 = vor.u32 %v10557, %v10561
        %v10564 = vshll.u32 %v10544, 16
        %v10566 = vrot.slane %v10564, 1
        %v10567 = vsel %vm1862, %v10562, %v10566
        %v10595 = vunpack.c.l.b16 %v10514
        %v10596 = vunpack.c.h.b16 %v10514
        %v10597 = vunpack.c.l.b16 %v10515
        %v10598 = vunpack.c.h.b16 %v10515
        %v10599 = vunpack.c.l.b16 %v10516
        %v10600 = vunpack.c.h.b16 %v10516
        %v10601 = vunpack.c.l.b16 %v10517
        %v10602 = vunpack.c.h.b16 %v10517
        %v10603 = vunpack.c.l.b16 %v10518
        %v10604 = vunpack.c.h.b16 %v10518
        %v10605 = vunpack.c.l.b16 %v10519
        %v10606 = vunpack.c.h.b16 %v10519
        %v10607 = vunpack.c.l.b16 %v10520
        %v10608 = vunpack.c.h.b16 %v10520
        %v10609 = vunpack.c.l.b16 %v10521
        %v10610 = vunpack.c.h.b16 %v10521
        %v10611 = vunpack.c.l.b16 %v10522
        %v10612 = vunpack.c.h.b16 %v10522
        %v10613 = vunpack.c.l.b16 %v10523
        %v10614 = vunpack.c.h.b16 %v10523
        %v10615 = vunpack.c.l.b16 %v10524
        %v10616 = vunpack.c.h.b16 %v10524
        %v10617 = vunpack.c.l.b16 %v10525
        %v10618 = vunpack.c.h.b16 %v10525
        %v10619 = vunpack.c.l.b16 %v10526
        %v10620 = vunpack.c.h.b16 %v10526
        %v10621 = vunpack.c.l.b16 %v10527
        %v10622 = vunpack.c.h.b16 %v10527
        %v10623 = vunpack.c.l.b16 %v10528
        %v10624 = vunpack.c.h.b16 %v10528
        %v10625 = vunpack.c.l.b16 %v10529
        %v10626 = vunpack.c.h.b16 %v10529
        %v10627 = vunpack.c.l.b16 %v10530
        %v10628 = vunpack.c.h.b16 %v10530
        %v10629 = vunpack.c.l.b16 %v10531
        %v10630 = vunpack.c.h.b16 %v10531
        %v10631 = vunpack.c.l.b16 %v10532
        %v10632 = vunpack.c.h.b16 %v10532
        %v10633 = vunpack.c.l.b16 %v10533
        %v10634 = vunpack.c.h.b16 %v10533
        %v10635 = vunpack.c.l.b16 %v10534
        %v10636 = vunpack.c.h.b16 %v10534
        %v10637 = vunpack.c.l.b16 %v10535
        %v10638 = vunpack.c.h.b16 %v10535
        %v10639 = vunpack.c.l.b16 %v10536
        %v10640 = vunpack.c.h.b16 %v10536
        %v10641 = vunpack.c.l.b16 %v10537
        %v10642 = vunpack.c.h.b16 %v10537
        %v10643 = vunpack.c.l.b16 %v10538
        %v10644 = vunpack.c.h.b16 %v10538
        %v10645 = vunpack.c.l.b16 %v10539
        %v10646 = vunpack.c.h.b16 %v10539
        %v10647 = vpack.c.b16 %v10597, %v10595
        %v10648 = vpack.c.b16 %v10598, %v10596
        %v10649 = vpack.c.b16 %v10601, %v10599
        %v10650 = vpack.c.b16 %v10602, %v10600
        %v10651 = vpack.c.b16 %v10605, %v10603
        %v10652 = vpack.c.b16 %v10606, %v10604
        %v10653 = vpack.c.b16 %v10609, %v10607
        %v10654 = vpack.c.b16 %v10610, %v10608
        %v10655 = vpack.c.b16 %v10613, %v10611
        %v10656 = vpack.c.b16 %v10614, %v10612
        %v10657 = vpack.c.b16 %v10617, %v10615
        %v10658 = vpack.c.b16 %v10618, %v10616
        %v10659 = vpack.c.b16 %v10621, %v10619
        %v10660 = vpack.c.b16 %v10622, %v10620
        %v10661 = vpack.c.b16 %v10625, %v10623
        %v10662 = vpack.c.b16 %v10626, %v10624
        %v10663 = vpack.c.b16 %v10629, %v10627
        %v10664 = vpack.c.b16 %v10630, %v10628
        %v10665 = vpack.c.b16 %v10633, %v10631
        %v10666 = vpack.c.b16 %v10634, %v10632
        %v10667 = vpack.c.b16 %v10637, %v10635
        %v10668 = vpack.c.b16 %v10638, %v10636
        %v10669 = vpack.c.b16 %v10641, %v10639
        %v10670 = vpack.c.b16 %v10642, %v10640
        %v10671 = vpack.c.b16 %v10645, %v10643
        %v10672 = vpack.c.b16 %v10646, %v10644
        %v10698 = vsel %vm305, %v10567, 0
        %v10701 = vand.u32 %v10671, %v867
        %v10704 = vand.u32 %v10672, %v867
        %10706 = vmatpush.bf16.msra.mxu0 %v10661
        %10707 = vmatpush.bf16.msra.mxu0 %v10659
        %10708 = vmatpush.bf16.msra.mxu0 %v10657
        %10709 = vmatpush.bf16.msra.mxu0 %v10655
        %10710 = vmatpush.bf16.msra.mxu0 %v10653
        %10711 = vmatpush.bf16.msra.mxu0 %v10651
        %10712 = vmatpush.bf16.msra.mxu0 %v10649
        %10713 = vmatpush.bf16.msra.mxu0 %v10647
        %10714 = vmatmul.bf16.gmra.mxu0 %v10556
        %v10715 = vpop.f32.mrf.mxu0
        %v10716 = vadd.f32 0.0, %v10715
        %v10717 = vpop.f32.mrf.mxu0
        %v10718 = vadd.f32 0.0, %v10717
        %10719 = vdwg.mxu0
        %10720 = vmatpush.bf16.msra.mxu0 0
        %10721 = vmatpush.bf16.msra.mxu0 0
        %10722 = vmatpush.bf16.msra.mxu0 0
        %10723 = vmatpush.bf16.msra.mxu0 %v10701
        %10724 = vmatpush.bf16.msra.mxu0 %v10669
        %10725 = vmatpush.bf16.msra.mxu0 %v10667
        %10726 = vmatpush.bf16.msra.mxu0 %v10665
        %10727 = vmatpush.bf16.msra.mxu0 %v10663
        %10728 = vmatmul.bf16.gmra.mxu0 %v10698
        %v10729 = vpop.f32.mrf.mxu0
        %v10730 = vadd.f32 %v10716, %v10729
        %v10731 = vpop.f32.mrf.mxu0
        %v10732 = vadd.f32 %v10718, %v10731
        %10733 = vdwg.mxu0
        %10734 = vmatpush.bf16.msra.mxu0 %v10662
        %10735 = vmatpush.bf16.msra.mxu0 %v10660
        %10736 = vmatpush.bf16.msra.mxu0 %v10658
        %10737 = vmatpush.bf16.msra.mxu0 %v10656
        %10738 = vmatpush.bf16.msra.mxu0 %v10654
        %10739 = vmatpush.bf16.msra.mxu0 %v10652
        %10740 = vmatpush.bf16.msra.mxu0 %v10650
        %10741 = vmatpush.bf16.msra.mxu0 %v10648
        %10742 = vmatmul.bf16.gmra.mxu0 %v10556
        %v10743 = vpop.f32.mrf.mxu0
        %v10744 = vadd.f32 0.0, %v10743
        %v10745 = vpop.f32.mrf.mxu0
        %v10746 = vadd.f32 0.0, %v10745
        %10747 = vdwg.mxu0
        %10748 = vmatpush.bf16.msra.mxu0 0
        %10749 = vmatpush.bf16.msra.mxu0 0
        %10750 = vmatpush.bf16.msra.mxu0 0
        %10751 = vmatpush.bf16.msra.mxu0 %v10704
        %10752 = vmatpush.bf16.msra.mxu0 %v10670
        %10753 = vmatpush.bf16.msra.mxu0 %v10668
        %10754 = vmatpush.bf16.msra.mxu0 %v10666
        %10755 = vmatpush.bf16.msra.mxu0 %v10664
        %10756 = vmatmul.bf16.gmra.mxu0 %v10698
        %v10757 = vpop.f32.mrf.mxu0
        %v10758 = vadd.f32 %v10744, %v10757
        %v10759 = vpop.f32.mrf.mxu0
        %v10760 = vadd.f32 %v10746, %v10759
        %10761 = vdwg.mxu0
        %v10762 = vadd.f32 %v10509, %v10730
        %v10763 = vadd.f32 %v10510, %v10758
        %v10764 = vadd.f32 %v10511, %v10732
        %v10765 = vadd.f32 %v10512, %v10760
        %s10766 = scalar_lea.vmem [#allocation10], 7072
        %v10767 = vld [vmem:[%s10766] sm:$0xff]
        %v10768 = vld [vmem:[%s10766 + $0x8] sm:$0xff]
        %v10769 = vld [vmem:[%s10766 + $0x10] sm:$0xff]
        %v10770 = vld [vmem:[%s10766 + $0x18] sm:$0xff]
        %v10771 = vld [vmem:[%s10766 + $0x20] sm:$0xff]
        %v10772 = vld [vmem:[%s10766 + $0x28] sm:$0xff]
        %v10773 = vld [vmem:[%s10766 + $0x30] sm:$0xff]
        %v10774 = vld [vmem:[%s10766 + $0x38] sm:$0xff]
        %v10775 = vld [vmem:[%s10766 + $0x40] sm:$0xff]
        %v10776 = vld [vmem:[%s10766 + $0x48] sm:$0xff]
        %v10777 = vld [vmem:[%s10766 + $0x50] sm:$0xff]
        %v10778 = vld [vmem:[%s10766 + $0x58] sm:$0xff]
        %v10779 = vld [vmem:[%s10766 + $0x60] sm:$0xff]
        %v10780 = vld [vmem:[%s10766 + $0x68] sm:$0xff]
        %v10781 = vld [vmem:[%s10766 + $0x70] sm:$0xff]
        %v10782 = vld [vmem:[%s10766 + $0x78] sm:$0xff]
        %v10783 = vld [vmem:[%s10766 + $0x80] sm:$0xff]
        %v10784 = vld [vmem:[%s10766 + $0x88] sm:$0xff]
        %v10785 = vld [vmem:[%s10766 + $0x90] sm:$0xff]
        %v10786 = vld [vmem:[%s10766 + $0x98] sm:$0xff]
        %v10787 = vld [vmem:[%s10766 + $0xa0] sm:$0xff]
        %v10788 = vld [vmem:[%s10766 + $0xa8] sm:$0xff]
        %v10789 = vld [vmem:[%s10766 + $0xb0] sm:$0xff]
        %v10790 = vld [vmem:[%s10766 + $0xb8] sm:$0xff]
        %v10791 = vld [vmem:[%s10766 + $0xc0] sm:$0xff]
        %v10792 = vld [vmem:[%s10766 + $0xc8] sm:$0x11]
        %v10793 = vrot.slane %v10313, 1
        %v10794 = vrot.slane %v10543, 1
        %v10795 = vsel %vm2111, %v10793, %v10794
        %v10796 = vrot.slane %v10314, 1
        %v10797 = vrot.slane %v10544, 1
        %v10798 = vsel %vm2111, %v10796, %v10797
        %v10826 = vunpack.c.l.b16 %v10767
        %v10827 = vunpack.c.h.b16 %v10767
        %v10828 = vunpack.c.l.b16 %v10768
        %v10829 = vunpack.c.h.b16 %v10768
        %v10830 = vunpack.c.l.b16 %v10769
        %v10831 = vunpack.c.h.b16 %v10769
        %v10832 = vunpack.c.l.b16 %v10770
        %v10833 = vunpack.c.h.b16 %v10770
        %v10834 = vunpack.c.l.b16 %v10771
        %v10835 = vunpack.c.h.b16 %v10771
        %v10836 = vunpack.c.l.b16 %v10772
        %v10837 = vunpack.c.h.b16 %v10772
        %v10838 = vunpack.c.l.b16 %v10773
        %v10839 = vunpack.c.h.b16 %v10773
        %v10840 = vunpack.c.l.b16 %v10774
        %v10841 = vunpack.c.h.b16 %v10774
        %v10842 = vunpack.c.l.b16 %v10775
        %v10843 = vunpack.c.h.b16 %v10775
        %v10844 = vunpack.c.l.b16 %v10776
        %v10845 = vunpack.c.h.b16 %v10776
        %v10846 = vunpack.c.l.b16 %v10777
        %v10847 = vunpack.c.h.b16 %v10777
        %v10848 = vunpack.c.l.b16 %v10778
        %v10849 = vunpack.c.h.b16 %v10778
        %v10850 = vunpack.c.l.b16 %v10779
        %v10851 = vunpack.c.h.b16 %v10779
        %v10852 = vunpack.c.l.b16 %v10780
        %v10853 = vunpack.c.h.b16 %v10780
        %v10854 = vunpack.c.l.b16 %v10781
        %v10855 = vunpack.c.h.b16 %v10781
        %v10856 = vunpack.c.l.b16 %v10782
        %v10857 = vunpack.c.h.b16 %v10782
        %v10858 = vunpack.c.l.b16 %v10783
        %v10859 = vunpack.c.h.b16 %v10783
        %v10860 = vunpack.c.l.b16 %v10784
        %v10861 = vunpack.c.h.b16 %v10784
        %v10862 = vunpack.c.l.b16 %v10785
        %v10863 = vunpack.c.h.b16 %v10785
        %v10864 = vunpack.c.l.b16 %v10786
        %v10865 = vunpack.c.h.b16 %v10786
        %v10866 = vunpack.c.l.b16 %v10787
        %v10867 = vunpack.c.h.b16 %v10787
        %v10868 = vunpack.c.l.b16 %v10788
        %v10869 = vunpack.c.h.b16 %v10788
        %v10870 = vunpack.c.l.b16 %v10789
        %v10871 = vunpack.c.h.b16 %v10789
        %v10872 = vunpack.c.l.b16 %v10790
        %v10873 = vunpack.c.h.b16 %v10790
        %v10874 = vunpack.c.l.b16 %v10791
        %v10875 = vunpack.c.h.b16 %v10791
        %v10876 = vunpack.c.l.b16 %v10792
        %v10877 = vunpack.c.h.b16 %v10792
        %v10878 = vpack.c.b16 %v10828, %v10826
        %v10879 = vpack.c.b16 %v10829, %v10827
        %v10880 = vpack.c.b16 %v10832, %v10830
        %v10881 = vpack.c.b16 %v10833, %v10831
        %v10882 = vpack.c.b16 %v10836, %v10834
        %v10883 = vpack.c.b16 %v10837, %v10835
        %v10884 = vpack.c.b16 %v10840, %v10838
        %v10885 = vpack.c.b16 %v10841, %v10839
        %v10886 = vpack.c.b16 %v10844, %v10842
        %v10887 = vpack.c.b16 %v10845, %v10843
        %v10888 = vpack.c.b16 %v10848, %v10846
        %v10889 = vpack.c.b16 %v10849, %v10847
        %v10890 = vpack.c.b16 %v10852, %v10850
        %v10891 = vpack.c.b16 %v10853, %v10851
        %v10892 = vpack.c.b16 %v10856, %v10854
        %v10893 = vpack.c.b16 %v10857, %v10855
        %v10894 = vpack.c.b16 %v10860, %v10858
        %v10895 = vpack.c.b16 %v10861, %v10859
        %v10896 = vpack.c.b16 %v10864, %v10862
        %v10897 = vpack.c.b16 %v10865, %v10863
        %v10898 = vpack.c.b16 %v10868, %v10866
        %v10899 = vpack.c.b16 %v10869, %v10867
        %v10900 = vpack.c.b16 %v10872, %v10870
        %v10901 = vpack.c.b16 %v10873, %v10871
        %v10902 = vpack.c.b16 %v10876, %v10874
        %v10903 = vpack.c.b16 %v10877, %v10875
        %v10929 = vsel %vm305, %v10798, 0
        %v10932 = vand.u32 %v10902, %v867
        %v10935 = vand.u32 %v10903, %v867
        %10937 = vmatpush.bf16.msra.mxu0 %v10892
        %10938 = vmatpush.bf16.msra.mxu0 %v10890
        %10939 = vmatpush.bf16.msra.mxu0 %v10888
        %10940 = vmatpush.bf16.msra.mxu0 %v10886
        %10941 = vmatpush.bf16.msra.mxu0 %v10884
        %10942 = vmatpush.bf16.msra.mxu0 %v10882
        %10943 = vmatpush.bf16.msra.mxu0 %v10880
        %10944 = vmatpush.bf16.msra.mxu0 %v10878
        %10945 = vmatmul.bf16.gmra.mxu0 %v10795
        %v10946 = vpop.f32.mrf.mxu0
        %v10947 = vadd.f32 0.0, %v10946
        %v10948 = vpop.f32.mrf.mxu0
        %v10949 = vadd.f32 0.0, %v10948
        %10950 = vdwg.mxu0
        %10951 = vmatpush.bf16.msra.mxu0 0
        %10952 = vmatpush.bf16.msra.mxu0 0
        %10953 = vmatpush.bf16.msra.mxu0 0
        %10954 = vmatpush.bf16.msra.mxu0 %v10932
        %10955 = vmatpush.bf16.msra.mxu0 %v10900
        %10956 = vmatpush.bf16.msra.mxu0 %v10898
        %10957 = vmatpush.bf16.msra.mxu0 %v10896
        %10958 = vmatpush.bf16.msra.mxu0 %v10894
        %10959 = vmatmul.bf16.gmra.mxu0 %v10929
        %v10960 = vpop.f32.mrf.mxu0
        %v10961 = vadd.f32 %v10947, %v10960
        %v10962 = vpop.f32.mrf.mxu0
        %v10963 = vadd.f32 %v10949, %v10962
        %10964 = vdwg.mxu0
        %10965 = vmatpush.bf16.msra.mxu0 %v10893
        %10966 = vmatpush.bf16.msra.mxu0 %v10891
        %10967 = vmatpush.bf16.msra.mxu0 %v10889
        %10968 = vmatpush.bf16.msra.mxu0 %v10887
        %10969 = vmatpush.bf16.msra.mxu0 %v10885
        %10970 = vmatpush.bf16.msra.mxu0 %v10883
        %10971 = vmatpush.bf16.msra.mxu0 %v10881
        %10972 = vmatpush.bf16.msra.mxu0 %v10879
        %10973 = vmatmul.bf16.gmra.mxu0 %v10795
        %v10974 = vpop.f32.mrf.mxu0
        %v10975 = vadd.f32 0.0, %v10974
        %v10976 = vpop.f32.mrf.mxu0
        %v10977 = vadd.f32 0.0, %v10976
        %10978 = vdwg.mxu0
        %10979 = vmatpush.bf16.msra.mxu0 0
        %10980 = vmatpush.bf16.msra.mxu0 0
        %10981 = vmatpush.bf16.msra.mxu0 0
        %10982 = vmatpush.bf16.msra.mxu0 %v10935
        %10983 = vmatpush.bf16.msra.mxu0 %v10901
        %10984 = vmatpush.bf16.msra.mxu0 %v10899
        %10985 = vmatpush.bf16.msra.mxu0 %v10897
        %10986 = vmatpush.bf16.msra.mxu0 %v10895
        %10987 = vmatmul.bf16.gmra.mxu0 %v10929
        %v10988 = vpop.f32.mrf.mxu0
        %v10989 = vadd.f32 %v10975, %v10988
        %v10990 = vpop.f32.mrf.mxu0
        %v10991 = vadd.f32 %v10977, %v10990
        %10992 = vdwg.mxu0
        %v10993 = vadd.f32 %v10762, %v10961
        %v10994 = vadd.f32 %v10763, %v10989
        %v10995 = vadd.f32 %v10764, %v10963
        %v10996 = vadd.f32 %v10765, %v10991
        %s10997 = scalar_lea.vmem [#allocation10], 8112
        %v10998 = vld [vmem:[%s10997] sm:$0xff]
        %v10999 = vld [vmem:[%s10997 + $0x8] sm:$0xff]
        %v11000 = vld [vmem:[%s10997 + $0x10] sm:$0xff]
        %v11001 = vld [vmem:[%s10997 + $0x18] sm:$0xff]
        %v11002 = vld [vmem:[%s10997 + $0x20] sm:$0xff]
        %v11003 = vld [vmem:[%s10997 + $0x28] sm:$0xff]
        %v11004 = vld [vmem:[%s10997 + $0x30] sm:$0xff]
        %v11005 = vld [vmem:[%s10997 + $0x38] sm:$0xff]
        %v11006 = vld [vmem:[%s10997 + $0x40] sm:$0xff]
        %v11007 = vld [vmem:[%s10997 + $0x48] sm:$0xff]
        %v11008 = vld [vmem:[%s10997 + $0x50] sm:$0xff]
        %v11009 = vld [vmem:[%s10997 + $0x58] sm:$0xff]
        %v11010 = vld [vmem:[%s10997 + $0x60] sm:$0xff]
        %v11011 = vld [vmem:[%s10997 + $0x68] sm:$0xff]
        %v11012 = vld [vmem:[%s10997 + $0x70] sm:$0xff]
        %v11013 = vld [vmem:[%s10997 + $0x78] sm:$0xff]
        %v11014 = vld [vmem:[%s10997 + $0x80] sm:$0xff]
        %v11015 = vld [vmem:[%s10997 + $0x88] sm:$0xff]
        %v11016 = vld [vmem:[%s10997 + $0x90] sm:$0xff]
        %v11017 = vld [vmem:[%s10997 + $0x98] sm:$0xff]
        %v11018 = vld [vmem:[%s10997 + $0xa0] sm:$0xff]
        %v11019 = vld [vmem:[%s10997 + $0xa8] sm:$0xff]
        %v11020 = vld [vmem:[%s10997 + $0xb0] sm:$0xff]
        %v11021 = vld [vmem:[%s10997 + $0xb8] sm:$0xff]
        %v11022 = vld [vmem:[%s10997 + $0xc0] sm:$0xff]
        %v11023 = vld [vmem:[%s10997 + $0xc8] sm:$0x11]
        %v11024 = vrot.slane %v10546, 1
        %v11025 = vrot.slane %v10548, 2
        %v11026 = vor.u32 %v11024, %v11025
        %v11027 = vshrl.u32 %v10543, 16
        %v11029 = vrot.slane %v11027, 1
        %v11030 = vrot.slane %v10553, 2
        %v11031 = vor.u32 %v11029, %v11030
        %v11032 = vsel %vm2343, %v11026, %v11031
        %v11033 = vrot.slane %v10557, 1
        %v11034 = vrot.slane %v10559, 2
        %v11035 = vor.u32 %v11033, %v11034
        %v11036 = vshrl.u32 %v10544, 16
        %v11038 = vrot.slane %v11036, 1
        %v11039 = vrot.slane %v10564, 2
        %v11040 = vor.u32 %v11038, %v11039
        %v11041 = vsel %vm2343, %v11035, %v11040
        %v11069 = vunpack.c.l.b16 %v10998
        %v11070 = vunpack.c.h.b16 %v10998
        %v11071 = vunpack.c.l.b16 %v10999
        %v11072 = vunpack.c.h.b16 %v10999
        %v11073 = vunpack.c.l.b16 %v11000
        %v11074 = vunpack.c.h.b16 %v11000
        %v11075 = vunpack.c.l.b16 %v11001
        %v11076 = vunpack.c.h.b16 %v11001
        %v11077 = vunpack.c.l.b16 %v11002
        %v11078 = vunpack.c.h.b16 %v11002
        %v11079 = vunpack.c.l.b16 %v11003
        %v11080 = vunpack.c.h.b16 %v11003
        %v11081 = vunpack.c.l.b16 %v11004
        %v11082 = vunpack.c.h.b16 %v11004
        %v11083 = vunpack.c.l.b16 %v11005
        %v11084 = vunpack.c.h.b16 %v11005
        %v11085 = vunpack.c.l.b16 %v11006
        %v11086 = vunpack.c.h.b16 %v11006
        %v11087 = vunpack.c.l.b16 %v11007
        %v11088 = vunpack.c.h.b16 %v11007
        %v11089 = vunpack.c.l.b16 %v11008
        %v11090 = vunpack.c.h.b16 %v11008
        %v11091 = vunpack.c.l.b16 %v11009
        %v11092 = vunpack.c.h.b16 %v11009
        %v11093 = vunpack.c.l.b16 %v11010
        %v11094 = vunpack.c.h.b16 %v11010
        %v11095 = vunpack.c.l.b16 %v11011
        %v11096 = vunpack.c.h.b16 %v11011
        %v11097 = vunpack.c.l.b16 %v11012
        %v11098 = vunpack.c.h.b16 %v11012
        %v11099 = vunpack.c.l.b16 %v11013
        %v11100 = vunpack.c.h.b16 %v11013
        %v11101 = vunpack.c.l.b16 %v11014
        %v11102 = vunpack.c.h.b16 %v11014
        %v11103 = vunpack.c.l.b16 %v11015
        %v11104 = vunpack.c.h.b16 %v11015
        %v11105 = vunpack.c.l.b16 %v11016
        %v11106 = vunpack.c.h.b16 %v11016
        %v11107 = vunpack.c.l.b16 %v11017
        %v11108 = vunpack.c.h.b16 %v11017
        %v11109 = vunpack.c.l.b16 %v11018
        %v11110 = vunpack.c.h.b16 %v11018
        %v11111 = vunpack.c.l.b16 %v11019
        %v11112 = vunpack.c.h.b16 %v11019
        %v11113 = vunpack.c.l.b16 %v11020
        %v11114 = vunpack.c.h.b16 %v11020
        %v11115 = vunpack.c.l.b16 %v11021
        %v11116 = vunpack.c.h.b16 %v11021
        %v11117 = vunpack.c.l.b16 %v11022
        %v11118 = vunpack.c.h.b16 %v11022
        %v11119 = vunpack.c.l.b16 %v11023
        %v11120 = vunpack.c.h.b16 %v11023
        %v11121 = vpack.c.b16 %v11071, %v11069
        %v11122 = vpack.c.b16 %v11072, %v11070
        %v11123 = vpack.c.b16 %v11075, %v11073
        %v11124 = vpack.c.b16 %v11076, %v11074
        %v11125 = vpack.c.b16 %v11079, %v11077
        %v11126 = vpack.c.b16 %v11080, %v11078
        %v11127 = vpack.c.b16 %v11083, %v11081
        %v11128 = vpack.c.b16 %v11084, %v11082
        %v11129 = vpack.c.b16 %v11087, %v11085
        %v11130 = vpack.c.b16 %v11088, %v11086
        %v11131 = vpack.c.b16 %v11091, %v11089
        %v11132 = vpack.c.b16 %v11092, %v11090
        %v11133 = vpack.c.b16 %v11095, %v11093
        %v11134 = vpack.c.b16 %v11096, %v11094
        %v11135 = vpack.c.b16 %v11099, %v11097
        %v11136 = vpack.c.b16 %v11100, %v11098
        %v11137 = vpack.c.b16 %v11103, %v11101
        %v11138 = vpack.c.b16 %v11104, %v11102
        %v11139 = vpack.c.b16 %v11107, %v11105
        %v11140 = vpack.c.b16 %v11108, %v11106
        %v11141 = vpack.c.b16 %v11111, %v11109
        %v11142 = vpack.c.b16 %v11112, %v11110
        %v11143 = vpack.c.b16 %v11115, %v11113
        %v11144 = vpack.c.b16 %v11116, %v11114
        %v11145 = vpack.c.b16 %v11119, %v11117
        %v11146 = vpack.c.b16 %v11120, %v11118
        %v11172 = vsel %vm305, %v11041, 0
        %v11175 = vand.u32 %v11145, %v867
        %v11178 = vand.u32 %v11146, %v867
        %11180 = vmatpush.bf16.msra.mxu0 %v11135
        %11181 = vmatpush.bf16.msra.mxu0 %v11133
        %11182 = vmatpush.bf16.msra.mxu0 %v11131
        %11183 = vmatpush.bf16.msra.mxu0 %v11129
        %11184 = vmatpush.bf16.msra.mxu0 %v11127
        %11185 = vmatpush.bf16.msra.mxu0 %v11125
        %11186 = vmatpush.bf16.msra.mxu0 %v11123
        %11187 = vmatpush.bf16.msra.mxu0 %v11121
        %11188 = vmatmul.bf16.gmra.mxu0 %v11032
        %v11189 = vpop.f32.mrf.mxu0
        %v11190 = vadd.f32 0.0, %v11189
        %v11191 = vpop.f32.mrf.mxu0
        %v11192 = vadd.f32 0.0, %v11191
        %11193 = vdwg.mxu0
        %11194 = vmatpush.bf16.msra.mxu0 0
        %11195 = vmatpush.bf16.msra.mxu0 0
        %11196 = vmatpush.bf16.msra.mxu0 0
        %11197 = vmatpush.bf16.msra.mxu0 %v11175
        %11198 = vmatpush.bf16.msra.mxu0 %v11143
        %11199 = vmatpush.bf16.msra.mxu0 %v11141
        %11200 = vmatpush.bf16.msra.mxu0 %v11139
        %11201 = vmatpush.bf16.msra.mxu0 %v11137
        %11202 = vmatmul.bf16.gmra.mxu0 %v11172
        %v11203 = vpop.f32.mrf.mxu0
        %v11204 = vadd.f32 %v11190, %v11203
        %v11205 = vpop.f32.mrf.mxu0
        %v11206 = vadd.f32 %v11192, %v11205
        %11207 = vdwg.mxu0
        %11208 = vmatpush.bf16.msra.mxu0 %v11136
        %11209 = vmatpush.bf16.msra.mxu0 %v11134
        %11210 = vmatpush.bf16.msra.mxu0 %v11132
        %11211 = vmatpush.bf16.msra.mxu0 %v11130
        %11212 = vmatpush.bf16.msra.mxu0 %v11128
        %11213 = vmatpush.bf16.msra.mxu0 %v11126
        %11214 = vmatpush.bf16.msra.mxu0 %v11124
        %11215 = vmatpush.bf16.msra.mxu0 %v11122
        %11216 = vmatmul.bf16.gmra.mxu0 %v11032
        %v11217 = vpop.f32.mrf.mxu0
        %v11218 = vadd.f32 0.0, %v11217
        %v11219 = vpop.f32.mrf.mxu0
        %v11220 = vadd.f32 0.0, %v11219
        %11221 = vdwg.mxu0
        %11222 = vmatpush.bf16.msra.mxu0 0
        %11223 = vmatpush.bf16.msra.mxu0 0
        %11224 = vmatpush.bf16.msra.mxu0 0
        %11225 = vmatpush.bf16.msra.mxu0 %v11178
        %11226 = vmatpush.bf16.msra.mxu0 %v11144
        %11227 = vmatpush.bf16.msra.mxu0 %v11142
        %11228 = vmatpush.bf16.msra.mxu0 %v11140
        %11229 = vmatpush.bf16.msra.mxu0 %v11138
        %11230 = vmatmul.bf16.gmra.mxu0 %v11172
        %v11231 = vpop.f32.mrf.mxu0
        %v11232 = vadd.f32 %v11218, %v11231
        %v11233 = vpop.f32.mrf.mxu0
        %v11234 = vadd.f32 %v11220, %v11233
        %11235 = vdwg.mxu0
        %v11236 = vadd.f32 %v10993, %v11204
        %v11237 = vadd.f32 %v10994, %v11232
        %v11238 = vadd.f32 %v10995, %v11206
        %v11239 = vadd.f32 %v10996, %v11234
        %s11240 = scalar_lea.vmem [#allocation10], 9152
        %v11241 = vld [vmem:[%s11240] sm:$0xff]
        %v11242 = vld [vmem:[%s11240 + $0x8] sm:$0xff]
        %v11243 = vld [vmem:[%s11240 + $0x10] sm:$0xff]
        %v11244 = vld [vmem:[%s11240 + $0x18] sm:$0xff]
        %v11245 = vld [vmem:[%s11240 + $0x20] sm:$0xff]
        %v11246 = vld [vmem:[%s11240 + $0x28] sm:$0xff]
        %v11247 = vld [vmem:[%s11240 + $0x30] sm:$0xff]
        %v11248 = vld [vmem:[%s11240 + $0x38] sm:$0xff]
        %v11249 = vld [vmem:[%s11240 + $0x40] sm:$0xff]
        %v11250 = vld [vmem:[%s11240 + $0x48] sm:$0xff]
        %v11251 = vld [vmem:[%s11240 + $0x50] sm:$0xff]
        %v11252 = vld [vmem:[%s11240 + $0x58] sm:$0xff]
        %v11253 = vld [vmem:[%s11240 + $0x60] sm:$0xff]
        %v11254 = vld [vmem:[%s11240 + $0x68] sm:$0xff]
        %v11255 = vld [vmem:[%s11240 + $0x70] sm:$0xff]
        %v11256 = vld [vmem:[%s11240 + $0x78] sm:$0xff]
        %v11257 = vld [vmem:[%s11240 + $0x80] sm:$0xff]
        %v11258 = vld [vmem:[%s11240 + $0x88] sm:$0xff]
        %v11259 = vld [vmem:[%s11240 + $0x90] sm:$0xff]
        %v11260 = vld [vmem:[%s11240 + $0x98] sm:$0xff]
        %v11261 = vld [vmem:[%s11240 + $0xa0] sm:$0xff]
        %v11262 = vld [vmem:[%s11240 + $0xa8] sm:$0xff]
        %v11263 = vld [vmem:[%s11240 + $0xb0] sm:$0xff]
        %v11264 = vld [vmem:[%s11240 + $0xb8] sm:$0xff]
        %v11265 = vld [vmem:[%s11240 + $0xc0] sm:$0xff]
        %v11266 = vld [vmem:[%s11240 + $0xc8] sm:$0x11]
        %v11267 = vrot.slane %v10313, 2
        %v11268 = vrot.slane %v10543, 2
        %v11269 = vsel %vm930, %v11267, %v11268
        %v11270 = vrot.slane %v10314, 2
        %v11271 = vrot.slane %v10544, 2
        %v11272 = vsel %vm930, %v11270, %v11271
        %v11300 = vunpack.c.l.b16 %v11241
        %v11301 = vunpack.c.h.b16 %v11241
        %v11302 = vunpack.c.l.b16 %v11242
        %v11303 = vunpack.c.h.b16 %v11242
        %v11304 = vunpack.c.l.b16 %v11243
        %v11305 = vunpack.c.h.b16 %v11243
        %v11306 = vunpack.c.l.b16 %v11244
        %v11307 = vunpack.c.h.b16 %v11244
        %v11308 = vunpack.c.l.b16 %v11245
        %v11309 = vunpack.c.h.b16 %v11245
        %v11310 = vunpack.c.l.b16 %v11246
        %v11311 = vunpack.c.h.b16 %v11246
        %v11312 = vunpack.c.l.b16 %v11247
        %v11313 = vunpack.c.h.b16 %v11247
        %v11314 = vunpack.c.l.b16 %v11248
        %v11315 = vunpack.c.h.b16 %v11248
        %v11316 = vunpack.c.l.b16 %v11249
        %v11317 = vunpack.c.h.b16 %v11249
        %v11318 = vunpack.c.l.b16 %v11250
        %v11319 = vunpack.c.h.b16 %v11250
        %v11320 = vunpack.c.l.b16 %v11251
        %v11321 = vunpack.c.h.b16 %v11251
        %v11322 = vunpack.c.l.b16 %v11252
        %v11323 = vunpack.c.h.b16 %v11252
        %v11324 = vunpack.c.l.b16 %v11253
        %v11325 = vunpack.c.h.b16 %v11253
        %v11326 = vunpack.c.l.b16 %v11254
        %v11327 = vunpack.c.h.b16 %v11254
        %v11328 = vunpack.c.l.b16 %v11255
        %v11329 = vunpack.c.h.b16 %v11255
        %v11330 = vunpack.c.l.b16 %v11256
        %v11331 = vunpack.c.h.b16 %v11256
        %v11332 = vunpack.c.l.b16 %v11257
        %v11333 = vunpack.c.h.b16 %v11257
        %v11334 = vunpack.c.l.b16 %v11258
        %v11335 = vunpack.c.h.b16 %v11258
        %v11336 = vunpack.c.l.b16 %v11259
        %v11337 = vunpack.c.h.b16 %v11259
        %v11338 = vunpack.c.l.b16 %v11260
        %v11339 = vunpack.c.h.b16 %v11260
        %v11340 = vunpack.c.l.b16 %v11261
        %v11341 = vunpack.c.h.b16 %v11261
        %v11342 = vunpack.c.l.b16 %v11262
        %v11343 = vunpack.c.h.b16 %v11262
        %v11344 = vunpack.c.l.b16 %v11263
        %v11345 = vunpack.c.h.b16 %v11263
        %v11346 = vunpack.c.l.b16 %v11264
        %v11347 = vunpack.c.h.b16 %v11264
        %v11348 = vunpack.c.l.b16 %v11265
        %v11349 = vunpack.c.h.b16 %v11265
        %v11350 = vunpack.c.l.b16 %v11266
        %v11351 = vunpack.c.h.b16 %v11266
        %v11352 = vpack.c.b16 %v11302, %v11300
        %v11353 = vpack.c.b16 %v11303, %v11301
        %v11354 = vpack.c.b16 %v11306, %v11304
        %v11355 = vpack.c.b16 %v11307, %v11305
        %v11356 = vpack.c.b16 %v11310, %v11308
        %v11357 = vpack.c.b16 %v11311, %v11309
        %v11358 = vpack.c.b16 %v11314, %v11312
        %v11359 = vpack.c.b16 %v11315, %v11313
        %v11360 = vpack.c.b16 %v11318, %v11316
        %v11361 = vpack.c.b16 %v11319, %v11317
        %v11362 = vpack.c.b16 %v11322, %v11320
        %v11363 = vpack.c.b16 %v11323, %v11321
        %v11364 = vpack.c.b16 %v11326, %v11324
        %v11365 = vpack.c.b16 %v11327, %v11325
        %v11366 = vpack.c.b16 %v11330, %v11328
        %v11367 = vpack.c.b16 %v11331, %v11329
        %v11368 = vpack.c.b16 %v11334, %v11332
        %v11369 = vpack.c.b16 %v11335, %v11333
        %v11370 = vpack.c.b16 %v11338, %v11336
        %v11371 = vpack.c.b16 %v11339, %v11337
        %v11372 = vpack.c.b16 %v11342, %v11340
        %v11373 = vpack.c.b16 %v11343, %v11341
        %v11374 = vpack.c.b16 %v11346, %v11344
        %v11375 = vpack.c.b16 %v11347, %v11345
        %v11376 = vpack.c.b16 %v11350, %v11348
        %v11377 = vpack.c.b16 %v11351, %v11349
        %v11403 = vsel %vm305, %v11272, 0
        %v11406 = vand.u32 %v11376, %v867
        %v11409 = vand.u32 %v11377, %v867
        %11411 = vmatpush.bf16.msra.mxu0 %v11366
        %11412 = vmatpush.bf16.msra.mxu0 %v11364
        %11413 = vmatpush.bf16.msra.mxu0 %v11362
        %11414 = vmatpush.bf16.msra.mxu0 %v11360
        %11415 = vmatpush.bf16.msra.mxu0 %v11358
        %11416 = vmatpush.bf16.msra.mxu0 %v11356
        %11417 = vmatpush.bf16.msra.mxu0 %v11354
        %11418 = vmatpush.bf16.msra.mxu0 %v11352
        %11419 = vmatmul.bf16.gmra.mxu0 %v11269
        %v11420 = vpop.f32.mrf.mxu0
        %v11421 = vadd.f32 0.0, %v11420
        %v11422 = vpop.f32.mrf.mxu0
        %v11423 = vadd.f32 0.0, %v11422
        %11424 = vdwg.mxu0
        %11425 = vmatpush.bf16.msra.mxu0 0
        %11426 = vmatpush.bf16.msra.mxu0 0
        %11427 = vmatpush.bf16.msra.mxu0 0
        %11428 = vmatpush.bf16.msra.mxu0 %v11406
        %11429 = vmatpush.bf16.msra.mxu0 %v11374
        %11430 = vmatpush.bf16.msra.mxu0 %v11372
        %11431 = vmatpush.bf16.msra.mxu0 %v11370
        %11432 = vmatpush.bf16.msra.mxu0 %v11368
        %11433 = vmatmul.bf16.gmra.mxu0 %v11403
        %v11434 = vpop.f32.mrf.mxu0
        %v11435 = vadd.f32 %v11421, %v11434
        %v11436 = vpop.f32.mrf.mxu0
        %v11437 = vadd.f32 %v11423, %v11436
        %11438 = vdwg.mxu0
        %11439 = vmatpush.bf16.msra.mxu0 %v11367
        %11440 = vmatpush.bf16.msra.mxu0 %v11365
        %11441 = vmatpush.bf16.msra.mxu0 %v11363
        %11442 = vmatpush.bf16.msra.mxu0 %v11361
        %11443 = vmatpush.bf16.msra.mxu0 %v11359
        %11444 = vmatpush.bf16.msra.mxu0 %v11357
        %11445 = vmatpush.bf16.msra.mxu0 %v11355
        %11446 = vmatpush.bf16.msra.mxu0 %v11353
        %11447 = vmatmul.bf16.gmra.mxu0 %v11269
        %v11448 = vpop.f32.mrf.mxu0
        %v11449 = vadd.f32 0.0, %v11448
        %v11450 = vpop.f32.mrf.mxu0
        %v11451 = vadd.f32 0.0, %v11450
        %11452 = vdwg.mxu0
        %11453 = vmatpush.bf16.msra.mxu0 0
        %11454 = vmatpush.bf16.msra.mxu0 0
        %11455 = vmatpush.bf16.msra.mxu0 0
        %11456 = vmatpush.bf16.msra.mxu0 %v11409
        %11457 = vmatpush.bf16.msra.mxu0 %v11375
        %11458 = vmatpush.bf16.msra.mxu0 %v11373
        %11459 = vmatpush.bf16.msra.mxu0 %v11371
        %11460 = vmatpush.bf16.msra.mxu0 %v11369
        %11461 = vmatmul.bf16.gmra.mxu0 %v11403
        %v11462 = vpop.f32.mrf.mxu0
        %v11463 = vadd.f32 %v11449, %v11462
        %v11464 = vpop.f32.mrf.mxu0
        %v11465 = vadd.f32 %v11451, %v11464
        %11466 = vdwg.mxu0
        %v11467 = vadd.f32 %v11236, %v11435
        %v11468 = vadd.f32 %v11237, %v11463
        %v11469 = vadd.f32 %v11238, %v11437
        %v11470 = vadd.f32 %v11239, %v11465
        %v11471 = vld [vmem:[#allocation12] sm:$0x3]
        %v11473 = vperm.slane %v11471, 0
        %v11474 = vperm.slane %v11471, 1
        %v11477 = vadd.f32 %v11467, %v11473
        %v11478 = vadd.f32 %v11468, %v11474
        %v11479 = vadd.f32 %v11469, %v11473
        %v11480 = vadd.f32 %v11470, %v11474
        %v11481 = vmax.f32 %v11477, 0.0
        %v11482 = vmax.f32 %v11478, 0.0
        %v11483 = vmax.f32 %v11479, 0.0
        %v11484 = vmax.f32 %v11480, 0.0
        %11485 = vst [vmem:[%s302] sm:$0xff] %v11481
        %11486 = vst.msk [vmem:[%s302 + $0x8] sm:$0xff] %vm305, %v11482
        %11487 = vst [vmem:[%s302 + $0x10] sm:$0xff] %v11483
        %11488 = vst.msk [vmem:[%s302 + $0x18] sm:$0xff] %vm305, %v11484
        %s11489 = sand.u32 %s143, 1
        %s11490 = scalar_lea.sflag [#allocation5], %s11489
        %s11491 = sand.u32 %s143, 1
        %s11492 = smul.addr %s11491, 32
        %s11493 = scalar_lea.vmem [#allocation13], %s11492
        // Predicated region
        $region61: #{attention_forward.1} parent=39 // pred_check
          %p11494 = pneg %p153
        $region62: #{attention_forward.1} parent=39 // pred_check_branch
          %11496 = sbr.rel (%p11494) target = $region64
        $region63: #{attention_forward.1} parent=39 // pred_region
          %11498 = vsyncadd %s11490, 0
          %s11499 = smul.addr %s25, 4
          %s11500 = smul.addr %s11499, 8
          %s11501 = scalar_lea.hbm %s5, %s11500
          %s11502 = sshll.u32 %s11493, 4
          %s11503 = int_to_ptr.vmem [resolvable:$true] %s11502
          %s11504 = sshll.u32 %s11501, 4
          %s11505 = int_to_ptr.hbm [resolvable:$true] %s11504
          %11510 = dma.vmem_to_hbm [thread:$0]  %s11503, 512, %s11505, %s11490, 256, 256, 16
        $region64: #{attention_forward.1} parent=39 // pred_fallthru
          _
      $region40: #{attention_forward.1} parent=5 // pred_fallthru
        _
      %p11511 = scmp.le.s32.totalorder 2, %s20
      // Predicated region
      $region65: #{attention_forward.1} parent=5 // pred_check
        %p11512 = pneg %p11511
      $region66: #{attention_forward.1} parent=5 // pred_check_branch
        %11514 = sbr.rel (%p11512) target = $region68
      $region67: #{attention_forward.1} parent=5 // pred_region
        %s11515 = ssub.s32 %s20, 2
        // Predicated region
        $region69: #{attention_forward.1} parent=67 // pred_check
          %p11516 = pneg %p159
        $region70: #{attention_forward.1} parent=67 // pred_check_branch
          %11518 = sbr.rel (%p11516) target = $region72
        $region71: #{attention_forward.1} parent=67 // pred_region
          %s11519 = sand.u32 %s144, 1
          %s11520 = scalar_lea.sflag [#allocation5], %s11519
          %s11521 = sand.u32 %s144, 1
          %s11522 = smul.addr %s11521, 32
          %s11523 = scalar_lea.vmem [#allocation13], %s11522
          %11525 = dma.done %s11520, 512
        $region72: #{attention_forward.1} parent=67 // pred_fallthru
          _
      $region68: #{attention_forward.1} parent=5 // pred_fallthru
        _
    $region6: #{attention_forward.1} parent=1 // loop_footer
      %s24 = sadd.s32 1, %s20
    $region7: #{attention_forward.1} parent=1 // loop_footer_branch
      %19 = sbr.rel target = $region3
    $region8: #{attention_forward.1} parent=1 // loop_exit
      _
    %11526 = vsyncpa [#allocation4], 1
    %s11527 = scalar_lea.sflag [#allocation4], 1
    %11528 = vsyncpa %s11527, 1
    %11529 = vsyncpa [#allocation11], 1
    %11530 = vsyncpa [#allocation5], 1
    %s11531 = scalar_lea.sflag [#allocation5], 1
    %11532 = vsyncpa %s11531, 1
    %11533 = vsyncpa [#allocation6], 1
    %s11534 = scalar_lea.sflag [#allocation6], 1
    %11535 = vsyncpa %s11534, 1
    %11536 = vsyncpa [#allocation7], 1
    %s11537 = scalar_lea.sflag [#allocation7], 1
    %11538 = vsyncpa %s11537, 1

</llo_original>
